<compile_context>
chip_gen: v6e
topology: v6e:2x2x1
jax: 0.10.0
libtpu: 0.0.40
codegen_flags: <defaults>
</compile_context>

<pallas_src>
import jax
import jax.numpy as jnp
from jax.experimental import pallas as pl
from jax.experimental.pallas import tpu as pltpu

NB = 8            # real images per grid step
SLOTS = NB + 1    # + one dummy image slot = row halo for shifted slices


# ----------------------------- Pallas kernel -------------------------------

def lenet_kernel(x_ref, wb1_ref, b1_ref, wb2_ref, b2_ref,
                 wf1_ref, bf1_ref, wf2_ref, bf2_ref, wf3_ref, bf3_ref, o_ref):
    f32, bf16 = jnp.float32, jnp.bfloat16
    rows = x_ref.shape[1]          # SLOTS*8 stacked rows (8 rows / image slot)
    m2 = rows - 4                  # conv2 rows (needs +2 row halo below)
    mfc = rows - 8                 # fc rows = NB*8 (needs +4 row halo below)

    # ---- conv1 (5x5, 3->6) as banded matmuls over stacked image rows -------
    # x_ref[p]     : image rows 4i+p      (p = 0..3), (W=32, Cpad=4) in lanes
    # x_ref[4 + p] : image rows 4(i+1)+p  (pre-shifted in the wrapper)
    def conv1_phase(q):            # conv1 output rows 4i+q for every image
        acc = None
        for dy in range(5):
            p, off = (q + dy) % 4, (q + dy) // 4
            t = jnp.dot(x_ref[p + 4 * off], wb1_ref[dy],
                        preferred_element_type=f32)           # (rows, 256)
            acc = t if acc is None else acc + t
        return acc

    b1 = b1_ref[...]                                          # (1, 128)
    # keep at most two (rows,256) f32 accumulators live at a time
    y0 = conv1_phase(0)
    y1 = conv1_phase(1)
    ze = jnp.maximum(y0, y1)                                  # pooled rows 2t
    ze = jnp.maximum(jnp.maximum(ze[:, :128], ze[:, 128:]) + b1, 0.0)
    y2 = conv1_phase(2)
    y3 = conv1_phase(3)
    zo = jnp.maximum(y2, y3)                                  # pooled rows 2t+1
    zo = jnp.maximum(jnp.maximum(zo[:, :128], zo[:, 128:]) + b1, 0.0)

    # ---- conv2 (5x5, 6->16): 6 shifted bf16 slabs built once, reused -------
    slab = {}
    for off in range(3):
        slab[(0, off)] = ze[off:off + m2, :].astype(bf16)     # (m2, 128)
        slab[(1, off)] = zo[off:off + m2, :].astype(bf16)

    def conv2_phase(par):          # conv2 output rows 2m+par for every image
        acc = None
        for dy in range(5):
            s, off = (par + dy) % 2, (par + dy) // 2
            t = jnp.dot(slab[(s, off)], wb2_ref[dy],
                        preferred_element_type=f32)           # (m2, 256)
            acc = t if acc is None else acc + t
        return acc

    u0 = conv2_phase(0)
    u1 = conv2_phase(1)
    p2 = jnp.maximum(u0, u1)
    p2 = jnp.maximum(jnp.maximum(p2[:, :128], p2[:, 128:]) + b2_ref[...], 0.0)

    # ---- fc head: valid result lands in row 8*b of every image block -------
    hacc = None
    for h in range(5):
        t = jnp.dot(p2[h:h + mfc, :].astype(bf16), wf1_ref[h],
                    preferred_element_type=f32)               # (mfc, 128)
        hacc = t if hacc is None else hacc + t
    h1 = jnp.maximum(hacc + bf1_ref[...], 0.0).astype(bf16)
    h2 = jnp.dot(h1, wf2_ref[...], preferred_element_type=f32)
    h2 = jnp.maximum(h2 + bf2_ref[...], 0.0).astype(bf16)
    out = jnp.dot(h2, wf3_ref[...], preferred_element_type=f32)
    o_ref[...] = out + bf3_ref[...]                           # (mfc, 128)


# ------------------------ parameter preparation -----------------------------

def _conv_band(w, n_in_cols, n_out_cols, c_in_pad, c_out_pad):
    """Banded conv weight for the row-matmul formulation.

    band[dy, w_in*c_in_pad + ci, half*128 + jj*c_out_pad + co]
      = w[co, ci, dy, w_in - (2*jj + half)]  when 0 <= dx < kw, else 0.
    Even/odd output columns go to the [0:128)/[128:256) lane halves so the
    2x2 pool's column max is an aligned lane slice inside the kernel.
    """
    oc, ic, kh, kw = w.shape
    jj = jnp.arange(n_out_cols // 2)
    half = jnp.arange(2)
    dx = jnp.arange(kw)
    win = jnp.arange(n_in_cols)
    sel = (win[None, None, None, :] ==
           (2 * jj[None, None, :, None] + half[None, :, None, None]
            + dx[:, None, None, None])).astype(w.dtype)     # (kw, 2, J, n_in)
    band = jnp.einsum("dhjw,ocyd->ywchjo", sel, w)           # (kh,n_in,ic,2,J,oc)
    band = jnp.pad(band, ((0, 0), (0, 0), (0, c_in_pad - ic),
                          (0, 0), (0, 0), (0, c_out_pad - oc)))
    J = n_out_cols // 2
    band = band.reshape(kh, n_in_cols * c_in_pad, 2, J * c_out_pad)
    band = jnp.pad(band, ((0, 0), (0, 0), (0, 0), (0, 128 - J * c_out_pad)))
    return band.reshape(kh, n_in_cols * c_in_pad, 256)


def prepare_params(p):
    """One-time repack: banded conv weights, padded/permuted fc weights, bf16."""
    f32, bf16 = jnp.float32, jnp.bfloat16
    wb1 = _conv_band(p["conv1_w"], 32, 28, 4, 8).astype(bf16)      # (5,128,256)
    wb2 = _conv_band(p["conv2_w"], 14, 10, 8, 16)                  # (5,112,256)
    wb2 = jnp.pad(wb2, ((0, 0), (0, 16), (0, 0))).astype(bf16)     # (5,128,256)
    b1 = jnp.pad(jnp.tile(jnp.pad(p["conv1_b"], (0, 2)), 14),
                 (0, 16)).reshape(1, 128).astype(f32)
    b2 = jnp.pad(jnp.tile(p["conv2_b"], 5), (0, 48)).reshape(1, 128).astype(f32)
    # fc1: fold PyTorch's NCHW flatten (c*25 + h*5 + w) and the kernel's
    # per-row (w*16 + c) activation layout into the weight at prep time.
    wf1 = (p["fc1_w"].reshape(16, 5, 5, 120).transpose(1, 2, 0, 3)
           .reshape(5, 80, 120))
    wf1 = jnp.pad(wf1, ((0, 0), (0, 48), (0, 8))).astype(bf16)     # (5,128,128)
    bf1 = jnp.pad(p["fc1_b"], ((0, 0), (0, 8))).astype(f32)        # (1,128)
    wf2 = jnp.pad(p["fc2_w"], ((0, 8), (0, 44))).astype(bf16)      # (128,128)
    bf2 = jnp.pad(p["fc2_b"], ((0, 0), (0, 44))).astype(f32)       # (1,128)
    wf3 = jnp.pad(p["fc3_w"], ((0, 44), (0, 118))).astype(bf16)    # (128,128)
    bf3 = jnp.pad(p["fc3_b"], ((0, 0), (0, 118))).astype(f32)      # (1,128)
    return (wb1, b1, wb2, b2, wf1, bf1, wf2, bf2, wf3, bf3)


# ----------------------------- forward wrapper ------------------------------

def net_forward(x_nchw, prep):
    B, C, H, W = x_nchw.shape
    assert (C, H, W) == (3, 32, 32)
    nsteps = max(1, -(-B // NB))
    Bp = nsteps * NB

    # Input repack (fused in the same jit): NCHW -> rows with (W=32, Cpad=4)
    # merged into 128 lanes, rows split by (row mod 4), plus the 4 slabs
    # pre-shifted by one row group, one dummy image slot per step, bf16.
    x = jnp.transpose(x_nchw, (0, 2, 3, 1))                       # (B,32,32,3)
    x = jnp.pad(x, ((0, Bp - B), (0, 0), (0, 0), (0, 1)))         # (Bp,32,32,4)
    x = x.reshape(Bp, 32, 128).reshape(Bp, 8, 4, 128)             # [b,i,p]
    base = jnp.transpose(x, (2, 0, 1, 3))                         # (4,Bp,8,128)
    shift = jnp.concatenate(
        [base[:, :, 1:, :], jnp.zeros((4, Bp, 1, 128), base.dtype)], axis=2)
    slabs = jnp.concatenate([base, shift], axis=0)                # (8,Bp,8,128)
    slabs = slabs.reshape(8, nsteps, NB, 8, 128)
    slabs = jnp.pad(slabs, ((0, 0), (0, 0), (0, 1), (0, 0), (0, 0)))
    slabs = slabs.reshape(8, nsteps * SLOTS * 8, 128).astype(jnp.bfloat16)

    wb1, b1, wb2, b2, wf1, bf1, wf2, bf2, wf3, bf3 = prep
    c3 = lambda i: (0, 0, 0)
    c2 = lambda i: (0, 0)
    out = pl.pallas_call(
        lenet_kernel,
        out_shape=jax.ShapeDtypeStruct((nsteps * NB * 8, 128), jnp.float32),
        grid=(nsteps,),
        in_specs=[
            pl.BlockSpec((8, SLOTS * 8, 128), lambda i: (0, i, 0)),  # images
            pl.BlockSpec((5, 128, 256), c3),   # conv1 band
            pl.BlockSpec((1, 128), c2),        # conv1 bias
            pl.BlockSpec((5, 128, 256), c3),   # conv2 band
            pl.BlockSpec((1, 128), c2),        # conv2 bias
            pl.BlockSpec((5, 128, 128), c3),   # fc1 (per output-row h)
            pl.BlockSpec((1, 128), c2),
            pl.BlockSpec((128, 128), c2),      # fc2
            pl.BlockSpec((1, 128), c2),
            pl.BlockSpec((128, 128), c2),      # fc3
            pl.BlockSpec((1, 128), c2),
        ],
        out_specs=pl.BlockSpec((NB * 8, 128), lambda i: (i, 0)),
        compiler_params=pltpu.CompilerParams(
            dimension_semantics=("parallel",),
            vmem_limit_bytes=32 * 1024 * 1024),
    )(slabs, wb1, b1, wb2, b2, wf1, bf1, wf2, bf2, wf3, bf3)
    out = out.reshape(nsteps, NB, 8, 128)[:, :, 0, :10].reshape(Bp, 10)
    return out[:B]


# ------------------------- pure-JAX reference -------------------------------

def reference_forward(x_nchw, params):
    def conv(x, w, b):
        y = jax.lax.conv_general_dilated(
            x, w, window_strides=(1, 1), padding="VALID",
            dimension_numbers=("NCHW", "OIHW", "NCHW"))
        return y + b.reshape(1, -1, 1, 1)

    def pool(x):
        return jax.lax.reduce_window(x, -jnp.inf, jax.lax.max,
                                     (1, 1, 2, 2), (1, 1, 2, 2), "VALID")

    x = pool(jax.nn.relu(conv(x_nchw, params["conv1_w"], params["conv1_b"])))
    x = pool(jax.nn.relu(conv(x, params["conv2_w"], params["conv2_b"])))
    x = x.reshape(x.shape[0], -1)
    x = jax.nn.relu(x @ params["fc1_w"] + params["fc1_b"].reshape(-1))
    x = jax.nn.relu(x @ params["fc2_w"] + params["fc2_b"].reshape(-1))
    return x @ params["fc3_w"] + params["fc3_b"].reshape(-1)


# ----------------------------- main ------------------------------------------

def init_params(key):
    ks = jax.random.split(key, 10)
    s = 0.1
    return {
        "conv1_w": s * jax.random.normal(ks[0], (6, 3, 5, 5), jnp.float32),
        "conv1_b": s * jax.random.normal(ks[1], (6,), jnp.float32),
        "conv2_w": s * jax.random.normal(ks[2], (16, 6, 5, 5), jnp.float32),
        "conv2_b": s * jax.random.normal(ks[3], (16,), jnp.float32),
        # fc weights stored as (in, out); equivalent to PyTorch (out, in).T
        "fc1_w": s * jax.random.normal(ks[4], (400, 120), jnp.float32),
        "fc1_b": s * jax.random.normal(ks[5], (1, 120), jnp.float32),
        "fc2_w": s * jax.random.normal(ks[6], (120, 84), jnp.float32),
        "fc2_b": s * jax.random.normal(ks[7], (1, 84), jnp.float32),
        "fc3_w": s * jax.random.normal(ks[8], (84, 10), jnp.float32),
        "fc3_b": s * jax.random.normal(ks[9], (1, 10), jnp.float32),
    }


if __name__ == "__main__":
    key = jax.random.PRNGKey(0)
    kx, kp = jax.random.split(key)
    # The module's 16*5*5 flatten implies 3x32x32 inputs (CIFAR-like).
    # batch=16 -> 2 grid steps of NB=8 images (also feeds both v7x TCs).
    x = jax.random.normal(kx, (16, 3, 32, 32), jnp.float32)
    params = init_params(kp)
    prep = prepare_params(params)   # one-time weight repack (outside fwd path)

    fwd = jax.jit(net_forward)
    out = jax.block_until_ready(fwd(x, prep))
    assert out.shape == (16, 10) and out.dtype == jnp.float32

    ref = jax.block_until_ready(reference_forward(x, params))
    # bf16 matmul operands with f32 accumulation -> 5e-2 tolerance.
    assert jnp.allclose(out, ref, atol=5e-2, rtol=5e-2), (
        f"max abs diff {jnp.max(jnp.abs(out - ref))}")
    print("KERNEL_OK")
</pallas_src>

<mosaic_0001>
module attributes {stable_mosaic.version = 11 : i64} {
  func.func @lenet_kernel(%arg0: i32, %arg1: memref<8x72x128xbf16, #tpu.memory_space<vmem>>, %arg2: memref<5x128x256xbf16, #tpu.memory_space<vmem>>, %arg3: memref<1x128xf32, #tpu.memory_space<vmem>>, %arg4: memref<5x128x256xbf16, #tpu.memory_space<vmem>>, %arg5: memref<1x128xf32, #tpu.memory_space<vmem>>, %arg6: memref<5x128x128xbf16, #tpu.memory_space<vmem>>, %arg7: memref<1x128xf32, #tpu.memory_space<vmem>>, %arg8: memref<128x128xbf16, #tpu.memory_space<vmem>>, %arg9: memref<1x128xf32, #tpu.memory_space<vmem>>, %arg10: memref<128x128xbf16, #tpu.memory_space<vmem>>, %arg11: memref<1x128xf32, #tpu.memory_space<vmem>>, %arg12: memref<64x128xf32, #tpu.memory_space<vmem>>) attributes {dimension_semantics = [#tpu.dimension_semantics<parallel>], iteration_bounds = array<i64: 2>, scalar_prefetch = 0 : i64, scratch_operands = 0 : i64, tpu.core_type = #tpu.core_type<tc>, window_params = [{transform_indices = @transform_0, window_bounds = array<i64: 8, 72, 128>}, {pipeline_mode = #tpu.pipeline_mode<synchronous>, transform_indices = @transform_1, window_bounds = array<i64: 5, 128, 256>}, {pipeline_mode = #tpu.pipeline_mode<synchronous>, transform_indices = @transform_2, window_bounds = array<i64: 1, 128>}, {pipeline_mode = #tpu.pipeline_mode<synchronous>, transform_indices = @transform_3, window_bounds = array<i64: 5, 128, 256>}, {pipeline_mode = #tpu.pipeline_mode<synchronous>, transform_indices = @transform_4, window_bounds = array<i64: 1, 128>}, {pipeline_mode = #tpu.pipeline_mode<synchronous>, transform_indices = @transform_5, window_bounds = array<i64: 5, 128, 128>}, {pipeline_mode = #tpu.pipeline_mode<synchronous>, transform_indices = @transform_6, window_bounds = array<i64: 1, 128>}, {pipeline_mode = #tpu.pipeline_mode<synchronous>, transform_indices = @transform_7, window_bounds = array<i64: 128, 128>}, {pipeline_mode = #tpu.pipeline_mode<synchronous>, transform_indices = @transform_8, window_bounds = array<i64: 1, 128>}, {pipeline_mode = #tpu.pipeline_mode<synchronous>, transform_indices = @transform_9, window_bounds = array<i64: 128, 128>}, {pipeline_mode = #tpu.pipeline_mode<synchronous>, transform_indices = @transform_10, window_bounds = array<i64: 1, 128>}, {transform_indices = @transform_11, window_bounds = array<i64: 64, 128>}]} {
    %c0 = arith.constant 0 : index
    %c0_0 = arith.constant 0 : index
    %0 = vector.load %arg3[%c0, %c0_0] : memref<1x128xf32, #tpu.memory_space<vmem>>, vector<1x128xf32>
    %c0_1 = arith.constant 0 : index
    %c0_2 = arith.constant 0 : index
    %c0_3 = arith.constant 0 : index
    %1 = vector.load %arg1[%c0_1, %c0_2, %c0_3] : memref<8x72x128xbf16, #tpu.memory_space<vmem>>, vector<1x72x128xbf16>
    %2 = vector.shape_cast %1 : vector<1x72x128xbf16> to vector<72x128xbf16>
    %c0_4 = arith.constant 0 : index
    %c0_5 = arith.constant 0 : index
    %c0_6 = arith.constant 0 : index
    %3 = vector.load %arg2[%c0_4, %c0_5, %c0_6] : memref<5x128x256xbf16, #tpu.memory_space<vmem>>, vector<1x128x256xbf16>
    %4 = vector.shape_cast %3 : vector<1x128x256xbf16> to vector<128x256xbf16>
    %cst = arith.constant dense<0.000000e+00> : vector<72x256xf32>
    %5 = tpu.matmul %2, %4, %cst {dimension_numbers = #tpu.dot_dimension_numbers<[1], [0], [0], [1], [0, 0, 1, 1], [], []>} : vector<72x128xbf16>, vector<128x256xbf16>, vector<72x256xf32> -> vector<72x256xf32>
    %c1 = arith.constant 1 : index
    %c0_7 = arith.constant 0 : index
    %c0_8 = arith.constant 0 : index
    %6 = vector.load %arg1[%c1, %c0_7, %c0_8] : memref<8x72x128xbf16, #tpu.memory_space<vmem>>, vector<1x72x128xbf16>
    %7 = vector.shape_cast %6 : vector<1x72x128xbf16> to vector<72x128xbf16>
    %c1_9 = arith.constant 1 : index
    %c0_10 = arith.constant 0 : index
    %c0_11 = arith.constant 0 : index
    %8 = vector.load %arg2[%c1_9, %c0_10, %c0_11] : memref<5x128x256xbf16, #tpu.memory_space<vmem>>, vector<1x128x256xbf16>
    %9 = vector.shape_cast %8 : vector<1x128x256xbf16> to vector<128x256xbf16>
    %cst_12 = arith.constant dense<0.000000e+00> : vector<72x256xf32>
    %10 = tpu.matmul %7, %9, %cst_12 {dimension_numbers = #tpu.dot_dimension_numbers<[1], [0], [0], [1], [0, 0, 1, 1], [], []>} : vector<72x128xbf16>, vector<128x256xbf16>, vector<72x256xf32> -> vector<72x256xf32>
    %11 = arith.addf %5, %10 : vector<72x256xf32>
    %c2 = arith.constant 2 : index
    %c0_13 = arith.constant 0 : index
    %c0_14 = arith.constant 0 : index
    %12 = vector.load %arg1[%c2, %c0_13, %c0_14] : memref<8x72x128xbf16, #tpu.memory_space<vmem>>, vector<1x72x128xbf16>
    %13 = vector.shape_cast %12 : vector<1x72x128xbf16> to vector<72x128xbf16>
    %c2_15 = arith.constant 2 : index
    %c0_16 = arith.constant 0 : index
    %c0_17 = arith.constant 0 : index
    %14 = vector.load %arg2[%c2_15, %c0_16, %c0_17] : memref<5x128x256xbf16, #tpu.memory_space<vmem>>, vector<1x128x256xbf16>
    %15 = vector.shape_cast %14 : vector<1x128x256xbf16> to vector<128x256xbf16>
    %cst_18 = arith.constant dense<0.000000e+00> : vector<72x256xf32>
    %16 = tpu.matmul %13, %15, %cst_18 {dimension_numbers = #tpu.dot_dimension_numbers<[1], [0], [0], [1], [0, 0, 1, 1], [], []>} : vector<72x128xbf16>, vector<128x256xbf16>, vector<72x256xf32> -> vector<72x256xf32>
    %17 = arith.addf %11, %16 : vector<72x256xf32>
    %c3 = arith.constant 3 : index
    %c0_19 = arith.constant 0 : index
    %c0_20 = arith.constant 0 : index
    %18 = vector.load %arg1[%c3, %c0_19, %c0_20] : memref<8x72x128xbf16, #tpu.memory_space<vmem>>, vector<1x72x128xbf16>
    %19 = vector.shape_cast %18 : vector<1x72x128xbf16> to vector<72x128xbf16>
    %c3_21 = arith.constant 3 : index
    %c0_22 = arith.constant 0 : index
    %c0_23 = arith.constant 0 : index
    %20 = vector.load %arg2[%c3_21, %c0_22, %c0_23] : memref<5x128x256xbf16, #tpu.memory_space<vmem>>, vector<1x128x256xbf16>
    %21 = vector.shape_cast %20 : vector<1x128x256xbf16> to vector<128x256xbf16>
    %cst_24 = arith.constant dense<0.000000e+00> : vector<72x256xf32>
    %22 = tpu.matmul %19, %21, %cst_24 {dimension_numbers = #tpu.dot_dimension_numbers<[1], [0], [0], [1], [0, 0, 1, 1], [], []>} : vector<72x128xbf16>, vector<128x256xbf16>, vector<72x256xf32> -> vector<72x256xf32>
    %23 = arith.addf %17, %22 : vector<72x256xf32>
    %c4 = arith.constant 4 : index
    %c0_25 = arith.constant 0 : index
    %c0_26 = arith.constant 0 : index
    %24 = vector.load %arg1[%c4, %c0_25, %c0_26] : memref<8x72x128xbf16, #tpu.memory_space<vmem>>, vector<1x72x128xbf16>
    %25 = vector.shape_cast %24 : vector<1x72x128xbf16> to vector<72x128xbf16>
    %c4_27 = arith.constant 4 : index
    %c0_28 = arith.constant 0 : index
    %c0_29 = arith.constant 0 : index
    %26 = vector.load %arg2[%c4_27, %c0_28, %c0_29] : memref<5x128x256xbf16, #tpu.memory_space<vmem>>, vector<1x128x256xbf16>
    %27 = vector.shape_cast %26 : vector<1x128x256xbf16> to vector<128x256xbf16>
    %cst_30 = arith.constant dense<0.000000e+00> : vector<72x256xf32>
    %28 = tpu.matmul %25, %27, %cst_30 {dimension_numbers = #tpu.dot_dimension_numbers<[1], [0], [0], [1], [0, 0, 1, 1], [], []>} : vector<72x128xbf16>, vector<128x256xbf16>, vector<72x256xf32> -> vector<72x256xf32>
    %29 = arith.addf %23, %28 : vector<72x256xf32>
    %c1_31 = arith.constant 1 : index
    %c0_32 = arith.constant 0 : index
    %c0_33 = arith.constant 0 : index
    %30 = vector.load %arg1[%c1_31, %c0_32, %c0_33] : memref<8x72x128xbf16, #tpu.memory_space<vmem>>, vector<1x72x128xbf16>
    %31 = vector.shape_cast %30 : vector<1x72x128xbf16> to vector<72x128xbf16>
    %c0_34 = arith.constant 0 : index
    %c0_35 = arith.constant 0 : index
    %c0_36 = arith.constant 0 : index
    %32 = vector.load %arg2[%c0_34, %c0_35, %c0_36] : memref<5x128x256xbf16, #tpu.memory_space<vmem>>, vector<1x128x256xbf16>
    %33 = vector.shape_cast %32 : vector<1x128x256xbf16> to vector<128x256xbf16>
    %cst_37 = arith.constant dense<0.000000e+00> : vector<72x256xf32>
    %34 = tpu.matmul %31, %33, %cst_37 {dimension_numbers = #tpu.dot_dimension_numbers<[1], [0], [0], [1], [0, 0, 1, 1], [], []>} : vector<72x128xbf16>, vector<128x256xbf16>, vector<72x256xf32> -> vector<72x256xf32>
    %c2_38 = arith.constant 2 : index
    %c0_39 = arith.constant 0 : index
    %c0_40 = arith.constant 0 : index
    %35 = vector.load %arg1[%c2_38, %c0_39, %c0_40] : memref<8x72x128xbf16, #tpu.memory_space<vmem>>, vector<1x72x128xbf16>
    %36 = vector.shape_cast %35 : vector<1x72x128xbf16> to vector<72x128xbf16>
    %c1_41 = arith.constant 1 : index
    %c0_42 = arith.constant 0 : index
    %c0_43 = arith.constant 0 : index
    %37 = vector.load %arg2[%c1_41, %c0_42, %c0_43] : memref<5x128x256xbf16, #tpu.memory_space<vmem>>, vector<1x128x256xbf16>
    %38 = vector.shape_cast %37 : vector<1x128x256xbf16> to vector<128x256xbf16>
    %cst_44 = arith.constant dense<0.000000e+00> : vector<72x256xf32>
    %39 = tpu.matmul %36, %38, %cst_44 {dimension_numbers = #tpu.dot_dimension_numbers<[1], [0], [0], [1], [0, 0, 1, 1], [], []>} : vector<72x128xbf16>, vector<128x256xbf16>, vector<72x256xf32> -> vector<72x256xf32>
    %40 = arith.addf %34, %39 : vector<72x256xf32>
    %c3_45 = arith.constant 3 : index
    %c0_46 = arith.constant 0 : index
    %c0_47 = arith.constant 0 : index
    %41 = vector.load %arg1[%c3_45, %c0_46, %c0_47] : memref<8x72x128xbf16, #tpu.memory_space<vmem>>, vector<1x72x128xbf16>
    %42 = vector.shape_cast %41 : vector<1x72x128xbf16> to vector<72x128xbf16>
    %c2_48 = arith.constant 2 : index
    %c0_49 = arith.constant 0 : index
    %c0_50 = arith.constant 0 : index
    %43 = vector.load %arg2[%c2_48, %c0_49, %c0_50] : memref<5x128x256xbf16, #tpu.memory_space<vmem>>, vector<1x128x256xbf16>
    %44 = vector.shape_cast %43 : vector<1x128x256xbf16> to vector<128x256xbf16>
    %cst_51 = arith.constant dense<0.000000e+00> : vector<72x256xf32>
    %45 = tpu.matmul %42, %44, %cst_51 {dimension_numbers = #tpu.dot_dimension_numbers<[1], [0], [0], [1], [0, 0, 1, 1], [], []>} : vector<72x128xbf16>, vector<128x256xbf16>, vector<72x256xf32> -> vector<72x256xf32>
    %46 = arith.addf %40, %45 : vector<72x256xf32>
    %c4_52 = arith.constant 4 : index
    %c0_53 = arith.constant 0 : index
    %c0_54 = arith.constant 0 : index
    %47 = vector.load %arg1[%c4_52, %c0_53, %c0_54] : memref<8x72x128xbf16, #tpu.memory_space<vmem>>, vector<1x72x128xbf16>
    %48 = vector.shape_cast %47 : vector<1x72x128xbf16> to vector<72x128xbf16>
    %c3_55 = arith.constant 3 : index
    %c0_56 = arith.constant 0 : index
    %c0_57 = arith.constant 0 : index
    %49 = vector.load %arg2[%c3_55, %c0_56, %c0_57] : memref<5x128x256xbf16, #tpu.memory_space<vmem>>, vector<1x128x256xbf16>
    %50 = vector.shape_cast %49 : vector<1x128x256xbf16> to vector<128x256xbf16>
    %cst_58 = arith.constant dense<0.000000e+00> : vector<72x256xf32>
    %51 = tpu.matmul %48, %50, %cst_58 {dimension_numbers = #tpu.dot_dimension_numbers<[1], [0], [0], [1], [0, 0, 1, 1], [], []>} : vector<72x128xbf16>, vector<128x256xbf16>, vector<72x256xf32> -> vector<72x256xf32>
    %52 = arith.addf %46, %51 : vector<72x256xf32>
    %c5 = arith.constant 5 : index
    %c0_59 = arith.constant 0 : index
    %c0_60 = arith.constant 0 : index
    %53 = vector.load %arg1[%c5, %c0_59, %c0_60] : memref<8x72x128xbf16, #tpu.memory_space<vmem>>, vector<1x72x128xbf16>
    %54 = vector.shape_cast %53 : vector<1x72x128xbf16> to vector<72x128xbf16>
    %c4_61 = arith.constant 4 : index
    %c0_62 = arith.constant 0 : index
    %c0_63 = arith.constant 0 : index
    %55 = vector.load %arg2[%c4_61, %c0_62, %c0_63] : memref<5x128x256xbf16, #tpu.memory_space<vmem>>, vector<1x128x256xbf16>
    %56 = vector.shape_cast %55 : vector<1x128x256xbf16> to vector<128x256xbf16>
    %cst_64 = arith.constant dense<0.000000e+00> : vector<72x256xf32>
    %57 = tpu.matmul %54, %56, %cst_64 {dimension_numbers = #tpu.dot_dimension_numbers<[1], [0], [0], [1], [0, 0, 1, 1], [], []>} : vector<72x128xbf16>, vector<128x256xbf16>, vector<72x256xf32> -> vector<72x256xf32>
    %58 = arith.addf %52, %57 : vector<72x256xf32>
    %59 = arith.maximumf %29, %58 : vector<72x256xf32>
    %60 = vector.extract_strided_slice %59 {offsets = [0, 0], sizes = [72, 128], strides = [1, 1]} : vector<72x256xf32> to vector<72x128xf32>
    %61 = vector.extract_strided_slice %59 {offsets = [0, 128], sizes = [72, 128], strides = [1, 1]} : vector<72x256xf32> to vector<72x128xf32>
    %62 = arith.maximumf %60, %61 : vector<72x128xf32>
    %63 = vector.broadcast %0 : vector<1x128xf32> to vector<72x128xf32>
    %64 = arith.addf %62, %63 : vector<72x128xf32>
    %cst_65 = arith.constant 0.000000e+00 : f32
    %65 = vector.broadcast %cst_65 : f32 to vector<72x128xf32>
    %66 = arith.maximumf %64, %65 : vector<72x128xf32>
    %c2_66 = arith.constant 2 : index
    %c0_67 = arith.constant 0 : index
    %c0_68 = arith.constant 0 : index
    %67 = vector.load %arg1[%c2_66, %c0_67, %c0_68] : memref<8x72x128xbf16, #tpu.memory_space<vmem>>, vector<1x72x128xbf16>
    %68 = vector.shape_cast %67 : vector<1x72x128xbf16> to vector<72x128xbf16>
    %c0_69 = arith.constant 0 : index
    %c0_70 = arith.constant 0 : index
    %c0_71 = arith.constant 0 : index
    %69 = vector.load %arg2[%c0_69, %c0_70, %c0_71] : memref<5x128x256xbf16, #tpu.memory_space<vmem>>, vector<1x128x256xbf16>
    %70 = vector.shape_cast %69 : vector<1x128x256xbf16> to vector<128x256xbf16>
    %cst_72 = arith.constant dense<0.000000e+00> : vector<72x256xf32>
    %71 = tpu.matmul %68, %70, %cst_72 {dimension_numbers = #tpu.dot_dimension_numbers<[1], [0], [0], [1], [0, 0, 1, 1], [], []>} : vector<72x128xbf16>, vector<128x256xbf16>, vector<72x256xf32> -> vector<72x256xf32>
    %c3_73 = arith.constant 3 : index
    %c0_74 = arith.constant 0 : index
    %c0_75 = arith.constant 0 : index
    %72 = vector.load %arg1[%c3_73, %c0_74, %c0_75] : memref<8x72x128xbf16, #tpu.memory_space<vmem>>, vector<1x72x128xbf16>
    %73 = vector.shape_cast %72 : vector<1x72x128xbf16> to vector<72x128xbf16>
    %c1_76 = arith.constant 1 : index
    %c0_77 = arith.constant 0 : index
    %c0_78 = arith.constant 0 : index
    %74 = vector.load %arg2[%c1_76, %c0_77, %c0_78] : memref<5x128x256xbf16, #tpu.memory_space<vmem>>, vector<1x128x256xbf16>
    %75 = vector.shape_cast %74 : vector<1x128x256xbf16> to vector<128x256xbf16>
    %cst_79 = arith.constant dense<0.000000e+00> : vector<72x256xf32>
    %76 = tpu.matmul %73, %75, %cst_79 {dimension_numbers = #tpu.dot_dimension_numbers<[1], [0], [0], [1], [0, 0, 1, 1], [], []>} : vector<72x128xbf16>, vector<128x256xbf16>, vector<72x256xf32> -> vector<72x256xf32>
    %77 = arith.addf %71, %76 : vector<72x256xf32>
    %c4_80 = arith.constant 4 : index
    %c0_81 = arith.constant 0 : index
    %c0_82 = arith.constant 0 : index
    %78 = vector.load %arg1[%c4_80, %c0_81, %c0_82] : memref<8x72x128xbf16, #tpu.memory_space<vmem>>, vector<1x72x128xbf16>
    %79 = vector.shape_cast %78 : vector<1x72x128xbf16> to vector<72x128xbf16>
    %c2_83 = arith.constant 2 : index
    %c0_84 = arith.constant 0 : index
    %c0_85 = arith.constant 0 : index
    %80 = vector.load %arg2[%c2_83, %c0_84, %c0_85] : memref<5x128x256xbf16, #tpu.memory_space<vmem>>, vector<1x128x256xbf16>
    %81 = vector.shape_cast %80 : vector<1x128x256xbf16> to vector<128x256xbf16>
    %cst_86 = arith.constant dense<0.000000e+00> : vector<72x256xf32>
    %82 = tpu.matmul %79, %81, %cst_86 {dimension_numbers = #tpu.dot_dimension_numbers<[1], [0], [0], [1], [0, 0, 1, 1], [], []>} : vector<72x128xbf16>, vector<128x256xbf16>, vector<72x256xf32> -> vector<72x256xf32>
    %83 = arith.addf %77, %82 : vector<72x256xf32>
    %c5_87 = arith.constant 5 : index
    %c0_88 = arith.constant 0 : index
    %c0_89 = arith.constant 0 : index
    %84 = vector.load %arg1[%c5_87, %c0_88, %c0_89] : memref<8x72x128xbf16, #tpu.memory_space<vmem>>, vector<1x72x128xbf16>
    %85 = vector.shape_cast %84 : vector<1x72x128xbf16> to vector<72x128xbf16>
    %c3_90 = arith.constant 3 : index
    %c0_91 = arith.constant 0 : index
    %c0_92 = arith.constant 0 : index
    %86 = vector.load %arg2[%c3_90, %c0_91, %c0_92] : memref<5x128x256xbf16, #tpu.memory_space<vmem>>, vector<1x128x256xbf16>
    %87 = vector.shape_cast %86 : vector<1x128x256xbf16> to vector<128x256xbf16>
    %cst_93 = arith.constant dense<0.000000e+00> : vector<72x256xf32>
    %88 = tpu.matmul %85, %87, %cst_93 {dimension_numbers = #tpu.dot_dimension_numbers<[1], [0], [0], [1], [0, 0, 1, 1], [], []>} : vector<72x128xbf16>, vector<128x256xbf16>, vector<72x256xf32> -> vector<72x256xf32>
    %89 = arith.addf %83, %88 : vector<72x256xf32>
    %c6 = arith.constant 6 : index
    %c0_94 = arith.constant 0 : index
    %c0_95 = arith.constant 0 : index
    %90 = vector.load %arg1[%c6, %c0_94, %c0_95] : memref<8x72x128xbf16, #tpu.memory_space<vmem>>, vector<1x72x128xbf16>
    %91 = vector.shape_cast %90 : vector<1x72x128xbf16> to vector<72x128xbf16>
    %c4_96 = arith.constant 4 : index
    %c0_97 = arith.constant 0 : index
    %c0_98 = arith.constant 0 : index
    %92 = vector.load %arg2[%c4_96, %c0_97, %c0_98] : memref<5x128x256xbf16, #tpu.memory_space<vmem>>, vector<1x128x256xbf16>
    %93 = vector.shape_cast %92 : vector<1x128x256xbf16> to vector<128x256xbf16>
    %cst_99 = arith.constant dense<0.000000e+00> : vector<72x256xf32>
    %94 = tpu.matmul %91, %93, %cst_99 {dimension_numbers = #tpu.dot_dimension_numbers<[1], [0], [0], [1], [0, 0, 1, 1], [], []>} : vector<72x128xbf16>, vector<128x256xbf16>, vector<72x256xf32> -> vector<72x256xf32>
    %95 = arith.addf %89, %94 : vector<72x256xf32>
    %c3_100 = arith.constant 3 : index
    %c0_101 = arith.constant 0 : index
    %c0_102 = arith.constant 0 : index
    %96 = vector.load %arg1[%c3_100, %c0_101, %c0_102] : memref<8x72x128xbf16, #tpu.memory_space<vmem>>, vector<1x72x128xbf16>
    %97 = vector.shape_cast %96 : vector<1x72x128xbf16> to vector<72x128xbf16>
    %c0_103 = arith.constant 0 : index
    %c0_104 = arith.constant 0 : index
    %c0_105 = arith.constant 0 : index
    %98 = vector.load %arg2[%c0_103, %c0_104, %c0_105] : memref<5x128x256xbf16, #tpu.memory_space<vmem>>, vector<1x128x256xbf16>
    %99 = vector.shape_cast %98 : vector<1x128x256xbf16> to vector<128x256xbf16>
    %cst_106 = arith.constant dense<0.000000e+00> : vector<72x256xf32>
    %100 = tpu.matmul %97, %99, %cst_106 {dimension_numbers = #tpu.dot_dimension_numbers<[1], [0], [0], [1], [0, 0, 1, 1], [], []>} : vector<72x128xbf16>, vector<128x256xbf16>, vector<72x256xf32> -> vector<72x256xf32>
    %c4_107 = arith.constant 4 : index
    %c0_108 = arith.constant 0 : index
    %c0_109 = arith.constant 0 : index
    %101 = vector.load %arg1[%c4_107, %c0_108, %c0_109] : memref<8x72x128xbf16, #tpu.memory_space<vmem>>, vector<1x72x128xbf16>
    %102 = vector.shape_cast %101 : vector<1x72x128xbf16> to vector<72x128xbf16>
    %c1_110 = arith.constant 1 : index
    %c0_111 = arith.constant 0 : index
    %c0_112 = arith.constant 0 : index
    %103 = vector.load %arg2[%c1_110, %c0_111, %c0_112] : memref<5x128x256xbf16, #tpu.memory_space<vmem>>, vector<1x128x256xbf16>
    %104 = vector.shape_cast %103 : vector<1x128x256xbf16> to vector<128x256xbf16>
    %cst_113 = arith.constant dense<0.000000e+00> : vector<72x256xf32>
    %105 = tpu.matmul %102, %104, %cst_113 {dimension_numbers = #tpu.dot_dimension_numbers<[1], [0], [0], [1], [0, 0, 1, 1], [], []>} : vector<72x128xbf16>, vector<128x256xbf16>, vector<72x256xf32> -> vector<72x256xf32>
    %106 = arith.addf %100, %105 : vector<72x256xf32>
    %c5_114 = arith.constant 5 : index
    %c0_115 = arith.constant 0 : index
    %c0_116 = arith.constant 0 : index
    %107 = vector.load %arg1[%c5_114, %c0_115, %c0_116] : memref<8x72x128xbf16, #tpu.memory_space<vmem>>, vector<1x72x128xbf16>
    %108 = vector.shape_cast %107 : vector<1x72x128xbf16> to vector<72x128xbf16>
    %c2_117 = arith.constant 2 : index
    %c0_118 = arith.constant 0 : index
    %c0_119 = arith.constant 0 : index
    %109 = vector.load %arg2[%c2_117, %c0_118, %c0_119] : memref<5x128x256xbf16, #tpu.memory_space<vmem>>, vector<1x128x256xbf16>
    %110 = vector.shape_cast %109 : vector<1x128x256xbf16> to vector<128x256xbf16>
    %cst_120 = arith.constant dense<0.000000e+00> : vector<72x256xf32>
    %111 = tpu.matmul %108, %110, %cst_120 {dimension_numbers = #tpu.dot_dimension_numbers<[1], [0], [0], [1], [0, 0, 1, 1], [], []>} : vector<72x128xbf16>, vector<128x256xbf16>, vector<72x256xf32> -> vector<72x256xf32>
    %112 = arith.addf %106, %111 : vector<72x256xf32>
    %c6_121 = arith.constant 6 : index
    %c0_122 = arith.constant 0 : index
    %c0_123 = arith.constant 0 : index
    %113 = vector.load %arg1[%c6_121, %c0_122, %c0_123] : memref<8x72x128xbf16, #tpu.memory_space<vmem>>, vector<1x72x128xbf16>
    %114 = vector.shape_cast %113 : vector<1x72x128xbf16> to vector<72x128xbf16>
    %c3_124 = arith.constant 3 : index
    %c0_125 = arith.constant 0 : index
    %c0_126 = arith.constant 0 : index
    %115 = vector.load %arg2[%c3_124, %c0_125, %c0_126] : memref<5x128x256xbf16, #tpu.memory_space<vmem>>, vector<1x128x256xbf16>
    %116 = vector.shape_cast %115 : vector<1x128x256xbf16> to vector<128x256xbf16>
    %cst_127 = arith.constant dense<0.000000e+00> : vector<72x256xf32>
    %117 = tpu.matmul %114, %116, %cst_127 {dimension_numbers = #tpu.dot_dimension_numbers<[1], [0], [0], [1], [0, 0, 1, 1], [], []>} : vector<72x128xbf16>, vector<128x256xbf16>, vector<72x256xf32> -> vector<72x256xf32>
    %118 = arith.addf %112, %117 : vector<72x256xf32>
    %c7 = arith.constant 7 : index
    %c0_128 = arith.constant 0 : index
    %c0_129 = arith.constant 0 : index
    %119 = vector.load %arg1[%c7, %c0_128, %c0_129] : memref<8x72x128xbf16, #tpu.memory_space<vmem>>, vector<1x72x128xbf16>
    %120 = vector.shape_cast %119 : vector<1x72x128xbf16> to vector<72x128xbf16>
    %c4_130 = arith.constant 4 : index
    %c0_131 = arith.constant 0 : index
    %c0_132 = arith.constant 0 : index
    %121 = vector.load %arg2[%c4_130, %c0_131, %c0_132] : memref<5x128x256xbf16, #tpu.memory_space<vmem>>, vector<1x128x256xbf16>
    %122 = vector.shape_cast %121 : vector<1x128x256xbf16> to vector<128x256xbf16>
    %cst_133 = arith.constant dense<0.000000e+00> : vector<72x256xf32>
    %123 = tpu.matmul %120, %122, %cst_133 {dimension_numbers = #tpu.dot_dimension_numbers<[1], [0], [0], [1], [0, 0, 1, 1], [], []>} : vector<72x128xbf16>, vector<128x256xbf16>, vector<72x256xf32> -> vector<72x256xf32>
    %124 = arith.addf %118, %123 : vector<72x256xf32>
    %125 = arith.maximumf %95, %124 : vector<72x256xf32>
    %126 = vector.extract_strided_slice %125 {offsets = [0, 0], sizes = [72, 128], strides = [1, 1]} : vector<72x256xf32> to vector<72x128xf32>
    %127 = vector.extract_strided_slice %125 {offsets = [0, 128], sizes = [72, 128], strides = [1, 1]} : vector<72x256xf32> to vector<72x128xf32>
    %128 = arith.maximumf %126, %127 : vector<72x128xf32>
    %129 = vector.broadcast %0 : vector<1x128xf32> to vector<72x128xf32>
    %130 = arith.addf %128, %129 : vector<72x128xf32>
    %cst_134 = arith.constant 0.000000e+00 : f32
    %131 = vector.broadcast %cst_134 : f32 to vector<72x128xf32>
    %132 = arith.maximumf %130, %131 : vector<72x128xf32>
    %133 = vector.extract_strided_slice %66 {offsets = [0, 0], sizes = [68, 128], strides = [1, 1]} : vector<72x128xf32> to vector<68x128xf32>
    %134 = arith.truncf %133 : vector<68x128xf32> to vector<68x128xbf16>
    %135 = vector.extract_strided_slice %132 {offsets = [0, 0], sizes = [68, 128], strides = [1, 1]} : vector<72x128xf32> to vector<68x128xf32>
    %136 = arith.truncf %135 : vector<68x128xf32> to vector<68x128xbf16>
    %137 = vector.extract_strided_slice %66 {offsets = [1, 0], sizes = [68, 128], strides = [1, 1]} : vector<72x128xf32> to vector<68x128xf32>
    %138 = arith.truncf %137 : vector<68x128xf32> to vector<68x128xbf16>
    %139 = vector.extract_strided_slice %132 {offsets = [1, 0], sizes = [68, 128], strides = [1, 1]} : vector<72x128xf32> to vector<68x128xf32>
    %140 = arith.truncf %139 : vector<68x128xf32> to vector<68x128xbf16>
    %141 = vector.extract_strided_slice %66 {offsets = [2, 0], sizes = [68, 128], strides = [1, 1]} : vector<72x128xf32> to vector<68x128xf32>
    %142 = arith.truncf %141 : vector<68x128xf32> to vector<68x128xbf16>
    %143 = vector.extract_strided_slice %132 {offsets = [2, 0], sizes = [68, 128], strides = [1, 1]} : vector<72x128xf32> to vector<68x128xf32>
    %144 = arith.truncf %143 : vector<68x128xf32> to vector<68x128xbf16>
    %c0_135 = arith.constant 0 : index
    %c0_136 = arith.constant 0 : index
    %c0_137 = arith.constant 0 : index
    %145 = vector.load %arg4[%c0_135, %c0_136, %c0_137] : memref<5x128x256xbf16, #tpu.memory_space<vmem>>, vector<1x128x256xbf16>
    %146 = vector.shape_cast %145 : vector<1x128x256xbf16> to vector<128x256xbf16>
    %cst_138 = arith.constant dense<0.000000e+00> : vector<68x256xf32>
    %147 = tpu.matmul %134, %146, %cst_138 {dimension_numbers = #tpu.dot_dimension_numbers<[1], [0], [0], [1], [0, 0, 1, 1], [], []>} : vector<68x128xbf16>, vector<128x256xbf16>, vector<68x256xf32> -> vector<68x256xf32>
    %c1_139 = arith.constant 1 : index
    %c0_140 = arith.constant 0 : index
    %c0_141 = arith.constant 0 : index
    %148 = vector.load %arg4[%c1_139, %c0_140, %c0_141] : memref<5x128x256xbf16, #tpu.memory_space<vmem>>, vector<1x128x256xbf16>
    %149 = vector.shape_cast %148 : vector<1x128x256xbf16> to vector<128x256xbf16>
    %cst_142 = arith.constant dense<0.000000e+00> : vector<68x256xf32>
    %150 = tpu.matmul %136, %149, %cst_142 {dimension_numbers = #tpu.dot_dimension_numbers<[1], [0], [0], [1], [0, 0, 1, 1], [], []>} : vector<68x128xbf16>, vector<128x256xbf16>, vector<68x256xf32> -> vector<68x256xf32>
    %151 = arith.addf %147, %150 : vector<68x256xf32>
    %c2_143 = arith.constant 2 : index
    %c0_144 = arith.constant 0 : index
    %c0_145 = arith.constant 0 : index
    %152 = vector.load %arg4[%c2_143, %c0_144, %c0_145] : memref<5x128x256xbf16, #tpu.memory_space<vmem>>, vector<1x128x256xbf16>
    %153 = vector.shape_cast %152 : vector<1x128x256xbf16> to vector<128x256xbf16>
    %cst_146 = arith.constant dense<0.000000e+00> : vector<68x256xf32>
    %154 = tpu.matmul %138, %153, %cst_146 {dimension_numbers = #tpu.dot_dimension_numbers<[1], [0], [0], [1], [0, 0, 1, 1], [], []>} : vector<68x128xbf16>, vector<128x256xbf16>, vector<68x256xf32> -> vector<68x256xf32>
    %155 = arith.addf %151, %154 : vector<68x256xf32>
    %c3_147 = arith.constant 3 : index
    %c0_148 = arith.constant 0 : index
    %c0_149 = arith.constant 0 : index
    %156 = vector.load %arg4[%c3_147, %c0_148, %c0_149] : memref<5x128x256xbf16, #tpu.memory_space<vmem>>, vector<1x128x256xbf16>
    %157 = vector.shape_cast %156 : vector<1x128x256xbf16> to vector<128x256xbf16>
    %cst_150 = arith.constant dense<0.000000e+00> : vector<68x256xf32>
    %158 = tpu.matmul %140, %157, %cst_150 {dimension_numbers = #tpu.dot_dimension_numbers<[1], [0], [0], [1], [0, 0, 1, 1], [], []>} : vector<68x128xbf16>, vector<128x256xbf16>, vector<68x256xf32> -> vector<68x256xf32>
    %159 = arith.addf %155, %158 : vector<68x256xf32>
    %c4_151 = arith.constant 4 : index
    %c0_152 = arith.constant 0 : index
    %c0_153 = arith.constant 0 : index
    %160 = vector.load %arg4[%c4_151, %c0_152, %c0_153] : memref<5x128x256xbf16, #tpu.memory_space<vmem>>, vector<1x128x256xbf16>
    %161 = vector.shape_cast %160 : vector<1x128x256xbf16> to vector<128x256xbf16>
    %cst_154 = arith.constant dense<0.000000e+00> : vector<68x256xf32>
    %162 = tpu.matmul %142, %161, %cst_154 {dimension_numbers = #tpu.dot_dimension_numbers<[1], [0], [0], [1], [0, 0, 1, 1], [], []>} : vector<68x128xbf16>, vector<128x256xbf16>, vector<68x256xf32> -> vector<68x256xf32>
    %163 = arith.addf %159, %162 : vector<68x256xf32>
    %c0_155 = arith.constant 0 : index
    %c0_156 = arith.constant 0 : index
    %c0_157 = arith.constant 0 : index
    %164 = vector.load %arg4[%c0_155, %c0_156, %c0_157] : memref<5x128x256xbf16, #tpu.memory_space<vmem>>, vector<1x128x256xbf16>
    %165 = vector.shape_cast %164 : vector<1x128x256xbf16> to vector<128x256xbf16>
    %cst_158 = arith.constant dense<0.000000e+00> : vector<68x256xf32>
    %166 = tpu.matmul %136, %165, %cst_158 {dimension_numbers = #tpu.dot_dimension_numbers<[1], [0], [0], [1], [0, 0, 1, 1], [], []>} : vector<68x128xbf16>, vector<128x256xbf16>, vector<68x256xf32> -> vector<68x256xf32>
    %c1_159 = arith.constant 1 : index
    %c0_160 = arith.constant 0 : index
    %c0_161 = arith.constant 0 : index
    %167 = vector.load %arg4[%c1_159, %c0_160, %c0_161] : memref<5x128x256xbf16, #tpu.memory_space<vmem>>, vector<1x128x256xbf16>
    %168 = vector.shape_cast %167 : vector<1x128x256xbf16> to vector<128x256xbf16>
    %cst_162 = arith.constant dense<0.000000e+00> : vector<68x256xf32>
    %169 = tpu.matmul %138, %168, %cst_162 {dimension_numbers = #tpu.dot_dimension_numbers<[1], [0], [0], [1], [0, 0, 1, 1], [], []>} : vector<68x128xbf16>, vector<128x256xbf16>, vector<68x256xf32> -> vector<68x256xf32>
    %170 = arith.addf %166, %169 : vector<68x256xf32>
    %c2_163 = arith.constant 2 : index
    %c0_164 = arith.constant 0 : index
    %c0_165 = arith.constant 0 : index
    %171 = vector.load %arg4[%c2_163, %c0_164, %c0_165] : memref<5x128x256xbf16, #tpu.memory_space<vmem>>, vector<1x128x256xbf16>
    %172 = vector.shape_cast %171 : vector<1x128x256xbf16> to vector<128x256xbf16>
    %cst_166 = arith.constant dense<0.000000e+00> : vector<68x256xf32>
    %173 = tpu.matmul %140, %172, %cst_166 {dimension_numbers = #tpu.dot_dimension_numbers<[1], [0], [0], [1], [0, 0, 1, 1], [], []>} : vector<68x128xbf16>, vector<128x256xbf16>, vector<68x256xf32> -> vector<68x256xf32>
    %174 = arith.addf %170, %173 : vector<68x256xf32>
    %c3_167 = arith.constant 3 : index
    %c0_168 = arith.constant 0 : index
    %c0_169 = arith.constant 0 : index
    %175 = vector.load %arg4[%c3_167, %c0_168, %c0_169] : memref<5x128x256xbf16, #tpu.memory_space<vmem>>, vector<1x128x256xbf16>
    %176 = vector.shape_cast %175 : vector<1x128x256xbf16> to vector<128x256xbf16>
    %cst_170 = arith.constant dense<0.000000e+00> : vector<68x256xf32>
    %177 = tpu.matmul %142, %176, %cst_170 {dimension_numbers = #tpu.dot_dimension_numbers<[1], [0], [0], [1], [0, 0, 1, 1], [], []>} : vector<68x128xbf16>, vector<128x256xbf16>, vector<68x256xf32> -> vector<68x256xf32>
    %178 = arith.addf %174, %177 : vector<68x256xf32>
    %c4_171 = arith.constant 4 : index
    %c0_172 = arith.constant 0 : index
    %c0_173 = arith.constant 0 : index
    %179 = vector.load %arg4[%c4_171, %c0_172, %c0_173] : memref<5x128x256xbf16, #tpu.memory_space<vmem>>, vector<1x128x256xbf16>
    %180 = vector.shape_cast %179 : vector<1x128x256xbf16> to vector<128x256xbf16>
    %cst_174 = arith.constant dense<0.000000e+00> : vector<68x256xf32>
    %181 = tpu.matmul %144, %180, %cst_174 {dimension_numbers = #tpu.dot_dimension_numbers<[1], [0], [0], [1], [0, 0, 1, 1], [], []>} : vector<68x128xbf16>, vector<128x256xbf16>, vector<68x256xf32> -> vector<68x256xf32>
    %182 = arith.addf %178, %181 : vector<68x256xf32>
    %183 = arith.maximumf %163, %182 : vector<68x256xf32>
    %184 = vector.extract_strided_slice %183 {offsets = [0, 0], sizes = [68, 128], strides = [1, 1]} : vector<68x256xf32> to vector<68x128xf32>
    %185 = vector.extract_strided_slice %183 {offsets = [0, 128], sizes = [68, 128], strides = [1, 1]} : vector<68x256xf32> to vector<68x128xf32>
    %186 = arith.maximumf %184, %185 : vector<68x128xf32>
    %c0_175 = arith.constant 0 : index
    %c0_176 = arith.constant 0 : index
    %187 = vector.load %arg5[%c0_175, %c0_176] : memref<1x128xf32, #tpu.memory_space<vmem>>, vector<1x128xf32>
    %188 = vector.broadcast %187 : vector<1x128xf32> to vector<68x128xf32>
    %189 = arith.addf %186, %188 : vector<68x128xf32>
    %cst_177 = arith.constant 0.000000e+00 : f32
    %190 = vector.broadcast %cst_177 : f32 to vector<68x128xf32>
    %191 = arith.maximumf %189, %190 : vector<68x128xf32>
    %192 = vector.extract_strided_slice %191 {offsets = [0, 0], sizes = [64, 128], strides = [1, 1]} : vector<68x128xf32> to vector<64x128xf32>
    %193 = arith.truncf %192 : vector<64x128xf32> to vector<64x128xbf16>
    %c0_178 = arith.constant 0 : index
    %c0_179 = arith.constant 0 : index
    %c0_180 = arith.constant 0 : index
    %194 = vector.load %arg6[%c0_178, %c0_179, %c0_180] : memref<5x128x128xbf16, #tpu.memory_space<vmem>>, vector<1x128x128xbf16>
    %195 = vector.shape_cast %194 : vector<1x128x128xbf16> to vector<128x128xbf16>
    %cst_181 = arith.constant dense<0.000000e+00> : vector<64x128xf32>
    %196 = tpu.matmul %193, %195, %cst_181 {dimension_numbers = #tpu.dot_dimension_numbers<[1], [0], [0], [1], [0, 0, 1, 1], [], []>} : vector<64x128xbf16>, vector<128x128xbf16>, vector<64x128xf32> -> vector<64x128xf32>
    %197 = vector.extract_strided_slice %191 {offsets = [1, 0], sizes = [64, 128], strides = [1, 1]} : vector<68x128xf32> to vector<64x128xf32>
    %198 = arith.truncf %197 : vector<64x128xf32> to vector<64x128xbf16>
    %c1_182 = arith.constant 1 : index
    %c0_183 = arith.constant 0 : index
    %c0_184 = arith.constant 0 : index
    %199 = vector.load %arg6[%c1_182, %c0_183, %c0_184] : memref<5x128x128xbf16, #tpu.memory_space<vmem>>, vector<1x128x128xbf16>
    %200 = vector.shape_cast %199 : vector<1x128x128xbf16> to vector<128x128xbf16>
    %cst_185 = arith.constant dense<0.000000e+00> : vector<64x128xf32>
    %201 = tpu.matmul %198, %200, %cst_185 {dimension_numbers = #tpu.dot_dimension_numbers<[1], [0], [0], [1], [0, 0, 1, 1], [], []>} : vector<64x128xbf16>, vector<128x128xbf16>, vector<64x128xf32> -> vector<64x128xf32>
    %202 = arith.addf %196, %201 : vector<64x128xf32>
    %203 = vector.extract_strided_slice %191 {offsets = [2, 0], sizes = [64, 128], strides = [1, 1]} : vector<68x128xf32> to vector<64x128xf32>
    %204 = arith.truncf %203 : vector<64x128xf32> to vector<64x128xbf16>
    %c2_186 = arith.constant 2 : index
    %c0_187 = arith.constant 0 : index
    %c0_188 = arith.constant 0 : index
    %205 = vector.load %arg6[%c2_186, %c0_187, %c0_188] : memref<5x128x128xbf16, #tpu.memory_space<vmem>>, vector<1x128x128xbf16>
    %206 = vector.shape_cast %205 : vector<1x128x128xbf16> to vector<128x128xbf16>
    %cst_189 = arith.constant dense<0.000000e+00> : vector<64x128xf32>
    %207 = tpu.matmul %204, %206, %cst_189 {dimension_numbers = #tpu.dot_dimension_numbers<[1], [0], [0], [1], [0, 0, 1, 1], [], []>} : vector<64x128xbf16>, vector<128x128xbf16>, vector<64x128xf32> -> vector<64x128xf32>
    %208 = arith.addf %202, %207 : vector<64x128xf32>
    %209 = vector.extract_strided_slice %191 {offsets = [3, 0], sizes = [64, 128], strides = [1, 1]} : vector<68x128xf32> to vector<64x128xf32>
    %210 = arith.truncf %209 : vector<64x128xf32> to vector<64x128xbf16>
    %c3_190 = arith.constant 3 : index
    %c0_191 = arith.constant 0 : index
    %c0_192 = arith.constant 0 : index
    %211 = vector.load %arg6[%c3_190, %c0_191, %c0_192] : memref<5x128x128xbf16, #tpu.memory_space<vmem>>, vector<1x128x128xbf16>
    %212 = vector.shape_cast %211 : vector<1x128x128xbf16> to vector<128x128xbf16>
    %cst_193 = arith.constant dense<0.000000e+00> : vector<64x128xf32>
    %213 = tpu.matmul %210, %212, %cst_193 {dimension_numbers = #tpu.dot_dimension_numbers<[1], [0], [0], [1], [0, 0, 1, 1], [], []>} : vector<64x128xbf16>, vector<128x128xbf16>, vector<64x128xf32> -> vector<64x128xf32>
    %214 = arith.addf %208, %213 : vector<64x128xf32>
    %215 = vector.extract_strided_slice %191 {offsets = [4, 0], sizes = [64, 128], strides = [1, 1]} : vector<68x128xf32> to vector<64x128xf32>
    %216 = arith.truncf %215 : vector<64x128xf32> to vector<64x128xbf16>
    %c4_194 = arith.constant 4 : index
    %c0_195 = arith.constant 0 : index
    %c0_196 = arith.constant 0 : index
    %217 = vector.load %arg6[%c4_194, %c0_195, %c0_196] : memref<5x128x128xbf16, #tpu.memory_space<vmem>>, vector<1x128x128xbf16>
    %218 = vector.shape_cast %217 : vector<1x128x128xbf16> to vector<128x128xbf16>
    %cst_197 = arith.constant dense<0.000000e+00> : vector<64x128xf32>
    %219 = tpu.matmul %216, %218, %cst_197 {dimension_numbers = #tpu.dot_dimension_numbers<[1], [0], [0], [1], [0, 0, 1, 1], [], []>} : vector<64x128xbf16>, vector<128x128xbf16>, vector<64x128xf32> -> vector<64x128xf32>
    %220 = arith.addf %214, %219 : vector<64x128xf32>
    %c0_198 = arith.constant 0 : index
    %c0_199 = arith.constant 0 : index
    %221 = vector.load %arg7[%c0_198, %c0_199] : memref<1x128xf32, #tpu.memory_space<vmem>>, vector<1x128xf32>
    %222 = vector.broadcast %221 : vector<1x128xf32> to vector<64x128xf32>
    %223 = arith.addf %220, %222 : vector<64x128xf32>
    %cst_200 = arith.constant 0.000000e+00 : f32
    %224 = vector.broadcast %cst_200 : f32 to vector<64x128xf32>
    %225 = arith.maximumf %223, %224 : vector<64x128xf32>
    %226 = arith.truncf %225 : vector<64x128xf32> to vector<64x128xbf16>
    %c0_201 = arith.constant 0 : index
    %c0_202 = arith.constant 0 : index
    %227 = vector.load %arg8[%c0_201, %c0_202] : memref<128x128xbf16, #tpu.memory_space<vmem>>, vector<128x128xbf16>
    %cst_203 = arith.constant dense<0.000000e+00> : vector<64x128xf32>
    %228 = tpu.matmul %226, %227, %cst_203 {dimension_numbers = #tpu.dot_dimension_numbers<[1], [0], [0], [1], [0, 0, 1, 1], [], []>} : vector<64x128xbf16>, vector<128x128xbf16>, vector<64x128xf32> -> vector<64x128xf32>
    %c0_204 = arith.constant 0 : index
    %c0_205 = arith.constant 0 : index
    %229 = vector.load %arg9[%c0_204, %c0_205] : memref<1x128xf32, #tpu.memory_space<vmem>>, vector<1x128xf32>
    %230 = vector.broadcast %229 : vector<1x128xf32> to vector<64x128xf32>
    %231 = arith.addf %228, %230 : vector<64x128xf32>
    %cst_206 = arith.constant 0.000000e+00 : f32
    %232 = vector.broadcast %cst_206 : f32 to vector<64x128xf32>
    %233 = arith.maximumf %231, %232 : vector<64x128xf32>
    %234 = arith.truncf %233 : vector<64x128xf32> to vector<64x128xbf16>
    %c0_207 = arith.constant 0 : index
    %c0_208 = arith.constant 0 : index
    %235 = vector.load %arg10[%c0_207, %c0_208] : memref<128x128xbf16, #tpu.memory_space<vmem>>, vector<128x128xbf16>
    %cst_209 = arith.constant dense<0.000000e+00> : vector<64x128xf32>
    %236 = tpu.matmul %234, %235, %cst_209 {dimension_numbers = #tpu.dot_dimension_numbers<[1], [0], [0], [1], [0, 0, 1, 1], [], []>} : vector<64x128xbf16>, vector<128x128xbf16>, vector<64x128xf32> -> vector<64x128xf32>
    %c0_210 = arith.constant 0 : index
    %c0_211 = arith.constant 0 : index
    %237 = vector.load %arg11[%c0_210, %c0_211] : memref<1x128xf32, #tpu.memory_space<vmem>>, vector<1x128xf32>
    %238 = vector.broadcast %237 : vector<1x128xf32> to vector<64x128xf32>
    %239 = arith.addf %236, %238 : vector<64x128xf32>
    %c0_212 = arith.constant 0 : index
    %c0_213 = arith.constant 0 : index
    %240 = vector.load %arg12[%c0_212, %c0_213] : memref<64x128xf32, #tpu.memory_space<vmem>>, vector<64x128xf32>
    tpu.vector_store %arg12[%c0_212, %c0_213], %239 {strides = array<i32>} : memref<64x128xf32, #tpu.memory_space<vmem>>, vector<64x128xf32>,
    return
  }
  func.func @transform_0(%arg0: i32) -> (i32, i32, i32) {
    %c0_i32 = arith.constant 0 : i32
    %c0_i32_0 = arith.constant 0 : i32
    %c0_i32_1 = arith.constant 0 : i32
    return %c0_i32, %arg0, %c0_i32_0 : i32, i32, i32
  }
  func.func @transform_1(%arg0: i32) -> (i32, i32, i32) {
    %c0_i32 = arith.constant 0 : i32
    %c0_i32_0 = arith.constant 0 : i32
    %c0_i32_1 = arith.constant 0 : i32
    %c0_i32_2 = arith.constant 0 : i32
    return %c0_i32, %c0_i32_0, %c0_i32_1 : i32, i32, i32
  }
  func.func @transform_2(%arg0: i32) -> (i32, i32) {
    %c0_i32 = arith.constant 0 : i32
    %c0_i32_0 = arith.constant 0 : i32
    %c0_i32_1 = arith.constant 0 : i32
    return %c0_i32, %c0_i32_0 : i32, i32
  }
  func.func @transform_3(%arg0: i32) -> (i32, i32, i32) {
    %c0_i32 = arith.constant 0 : i32
    %c0_i32_0 = arith.constant 0 : i32
    %c0_i32_1 = arith.constant 0 : i32
    %c0_i32_2 = arith.constant 0 : i32
    return %c0_i32, %c0_i32_0, %c0_i32_1 : i32, i32, i32
  }
  func.func @transform_4(%arg0: i32) -> (i32, i32) {
    %c0_i32 = arith.constant 0 : i32
    %c0_i32_0 = arith.constant 0 : i32
    %c0_i32_1 = arith.constant 0 : i32
    return %c0_i32, %c0_i32_0 : i32, i32
  }
  func.func @transform_5(%arg0: i32) -> (i32, i32, i32) {
    %c0_i32 = arith.constant 0 : i32
    %c0_i32_0 = arith.constant 0 : i32
    %c0_i32_1 = arith.constant 0 : i32
    %c0_i32_2 = arith.constant 0 : i32
    return %c0_i32, %c0_i32_0, %c0_i32_1 : i32, i32, i32
  }
  func.func @transform_6(%arg0: i32) -> (i32, i32) {
    %c0_i32 = arith.constant 0 : i32
    %c0_i32_0 = arith.constant 0 : i32
    %c0_i32_1 = arith.constant 0 : i32
    return %c0_i32, %c0_i32_0 : i32, i32
  }
  func.func @transform_7(%arg0: i32) -> (i32, i32) {
    %c0_i32 = arith.constant 0 : i32
    %c0_i32_0 = arith.constant 0 : i32
    %c0_i32_1 = arith.constant 0 : i32
    return %c0_i32, %c0_i32_0 : i32, i32
  }
  func.func @transform_8(%arg0: i32) -> (i32, i32) {
    %c0_i32 = arith.constant 0 : i32
    %c0_i32_0 = arith.constant 0 : i32
    %c0_i32_1 = arith.constant 0 : i32
    return %c0_i32, %c0_i32_0 : i32, i32
  }
  func.func @transform_9(%arg0: i32) -> (i32, i32) {
    %c0_i32 = arith.constant 0 : i32
    %c0_i32_0 = arith.constant 0 : i32
    %c0_i32_1 = arith.constant 0 : i32
    return %c0_i32, %c0_i32_0 : i32, i32
  }
  func.func @transform_10(%arg0: i32) -> (i32, i32) {
    %c0_i32 = arith.constant 0 : i32
    %c0_i32_0 = arith.constant 0 : i32
    %c0_i32_1 = arith.constant 0 : i32
    return %c0_i32, %c0_i32_0 : i32, i32
  }
  func.func @transform_11(%arg0: i32) -> (i32, i32) {
    %c0_i32 = arith.constant 0 : i32
    %c0_i32_0 = arith.constant 0 : i32
    return %arg0, %c0_i32 : i32, i32
  }
}

</mosaic_0001>

<llo_original>
// kernel: net_forward.1
$region0: #{net_forward.1}
  #allocation0 [shape = 'u32[]', space=smem, size = 0x4, offset = 0x4, fixed_abs, tag = 'smem constant byte address 0x4 - core index']
  #allocation1 [shape = 'u32[144,128]{1,0:T(1,128)}', space=vmem, size = 0x12000, scoped, tag = 'internal scratch']
  %s0 = inlined_call_operand.vmem [shape: bf16[8,144,128], index: 0, kind: input, shape index: {}]
  %s1 = inlined_call_operand.vmem [shape: bf16[5,128,256], index: 1, kind: input, shape index: {}]
  %s2 = inlined_call_operand.vmem [shape: f32[1,128], index: 2, kind: input, shape index: {}]
  %s3 = inlined_call_operand.vmem [shape: bf16[5,128,256], index: 3, kind: input, shape index: {}]
  %s4 = inlined_call_operand.vmem [shape: f32[1,128], index: 4, kind: input, shape index: {}]
  %s5 = inlined_call_operand.vmem [shape: bf16[5,128,128], index: 5, kind: input, shape index: {}]
  %s6 = inlined_call_operand.vmem [shape: f32[1,128], index: 6, kind: input, shape index: {}]
  %s7 = inlined_call_operand.vmem [shape: bf16[128,128], index: 7, kind: input, shape index: {}]
  %s8 = inlined_call_operand.vmem [shape: f32[1,128], index: 8, kind: input, shape index: {}]
  %s9 = inlined_call_operand.vmem [shape: bf16[128,128], index: 9, kind: input, shape index: {}]
  %s10 = inlined_call_operand.vmem [shape: f32[1,128], index: 10, kind: input, shape index: {}]
  %s11 = inlined_call_operand.vmem [shape: f32[128,128], index: 11, kind: output, shape index: {}]
  %s12 = sld [smem:[#allocation0]]
  $region118: #{net_forward.1} parent=0
    _
  %s14 = ssub.s32 1, %s12
  %s15 = scalar_select 0, %s14, %s12
  $region1: #{net_forward.1} parent=0
    #allocation2 [shape = 'u8[294912]{0}', space=vmem, size = 0x48000, scoped, tag = 'input window, operand 0']
    loop: start=0, step=1, limit=4
    $region2: #{net_forward.1} parent=1 // loop_pre_header
      _
    $region3: #{net_forward.1} parent=1 // loop_header
      %s17 = sphi 0, %s21
      %p18 = scmp.ge.s32.totalorder %s17, 4
      %s27 = sphi 0, %s29
      %s30 = sphi 0, %s27
      %s31 = sphi 0, %s30
      %s47 = sphi 0, %s31
      %s51 = sphi 0, %s51
      %s53 = sphi 0, %s51
      %s54 = sphi 0, %s53
      %s68 = sphi 0, %s54
      %s72 = sphi 0, %s72
      %s74 = sphi 0, %s72
      %s75 = sphi 0, %s74
      %s89 = sphi 0, %s75
      %s93 = sphi 0, %s93
      %s95 = sphi 0, %s93
      %s96 = sphi 0, %s95
      %s110 = sphi 0, %s96
      %s114 = sphi 0, %s114
      %s116 = sphi 0, %s114
      %s117 = sphi 0, %s116
      %s131 = sphi 0, %s117
      %s135 = sphi 0, %s135
      %s137 = sphi 0, %s135
      %s138 = sphi 0, %s137
      %s152 = sphi 0, %s138
      %s156 = sphi 0, %s156
      %s158 = sphi 0, %s156
      %s159 = sphi 0, %s158
      %s173 = sphi 0, %s159
      %s177 = sphi 0, %s177
      %s179 = sphi 0, %s177
      %s180 = sphi 0, %s179
      %s194 = sphi 0, %s180
      %s198 = sphi 0, %s198
      %s200 = sphi 0, %s198
      %s201 = sphi 0, %s200
      %s215 = sphi 0, %s201
      %s219 = sphi 0, %s219
      %s221 = sphi 0, %s219
      %s222 = sphi 0, %s221
      %s236 = sphi 0, %s222
      %s240 = sphi 0, %s240
      %s242 = sphi 0, %s240
      %s243 = sphi 0, %s242
      %s257 = sphi 0, %s243
      %s263 = sphi 0, %s265
      %s266 = sphi 0, %s263
      %s267 = sphi 0, %s266
      %s283 = sphi 0, %s267
    $region4: #{net_forward.1} parent=1 // loop_header_branch
      %20 = sbr.rel (%p18) target = $region8
    $region5: #{net_forward.1} parent=1 // loop_body
      %s22 = ssub.s32 %s17, 1
      %s23 = ssub.s32 %s17, 2
      %s24 = sadd.s32 %s17, 1
      %s25 = ssub.s32 %s17, %s24
      %p26 = scmp.eq.s32.totalorder %s25, 0
      %s28 = sadd.s32 %s27, 1
      %s29 = scalar_select %p26, %s27, %s28
      %p32 = pneg %p26
      %p33 = scmp.eq.s32.totalorder %s17, 1
      %p34 = por %p32, %p33
      %p35 = scmp.ne.s32.totalorder %s27, %s30
      %p36 = scmp.eq.s32.totalorder %s17, 0
      %p37 = por %p35, %p36
      %p38 = scmp.ne.s32.totalorder %s27, %s30
      %p39 = scmp.eq.s32.totalorder %s22, 1
      %p40 = por %p38, %p39
      %p41 = scmp.ne.s32.totalorder %s30, %s31
      %p42 = scmp.eq.s32.totalorder %s22, 0
      %p43 = por %p41, %p42
      %p44 = scmp.ne.s32.totalorder %s30, %s31
      %p45 = scmp.eq.s32.totalorder %s23, 1
      %p46 = por %p44, %p45
      %p48 = scmp.ne.s32.totalorder %s31, %s47
      %p49 = scmp.eq.s32.totalorder %s23, 0
      %p50 = por %p48, %p49
      %s52 = sadd.s32 %s51, 1
      %p55 = scmp.eq.s32.totalorder %s17, 1
      %p56 = scmp.ne.s32.totalorder %s51, %s53
      %p57 = scmp.eq.s32.totalorder %s17, 0
      %p58 = por %p56, %p57
      %p59 = scmp.ne.s32.totalorder %s51, %s53
      %p60 = scmp.eq.s32.totalorder %s22, 1
      %p61 = por %p59, %p60
      %p62 = scmp.ne.s32.totalorder %s53, %s54
      %p63 = scmp.eq.s32.totalorder %s22, 0
      %p64 = por %p62, %p63
      %p65 = scmp.ne.s32.totalorder %s53, %s54
      %p66 = scmp.eq.s32.totalorder %s23, 1
      %p67 = por %p65, %p66
      %p69 = scmp.ne.s32.totalorder %s54, %s68
      %p70 = scmp.eq.s32.totalorder %s23, 0
      %p71 = por %p69, %p70
      %s73 = sadd.s32 %s72, 1
      %p76 = scmp.eq.s32.totalorder %s17, 1
      %p77 = scmp.ne.s32.totalorder %s72, %s74
      %p78 = scmp.eq.s32.totalorder %s17, 0
      %p79 = por %p77, %p78
      %p80 = scmp.ne.s32.totalorder %s72, %s74
      %p81 = scmp.eq.s32.totalorder %s22, 1
      %p82 = por %p80, %p81
      %p83 = scmp.ne.s32.totalorder %s74, %s75
      %p84 = scmp.eq.s32.totalorder %s22, 0
      %p85 = por %p83, %p84
      %p86 = scmp.ne.s32.totalorder %s74, %s75
      %p87 = scmp.eq.s32.totalorder %s23, 1
      %p88 = por %p86, %p87
      %p90 = scmp.ne.s32.totalorder %s75, %s89
      %p91 = scmp.eq.s32.totalorder %s23, 0
      %p92 = por %p90, %p91
      %s94 = sadd.s32 %s93, 1
      %p97 = scmp.eq.s32.totalorder %s17, 1
      %p98 = scmp.ne.s32.totalorder %s93, %s95
      %p99 = scmp.eq.s32.totalorder %s17, 0
      %p100 = por %p98, %p99
      %p101 = scmp.ne.s32.totalorder %s93, %s95
      %p102 = scmp.eq.s32.totalorder %s22, 1
      %p103 = por %p101, %p102
      %p104 = scmp.ne.s32.totalorder %s95, %s96
      %p105 = scmp.eq.s32.totalorder %s22, 0
      %p106 = por %p104, %p105
      %p107 = scmp.ne.s32.totalorder %s95, %s96
      %p108 = scmp.eq.s32.totalorder %s23, 1
      %p109 = por %p107, %p108
      %p111 = scmp.ne.s32.totalorder %s96, %s110
      %p112 = scmp.eq.s32.totalorder %s23, 0
      %p113 = por %p111, %p112
      %s115 = sadd.s32 %s114, 1
      %p118 = scmp.eq.s32.totalorder %s17, 1
      %p119 = scmp.ne.s32.totalorder %s114, %s116
      %p120 = scmp.eq.s32.totalorder %s17, 0
      %p121 = por %p119, %p120
      %p122 = scmp.ne.s32.totalorder %s114, %s116
      %p123 = scmp.eq.s32.totalorder %s22, 1
      %p124 = por %p122, %p123
      %p125 = scmp.ne.s32.totalorder %s116, %s117
      %p126 = scmp.eq.s32.totalorder %s22, 0
      %p127 = por %p125, %p126
      %p128 = scmp.ne.s32.totalorder %s116, %s117
      %p129 = scmp.eq.s32.totalorder %s23, 1
      %p130 = por %p128, %p129
      %p132 = scmp.ne.s32.totalorder %s117, %s131
      %p133 = scmp.eq.s32.totalorder %s23, 0
      %p134 = por %p132, %p133
      %s136 = sadd.s32 %s135, 1
      %p139 = scmp.eq.s32.totalorder %s17, 1
      %p140 = scmp.ne.s32.totalorder %s135, %s137
      %p141 = scmp.eq.s32.totalorder %s17, 0
      %p142 = por %p140, %p141
      %p143 = scmp.ne.s32.totalorder %s135, %s137
      %p144 = scmp.eq.s32.totalorder %s22, 1
      %p145 = por %p143, %p144
      %p146 = scmp.ne.s32.totalorder %s137, %s138
      %p147 = scmp.eq.s32.totalorder %s22, 0
      %p148 = por %p146, %p147
      %p149 = scmp.ne.s32.totalorder %s137, %s138
      %p150 = scmp.eq.s32.totalorder %s23, 1
      %p151 = por %p149, %p150
      %p153 = scmp.ne.s32.totalorder %s138, %s152
      %p154 = scmp.eq.s32.totalorder %s23, 0
      %p155 = por %p153, %p154
      %s157 = sadd.s32 %s156, 1
      %p160 = scmp.eq.s32.totalorder %s17, 1
      %p161 = scmp.ne.s32.totalorder %s156, %s158
      %p162 = scmp.eq.s32.totalorder %s17, 0
      %p163 = por %p161, %p162
      %p164 = scmp.ne.s32.totalorder %s156, %s158
      %p165 = scmp.eq.s32.totalorder %s22, 1
      %p166 = por %p164, %p165
      %p167 = scmp.ne.s32.totalorder %s158, %s159
      %p168 = scmp.eq.s32.totalorder %s22, 0
      %p169 = por %p167, %p168
      %p170 = scmp.ne.s32.totalorder %s158, %s159
      %p171 = scmp.eq.s32.totalorder %s23, 1
      %p172 = por %p170, %p171
      %p174 = scmp.ne.s32.totalorder %s159, %s173
      %p175 = scmp.eq.s32.totalorder %s23, 0
      %p176 = por %p174, %p175
      %s178 = sadd.s32 %s177, 1
      %p181 = scmp.eq.s32.totalorder %s17, 1
      %p182 = scmp.ne.s32.totalorder %s177, %s179
      %p183 = scmp.eq.s32.totalorder %s17, 0
      %p184 = por %p182, %p183
      %p185 = scmp.ne.s32.totalorder %s177, %s179
      %p186 = scmp.eq.s32.totalorder %s22, 1
      %p187 = por %p185, %p186
      %p188 = scmp.ne.s32.totalorder %s179, %s180
      %p189 = scmp.eq.s32.totalorder %s22, 0
      %p190 = por %p188, %p189
      %p191 = scmp.ne.s32.totalorder %s179, %s180
      %p192 = scmp.eq.s32.totalorder %s23, 1
      %p193 = por %p191, %p192
      %p195 = scmp.ne.s32.totalorder %s180, %s194
      %p196 = scmp.eq.s32.totalorder %s23, 0
      %p197 = por %p195, %p196
      %s199 = sadd.s32 %s198, 1
      %p202 = scmp.eq.s32.totalorder %s17, 1
      %p203 = scmp.ne.s32.totalorder %s198, %s200
      %p204 = scmp.eq.s32.totalorder %s17, 0
      %p205 = por %p203, %p204
      %p206 = scmp.ne.s32.totalorder %s198, %s200
      %p207 = scmp.eq.s32.totalorder %s22, 1
      %p208 = por %p206, %p207
      %p209 = scmp.ne.s32.totalorder %s200, %s201
      %p210 = scmp.eq.s32.totalorder %s22, 0
      %p211 = por %p209, %p210
      %p212 = scmp.ne.s32.totalorder %s200, %s201
      %p213 = scmp.eq.s32.totalorder %s23, 1
      %p214 = por %p212, %p213
      %p216 = scmp.ne.s32.totalorder %s201, %s215
      %p217 = scmp.eq.s32.totalorder %s23, 0
      %p218 = por %p216, %p217
      %s220 = sadd.s32 %s219, 1
      %p223 = scmp.eq.s32.totalorder %s17, 1
      %p224 = scmp.ne.s32.totalorder %s219, %s221
      %p225 = scmp.eq.s32.totalorder %s17, 0
      %p226 = por %p224, %p225
      %p227 = scmp.ne.s32.totalorder %s219, %s221
      %p228 = scmp.eq.s32.totalorder %s22, 1
      %p229 = por %p227, %p228
      %p230 = scmp.ne.s32.totalorder %s221, %s222
      %p231 = scmp.eq.s32.totalorder %s22, 0
      %p232 = por %p230, %p231
      %p233 = scmp.ne.s32.totalorder %s221, %s222
      %p234 = scmp.eq.s32.totalorder %s23, 1
      %p235 = por %p233, %p234
      %p237 = scmp.ne.s32.totalorder %s222, %s236
      %p238 = scmp.eq.s32.totalorder %s23, 0
      %p239 = por %p237, %p238
      %s241 = sadd.s32 %s240, 1
      %p244 = scmp.eq.s32.totalorder %s17, 1
      %p245 = scmp.ne.s32.totalorder %s240, %s242
      %p246 = scmp.eq.s32.totalorder %s17, 0
      %p247 = por %p245, %p246
      %p248 = scmp.ne.s32.totalorder %s240, %s242
      %p249 = scmp.eq.s32.totalorder %s22, 1
      %p250 = por %p248, %p249
      %p251 = scmp.ne.s32.totalorder %s242, %s243
      %p252 = scmp.eq.s32.totalorder %s22, 0
      %p253 = por %p251, %p252
      %p254 = scmp.ne.s32.totalorder %s242, %s243
      %p255 = scmp.eq.s32.totalorder %s23, 1
      %p256 = por %p254, %p255
      %p258 = scmp.ne.s32.totalorder %s243, %s257
      %p259 = scmp.eq.s32.totalorder %s23, 0
      %p260 = por %p258, %p259
      %s261 = ssub.s32 %s17, %s24
      %p262 = scmp.eq.s32.totalorder %s261, 0
      %s264 = sadd.s32 %s263, 1
      %s265 = scalar_select %p262, %s263, %s264
      %p268 = pneg %p262
      %p269 = scmp.eq.s32.totalorder %s17, 1
      %p270 = por %p268, %p269
      %p271 = scmp.ne.s32.totalorder %s263, %s266
      %p272 = scmp.eq.s32.totalorder %s17, 0
      %p273 = por %p271, %p272
      %p274 = scmp.ne.s32.totalorder %s263, %s266
      %p275 = scmp.eq.s32.totalorder %s22, 1
      %p276 = por %p274, %p275
      %p277 = scmp.ne.s32.totalorder %s266, %s267
      %p278 = scmp.eq.s32.totalorder %s22, 0
      %p279 = por %p277, %p278
      %p280 = scmp.ne.s32.totalorder %s266, %s267
      %p281 = scmp.eq.s32.totalorder %s23, 1
      %p282 = por %p280, %p281
      %p284 = scmp.ne.s32.totalorder %s267, %s283
      %p285 = scmp.eq.s32.totalorder %s23, 0
      %p286 = por %p284, %p285
      %p287 = scmp.le.s32.totalorder 1, %s17
      %p288 = scmp.lt.s32.totalorder %s17, 3
      %p289 = pnand %p287, %p288
      %p290 = pneg %p289
      // Predicated region
      $region9: #{net_forward.1} parent=5 // pred_check
        _
      $region10: #{net_forward.1} parent=5 // pred_check_branch
        %292 = sbr.rel (%p289) target = $region12
      $region11: #{net_forward.1} parent=5 // pred_region
        %s293 = ssub.s32 %s17, 1
        // Predicated region
        $region13: #{net_forward.1} parent=11 // pred_check
          %p294 = pneg %p64
        $region14: #{net_forward.1} parent=11 // pred_check_branch
          %296 = sbr.rel (%p294) target = $region16
        $region15: #{net_forward.1} parent=11 // pred_region
          _
        $region16: #{net_forward.1} parent=11 // pred_fallthru
          _
        // Predicated region
        $region17: #{net_forward.1} parent=11 // pred_check
          %p297 = pneg %p85
        $region18: #{net_forward.1} parent=11 // pred_check_branch
          %299 = sbr.rel (%p297) target = $region20
        $region19: #{net_forward.1} parent=11 // pred_region
          _
        $region20: #{net_forward.1} parent=11 // pred_fallthru
          _
        // Predicated region
        $region21: #{net_forward.1} parent=11 // pred_check
          %p300 = pneg %p106
        $region22: #{net_forward.1} parent=11 // pred_check_branch
          %302 = sbr.rel (%p300) target = $region24
        $region23: #{net_forward.1} parent=11 // pred_region
          _
        $region24: #{net_forward.1} parent=11 // pred_fallthru
          _
        // Predicated region
        $region25: #{net_forward.1} parent=11 // pred_check
          %p303 = pneg %p127
        $region26: #{net_forward.1} parent=11 // pred_check_branch
          %305 = sbr.rel (%p303) target = $region28
        $region27: #{net_forward.1} parent=11 // pred_region
          _
        $region28: #{net_forward.1} parent=11 // pred_fallthru
          _
        // Predicated region
        $region29: #{net_forward.1} parent=11 // pred_check
          %p306 = pneg %p148
        $region30: #{net_forward.1} parent=11 // pred_check_branch
          %308 = sbr.rel (%p306) target = $region32
        $region31: #{net_forward.1} parent=11 // pred_region
          _
        $region32: #{net_forward.1} parent=11 // pred_fallthru
          _
        // Predicated region
        $region33: #{net_forward.1} parent=11 // pred_check
          %p309 = pneg %p169
        $region34: #{net_forward.1} parent=11 // pred_check_branch
          %311 = sbr.rel (%p309) target = $region36
        $region35: #{net_forward.1} parent=11 // pred_region
          _
        $region36: #{net_forward.1} parent=11 // pred_fallthru
          _
        // Predicated region
        $region37: #{net_forward.1} parent=11 // pred_check
          %p312 = pneg %p190
        $region38: #{net_forward.1} parent=11 // pred_check_branch
          %314 = sbr.rel (%p312) target = $region40
        $region39: #{net_forward.1} parent=11 // pred_region
          _
        $region40: #{net_forward.1} parent=11 // pred_fallthru
          _
        // Predicated region
        $region41: #{net_forward.1} parent=11 // pred_check
          %p315 = pneg %p211
        $region42: #{net_forward.1} parent=11 // pred_check_branch
          %317 = sbr.rel (%p315) target = $region44
        $region43: #{net_forward.1} parent=11 // pred_region
          _
        $region44: #{net_forward.1} parent=11 // pred_fallthru
          _
        // Predicated region
        $region45: #{net_forward.1} parent=11 // pred_check
          %p318 = pneg %p232
        $region46: #{net_forward.1} parent=11 // pred_check_branch
          %320 = sbr.rel (%p318) target = $region48
        $region47: #{net_forward.1} parent=11 // pred_region
          _
        $region48: #{net_forward.1} parent=11 // pred_fallthru
          _
        // Predicated region
        $region49: #{net_forward.1} parent=11 // pred_check
          %p321 = pneg %p253
        $region50: #{net_forward.1} parent=11 // pred_check_branch
          %323 = sbr.rel (%p321) target = $region52
        $region51: #{net_forward.1} parent=11 // pred_region
          _
        $region52: #{net_forward.1} parent=11 // pred_fallthru
          _
      $region12: #{net_forward.1} parent=5 // pred_fallthru
        _
      %p324 = scmp.lt.s32.totalorder %s17, 2
      // Predicated region
      $region53: #{net_forward.1} parent=5 // pred_check
        %p325 = pneg %p324
      $region54: #{net_forward.1} parent=5 // pred_check_branch
        %327 = sbr.rel (%p325) target = $region56
      $region55: #{net_forward.1} parent=5 // pred_region
        // Predicated region
        $region57: #{net_forward.1} parent=55 // pred_check
          %p328 = pneg %p37
        $region58: #{net_forward.1} parent=55 // pred_check_branch
          %330 = sbr.rel (%p328) target = $region60
        $region59: #{net_forward.1} parent=55 // pred_region
          %s331 = sand.u32 %s27, 1
          %s332 = sand.u32 %s27, 1
          %s333 = smul.addr %s332, 288
          %s334 = scalar_lea.vmem [#allocation2], %s333
          %s335 = smul.u32 9, %s17
          %s336 = smul.addr %s335, 4
          %s337 = scalar_lea.vmem %s0, %s336
          // Predicated region
          $region61: #{net_forward.1} parent=59 // pred_check
            _
          $region62: #{net_forward.1} parent=59 // pred_check_branch
            %339 = sbr.rel (0) target = $region64
          $region63: #{net_forward.1} parent=59 // pred_region
            // Predicated region
            $region65: #{net_forward.1} parent=63 // pred_check
              _
            $region66: #{net_forward.1} parent=63 // pred_check_branch
              %341 = sbr.rel target = $region68
            $region67: #{net_forward.1} parent=63 // pred_region
              // Predicated region
              $region80: #{net_forward.1} parent=67 // pred_check
                _
              $region81: #{net_forward.1} parent=67 // pred_check_branch
                %499 = sbr.rel (0) target = $region83
              $region82: #{net_forward.1} parent=67 // pred_region
                loop: start=0, step=1, limit=1
                $region84: #{net_forward.1} parent=82 // loop_pre_header
                  _
                $region85: #{net_forward.1} parent=82 // loop_header
                  %s501 = sphi 0, %s505
                  %p502 = scmp.ge.s32.totalorder %s501, 1
                  %s506 = sphi %s337, %s337
                  %s507 = sphi %s334, %s334
                $region86: #{net_forward.1} parent=82 // loop_header_branch
                  %504 = sbr.rel (%p502) target = $region90
                $region87: #{net_forward.1} parent=82 // loop_body
                  _
                $region88: #{net_forward.1} parent=82 // loop_footer
                  %s505 = sadd.s32 1, %s501
                $region89: #{net_forward.1} parent=82 // loop_footer_branch
                  %500 = sbr.rel target = $region85
                $region90: #{net_forward.1} parent=82 // loop_exit
                  _
                %s509 = ssub.s32 16, 1
                loop: start=0, step=1, limit=1
                $region91: #{net_forward.1} parent=82 // loop_pre_header
                  _
                $region92: #{net_forward.1} parent=82 // loop_header
                  %s511 = sphi 0, %s515
                  %p512 = scmp.ge.s32.totalorder %s511, 1
                  %s516 = sphi %s337, %s337
                  %s517 = sphi %s334, %s334
                $region93: #{net_forward.1} parent=82 // loop_header_branch
                  %514 = sbr.rel (%p512) target = $region97
                $region94: #{net_forward.1} parent=82 // loop_body
                  %v518 = vld [vmem:[%s516] sm:%s509]
                  %519 = vst [vmem:[%s517] sm:%s509] %v518
                  %v520 = vld [vmem:[%s516 + $0x4] sm:%s509]
                  %521 = vst [vmem:[%s517 + $0x4] sm:%s509] %v520
                  %v522 = vld [vmem:[%s516 + $0x8] sm:%s509]
                  %523 = vst [vmem:[%s517 + $0x8] sm:%s509] %v522
                  %v524 = vld [vmem:[%s516 + $0xc] sm:%s509]
                  %525 = vst [vmem:[%s517 + $0xc] sm:%s509] %v524
                  %v526 = vld [vmem:[%s516 + $0x10] sm:%s509]
                  %527 = vst [vmem:[%s517 + $0x10] sm:%s509] %v526
                  %v528 = vld [vmem:[%s516 + $0x14] sm:%s509]
                  %529 = vst [vmem:[%s517 + $0x14] sm:%s509] %v528
                  %v530 = vld [vmem:[%s516 + $0x18] sm:%s509]
                  %531 = vst [vmem:[%s517 + $0x18] sm:%s509] %v530
                  %v532 = vld [vmem:[%s516 + $0x1c] sm:%s509]
                  %533 = vst [vmem:[%s517 + $0x1c] sm:%s509] %v532
                  %v534 = vld [vmem:[%s516 + $0x20] sm:%s509]
                  %535 = vst [vmem:[%s517 + $0x20] sm:%s509] %v534
                  %v536 = vld [vmem:[%s516 + $0x48] sm:%s509]
                  %537 = vst [vmem:[%s517 + $0x24] sm:%s509] %v536
                  %v538 = vld [vmem:[%s516 + $0x4c] sm:%s509]
                  %539 = vst [vmem:[%s517 + $0x28] sm:%s509] %v538
                  %v540 = vld [vmem:[%s516 + $0x50] sm:%s509]
                  %541 = vst [vmem:[%s517 + $0x2c] sm:%s509] %v540
                  %v542 = vld [vmem:[%s516 + $0x54] sm:%s509]
                  %543 = vst [vmem:[%s517 + $0x30] sm:%s509] %v542
                  %v544 = vld [vmem:[%s516 + $0x58] sm:%s509]
                  %545 = vst [vmem:[%s517 + $0x34] sm:%s509] %v544
                  %v546 = vld [vmem:[%s516 + $0x5c] sm:%s509]
                  %547 = vst [vmem:[%s517 + $0x38] sm:%s509] %v546
                  %v548 = vld [vmem:[%s516 + $0x60] sm:%s509]
                  %549 = vst [vmem:[%s517 + $0x3c] sm:%s509] %v548
                  %v550 = vld [vmem:[%s516 + $0x64] sm:%s509]
                  %551 = vst [vmem:[%s517 + $0x40] sm:%s509] %v550
                  %v552 = vld [vmem:[%s516 + $0x68] sm:%s509]
                  %553 = vst [vmem:[%s517 + $0x44] sm:%s509] %v552
                  %v554 = vld [vmem:[%s516 + $0x90] sm:%s509]
                  %555 = vst [vmem:[%s517 + $0x48] sm:%s509] %v554
                  %v556 = vld [vmem:[%s516 + $0x94] sm:%s509]
                  %557 = vst [vmem:[%s517 + $0x4c] sm:%s509] %v556
                  %v558 = vld [vmem:[%s516 + $0x98] sm:%s509]
                  %559 = vst [vmem:[%s517 + $0x50] sm:%s509] %v558
                  %v560 = vld [vmem:[%s516 + $0x9c] sm:%s509]
                  %561 = vst [vmem:[%s517 + $0x54] sm:%s509] %v560
                  %v562 = vld [vmem:[%s516 + $0xa0] sm:%s509]
                  %563 = vst [vmem:[%s517 + $0x58] sm:%s509] %v562
                  %v564 = vld [vmem:[%s516 + $0xa4] sm:%s509]
                  %565 = vst [vmem:[%s517 + $0x5c] sm:%s509] %v564
                  %v566 = vld [vmem:[%s516 + $0xa8] sm:%s509]
                  %567 = vst [vmem:[%s517 + $0x60] sm:%s509] %v566
                  %v568 = vld [vmem:[%s516 + $0xac] sm:%s509]
                  %569 = vst [vmem:[%s517 + $0x64] sm:%s509] %v568
                  %v570 = vld [vmem:[%s516 + $0xb0] sm:%s509]
                  %571 = vst [vmem:[%s517 + $0x68] sm:%s509] %v570
                  %v572 = vld [vmem:[%s516 + $0xd8] sm:%s509]
                  %573 = vst [vmem:[%s517 + $0x6c] sm:%s509] %v572
                  %v574 = vld [vmem:[%s516 + $0xdc] sm:%s509]
                  %575 = vst [vmem:[%s517 + $0x70] sm:%s509] %v574
                  %v576 = vld [vmem:[%s516 + $0xe0] sm:%s509]
                  %577 = vst [vmem:[%s517 + $0x74] sm:%s509] %v576
                  %v578 = vld [vmem:[%s516 + $0xe4] sm:%s509]
                  %579 = vst [vmem:[%s517 + $0x78] sm:%s509] %v578
                  %v580 = vld [vmem:[%s516 + $0xe8] sm:%s509]
                  %581 = vst [vmem:[%s517 + $0x7c] sm:%s509] %v580
                  %v582 = vld [vmem:[%s516 + $0xec] sm:%s509]
                  %583 = vst [vmem:[%s517 + $0x80] sm:%s509] %v582
                  %v584 = vld [vmem:[%s516 + $0xf0] sm:%s509]
                  %585 = vst [vmem:[%s517 + $0x84] sm:%s509] %v584
                  %v586 = vld [vmem:[%s516 + $0xf4] sm:%s509]
                  %587 = vst [vmem:[%s517 + $0x88] sm:%s509] %v586
                  %v588 = vld [vmem:[%s516 + $0xf8] sm:%s509]
                  %589 = vst [vmem:[%s517 + $0x8c] sm:%s509] %v588
                  %v590 = vld [vmem:[%s516 + $0x120] sm:%s509]
                  %591 = vst [vmem:[%s517 + $0x90] sm:%s509] %v590
                  %v592 = vld [vmem:[%s516 + $0x124] sm:%s509]
                  %593 = vst [vmem:[%s517 + $0x94] sm:%s509] %v592
                  %v594 = vld [vmem:[%s516 + $0x128] sm:%s509]
                  %595 = vst [vmem:[%s517 + $0x98] sm:%s509] %v594
                  %v596 = vld [vmem:[%s516 + $0x12c] sm:%s509]
                  %597 = vst [vmem:[%s517 + $0x9c] sm:%s509] %v596
                  %v598 = vld [vmem:[%s516 + $0x130] sm:%s509]
                  %599 = vst [vmem:[%s517 + $0xa0] sm:%s509] %v598
                  %v600 = vld [vmem:[%s516 + $0x134] sm:%s509]
                  %601 = vst [vmem:[%s517 + $0xa4] sm:%s509] %v600
                  %v602 = vld [vmem:[%s516 + $0x138] sm:%s509]
                  %603 = vst [vmem:[%s517 + $0xa8] sm:%s509] %v602
                  %v604 = vld [vmem:[%s516 + $0x13c] sm:%s509]
                  %605 = vst [vmem:[%s517 + $0xac] sm:%s509] %v604
                  %v606 = vld [vmem:[%s516 + $0x140] sm:%s509]
                  %607 = vst [vmem:[%s517 + $0xb0] sm:%s509] %v606
                  %v608 = vld [vmem:[%s516 + $0x168] sm:%s509]
                  %609 = vst [vmem:[%s517 + $0xb4] sm:%s509] %v608
                  %v610 = vld [vmem:[%s516 + $0x16c] sm:%s509]
                  %611 = vst [vmem:[%s517 + $0xb8] sm:%s509] %v610
                  %v612 = vld [vmem:[%s516 + $0x170] sm:%s509]
                  %613 = vst [vmem:[%s517 + $0xbc] sm:%s509] %v612
                  %v614 = vld [vmem:[%s516 + $0x174] sm:%s509]
                  %615 = vst [vmem:[%s517 + $0xc0] sm:%s509] %v614
                  %v616 = vld [vmem:[%s516 + $0x178] sm:%s509]
                  %617 = vst [vmem:[%s517 + $0xc4] sm:%s509] %v616
                  %v618 = vld [vmem:[%s516 + $0x17c] sm:%s509]
                  %619 = vst [vmem:[%s517 + $0xc8] sm:%s509] %v618
                  %v620 = vld [vmem:[%s516 + $0x180] sm:%s509]
                  %621 = vst [vmem:[%s517 + $0xcc] sm:%s509] %v620
                  %v622 = vld [vmem:[%s516 + $0x184] sm:%s509]
                  %623 = vst [vmem:[%s517 + $0xd0] sm:%s509] %v622
                  %v624 = vld [vmem:[%s516 + $0x188] sm:%s509]
                  %625 = vst [vmem:[%s517 + $0xd4] sm:%s509] %v624
                  %v626 = vld [vmem:[%s516 + $0x1b0] sm:%s509]
                  %627 = vst [vmem:[%s517 + $0xd8] sm:%s509] %v626
                  %v628 = vld [vmem:[%s516 + $0x1b4] sm:%s509]
                  %629 = vst [vmem:[%s517 + $0xdc] sm:%s509] %v628
                  %v630 = vld [vmem:[%s516 + $0x1b8] sm:%s509]
                  %631 = vst [vmem:[%s517 + $0xe0] sm:%s509] %v630
                  %v632 = vld [vmem:[%s516 + $0x1bc] sm:%s509]
                  %633 = vst [vmem:[%s517 + $0xe4] sm:%s509] %v632
                  %v634 = vld [vmem:[%s516 + $0x1c0] sm:%s509]
                  %635 = vst [vmem:[%s517 + $0xe8] sm:%s509] %v634
                  %v636 = vld [vmem:[%s516 + $0x1c4] sm:%s509]
                  %637 = vst [vmem:[%s517 + $0xec] sm:%s509] %v636
                  %v638 = vld [vmem:[%s516 + $0x1c8] sm:%s509]
                  %639 = vst [vmem:[%s517 + $0xf0] sm:%s509] %v638
                  %v640 = vld [vmem:[%s516 + $0x1cc] sm:%s509]
                  %641 = vst [vmem:[%s517 + $0xf4] sm:%s509] %v640
                  %v642 = vld [vmem:[%s516 + $0x1d0] sm:%s509]
                  %643 = vst [vmem:[%s517 + $0xf8] sm:%s509] %v642
                  %v644 = vld [vmem:[%s516 + $0x1f8] sm:%s509]
                  %645 = vst [vmem:[%s517 + $0xfc] sm:%s509] %v644
                  %v646 = vld [vmem:[%s516 + $0x1fc] sm:%s509]
                  %647 = vst [vmem:[%s517 + $0x100] sm:%s509] %v646
                  %v648 = vld [vmem:[%s516 + $0x200] sm:%s509]
                  %649 = vst [vmem:[%s517 + $0x104] sm:%s509] %v648
                  %v650 = vld [vmem:[%s516 + $0x204] sm:%s509]
                  %651 = vst [vmem:[%s517 + $0x108] sm:%s509] %v650
                  %v652 = vld [vmem:[%s516 + $0x208] sm:%s509]
                  %653 = vst [vmem:[%s517 + $0x10c] sm:%s509] %v652
                  %v654 = vld [vmem:[%s516 + $0x20c] sm:%s509]
                  %655 = vst [vmem:[%s517 + $0x110] sm:%s509] %v654
                  %v656 = vld [vmem:[%s516 + $0x210] sm:%s509]
                  %657 = vst [vmem:[%s517 + $0x114] sm:%s509] %v656
                  %v658 = vld [vmem:[%s516 + $0x214] sm:%s509]
                  %659 = vst [vmem:[%s517 + $0x118] sm:%s509] %v658
                  %v660 = vld [vmem:[%s516 + $0x218] sm:%s509]
                  %661 = vst [vmem:[%s517 + $0x11c] sm:%s509] %v660
                $region95: #{net_forward.1} parent=82 // loop_footer
                  %s515 = sadd.s32 1, %s511
                $region96: #{net_forward.1} parent=82 // loop_footer_branch
                  %510 = sbr.rel target = $region92
                $region97: #{net_forward.1} parent=82 // loop_exit
                  _
              $region83: #{net_forward.1} parent=67 // pred_fallthru
                _
            $region68: #{net_forward.1} parent=63 // pred_fallthru
              _
            // Predicated region
            $region69: #{net_forward.1} parent=63 // pred_check
              _
            $region70: #{net_forward.1} parent=63 // pred_check_branch
              %343 = sbr.rel (0) target = $region72
            $region71: #{net_forward.1} parent=63 // pred_region
              %s345 = ssub.s32 16, 1
              loop: start=0, step=1, limit=1
              $region73: #{net_forward.1} parent=71 // loop_pre_header
                _
              $region74: #{net_forward.1} parent=71 // loop_header
                %s347 = sphi 0, %s351
                %p348 = scmp.ge.s32.totalorder %s347, 1
                %s352 = sphi %s337, %s337
                %s353 = sphi %s334, %s334
              $region75: #{net_forward.1} parent=71 // loop_header_branch
                %350 = sbr.rel (%p348) target = $region79
              $region76: #{net_forward.1} parent=71 // loop_body
                %v354 = vld [vmem:[%s352] sm:%s345]
                %355 = vst [vmem:[%s353] sm:%s345] %v354
                %v356 = vld [vmem:[%s352 + $0x4] sm:%s345]
                %357 = vst [vmem:[%s353 + $0x4] sm:%s345] %v356
                %v358 = vld [vmem:[%s352 + $0x8] sm:%s345]
                %359 = vst [vmem:[%s353 + $0x8] sm:%s345] %v358
                %v360 = vld [vmem:[%s352 + $0xc] sm:%s345]
                %361 = vst [vmem:[%s353 + $0xc] sm:%s345] %v360
                %v362 = vld [vmem:[%s352 + $0x10] sm:%s345]
                %363 = vst [vmem:[%s353 + $0x10] sm:%s345] %v362
                %v364 = vld [vmem:[%s352 + $0x14] sm:%s345]
                %365 = vst [vmem:[%s353 + $0x14] sm:%s345] %v364
                %v366 = vld [vmem:[%s352 + $0x18] sm:%s345]
                %367 = vst [vmem:[%s353 + $0x18] sm:%s345] %v366
                %v368 = vld [vmem:[%s352 + $0x1c] sm:%s345]
                %369 = vst [vmem:[%s353 + $0x1c] sm:%s345] %v368
                %v370 = vld [vmem:[%s352 + $0x20] sm:%s345]
                %371 = vst [vmem:[%s353 + $0x20] sm:%s345] %v370
                %v372 = vld [vmem:[%s352 + $0x48] sm:%s345]
                %373 = vst [vmem:[%s353 + $0x24] sm:%s345] %v372
                %v374 = vld [vmem:[%s352 + $0x4c] sm:%s345]
                %375 = vst [vmem:[%s353 + $0x28] sm:%s345] %v374
                %v376 = vld [vmem:[%s352 + $0x50] sm:%s345]
                %377 = vst [vmem:[%s353 + $0x2c] sm:%s345] %v376
                %v378 = vld [vmem:[%s352 + $0x54] sm:%s345]
                %379 = vst [vmem:[%s353 + $0x30] sm:%s345] %v378
                %v380 = vld [vmem:[%s352 + $0x58] sm:%s345]
                %381 = vst [vmem:[%s353 + $0x34] sm:%s345] %v380
                %v382 = vld [vmem:[%s352 + $0x5c] sm:%s345]
                %383 = vst [vmem:[%s353 + $0x38] sm:%s345] %v382
                %v384 = vld [vmem:[%s352 + $0x60] sm:%s345]
                %385 = vst [vmem:[%s353 + $0x3c] sm:%s345] %v384
                %v386 = vld [vmem:[%s352 + $0x64] sm:%s345]
                %387 = vst [vmem:[%s353 + $0x40] sm:%s345] %v386
                %v388 = vld [vmem:[%s352 + $0x68] sm:%s345]
                %389 = vst [vmem:[%s353 + $0x44] sm:%s345] %v388
                %v390 = vld [vmem:[%s352 + $0x90] sm:%s345]
                %391 = vst [vmem:[%s353 + $0x48] sm:%s345] %v390
                %v392 = vld [vmem:[%s352 + $0x94] sm:%s345]
                %393 = vst [vmem:[%s353 + $0x4c] sm:%s345] %v392
                %v394 = vld [vmem:[%s352 + $0x98] sm:%s345]
                %395 = vst [vmem:[%s353 + $0x50] sm:%s345] %v394
                %v396 = vld [vmem:[%s352 + $0x9c] sm:%s345]
                %397 = vst [vmem:[%s353 + $0x54] sm:%s345] %v396
                %v398 = vld [vmem:[%s352 + $0xa0] sm:%s345]
                %399 = vst [vmem:[%s353 + $0x58] sm:%s345] %v398
                %v400 = vld [vmem:[%s352 + $0xa4] sm:%s345]
                %401 = vst [vmem:[%s353 + $0x5c] sm:%s345] %v400
                %v402 = vld [vmem:[%s352 + $0xa8] sm:%s345]
                %403 = vst [vmem:[%s353 + $0x60] sm:%s345] %v402
                %v404 = vld [vmem:[%s352 + $0xac] sm:%s345]
                %405 = vst [vmem:[%s353 + $0x64] sm:%s345] %v404
                %v406 = vld [vmem:[%s352 + $0xb0] sm:%s345]
                %407 = vst [vmem:[%s353 + $0x68] sm:%s345] %v406
                %v408 = vld [vmem:[%s352 + $0xd8] sm:%s345]
                %409 = vst [vmem:[%s353 + $0x6c] sm:%s345] %v408
                %v410 = vld [vmem:[%s352 + $0xdc] sm:%s345]
                %411 = vst [vmem:[%s353 + $0x70] sm:%s345] %v410
                %v412 = vld [vmem:[%s352 + $0xe0] sm:%s345]
                %413 = vst [vmem:[%s353 + $0x74] sm:%s345] %v412
                %v414 = vld [vmem:[%s352 + $0xe4] sm:%s345]
                %415 = vst [vmem:[%s353 + $0x78] sm:%s345] %v414
                %v416 = vld [vmem:[%s352 + $0xe8] sm:%s345]
                %417 = vst [vmem:[%s353 + $0x7c] sm:%s345] %v416
                %v418 = vld [vmem:[%s352 + $0xec] sm:%s345]
                %419 = vst [vmem:[%s353 + $0x80] sm:%s345] %v418
                %v420 = vld [vmem:[%s352 + $0xf0] sm:%s345]
                %421 = vst [vmem:[%s353 + $0x84] sm:%s345] %v420
                %v422 = vld [vmem:[%s352 + $0xf4] sm:%s345]
                %423 = vst [vmem:[%s353 + $0x88] sm:%s345] %v422
                %v424 = vld [vmem:[%s352 + $0xf8] sm:%s345]
                %425 = vst [vmem:[%s353 + $0x8c] sm:%s345] %v424
                %v426 = vld [vmem:[%s352 + $0x120] sm:%s345]
                %427 = vst [vmem:[%s353 + $0x90] sm:%s345] %v426
                %v428 = vld [vmem:[%s352 + $0x124] sm:%s345]
                %429 = vst [vmem:[%s353 + $0x94] sm:%s345] %v428
                %v430 = vld [vmem:[%s352 + $0x128] sm:%s345]
                %431 = vst [vmem:[%s353 + $0x98] sm:%s345] %v430
                %v432 = vld [vmem:[%s352 + $0x12c] sm:%s345]
                %433 = vst [vmem:[%s353 + $0x9c] sm:%s345] %v432
                %v434 = vld [vmem:[%s352 + $0x130] sm:%s345]
                %435 = vst [vmem:[%s353 + $0xa0] sm:%s345] %v434
                %v436 = vld [vmem:[%s352 + $0x134] sm:%s345]
                %437 = vst [vmem:[%s353 + $0xa4] sm:%s345] %v436
                %v438 = vld [vmem:[%s352 + $0x138] sm:%s345]
                %439 = vst [vmem:[%s353 + $0xa8] sm:%s345] %v438
                %v440 = vld [vmem:[%s352 + $0x13c] sm:%s345]
                %441 = vst [vmem:[%s353 + $0xac] sm:%s345] %v440
                %v442 = vld [vmem:[%s352 + $0x140] sm:%s345]
                %443 = vst [vmem:[%s353 + $0xb0] sm:%s345] %v442
                %v444 = vld [vmem:[%s352 + $0x168] sm:%s345]
                %445 = vst [vmem:[%s353 + $0xb4] sm:%s345] %v444
                %v446 = vld [vmem:[%s352 + $0x16c] sm:%s345]
                %447 = vst [vmem:[%s353 + $0xb8] sm:%s345] %v446
                %v448 = vld [vmem:[%s352 + $0x170] sm:%s345]
                %449 = vst [vmem:[%s353 + $0xbc] sm:%s345] %v448
                %v450 = vld [vmem:[%s352 + $0x174] sm:%s345]
                %451 = vst [vmem:[%s353 + $0xc0] sm:%s345] %v450
                %v452 = vld [vmem:[%s352 + $0x178] sm:%s345]
                %453 = vst [vmem:[%s353 + $0xc4] sm:%s345] %v452
                %v454 = vld [vmem:[%s352 + $0x17c] sm:%s345]
                %455 = vst [vmem:[%s353 + $0xc8] sm:%s345] %v454
                %v456 = vld [vmem:[%s352 + $0x180] sm:%s345]
                %457 = vst [vmem:[%s353 + $0xcc] sm:%s345] %v456
                %v458 = vld [vmem:[%s352 + $0x184] sm:%s345]
                %459 = vst [vmem:[%s353 + $0xd0] sm:%s345] %v458
                %v460 = vld [vmem:[%s352 + $0x188] sm:%s345]
                %461 = vst [vmem:[%s353 + $0xd4] sm:%s345] %v460
                %v462 = vld [vmem:[%s352 + $0x1b0] sm:%s345]
                %463 = vst [vmem:[%s353 + $0xd8] sm:%s345] %v462
                %v464 = vld [vmem:[%s352 + $0x1b4] sm:%s345]
                %465 = vst [vmem:[%s353 + $0xdc] sm:%s345] %v464
                %v466 = vld [vmem:[%s352 + $0x1b8] sm:%s345]
                %467 = vst [vmem:[%s353 + $0xe0] sm:%s345] %v466
                %v468 = vld [vmem:[%s352 + $0x1bc] sm:%s345]
                %469 = vst [vmem:[%s353 + $0xe4] sm:%s345] %v468
                %v470 = vld [vmem:[%s352 + $0x1c0] sm:%s345]
                %471 = vst [vmem:[%s353 + $0xe8] sm:%s345] %v470
                %v472 = vld [vmem:[%s352 + $0x1c4] sm:%s345]
                %473 = vst [vmem:[%s353 + $0xec] sm:%s345] %v472
                %v474 = vld [vmem:[%s352 + $0x1c8] sm:%s345]
                %475 = vst [vmem:[%s353 + $0xf0] sm:%s345] %v474
                %v476 = vld [vmem:[%s352 + $0x1cc] sm:%s345]
                %477 = vst [vmem:[%s353 + $0xf4] sm:%s345] %v476
                %v478 = vld [vmem:[%s352 + $0x1d0] sm:%s345]
                %479 = vst [vmem:[%s353 + $0xf8] sm:%s345] %v478
                %v480 = vld [vmem:[%s352 + $0x1f8] sm:%s345]
                %481 = vst [vmem:[%s353 + $0xfc] sm:%s345] %v480
                %v482 = vld [vmem:[%s352 + $0x1fc] sm:%s345]
                %483 = vst [vmem:[%s353 + $0x100] sm:%s345] %v482
                %v484 = vld [vmem:[%s352 + $0x200] sm:%s345]
                %485 = vst [vmem:[%s353 + $0x104] sm:%s345] %v484
                %v486 = vld [vmem:[%s352 + $0x204] sm:%s345]
                %487 = vst [vmem:[%s353 + $0x108] sm:%s345] %v486
                %v488 = vld [vmem:[%s352 + $0x208] sm:%s345]
                %489 = vst [vmem:[%s353 + $0x10c] sm:%s345] %v488
                %v490 = vld [vmem:[%s352 + $0x20c] sm:%s345]
                %491 = vst [vmem:[%s353 + $0x110] sm:%s345] %v490
                %v492 = vld [vmem:[%s352 + $0x210] sm:%s345]
                %493 = vst [vmem:[%s353 + $0x114] sm:%s345] %v492
                %v494 = vld [vmem:[%s352 + $0x214] sm:%s345]
                %495 = vst [vmem:[%s353 + $0x118] sm:%s345] %v494
                %v496 = vld [vmem:[%s352 + $0x218] sm:%s345]
                %497 = vst [vmem:[%s353 + $0x11c] sm:%s345] %v496
              $region77: #{net_forward.1} parent=71 // loop_footer
                %s351 = sadd.s32 1, %s347
              $region78: #{net_forward.1} parent=71 // loop_footer_branch
                %346 = sbr.rel target = $region74
              $region79: #{net_forward.1} parent=71 // loop_exit
                _
            $region72: #{net_forward.1} parent=63 // pred_fallthru
              _
          $region64: #{net_forward.1} parent=59 // pred_fallthru
            _
          %662 = vnop
        $region60: #{net_forward.1} parent=55 // pred_fallthru
          _
      $region56: #{net_forward.1} parent=5 // pred_fallthru
        _
      %p663 = scmp.le.s32.totalorder 1, %s17
      %p664 = scmp.lt.s32.totalorder %s17, 3
      %p665 = pnand %p663, %p664
      %p666 = pneg %p665
      // Predicated region
      $region98: #{net_forward.1} parent=5 // pred_check
        _
      $region99: #{net_forward.1} parent=5 // pred_check_branch
        %668 = sbr.rel (%p665) target = $region101
      $region100: #{net_forward.1} parent=5 // pred_region
        %s669 = ssub.s32 %s17, 1
        %s670 = sand.u32 %s30, 1
        %s671 = sand.u32 %s30, 1
        %s672 = smul.addr %s671, 288
        %s673 = scalar_lea.vmem [#allocation2], %s672
        // Predicated region
        $region102: #{net_forward.1} parent=100 // pred_check
          %p674 = pneg %p43
        $region103: #{net_forward.1} parent=100 // pred_check_branch
          %676 = sbr.rel (%p674) target = $region105
        $region104: #{net_forward.1} parent=100 // pred_region
          _
        $region105: #{net_forward.1} parent=100 // pred_fallthru
          _
        %s677 = sand.u32 %s30, 1
        %s678 = sand.u32 %s30, 1
        %s679 = smul.addr %s678, 288
        %s680 = scalar_lea.vmem [#allocation2], %s679
        %p681 = pneg %p43
        %p682 = pneg %p40
        %p683 = pneg %p64
        %p684 = pneg %p61
        %p685 = pneg %p85
        %p686 = pneg %p82
        %p687 = pneg %p106
        %p688 = pneg %p103
        %p689 = pneg %p127
        %p690 = pneg %p124
        %p691 = pneg %p148
        %p692 = pneg %p145
        %p693 = pneg %p169
        %p694 = pneg %p166
        %p695 = pneg %p190
        %p696 = pneg %p187
        %p697 = pneg %p211
        %p698 = pneg %p208
        %p699 = pneg %p232
        %p700 = pneg %p229
        %p701 = pneg %p253
        %p702 = pneg %p250
        %p703 = pneg %p279
        %p704 = pneg %p276
        %s705 = smul.u32 8, %s22
        %p706 = scmp.lt.s32.totalorder %s705, 15
        %s707 = scalar_select %p706, %s705, 15
        %s708 = smul.addr %s707, 8
        %s709 = scalar_lea.vmem %s11, %s708
        %s710 = smul.u32 9, %s22
        %s711 = smul.u32 8, %s22
        %p712 = scmp.lt.s32.totalorder %s711, 15
        %s713 = scalar_select %p712, %s711, 15
        %s714 = smul.addr %s713, 8
        %s715 = scalar_lea.vmem %s11, %s714
        %s716 = smul.u32 8, %s22
        %v718 = vld [vmem:[%s2] sm:$0x1]
        %v719 = vld [vmem:[%s673] sm:$0xf]
        %v720 = vld [vmem:[%s673 + $0x4] sm:$0xf]
        %v721 = vld [vmem:[%s673 + $0x8] sm:$0xf]
        %v722 = vld [vmem:[%s673 + $0xc] sm:$0xf]
        %v723 = vld [vmem:[%s673 + $0x10] sm:$0xf]
        %v724 = vld [vmem:[%s673 + $0x14] sm:$0xf]
        %v725 = vld [vmem:[%s673 + $0x18] sm:$0xf]
        %v726 = vld [vmem:[%s673 + $0x1c] sm:$0xf]
        %v727 = vld [vmem:[%s673 + $0x20] sm:$0xf]
        %v728 = vld [vmem:[%s1] sm:$0xff]
        %v729 = vld [vmem:[%s1 + $0x8] sm:$0xff]
        %v730 = vld [vmem:[%s1 + $0x10] sm:$0xff]
        %v731 = vld [vmem:[%s1 + $0x18] sm:$0xff]
        %v732 = vld [vmem:[%s1 + $0x20] sm:$0xff]
        %v733 = vld [vmem:[%s1 + $0x28] sm:$0xff]
        %v734 = vld [vmem:[%s1 + $0x30] sm:$0xff]
        %v735 = vld [vmem:[%s1 + $0x38] sm:$0xff]
        %v736 = vld [vmem:[%s1 + $0x40] sm:$0xff]
        %v737 = vld [vmem:[%s1 + $0x48] sm:$0xff]
        %v738 = vld [vmem:[%s1 + $0x50] sm:$0xff]
        %v739 = vld [vmem:[%s1 + $0x58] sm:$0xff]
        %v740 = vld [vmem:[%s1 + $0x60] sm:$0xff]
        %v741 = vld [vmem:[%s1 + $0x68] sm:$0xff]
        %v742 = vld [vmem:[%s1 + $0x70] sm:$0xff]
        %v743 = vld [vmem:[%s1 + $0x78] sm:$0xff]
        %s744 = scalar_lea.vmem %s673, 36 [#allocation2]
        %v745 = vld [vmem:[%s744] sm:$0xf]
        %v746 = vld [vmem:[%s744 + $0x4] sm:$0xf]
        %v747 = vld [vmem:[%s744 + $0x8] sm:$0xf]
        %v748 = vld [vmem:[%s744 + $0xc] sm:$0xf]
        %v749 = vld [vmem:[%s744 + $0x10] sm:$0xf]
        %v750 = vld [vmem:[%s744 + $0x14] sm:$0xf]
        %v751 = vld [vmem:[%s744 + $0x18] sm:$0xf]
        %v752 = vld [vmem:[%s744 + $0x1c] sm:$0xf]
        %v753 = vld [vmem:[%s744 + $0x20] sm:$0xf]
        %s754 = scalar_lea.vmem %s1, 128
        %v755 = vld [vmem:[%s754] sm:$0xff]
        %v756 = vld [vmem:[%s754 + $0x8] sm:$0xff]
        %v757 = vld [vmem:[%s754 + $0x10] sm:$0xff]
        %v758 = vld [vmem:[%s754 + $0x18] sm:$0xff]
        %v759 = vld [vmem:[%s754 + $0x20] sm:$0xff]
        %v760 = vld [vmem:[%s754 + $0x28] sm:$0xff]
        %v761 = vld [vmem:[%s754 + $0x30] sm:$0xff]
        %v762 = vld [vmem:[%s754 + $0x38] sm:$0xff]
        %v763 = vld [vmem:[%s754 + $0x40] sm:$0xff]
        %v764 = vld [vmem:[%s754 + $0x48] sm:$0xff]
        %v765 = vld [vmem:[%s754 + $0x50] sm:$0xff]
        %v766 = vld [vmem:[%s754 + $0x58] sm:$0xff]
        %v767 = vld [vmem:[%s754 + $0x60] sm:$0xff]
        %v768 = vld [vmem:[%s754 + $0x68] sm:$0xff]
        %v769 = vld [vmem:[%s754 + $0x70] sm:$0xff]
        %v770 = vld [vmem:[%s754 + $0x78] sm:$0xff]
        %v780 = vunpack.c.l.b16 %v745
        %v781 = vunpack.c.l.b16 %v746
        %v782 = vunpack.c.l.b16 %v747
        %v783 = vunpack.c.l.b16 %v748
        %v784 = vunpack.c.l.b16 %v749
        %v785 = vunpack.c.l.b16 %v750
        %v786 = vunpack.c.l.b16 %v751
        %v787 = vunpack.c.l.b16 %v752
        %v788 = vunpack.c.l.b16 %v753
        %v789 = vpack.c.b16 %v781, %v780
        %v790 = vpack.c.b16 %v783, %v782
        %v791 = vpack.c.b16 %v785, %v784
        %v792 = vpack.c.b16 %v787, %v786
        %v793 = vpack.c.b16 %v788, %v788
        %v815 = vunpack.c.l.b16 %v755
        %v816 = vunpack.c.h.b16 %v755
        %v817 = vunpack.c.l.b16 %v756
        %v818 = vunpack.c.h.b16 %v756
        %v819 = vunpack.c.l.b16 %v757
        %v820 = vunpack.c.h.b16 %v757
        %v821 = vunpack.c.l.b16 %v758
        %v822 = vunpack.c.h.b16 %v758
        %v823 = vunpack.c.l.b16 %v759
        %v824 = vunpack.c.h.b16 %v759
        %v825 = vunpack.c.l.b16 %v760
        %v826 = vunpack.c.h.b16 %v760
        %v827 = vunpack.c.l.b16 %v761
        %v828 = vunpack.c.h.b16 %v761
        %v829 = vunpack.c.l.b16 %v762
        %v830 = vunpack.c.h.b16 %v762
        %v831 = vunpack.c.l.b16 %v763
        %v832 = vunpack.c.h.b16 %v763
        %v833 = vunpack.c.l.b16 %v764
        %v834 = vunpack.c.h.b16 %v764
        %v835 = vunpack.c.l.b16 %v765
        %v836 = vunpack.c.h.b16 %v765
        %v837 = vunpack.c.l.b16 %v766
        %v838 = vunpack.c.h.b16 %v766
        %v839 = vunpack.c.l.b16 %v767
        %v840 = vunpack.c.h.b16 %v767
        %v841 = vunpack.c.l.b16 %v768
        %v842 = vunpack.c.h.b16 %v768
        %v843 = vunpack.c.l.b16 %v769
        %v844 = vunpack.c.h.b16 %v769
        %v845 = vunpack.c.l.b16 %v770
        %v846 = vunpack.c.h.b16 %v770
        %v847 = vpack.c.b16 %v817, %v815
        %v848 = vpack.c.b16 %v818, %v816
        %v849 = vpack.c.b16 %v821, %v819
        %v850 = vpack.c.b16 %v822, %v820
        %v851 = vpack.c.b16 %v825, %v823
        %v852 = vpack.c.b16 %v826, %v824
        %v853 = vpack.c.b16 %v829, %v827
        %v854 = vpack.c.b16 %v830, %v828
        %v855 = vpack.c.b16 %v833, %v831
        %v856 = vpack.c.b16 %v834, %v832
        %v857 = vpack.c.b16 %v837, %v835
        %v858 = vpack.c.b16 %v838, %v836
        %v859 = vpack.c.b16 %v841, %v839
        %v860 = vpack.c.b16 %v842, %v840
        %v861 = vpack.c.b16 %v845, %v843
        %v862 = vpack.c.b16 %v846, %v844
        %879 = vmatprep.subr.bf16.mxu0 %v862
        %880 = vmatpush1.bf16.msra.mxu0 %v861
        %881 = vmatprep.subr.bf16.mxu0 %v860
        %882 = vmatpush1.bf16.msra.mxu0 %v859
        %883 = vmatprep.subr.bf16.mxu0 %v858
        %884 = vmatpush1.bf16.msra.mxu0 %v857
        %885 = vmatprep.subr.bf16.mxu0 %v856
        %886 = vmatpush1.bf16.msra.mxu0 %v855
        %887 = vmatprep.subr.bf16.mxu0 %v854
        %888 = vmatpush1.bf16.msra.mxu0 %v853
        %889 = vmatprep.subr.bf16.mxu0 %v852
        %890 = vmatpush1.bf16.msra.mxu0 %v851
        %891 = vmatprep.subr.bf16.mxu0 %v850
        %892 = vmatpush1.bf16.msra.mxu0 %v849
        %893 = vmatprep.subr.bf16.mxu0 %v848
        %894 = vmatpush1.bf16.msra.mxu0 %v847
        %895 = vmatprep.subr.bf16.mxu0 0
        %896 = vmatpush2.bf16.msra.mxu0 0
        %897 = vmatprep.subr.bf16.mxu0 0
        %898 = vmatpush2.bf16.msra.mxu0 0
        %899 = vmatprep.subr.bf16.mxu0 0
        %900 = vmatpush2.bf16.msra.mxu0 0
        %901 = vmatprep.subr.bf16.mxu0 0
        %902 = vmatpush2.bf16.msra.mxu0 0
        %903 = vmatprep.subr.bf16.mxu0 0
        %904 = vmatpush2.bf16.msra.mxu0 0
        %905 = vmatprep.subr.bf16.mxu0 0
        %906 = vmatpush2.bf16.msra.mxu0 0
        %907 = vmatprep.subr.bf16.mxu0 0
        %908 = vmatpush2.bf16.msra.mxu0 0
        %909 = vmatprep.subr.bf16.mxu0 0
        %910 = vmatpush2.bf16.msra.mxu0 0
        %911 = vmatprep.mubr.bf16.mxu0 0
        %912 = vmatmul.mubr.bf16.gmra.mxu0 %v789
        %v913 = vpop.f32.mrf.mxu0
        %v914 = vadd.f32 0.0, %v913
        %v915 = vpop.f32.mrf.mxu0
        %v916 = vadd.f32 0.0, %v915
        %v917 = vpop.f32.mrf.mxu0
        %v918 = vadd.f32 0.0, %v917
        %v919 = vpop.f32.mrf.mxu0
        %v920 = vadd.f32 0.0, %v919
        %921 = vmatprep.mubr.bf16.mxu0 0
        %922 = vmatmul.mubr.bf16.gmra.mxu0 %v790
        %v923 = vpop.f32.mrf.mxu0
        %v924 = vadd.f32 0.0, %v923
        %v925 = vpop.f32.mrf.mxu0
        %v926 = vadd.f32 0.0, %v925
        %v927 = vpop.f32.mrf.mxu0
        %v928 = vadd.f32 0.0, %v927
        %v929 = vpop.f32.mrf.mxu0
        %v930 = vadd.f32 0.0, %v929
        %931 = vmatprep.mubr.bf16.mxu0 0
        %932 = vmatmul.mubr.bf16.gmra.mxu0 %v791
        %v933 = vpop.f32.mrf.mxu0
        %v934 = vadd.f32 0.0, %v933
        %v935 = vpop.f32.mrf.mxu0
        %v936 = vadd.f32 0.0, %v935
        %v937 = vpop.f32.mrf.mxu0
        %v938 = vadd.f32 0.0, %v937
        %v939 = vpop.f32.mrf.mxu0
        %v940 = vadd.f32 0.0, %v939
        %941 = vmatprep.mubr.bf16.mxu0 0
        %942 = vmatmul.mubr.bf16.gmra.mxu0 %v792
        %v943 = vpop.f32.mrf.mxu0
        %v944 = vadd.f32 0.0, %v943
        %v945 = vpop.f32.mrf.mxu0
        %v946 = vadd.f32 0.0, %v945
        %v947 = vpop.f32.mrf.mxu0
        %v948 = vadd.f32 0.0, %v947
        %v949 = vpop.f32.mrf.mxu0
        %v950 = vadd.f32 0.0, %v949
        %951 = vmatprep.mubr.bf16.mxu0 0
        %952 = vmatmul.mubr.bf16.gmra.mxu0 %v793
        %v953 = vpop.f32.mrf.mxu0
        %v954 = vadd.f32 0.0, %v953
        %v955 = vpop.f32.mrf.mxu0
        %v956 = vadd.f32 0.0, %v955
        %v957 = vpop.f32.mrf.mxu0
        %v958 = vpop.f32.mrf.mxu0
        %959 = vdwg.mxu0
        %v969 = vunpack.c.l.b16 %v719
        %v970 = vunpack.c.l.b16 %v720
        %v971 = vunpack.c.l.b16 %v721
        %v972 = vunpack.c.l.b16 %v722
        %v973 = vunpack.c.l.b16 %v723
        %v974 = vunpack.c.l.b16 %v724
        %v975 = vunpack.c.l.b16 %v725
        %v976 = vunpack.c.l.b16 %v726
        %v977 = vunpack.c.l.b16 %v727
        %v978 = vpack.c.b16 %v970, %v969
        %v979 = vpack.c.b16 %v972, %v971
        %v980 = vpack.c.b16 %v974, %v973
        %v981 = vpack.c.b16 %v976, %v975
        %v982 = vpack.c.b16 %v977, %v977
        %v1004 = vunpack.c.l.b16 %v728
        %v1005 = vunpack.c.h.b16 %v728
        %v1006 = vunpack.c.l.b16 %v729
        %v1007 = vunpack.c.h.b16 %v729
        %v1008 = vunpack.c.l.b16 %v730
        %v1009 = vunpack.c.h.b16 %v730
        %v1010 = vunpack.c.l.b16 %v731
        %v1011 = vunpack.c.h.b16 %v731
        %v1012 = vunpack.c.l.b16 %v732
        %v1013 = vunpack.c.h.b16 %v732
        %v1014 = vunpack.c.l.b16 %v733
        %v1015 = vunpack.c.h.b16 %v733
        %v1016 = vunpack.c.l.b16 %v734
        %v1017 = vunpack.c.h.b16 %v734
        %v1018 = vunpack.c.l.b16 %v735
        %v1019 = vunpack.c.h.b16 %v735
        %v1020 = vunpack.c.l.b16 %v736
        %v1021 = vunpack.c.h.b16 %v736
        %v1022 = vunpack.c.l.b16 %v737
        %v1023 = vunpack.c.h.b16 %v737
        %v1024 = vunpack.c.l.b16 %v738
        %v1025 = vunpack.c.h.b16 %v738
        %v1026 = vunpack.c.l.b16 %v739
        %v1027 = vunpack.c.h.b16 %v739
        %v1028 = vunpack.c.l.b16 %v740
        %v1029 = vunpack.c.h.b16 %v740
        %v1030 = vunpack.c.l.b16 %v741
        %v1031 = vunpack.c.h.b16 %v741
        %v1032 = vunpack.c.l.b16 %v742
        %v1033 = vunpack.c.h.b16 %v742
        %v1034 = vunpack.c.l.b16 %v743
        %v1035 = vunpack.c.h.b16 %v743
        %v1036 = vpack.c.b16 %v1006, %v1004
        %v1037 = vpack.c.b16 %v1007, %v1005
        %v1038 = vpack.c.b16 %v1010, %v1008
        %v1039 = vpack.c.b16 %v1011, %v1009
        %v1040 = vpack.c.b16 %v1014, %v1012
        %v1041 = vpack.c.b16 %v1015, %v1013
        %v1042 = vpack.c.b16 %v1018, %v1016
        %v1043 = vpack.c.b16 %v1019, %v1017
        %v1044 = vpack.c.b16 %v1022, %v1020
        %v1045 = vpack.c.b16 %v1023, %v1021
        %v1046 = vpack.c.b16 %v1026, %v1024
        %v1047 = vpack.c.b16 %v1027, %v1025
        %v1048 = vpack.c.b16 %v1030, %v1028
        %v1049 = vpack.c.b16 %v1031, %v1029
        %v1050 = vpack.c.b16 %v1034, %v1032
        %v1051 = vpack.c.b16 %v1035, %v1033
        %1068 = vmatprep.subr.bf16.mxu0 %v1051
        %1069 = vmatpush1.bf16.msra.mxu0 %v1050
        %1070 = vmatprep.subr.bf16.mxu0 %v1049
        %1071 = vmatpush1.bf16.msra.mxu0 %v1048
        %1072 = vmatprep.subr.bf16.mxu0 %v1047
        %1073 = vmatpush1.bf16.msra.mxu0 %v1046
        %1074 = vmatprep.subr.bf16.mxu0 %v1045
        %1075 = vmatpush1.bf16.msra.mxu0 %v1044
        %1076 = vmatprep.subr.bf16.mxu0 %v1043
        %1077 = vmatpush1.bf16.msra.mxu0 %v1042
        %1078 = vmatprep.subr.bf16.mxu0 %v1041
        %1079 = vmatpush1.bf16.msra.mxu0 %v1040
        %1080 = vmatprep.subr.bf16.mxu0 %v1039
        %1081 = vmatpush1.bf16.msra.mxu0 %v1038
        %1082 = vmatprep.subr.bf16.mxu0 %v1037
        %1083 = vmatpush1.bf16.msra.mxu0 %v1036
        %1084 = vmatprep.subr.bf16.mxu0 0
        %1085 = vmatpush2.bf16.msra.mxu0 0
        %1086 = vmatprep.subr.bf16.mxu0 0
        %1087 = vmatpush2.bf16.msra.mxu0 0
        %1088 = vmatprep.subr.bf16.mxu0 0
        %1089 = vmatpush2.bf16.msra.mxu0 0
        %1090 = vmatprep.subr.bf16.mxu0 0
        %1091 = vmatpush2.bf16.msra.mxu0 0
        %1092 = vmatprep.subr.bf16.mxu0 0
        %1093 = vmatpush2.bf16.msra.mxu0 0
        %1094 = vmatprep.subr.bf16.mxu0 0
        %1095 = vmatpush2.bf16.msra.mxu0 0
        %1096 = vmatprep.subr.bf16.mxu0 0
        %1097 = vmatpush2.bf16.msra.mxu0 0
        %1098 = vmatprep.subr.bf16.mxu0 0
        %1099 = vmatpush2.bf16.msra.mxu0 0
        %1100 = vmatprep.mubr.bf16.mxu0 0
        %1101 = vmatmul.mubr.bf16.gmra.mxu0 %v978
        %v1102 = vpop.f32.mrf.mxu0
        %v1103 = vadd.f32 %v914, %v1102
        %v1104 = vpop.f32.mrf.mxu0
        %v1105 = vadd.f32 %v916, %v1104
        %v1106 = vpop.f32.mrf.mxu0
        %v1107 = vadd.f32 %v918, %v1106
        %v1108 = vpop.f32.mrf.mxu0
        %v1109 = vadd.f32 %v920, %v1108
        %1110 = vmatprep.mubr.bf16.mxu0 0
        %1111 = vmatmul.mubr.bf16.gmra.mxu0 %v979
        %v1112 = vpop.f32.mrf.mxu0
        %v1113 = vadd.f32 %v924, %v1112
        %v1114 = vpop.f32.mrf.mxu0
        %v1115 = vadd.f32 %v926, %v1114
        %v1116 = vpop.f32.mrf.mxu0
        %v1117 = vadd.f32 %v928, %v1116
        %v1118 = vpop.f32.mrf.mxu0
        %v1119 = vadd.f32 %v930, %v1118
        %1120 = vmatprep.mubr.bf16.mxu0 0
        %1121 = vmatmul.mubr.bf16.gmra.mxu0 %v980
        %v1122 = vpop.f32.mrf.mxu0
        %v1123 = vadd.f32 %v934, %v1122
        %v1124 = vpop.f32.mrf.mxu0
        %v1125 = vadd.f32 %v936, %v1124
        %v1126 = vpop.f32.mrf.mxu0
        %v1127 = vadd.f32 %v938, %v1126
        %v1128 = vpop.f32.mrf.mxu0
        %v1129 = vadd.f32 %v940, %v1128
        %1130 = vmatprep.mubr.bf16.mxu0 0
        %1131 = vmatmul.mubr.bf16.gmra.mxu0 %v981
        %v1132 = vpop.f32.mrf.mxu0
        %v1133 = vadd.f32 %v944, %v1132
        %v1134 = vpop.f32.mrf.mxu0
        %v1135 = vadd.f32 %v946, %v1134
        %v1136 = vpop.f32.mrf.mxu0
        %v1137 = vadd.f32 %v948, %v1136
        %v1138 = vpop.f32.mrf.mxu0
        %v1139 = vadd.f32 %v950, %v1138
        %1140 = vmatprep.mubr.bf16.mxu0 0
        %1141 = vmatmul.mubr.bf16.gmra.mxu0 %v982
        %v1142 = vpop.f32.mrf.mxu0
        %v1143 = vadd.f32 %v954, %v1142
        %v1144 = vpop.f32.mrf.mxu0
        %v1145 = vadd.f32 %v956, %v1144
        %v1146 = vpop.f32.mrf.mxu0
        %v1147 = vpop.f32.mrf.mxu0
        %1148 = vdwg.mxu0
        %s1149 = scalar_lea.vmem %s673, 72 [#allocation2]
        %v1150 = vld [vmem:[%s1149] sm:$0xf]
        %v1151 = vld [vmem:[%s1149 + $0x4] sm:$0xf]
        %v1152 = vld [vmem:[%s1149 + $0x8] sm:$0xf]
        %v1153 = vld [vmem:[%s1149 + $0xc] sm:$0xf]
        %v1154 = vld [vmem:[%s1149 + $0x10] sm:$0xf]
        %v1155 = vld [vmem:[%s1149 + $0x14] sm:$0xf]
        %v1156 = vld [vmem:[%s1149 + $0x18] sm:$0xf]
        %v1157 = vld [vmem:[%s1149 + $0x1c] sm:$0xf]
        %v1158 = vld [vmem:[%s1149 + $0x20] sm:$0xf]
        %s1159 = scalar_lea.vmem %s1, 256
        %v1160 = vld [vmem:[%s1159] sm:$0xff]
        %v1161 = vld [vmem:[%s1159 + $0x8] sm:$0xff]
        %v1162 = vld [vmem:[%s1159 + $0x10] sm:$0xff]
        %v1163 = vld [vmem:[%s1159 + $0x18] sm:$0xff]
        %v1164 = vld [vmem:[%s1159 + $0x20] sm:$0xff]
        %v1165 = vld [vmem:[%s1159 + $0x28] sm:$0xff]
        %v1166 = vld [vmem:[%s1159 + $0x30] sm:$0xff]
        %v1167 = vld [vmem:[%s1159 + $0x38] sm:$0xff]
        %v1168 = vld [vmem:[%s1159 + $0x40] sm:$0xff]
        %v1169 = vld [vmem:[%s1159 + $0x48] sm:$0xff]
        %v1170 = vld [vmem:[%s1159 + $0x50] sm:$0xff]
        %v1171 = vld [vmem:[%s1159 + $0x58] sm:$0xff]
        %v1172 = vld [vmem:[%s1159 + $0x60] sm:$0xff]
        %v1173 = vld [vmem:[%s1159 + $0x68] sm:$0xff]
        %v1174 = vld [vmem:[%s1159 + $0x70] sm:$0xff]
        %v1175 = vld [vmem:[%s1159 + $0x78] sm:$0xff]
        %v1185 = vunpack.c.l.b16 %v1150
        %v1186 = vunpack.c.l.b16 %v1151
        %v1187 = vunpack.c.l.b16 %v1152
        %v1188 = vunpack.c.l.b16 %v1153
        %v1189 = vunpack.c.l.b16 %v1154
        %v1190 = vunpack.c.l.b16 %v1155
        %v1191 = vunpack.c.l.b16 %v1156
        %v1192 = vunpack.c.l.b16 %v1157
        %v1193 = vunpack.c.l.b16 %v1158
        %v1194 = vpack.c.b16 %v1186, %v1185
        %v1195 = vpack.c.b16 %v1188, %v1187
        %v1196 = vpack.c.b16 %v1190, %v1189
        %v1197 = vpack.c.b16 %v1192, %v1191
        %v1198 = vpack.c.b16 %v1193, %v1193
        %v1220 = vunpack.c.l.b16 %v1160
        %v1221 = vunpack.c.h.b16 %v1160
        %v1222 = vunpack.c.l.b16 %v1161
        %v1223 = vunpack.c.h.b16 %v1161
        %v1224 = vunpack.c.l.b16 %v1162
        %v1225 = vunpack.c.h.b16 %v1162
        %v1226 = vunpack.c.l.b16 %v1163
        %v1227 = vunpack.c.h.b16 %v1163
        %v1228 = vunpack.c.l.b16 %v1164
        %v1229 = vunpack.c.h.b16 %v1164
        %v1230 = vunpack.c.l.b16 %v1165
        %v1231 = vunpack.c.h.b16 %v1165
        %v1232 = vunpack.c.l.b16 %v1166
        %v1233 = vunpack.c.h.b16 %v1166
        %v1234 = vunpack.c.l.b16 %v1167
        %v1235 = vunpack.c.h.b16 %v1167
        %v1236 = vunpack.c.l.b16 %v1168
        %v1237 = vunpack.c.h.b16 %v1168
        %v1238 = vunpack.c.l.b16 %v1169
        %v1239 = vunpack.c.h.b16 %v1169
        %v1240 = vunpack.c.l.b16 %v1170
        %v1241 = vunpack.c.h.b16 %v1170
        %v1242 = vunpack.c.l.b16 %v1171
        %v1243 = vunpack.c.h.b16 %v1171
        %v1244 = vunpack.c.l.b16 %v1172
        %v1245 = vunpack.c.h.b16 %v1172
        %v1246 = vunpack.c.l.b16 %v1173
        %v1247 = vunpack.c.h.b16 %v1173
        %v1248 = vunpack.c.l.b16 %v1174
        %v1249 = vunpack.c.h.b16 %v1174
        %v1250 = vunpack.c.l.b16 %v1175
        %v1251 = vunpack.c.h.b16 %v1175
        %v1252 = vpack.c.b16 %v1222, %v1220
        %v1253 = vpack.c.b16 %v1223, %v1221
        %v1254 = vpack.c.b16 %v1226, %v1224
        %v1255 = vpack.c.b16 %v1227, %v1225
        %v1256 = vpack.c.b16 %v1230, %v1228
        %v1257 = vpack.c.b16 %v1231, %v1229
        %v1258 = vpack.c.b16 %v1234, %v1232
        %v1259 = vpack.c.b16 %v1235, %v1233
        %v1260 = vpack.c.b16 %v1238, %v1236
        %v1261 = vpack.c.b16 %v1239, %v1237
        %v1262 = vpack.c.b16 %v1242, %v1240
        %v1263 = vpack.c.b16 %v1243, %v1241
        %v1264 = vpack.c.b16 %v1246, %v1244
        %v1265 = vpack.c.b16 %v1247, %v1245
        %v1266 = vpack.c.b16 %v1250, %v1248
        %v1267 = vpack.c.b16 %v1251, %v1249
        %1284 = vmatprep.subr.bf16.mxu0 %v1267
        %1285 = vmatpush1.bf16.msra.mxu0 %v1266
        %1286 = vmatprep.subr.bf16.mxu0 %v1265
        %1287 = vmatpush1.bf16.msra.mxu0 %v1264
        %1288 = vmatprep.subr.bf16.mxu0 %v1263
        %1289 = vmatpush1.bf16.msra.mxu0 %v1262
        %1290 = vmatprep.subr.bf16.mxu0 %v1261
        %1291 = vmatpush1.bf16.msra.mxu0 %v1260
        %1292 = vmatprep.subr.bf16.mxu0 %v1259
        %1293 = vmatpush1.bf16.msra.mxu0 %v1258
        %1294 = vmatprep.subr.bf16.mxu0 %v1257
        %1295 = vmatpush1.bf16.msra.mxu0 %v1256
        %1296 = vmatprep.subr.bf16.mxu0 %v1255
        %1297 = vmatpush1.bf16.msra.mxu0 %v1254
        %1298 = vmatprep.subr.bf16.mxu0 %v1253
        %1299 = vmatpush1.bf16.msra.mxu0 %v1252
        %1300 = vmatprep.subr.bf16.mxu0 0
        %1301 = vmatpush2.bf16.msra.mxu0 0
        %1302 = vmatprep.subr.bf16.mxu0 0
        %1303 = vmatpush2.bf16.msra.mxu0 0
        %1304 = vmatprep.subr.bf16.mxu0 0
        %1305 = vmatpush2.bf16.msra.mxu0 0
        %1306 = vmatprep.subr.bf16.mxu0 0
        %1307 = vmatpush2.bf16.msra.mxu0 0
        %1308 = vmatprep.subr.bf16.mxu0 0
        %1309 = vmatpush2.bf16.msra.mxu0 0
        %1310 = vmatprep.subr.bf16.mxu0 0
        %1311 = vmatpush2.bf16.msra.mxu0 0
        %1312 = vmatprep.subr.bf16.mxu0 0
        %1313 = vmatpush2.bf16.msra.mxu0 0
        %1314 = vmatprep.subr.bf16.mxu0 0
        %1315 = vmatpush2.bf16.msra.mxu0 0
        %1316 = vmatprep.mubr.bf16.mxu0 0
        %1317 = vmatmul.mubr.bf16.gmra.mxu0 %v1194
        %v1318 = vpop.f32.mrf.mxu0
        %v1319 = vadd.f32 0.0, %v1318
        %v1320 = vpop.f32.mrf.mxu0
        %v1321 = vadd.f32 0.0, %v1320
        %v1322 = vpop.f32.mrf.mxu0
        %v1323 = vadd.f32 0.0, %v1322
        %v1324 = vpop.f32.mrf.mxu0
        %v1325 = vadd.f32 0.0, %v1324
        %1326 = vmatprep.mubr.bf16.mxu0 0
        %1327 = vmatmul.mubr.bf16.gmra.mxu0 %v1195
        %v1328 = vpop.f32.mrf.mxu0
        %v1329 = vadd.f32 0.0, %v1328
        %v1330 = vpop.f32.mrf.mxu0
        %v1331 = vadd.f32 0.0, %v1330
        %v1332 = vpop.f32.mrf.mxu0
        %v1333 = vadd.f32 0.0, %v1332
        %v1334 = vpop.f32.mrf.mxu0
        %v1335 = vadd.f32 0.0, %v1334
        %1336 = vmatprep.mubr.bf16.mxu0 0
        %1337 = vmatmul.mubr.bf16.gmra.mxu0 %v1196
        %v1338 = vpop.f32.mrf.mxu0
        %v1339 = vadd.f32 0.0, %v1338
        %v1340 = vpop.f32.mrf.mxu0
        %v1341 = vadd.f32 0.0, %v1340
        %v1342 = vpop.f32.mrf.mxu0
        %v1343 = vadd.f32 0.0, %v1342
        %v1344 = vpop.f32.mrf.mxu0
        %v1345 = vadd.f32 0.0, %v1344
        %1346 = vmatprep.mubr.bf16.mxu0 0
        %1347 = vmatmul.mubr.bf16.gmra.mxu0 %v1197
        %v1348 = vpop.f32.mrf.mxu0
        %v1349 = vadd.f32 0.0, %v1348
        %v1350 = vpop.f32.mrf.mxu0
        %v1351 = vadd.f32 0.0, %v1350
        %v1352 = vpop.f32.mrf.mxu0
        %v1353 = vadd.f32 0.0, %v1352
        %v1354 = vpop.f32.mrf.mxu0
        %v1355 = vadd.f32 0.0, %v1354
        %1356 = vmatprep.mubr.bf16.mxu0 0
        %1357 = vmatmul.mubr.bf16.gmra.mxu0 %v1198
        %v1358 = vpop.f32.mrf.mxu0
        %v1359 = vadd.f32 0.0, %v1358
        %v1360 = vpop.f32.mrf.mxu0
        %v1361 = vadd.f32 0.0, %v1360
        %v1362 = vpop.f32.mrf.mxu0
        %v1363 = vpop.f32.mrf.mxu0
        %1364 = vdwg.mxu0
        %v1365 = vadd.f32 %v1103, %v1319
        %v1366 = vadd.f32 %v1105, %v1321
        %v1367 = vadd.f32 %v1107, %v1323
        %v1368 = vadd.f32 %v1109, %v1325
        %v1369 = vadd.f32 %v1113, %v1329
        %v1370 = vadd.f32 %v1115, %v1331
        %v1371 = vadd.f32 %v1117, %v1333
        %v1372 = vadd.f32 %v1119, %v1335
        %v1373 = vadd.f32 %v1123, %v1339
        %v1374 = vadd.f32 %v1125, %v1341
        %v1375 = vadd.f32 %v1127, %v1343
        %v1376 = vadd.f32 %v1129, %v1345
        %v1377 = vadd.f32 %v1133, %v1349
        %v1378 = vadd.f32 %v1135, %v1351
        %v1379 = vadd.f32 %v1137, %v1353
        %v1380 = vadd.f32 %v1139, %v1355
        %v1381 = vadd.f32 %v1143, %v1359
        %v1382 = vadd.f32 %v1145, %v1361
        %s1383 = scalar_lea.vmem %s673, 108 [#allocation2]
        %v1384 = vld [vmem:[%s1383] sm:$0xf]
        %v1385 = vld [vmem:[%s1383 + $0x4] sm:$0xf]
        %v1386 = vld [vmem:[%s1383 + $0x8] sm:$0xf]
        %v1387 = vld [vmem:[%s1383 + $0xc] sm:$0xf]
        %v1388 = vld [vmem:[%s1383 + $0x10] sm:$0xf]
        %v1389 = vld [vmem:[%s1383 + $0x14] sm:$0xf]
        %v1390 = vld [vmem:[%s1383 + $0x18] sm:$0xf]
        %v1391 = vld [vmem:[%s1383 + $0x1c] sm:$0xf]
        %v1392 = vld [vmem:[%s1383 + $0x20] sm:$0xf]
        %s1393 = scalar_lea.vmem %s1, 384
        %v1394 = vld [vmem:[%s1393] sm:$0xff]
        %v1395 = vld [vmem:[%s1393 + $0x8] sm:$0xff]
        %v1396 = vld [vmem:[%s1393 + $0x10] sm:$0xff]
        %v1397 = vld [vmem:[%s1393 + $0x18] sm:$0xff]
        %v1398 = vld [vmem:[%s1393 + $0x20] sm:$0xff]
        %v1399 = vld [vmem:[%s1393 + $0x28] sm:$0xff]
        %v1400 = vld [vmem:[%s1393 + $0x30] sm:$0xff]
        %v1401 = vld [vmem:[%s1393 + $0x38] sm:$0xff]
        %v1402 = vld [vmem:[%s1393 + $0x40] sm:$0xff]
        %v1403 = vld [vmem:[%s1393 + $0x48] sm:$0xff]
        %v1404 = vld [vmem:[%s1393 + $0x50] sm:$0xff]
        %v1405 = vld [vmem:[%s1393 + $0x58] sm:$0xff]
        %v1406 = vld [vmem:[%s1393 + $0x60] sm:$0xff]
        %v1407 = vld [vmem:[%s1393 + $0x68] sm:$0xff]
        %v1408 = vld [vmem:[%s1393 + $0x70] sm:$0xff]
        %v1409 = vld [vmem:[%s1393 + $0x78] sm:$0xff]
        %v1419 = vunpack.c.l.b16 %v1384
        %v1420 = vunpack.c.l.b16 %v1385
        %v1421 = vunpack.c.l.b16 %v1386
        %v1422 = vunpack.c.l.b16 %v1387
        %v1423 = vunpack.c.l.b16 %v1388
        %v1424 = vunpack.c.l.b16 %v1389
        %v1425 = vunpack.c.l.b16 %v1390
        %v1426 = vunpack.c.l.b16 %v1391
        %v1427 = vunpack.c.l.b16 %v1392
        %v1428 = vpack.c.b16 %v1420, %v1419
        %v1429 = vpack.c.b16 %v1422, %v1421
        %v1430 = vpack.c.b16 %v1424, %v1423
        %v1431 = vpack.c.b16 %v1426, %v1425
        %v1432 = vpack.c.b16 %v1427, %v1427
        %v1454 = vunpack.c.l.b16 %v1394
        %v1455 = vunpack.c.h.b16 %v1394
        %v1456 = vunpack.c.l.b16 %v1395
        %v1457 = vunpack.c.h.b16 %v1395
        %v1458 = vunpack.c.l.b16 %v1396
        %v1459 = vunpack.c.h.b16 %v1396
        %v1460 = vunpack.c.l.b16 %v1397
        %v1461 = vunpack.c.h.b16 %v1397
        %v1462 = vunpack.c.l.b16 %v1398
        %v1463 = vunpack.c.h.b16 %v1398
        %v1464 = vunpack.c.l.b16 %v1399
        %v1465 = vunpack.c.h.b16 %v1399
        %v1466 = vunpack.c.l.b16 %v1400
        %v1467 = vunpack.c.h.b16 %v1400
        %v1468 = vunpack.c.l.b16 %v1401
        %v1469 = vunpack.c.h.b16 %v1401
        %v1470 = vunpack.c.l.b16 %v1402
        %v1471 = vunpack.c.h.b16 %v1402
        %v1472 = vunpack.c.l.b16 %v1403
        %v1473 = vunpack.c.h.b16 %v1403
        %v1474 = vunpack.c.l.b16 %v1404
        %v1475 = vunpack.c.h.b16 %v1404
        %v1476 = vunpack.c.l.b16 %v1405
        %v1477 = vunpack.c.h.b16 %v1405
        %v1478 = vunpack.c.l.b16 %v1406
        %v1479 = vunpack.c.h.b16 %v1406
        %v1480 = vunpack.c.l.b16 %v1407
        %v1481 = vunpack.c.h.b16 %v1407
        %v1482 = vunpack.c.l.b16 %v1408
        %v1483 = vunpack.c.h.b16 %v1408
        %v1484 = vunpack.c.l.b16 %v1409
        %v1485 = vunpack.c.h.b16 %v1409
        %v1486 = vpack.c.b16 %v1456, %v1454
        %v1487 = vpack.c.b16 %v1457, %v1455
        %v1488 = vpack.c.b16 %v1460, %v1458
        %v1489 = vpack.c.b16 %v1461, %v1459
        %v1490 = vpack.c.b16 %v1464, %v1462
        %v1491 = vpack.c.b16 %v1465, %v1463
        %v1492 = vpack.c.b16 %v1468, %v1466
        %v1493 = vpack.c.b16 %v1469, %v1467
        %v1494 = vpack.c.b16 %v1472, %v1470
        %v1495 = vpack.c.b16 %v1473, %v1471
        %v1496 = vpack.c.b16 %v1476, %v1474
        %v1497 = vpack.c.b16 %v1477, %v1475
        %v1498 = vpack.c.b16 %v1480, %v1478
        %v1499 = vpack.c.b16 %v1481, %v1479
        %v1500 = vpack.c.b16 %v1484, %v1482
        %v1501 = vpack.c.b16 %v1485, %v1483
        %1518 = vmatprep.subr.bf16.mxu0 %v1501
        %1519 = vmatpush1.bf16.msra.mxu0 %v1500
        %1520 = vmatprep.subr.bf16.mxu0 %v1499
        %1521 = vmatpush1.bf16.msra.mxu0 %v1498
        %1522 = vmatprep.subr.bf16.mxu0 %v1497
        %1523 = vmatpush1.bf16.msra.mxu0 %v1496
        %1524 = vmatprep.subr.bf16.mxu0 %v1495
        %1525 = vmatpush1.bf16.msra.mxu0 %v1494
        %1526 = vmatprep.subr.bf16.mxu0 %v1493
        %1527 = vmatpush1.bf16.msra.mxu0 %v1492
        %1528 = vmatprep.subr.bf16.mxu0 %v1491
        %1529 = vmatpush1.bf16.msra.mxu0 %v1490
        %1530 = vmatprep.subr.bf16.mxu0 %v1489
        %1531 = vmatpush1.bf16.msra.mxu0 %v1488
        %1532 = vmatprep.subr.bf16.mxu0 %v1487
        %1533 = vmatpush1.bf16.msra.mxu0 %v1486
        %1534 = vmatprep.subr.bf16.mxu0 0
        %1535 = vmatpush2.bf16.msra.mxu0 0
        %1536 = vmatprep.subr.bf16.mxu0 0
        %1537 = vmatpush2.bf16.msra.mxu0 0
        %1538 = vmatprep.subr.bf16.mxu0 0
        %1539 = vmatpush2.bf16.msra.mxu0 0
        %1540 = vmatprep.subr.bf16.mxu0 0
        %1541 = vmatpush2.bf16.msra.mxu0 0
        %1542 = vmatprep.subr.bf16.mxu0 0
        %1543 = vmatpush2.bf16.msra.mxu0 0
        %1544 = vmatprep.subr.bf16.mxu0 0
        %1545 = vmatpush2.bf16.msra.mxu0 0
        %1546 = vmatprep.subr.bf16.mxu0 0
        %1547 = vmatpush2.bf16.msra.mxu0 0
        %1548 = vmatprep.subr.bf16.mxu0 0
        %1549 = vmatpush2.bf16.msra.mxu0 0
        %1550 = vmatprep.mubr.bf16.mxu0 0
        %1551 = vmatmul.mubr.bf16.gmra.mxu0 %v1428
        %v1552 = vpop.f32.mrf.mxu0
        %v1553 = vadd.f32 0.0, %v1552
        %v1554 = vpop.f32.mrf.mxu0
        %v1555 = vadd.f32 0.0, %v1554
        %v1556 = vpop.f32.mrf.mxu0
        %v1557 = vadd.f32 0.0, %v1556
        %v1558 = vpop.f32.mrf.mxu0
        %v1559 = vadd.f32 0.0, %v1558
        %1560 = vmatprep.mubr.bf16.mxu0 0
        %1561 = vmatmul.mubr.bf16.gmra.mxu0 %v1429
        %v1562 = vpop.f32.mrf.mxu0
        %v1563 = vadd.f32 0.0, %v1562
        %v1564 = vpop.f32.mrf.mxu0
        %v1565 = vadd.f32 0.0, %v1564
        %v1566 = vpop.f32.mrf.mxu0
        %v1567 = vadd.f32 0.0, %v1566
        %v1568 = vpop.f32.mrf.mxu0
        %v1569 = vadd.f32 0.0, %v1568
        %1570 = vmatprep.mubr.bf16.mxu0 0
        %1571 = vmatmul.mubr.bf16.gmra.mxu0 %v1430
        %v1572 = vpop.f32.mrf.mxu0
        %v1573 = vadd.f32 0.0, %v1572
        %v1574 = vpop.f32.mrf.mxu0
        %v1575 = vadd.f32 0.0, %v1574
        %v1576 = vpop.f32.mrf.mxu0
        %v1577 = vadd.f32 0.0, %v1576
        %v1578 = vpop.f32.mrf.mxu0
        %v1579 = vadd.f32 0.0, %v1578
        %1580 = vmatprep.mubr.bf16.mxu0 0
        %1581 = vmatmul.mubr.bf16.gmra.mxu0 %v1431
        %v1582 = vpop.f32.mrf.mxu0
        %v1583 = vadd.f32 0.0, %v1582
        %v1584 = vpop.f32.mrf.mxu0
        %v1585 = vadd.f32 0.0, %v1584
        %v1586 = vpop.f32.mrf.mxu0
        %v1587 = vadd.f32 0.0, %v1586
        %v1588 = vpop.f32.mrf.mxu0
        %v1589 = vadd.f32 0.0, %v1588
        %1590 = vmatprep.mubr.bf16.mxu0 0
        %1591 = vmatmul.mubr.bf16.gmra.mxu0 %v1432
        %v1592 = vpop.f32.mrf.mxu0
        %v1593 = vadd.f32 0.0, %v1592
        %v1594 = vpop.f32.mrf.mxu0
        %v1595 = vadd.f32 0.0, %v1594
        %v1596 = vpop.f32.mrf.mxu0
        %v1597 = vpop.f32.mrf.mxu0
        %1598 = vdwg.mxu0
        %v1599 = vadd.f32 %v1365, %v1553
        %v1600 = vadd.f32 %v1366, %v1555
        %v1601 = vadd.f32 %v1367, %v1557
        %v1602 = vadd.f32 %v1368, %v1559
        %v1603 = vadd.f32 %v1369, %v1563
        %v1604 = vadd.f32 %v1370, %v1565
        %v1605 = vadd.f32 %v1371, %v1567
        %v1606 = vadd.f32 %v1372, %v1569
        %v1607 = vadd.f32 %v1373, %v1573
        %v1608 = vadd.f32 %v1374, %v1575
        %v1609 = vadd.f32 %v1375, %v1577
        %v1610 = vadd.f32 %v1376, %v1579
        %v1611 = vadd.f32 %v1377, %v1583
        %v1612 = vadd.f32 %v1378, %v1585
        %v1613 = vadd.f32 %v1379, %v1587
        %v1614 = vadd.f32 %v1380, %v1589
        %v1615 = vadd.f32 %v1381, %v1593
        %v1616 = vadd.f32 %v1382, %v1595
        %s1617 = scalar_lea.vmem %s673, 144 [#allocation2]
        %v1618 = vld [vmem:[%s1617] sm:$0xf]
        %v1619 = vld [vmem:[%s1617 + $0x4] sm:$0xf]
        %v1620 = vld [vmem:[%s1617 + $0x8] sm:$0xf]
        %v1621 = vld [vmem:[%s1617 + $0xc] sm:$0xf]
        %v1622 = vld [vmem:[%s1617 + $0x10] sm:$0xf]
        %v1623 = vld [vmem:[%s1617 + $0x14] sm:$0xf]
        %v1624 = vld [vmem:[%s1617 + $0x18] sm:$0xf]
        %v1625 = vld [vmem:[%s1617 + $0x1c] sm:$0xf]
        %v1626 = vld [vmem:[%s1617 + $0x20] sm:$0xf]
        %s1627 = scalar_lea.vmem %s1, 512
        %v1628 = vld [vmem:[%s1627] sm:$0xff]
        %v1629 = vld [vmem:[%s1627 + $0x8] sm:$0xff]
        %v1630 = vld [vmem:[%s1627 + $0x10] sm:$0xff]
        %v1631 = vld [vmem:[%s1627 + $0x18] sm:$0xff]
        %v1632 = vld [vmem:[%s1627 + $0x20] sm:$0xff]
        %v1633 = vld [vmem:[%s1627 + $0x28] sm:$0xff]
        %v1634 = vld [vmem:[%s1627 + $0x30] sm:$0xff]
        %v1635 = vld [vmem:[%s1627 + $0x38] sm:$0xff]
        %v1636 = vld [vmem:[%s1627 + $0x40] sm:$0xff]
        %v1637 = vld [vmem:[%s1627 + $0x48] sm:$0xff]
        %v1638 = vld [vmem:[%s1627 + $0x50] sm:$0xff]
        %v1639 = vld [vmem:[%s1627 + $0x58] sm:$0xff]
        %v1640 = vld [vmem:[%s1627 + $0x60] sm:$0xff]
        %v1641 = vld [vmem:[%s1627 + $0x68] sm:$0xff]
        %v1642 = vld [vmem:[%s1627 + $0x70] sm:$0xff]
        %v1643 = vld [vmem:[%s1627 + $0x78] sm:$0xff]
        %v1653 = vunpack.c.l.b16 %v1618
        %v1654 = vunpack.c.l.b16 %v1619
        %v1655 = vunpack.c.l.b16 %v1620
        %v1656 = vunpack.c.l.b16 %v1621
        %v1657 = vunpack.c.l.b16 %v1622
        %v1658 = vunpack.c.l.b16 %v1623
        %v1659 = vunpack.c.l.b16 %v1624
        %v1660 = vunpack.c.l.b16 %v1625
        %v1661 = vunpack.c.l.b16 %v1626
        %v1662 = vpack.c.b16 %v1654, %v1653
        %v1663 = vpack.c.b16 %v1656, %v1655
        %v1664 = vpack.c.b16 %v1658, %v1657
        %v1665 = vpack.c.b16 %v1660, %v1659
        %v1666 = vpack.c.b16 %v1661, %v1661
        %v1688 = vunpack.c.l.b16 %v1628
        %v1689 = vunpack.c.h.b16 %v1628
        %v1690 = vunpack.c.l.b16 %v1629
        %v1691 = vunpack.c.h.b16 %v1629
        %v1692 = vunpack.c.l.b16 %v1630
        %v1693 = vunpack.c.h.b16 %v1630
        %v1694 = vunpack.c.l.b16 %v1631
        %v1695 = vunpack.c.h.b16 %v1631
        %v1696 = vunpack.c.l.b16 %v1632
        %v1697 = vunpack.c.h.b16 %v1632
        %v1698 = vunpack.c.l.b16 %v1633
        %v1699 = vunpack.c.h.b16 %v1633
        %v1700 = vunpack.c.l.b16 %v1634
        %v1701 = vunpack.c.h.b16 %v1634
        %v1702 = vunpack.c.l.b16 %v1635
        %v1703 = vunpack.c.h.b16 %v1635
        %v1704 = vunpack.c.l.b16 %v1636
        %v1705 = vunpack.c.h.b16 %v1636
        %v1706 = vunpack.c.l.b16 %v1637
        %v1707 = vunpack.c.h.b16 %v1637
        %v1708 = vunpack.c.l.b16 %v1638
        %v1709 = vunpack.c.h.b16 %v1638
        %v1710 = vunpack.c.l.b16 %v1639
        %v1711 = vunpack.c.h.b16 %v1639
        %v1712 = vunpack.c.l.b16 %v1640
        %v1713 = vunpack.c.h.b16 %v1640
        %v1714 = vunpack.c.l.b16 %v1641
        %v1715 = vunpack.c.h.b16 %v1641
        %v1716 = vunpack.c.l.b16 %v1642
        %v1717 = vunpack.c.h.b16 %v1642
        %v1718 = vunpack.c.l.b16 %v1643
        %v1719 = vunpack.c.h.b16 %v1643
        %v1720 = vpack.c.b16 %v1690, %v1688
        %v1721 = vpack.c.b16 %v1691, %v1689
        %v1722 = vpack.c.b16 %v1694, %v1692
        %v1723 = vpack.c.b16 %v1695, %v1693
        %v1724 = vpack.c.b16 %v1698, %v1696
        %v1725 = vpack.c.b16 %v1699, %v1697
        %v1726 = vpack.c.b16 %v1702, %v1700
        %v1727 = vpack.c.b16 %v1703, %v1701
        %v1728 = vpack.c.b16 %v1706, %v1704
        %v1729 = vpack.c.b16 %v1707, %v1705
        %v1730 = vpack.c.b16 %v1710, %v1708
        %v1731 = vpack.c.b16 %v1711, %v1709
        %v1732 = vpack.c.b16 %v1714, %v1712
        %v1733 = vpack.c.b16 %v1715, %v1713
        %v1734 = vpack.c.b16 %v1718, %v1716
        %v1735 = vpack.c.b16 %v1719, %v1717
        %1752 = vmatprep.subr.bf16.mxu0 %v1735
        %1753 = vmatpush1.bf16.msra.mxu0 %v1734
        %1754 = vmatprep.subr.bf16.mxu0 %v1733
        %1755 = vmatpush1.bf16.msra.mxu0 %v1732
        %1756 = vmatprep.subr.bf16.mxu0 %v1731
        %1757 = vmatpush1.bf16.msra.mxu0 %v1730
        %1758 = vmatprep.subr.bf16.mxu0 %v1729
        %1759 = vmatpush1.bf16.msra.mxu0 %v1728
        %1760 = vmatprep.subr.bf16.mxu0 %v1727
        %1761 = vmatpush1.bf16.msra.mxu0 %v1726
        %1762 = vmatprep.subr.bf16.mxu0 %v1725
        %1763 = vmatpush1.bf16.msra.mxu0 %v1724
        %1764 = vmatprep.subr.bf16.mxu0 %v1723
        %1765 = vmatpush1.bf16.msra.mxu0 %v1722
        %1766 = vmatprep.subr.bf16.mxu0 %v1721
        %1767 = vmatpush1.bf16.msra.mxu0 %v1720
        %1768 = vmatprep.subr.bf16.mxu0 0
        %1769 = vmatpush2.bf16.msra.mxu0 0
        %1770 = vmatprep.subr.bf16.mxu0 0
        %1771 = vmatpush2.bf16.msra.mxu0 0
        %1772 = vmatprep.subr.bf16.mxu0 0
        %1773 = vmatpush2.bf16.msra.mxu0 0
        %1774 = vmatprep.subr.bf16.mxu0 0
        %1775 = vmatpush2.bf16.msra.mxu0 0
        %1776 = vmatprep.subr.bf16.mxu0 0
        %1777 = vmatpush2.bf16.msra.mxu0 0
        %1778 = vmatprep.subr.bf16.mxu0 0
        %1779 = vmatpush2.bf16.msra.mxu0 0
        %1780 = vmatprep.subr.bf16.mxu0 0
        %1781 = vmatpush2.bf16.msra.mxu0 0
        %1782 = vmatprep.subr.bf16.mxu0 0
        %1783 = vmatpush2.bf16.msra.mxu0 0
        %1784 = vmatprep.mubr.bf16.mxu0 0
        %1785 = vmatmul.mubr.bf16.gmra.mxu0 %v1662
        %v1786 = vpop.f32.mrf.mxu0
        %v1787 = vadd.f32 0.0, %v1786
        %v1788 = vpop.f32.mrf.mxu0
        %v1789 = vadd.f32 0.0, %v1788
        %v1790 = vpop.f32.mrf.mxu0
        %v1791 = vadd.f32 0.0, %v1790
        %v1792 = vpop.f32.mrf.mxu0
        %v1793 = vadd.f32 0.0, %v1792
        %1794 = vmatprep.mubr.bf16.mxu0 0
        %1795 = vmatmul.mubr.bf16.gmra.mxu0 %v1663
        %v1796 = vpop.f32.mrf.mxu0
        %v1797 = vadd.f32 0.0, %v1796
        %v1798 = vpop.f32.mrf.mxu0
        %v1799 = vadd.f32 0.0, %v1798
        %v1800 = vpop.f32.mrf.mxu0
        %v1801 = vadd.f32 0.0, %v1800
        %v1802 = vpop.f32.mrf.mxu0
        %v1803 = vadd.f32 0.0, %v1802
        %1804 = vmatprep.mubr.bf16.mxu0 0
        %1805 = vmatmul.mubr.bf16.gmra.mxu0 %v1664
        %v1806 = vpop.f32.mrf.mxu0
        %v1807 = vadd.f32 0.0, %v1806
        %v1808 = vpop.f32.mrf.mxu0
        %v1809 = vadd.f32 0.0, %v1808
        %v1810 = vpop.f32.mrf.mxu0
        %v1811 = vadd.f32 0.0, %v1810
        %v1812 = vpop.f32.mrf.mxu0
        %v1813 = vadd.f32 0.0, %v1812
        %1814 = vmatprep.mubr.bf16.mxu0 0
        %1815 = vmatmul.mubr.bf16.gmra.mxu0 %v1665
        %v1816 = vpop.f32.mrf.mxu0
        %v1817 = vadd.f32 0.0, %v1816
        %v1818 = vpop.f32.mrf.mxu0
        %v1819 = vadd.f32 0.0, %v1818
        %v1820 = vpop.f32.mrf.mxu0
        %v1821 = vadd.f32 0.0, %v1820
        %v1822 = vpop.f32.mrf.mxu0
        %v1823 = vadd.f32 0.0, %v1822
        %1824 = vmatprep.mubr.bf16.mxu0 0
        %1825 = vmatmul.mubr.bf16.gmra.mxu0 %v1666
        %v1826 = vpop.f32.mrf.mxu0
        %v1827 = vadd.f32 0.0, %v1826
        %v1828 = vpop.f32.mrf.mxu0
        %v1829 = vadd.f32 0.0, %v1828
        %v1830 = vpop.f32.mrf.mxu0
        %v1831 = vpop.f32.mrf.mxu0
        %1832 = vdwg.mxu0
        %v1833 = vadd.f32 %v1599, %v1787
        %v1834 = vadd.f32 %v1600, %v1789
        %v1835 = vadd.f32 %v1601, %v1791
        %v1836 = vadd.f32 %v1602, %v1793
        %v1837 = vadd.f32 %v1603, %v1797
        %v1838 = vadd.f32 %v1604, %v1799
        %v1839 = vadd.f32 %v1605, %v1801
        %v1840 = vadd.f32 %v1606, %v1803
        %v1841 = vadd.f32 %v1607, %v1807
        %v1842 = vadd.f32 %v1608, %v1809
        %v1843 = vadd.f32 %v1609, %v1811
        %v1844 = vadd.f32 %v1610, %v1813
        %v1845 = vadd.f32 %v1611, %v1817
        %v1846 = vadd.f32 %v1612, %v1819
        %v1847 = vadd.f32 %v1613, %v1821
        %v1848 = vadd.f32 %v1614, %v1823
        %v1849 = vadd.f32 %v1615, %v1827
        %v1850 = vadd.f32 %v1616, %v1829
        %1851 = vmatprep.subr.bf16.mxu0 %v862
        %1852 = vmatpush1.bf16.msra.mxu0 %v861
        %1853 = vmatprep.subr.bf16.mxu0 %v860
        %1854 = vmatpush1.bf16.msra.mxu0 %v859
        %1855 = vmatprep.subr.bf16.mxu0 %v858
        %1856 = vmatpush1.bf16.msra.mxu0 %v857
        %1857 = vmatprep.subr.bf16.mxu0 %v856
        %1858 = vmatpush1.bf16.msra.mxu0 %v855
        %1859 = vmatprep.subr.bf16.mxu0 %v854
        %1860 = vmatpush1.bf16.msra.mxu0 %v853
        %1861 = vmatprep.subr.bf16.mxu0 %v852
        %1862 = vmatpush1.bf16.msra.mxu0 %v851
        %1863 = vmatprep.subr.bf16.mxu0 %v850
        %1864 = vmatpush1.bf16.msra.mxu0 %v849
        %1865 = vmatprep.subr.bf16.mxu0 %v848
        %1866 = vmatpush1.bf16.msra.mxu0 %v847
        %1867 = vmatprep.subr.bf16.mxu0 0
        %1868 = vmatpush2.bf16.msra.mxu0 0
        %1869 = vmatprep.subr.bf16.mxu0 0
        %1870 = vmatpush2.bf16.msra.mxu0 0
        %1871 = vmatprep.subr.bf16.mxu0 0
        %1872 = vmatpush2.bf16.msra.mxu0 0
        %1873 = vmatprep.subr.bf16.mxu0 0
        %1874 = vmatpush2.bf16.msra.mxu0 0
        %1875 = vmatprep.subr.bf16.mxu0 0
        %1876 = vmatpush2.bf16.msra.mxu0 0
        %1877 = vmatprep.subr.bf16.mxu0 0
        %1878 = vmatpush2.bf16.msra.mxu0 0
        %1879 = vmatprep.subr.bf16.mxu0 0
        %1880 = vmatpush2.bf16.msra.mxu0 0
        %1881 = vmatprep.subr.bf16.mxu0 0
        %1882 = vmatpush2.bf16.msra.mxu0 0
        %1883 = vmatprep.mubr.bf16.mxu0 0
        %1884 = vmatmul.mubr.bf16.gmra.mxu0 %v1194
        %v1885 = vpop.f32.mrf.mxu0
        %v1886 = vadd.f32 0.0, %v1885
        %v1887 = vpop.f32.mrf.mxu0
        %v1888 = vadd.f32 0.0, %v1887
        %v1889 = vpop.f32.mrf.mxu0
        %v1890 = vadd.f32 0.0, %v1889
        %v1891 = vpop.f32.mrf.mxu0
        %v1892 = vadd.f32 0.0, %v1891
        %1893 = vmatprep.mubr.bf16.mxu0 0
        %1894 = vmatmul.mubr.bf16.gmra.mxu0 %v1195
        %v1895 = vpop.f32.mrf.mxu0
        %v1896 = vadd.f32 0.0, %v1895
        %v1897 = vpop.f32.mrf.mxu0
        %v1898 = vadd.f32 0.0, %v1897
        %v1899 = vpop.f32.mrf.mxu0
        %v1900 = vadd.f32 0.0, %v1899
        %v1901 = vpop.f32.mrf.mxu0
        %v1902 = vadd.f32 0.0, %v1901
        %1903 = vmatprep.mubr.bf16.mxu0 0
        %1904 = vmatmul.mubr.bf16.gmra.mxu0 %v1196
        %v1905 = vpop.f32.mrf.mxu0
        %v1906 = vadd.f32 0.0, %v1905
        %v1907 = vpop.f32.mrf.mxu0
        %v1908 = vadd.f32 0.0, %v1907
        %v1909 = vpop.f32.mrf.mxu0
        %v1910 = vadd.f32 0.0, %v1909
        %v1911 = vpop.f32.mrf.mxu0
        %v1912 = vadd.f32 0.0, %v1911
        %1913 = vmatprep.mubr.bf16.mxu0 0
        %1914 = vmatmul.mubr.bf16.gmra.mxu0 %v1197
        %v1915 = vpop.f32.mrf.mxu0
        %v1916 = vadd.f32 0.0, %v1915
        %v1917 = vpop.f32.mrf.mxu0
        %v1918 = vadd.f32 0.0, %v1917
        %v1919 = vpop.f32.mrf.mxu0
        %v1920 = vadd.f32 0.0, %v1919
        %v1921 = vpop.f32.mrf.mxu0
        %v1922 = vadd.f32 0.0, %v1921
        %1923 = vmatprep.mubr.bf16.mxu0 0
        %1924 = vmatmul.mubr.bf16.gmra.mxu0 %v1198
        %v1925 = vpop.f32.mrf.mxu0
        %v1926 = vadd.f32 0.0, %v1925
        %v1927 = vpop.f32.mrf.mxu0
        %v1928 = vadd.f32 0.0, %v1927
        %v1929 = vpop.f32.mrf.mxu0
        %v1930 = vpop.f32.mrf.mxu0
        %1931 = vdwg.mxu0
        %1932 = vmatprep.subr.bf16.mxu0 %v1051
        %1933 = vmatpush1.bf16.msra.mxu0 %v1050
        %1934 = vmatprep.subr.bf16.mxu0 %v1049
        %1935 = vmatpush1.bf16.msra.mxu0 %v1048
        %1936 = vmatprep.subr.bf16.mxu0 %v1047
        %1937 = vmatpush1.bf16.msra.mxu0 %v1046
        %1938 = vmatprep.subr.bf16.mxu0 %v1045
        %1939 = vmatpush1.bf16.msra.mxu0 %v1044
        %1940 = vmatprep.subr.bf16.mxu0 %v1043
        %1941 = vmatpush1.bf16.msra.mxu0 %v1042
        %1942 = vmatprep.subr.bf16.mxu0 %v1041
        %1943 = vmatpush1.bf16.msra.mxu0 %v1040
        %1944 = vmatprep.subr.bf16.mxu0 %v1039
        %1945 = vmatpush1.bf16.msra.mxu0 %v1038
        %1946 = vmatprep.subr.bf16.mxu0 %v1037
        %1947 = vmatpush1.bf16.msra.mxu0 %v1036
        %1948 = vmatprep.subr.bf16.mxu0 0
        %1949 = vmatpush2.bf16.msra.mxu0 0
        %1950 = vmatprep.subr.bf16.mxu0 0
        %1951 = vmatpush2.bf16.msra.mxu0 0
        %1952 = vmatprep.subr.bf16.mxu0 0
        %1953 = vmatpush2.bf16.msra.mxu0 0
        %1954 = vmatprep.subr.bf16.mxu0 0
        %1955 = vmatpush2.bf16.msra.mxu0 0
        %1956 = vmatprep.subr.bf16.mxu0 0
        %1957 = vmatpush2.bf16.msra.mxu0 0
        %1958 = vmatprep.subr.bf16.mxu0 0
        %1959 = vmatpush2.bf16.msra.mxu0 0
        %1960 = vmatprep.subr.bf16.mxu0 0
        %1961 = vmatpush2.bf16.msra.mxu0 0
        %1962 = vmatprep.subr.bf16.mxu0 0
        %1963 = vmatpush2.bf16.msra.mxu0 0
        %1964 = vmatprep.mubr.bf16.mxu0 0
        %1965 = vmatmul.mubr.bf16.gmra.mxu0 %v789
        %v1966 = vpop.f32.mrf.mxu0
        %v1967 = vadd.f32 %v1886, %v1966
        %v1968 = vpop.f32.mrf.mxu0
        %v1969 = vadd.f32 %v1888, %v1968
        %v1970 = vpop.f32.mrf.mxu0
        %v1971 = vadd.f32 %v1890, %v1970
        %v1972 = vpop.f32.mrf.mxu0
        %v1973 = vadd.f32 %v1892, %v1972
        %1974 = vmatprep.mubr.bf16.mxu0 0
        %1975 = vmatmul.mubr.bf16.gmra.mxu0 %v790
        %v1976 = vpop.f32.mrf.mxu0
        %v1977 = vadd.f32 %v1896, %v1976
        %v1978 = vpop.f32.mrf.mxu0
        %v1979 = vadd.f32 %v1898, %v1978
        %v1980 = vpop.f32.mrf.mxu0
        %v1981 = vadd.f32 %v1900, %v1980
        %v1982 = vpop.f32.mrf.mxu0
        %v1983 = vadd.f32 %v1902, %v1982
        %1984 = vmatprep.mubr.bf16.mxu0 0
        %1985 = vmatmul.mubr.bf16.gmra.mxu0 %v791
        %v1986 = vpop.f32.mrf.mxu0
        %v1987 = vadd.f32 %v1906, %v1986
        %v1988 = vpop.f32.mrf.mxu0
        %v1989 = vadd.f32 %v1908, %v1988
        %v1990 = vpop.f32.mrf.mxu0
        %v1991 = vadd.f32 %v1910, %v1990
        %v1992 = vpop.f32.mrf.mxu0
        %v1993 = vadd.f32 %v1912, %v1992
        %1994 = vmatprep.mubr.bf16.mxu0 0
        %1995 = vmatmul.mubr.bf16.gmra.mxu0 %v792
        %v1996 = vpop.f32.mrf.mxu0
        %v1997 = vadd.f32 %v1916, %v1996
        %v1998 = vpop.f32.mrf.mxu0
        %v1999 = vadd.f32 %v1918, %v1998
        %v2000 = vpop.f32.mrf.mxu0
        %v2001 = vadd.f32 %v1920, %v2000
        %v2002 = vpop.f32.mrf.mxu0
        %v2003 = vadd.f32 %v1922, %v2002
        %2004 = vmatprep.mubr.bf16.mxu0 0
        %2005 = vmatmul.mubr.bf16.gmra.mxu0 %v793
        %v2006 = vpop.f32.mrf.mxu0
        %v2007 = vadd.f32 %v1926, %v2006
        %v2008 = vpop.f32.mrf.mxu0
        %v2009 = vadd.f32 %v1928, %v2008
        %v2010 = vpop.f32.mrf.mxu0
        %v2011 = vpop.f32.mrf.mxu0
        %2012 = vdwg.mxu0
        %2013 = vmatprep.subr.bf16.mxu0 %v1267
        %2014 = vmatpush1.bf16.msra.mxu0 %v1266
        %2015 = vmatprep.subr.bf16.mxu0 %v1265
        %2016 = vmatpush1.bf16.msra.mxu0 %v1264
        %2017 = vmatprep.subr.bf16.mxu0 %v1263
        %2018 = vmatpush1.bf16.msra.mxu0 %v1262
        %2019 = vmatprep.subr.bf16.mxu0 %v1261
        %2020 = vmatpush1.bf16.msra.mxu0 %v1260
        %2021 = vmatprep.subr.bf16.mxu0 %v1259
        %2022 = vmatpush1.bf16.msra.mxu0 %v1258
        %2023 = vmatprep.subr.bf16.mxu0 %v1257
        %2024 = vmatpush1.bf16.msra.mxu0 %v1256
        %2025 = vmatprep.subr.bf16.mxu0 %v1255
        %2026 = vmatpush1.bf16.msra.mxu0 %v1254
        %2027 = vmatprep.subr.bf16.mxu0 %v1253
        %2028 = vmatpush1.bf16.msra.mxu0 %v1252
        %2029 = vmatprep.subr.bf16.mxu0 0
        %2030 = vmatpush2.bf16.msra.mxu0 0
        %2031 = vmatprep.subr.bf16.mxu0 0
        %2032 = vmatpush2.bf16.msra.mxu0 0
        %2033 = vmatprep.subr.bf16.mxu0 0
        %2034 = vmatpush2.bf16.msra.mxu0 0
        %2035 = vmatprep.subr.bf16.mxu0 0
        %2036 = vmatpush2.bf16.msra.mxu0 0
        %2037 = vmatprep.subr.bf16.mxu0 0
        %2038 = vmatpush2.bf16.msra.mxu0 0
        %2039 = vmatprep.subr.bf16.mxu0 0
        %2040 = vmatpush2.bf16.msra.mxu0 0
        %2041 = vmatprep.subr.bf16.mxu0 0
        %2042 = vmatpush2.bf16.msra.mxu0 0
        %2043 = vmatprep.subr.bf16.mxu0 0
        %2044 = vmatpush2.bf16.msra.mxu0 0
        %2045 = vmatprep.mubr.bf16.mxu0 0
        %2046 = vmatmul.mubr.bf16.gmra.mxu0 %v1428
        %v2047 = vpop.f32.mrf.mxu0
        %v2048 = vadd.f32 0.0, %v2047
        %v2049 = vpop.f32.mrf.mxu0
        %v2050 = vadd.f32 0.0, %v2049
        %v2051 = vpop.f32.mrf.mxu0
        %v2052 = vadd.f32 0.0, %v2051
        %v2053 = vpop.f32.mrf.mxu0
        %v2054 = vadd.f32 0.0, %v2053
        %2055 = vmatprep.mubr.bf16.mxu0 0
        %2056 = vmatmul.mubr.bf16.gmra.mxu0 %v1429
        %v2057 = vpop.f32.mrf.mxu0
        %v2058 = vadd.f32 0.0, %v2057
        %v2059 = vpop.f32.mrf.mxu0
        %v2060 = vadd.f32 0.0, %v2059
        %v2061 = vpop.f32.mrf.mxu0
        %v2062 = vadd.f32 0.0, %v2061
        %v2063 = vpop.f32.mrf.mxu0
        %v2064 = vadd.f32 0.0, %v2063
        %2065 = vmatprep.mubr.bf16.mxu0 0
        %2066 = vmatmul.mubr.bf16.gmra.mxu0 %v1430
        %v2067 = vpop.f32.mrf.mxu0
        %v2068 = vadd.f32 0.0, %v2067
        %v2069 = vpop.f32.mrf.mxu0
        %v2070 = vadd.f32 0.0, %v2069
        %v2071 = vpop.f32.mrf.mxu0
        %v2072 = vadd.f32 0.0, %v2071
        %v2073 = vpop.f32.mrf.mxu0
        %v2074 = vadd.f32 0.0, %v2073
        %2075 = vmatprep.mubr.bf16.mxu0 0
        %2076 = vmatmul.mubr.bf16.gmra.mxu0 %v1431
        %v2077 = vpop.f32.mrf.mxu0
        %v2078 = vadd.f32 0.0, %v2077
        %v2079 = vpop.f32.mrf.mxu0
        %v2080 = vadd.f32 0.0, %v2079
        %v2081 = vpop.f32.mrf.mxu0
        %v2082 = vadd.f32 0.0, %v2081
        %v2083 = vpop.f32.mrf.mxu0
        %v2084 = vadd.f32 0.0, %v2083
        %2085 = vmatprep.mubr.bf16.mxu0 0
        %2086 = vmatmul.mubr.bf16.gmra.mxu0 %v1432
        %v2087 = vpop.f32.mrf.mxu0
        %v2088 = vadd.f32 0.0, %v2087
        %v2089 = vpop.f32.mrf.mxu0
        %v2090 = vadd.f32 0.0, %v2089
        %v2091 = vpop.f32.mrf.mxu0
        %v2092 = vpop.f32.mrf.mxu0
        %2093 = vdwg.mxu0
        %v2094 = vadd.f32 %v1967, %v2048
        %v2095 = vadd.f32 %v1969, %v2050
        %v2096 = vadd.f32 %v1971, %v2052
        %v2097 = vadd.f32 %v1973, %v2054
        %v2098 = vadd.f32 %v1977, %v2058
        %v2099 = vadd.f32 %v1979, %v2060
        %v2100 = vadd.f32 %v1981, %v2062
        %v2101 = vadd.f32 %v1983, %v2064
        %v2102 = vadd.f32 %v1987, %v2068
        %v2103 = vadd.f32 %v1989, %v2070
        %v2104 = vadd.f32 %v1991, %v2072
        %v2105 = vadd.f32 %v1993, %v2074
        %v2106 = vadd.f32 %v1997, %v2078
        %v2107 = vadd.f32 %v1999, %v2080
        %v2108 = vadd.f32 %v2001, %v2082
        %v2109 = vadd.f32 %v2003, %v2084
        %v2110 = vadd.f32 %v2007, %v2088
        %v2111 = vadd.f32 %v2009, %v2090
        %2112 = vmatprep.subr.bf16.mxu0 %v1501
        %2113 = vmatpush1.bf16.msra.mxu0 %v1500
        %2114 = vmatprep.subr.bf16.mxu0 %v1499
        %2115 = vmatpush1.bf16.msra.mxu0 %v1498
        %2116 = vmatprep.subr.bf16.mxu0 %v1497
        %2117 = vmatpush1.bf16.msra.mxu0 %v1496
        %2118 = vmatprep.subr.bf16.mxu0 %v1495
        %2119 = vmatpush1.bf16.msra.mxu0 %v1494
        %2120 = vmatprep.subr.bf16.mxu0 %v1493
        %2121 = vmatpush1.bf16.msra.mxu0 %v1492
        %2122 = vmatprep.subr.bf16.mxu0 %v1491
        %2123 = vmatpush1.bf16.msra.mxu0 %v1490
        %2124 = vmatprep.subr.bf16.mxu0 %v1489
        %2125 = vmatpush1.bf16.msra.mxu0 %v1488
        %2126 = vmatprep.subr.bf16.mxu0 %v1487
        %2127 = vmatpush1.bf16.msra.mxu0 %v1486
        %2128 = vmatprep.subr.bf16.mxu0 0
        %2129 = vmatpush2.bf16.msra.mxu0 0
        %2130 = vmatprep.subr.bf16.mxu0 0
        %2131 = vmatpush2.bf16.msra.mxu0 0
        %2132 = vmatprep.subr.bf16.mxu0 0
        %2133 = vmatpush2.bf16.msra.mxu0 0
        %2134 = vmatprep.subr.bf16.mxu0 0
        %2135 = vmatpush2.bf16.msra.mxu0 0
        %2136 = vmatprep.subr.bf16.mxu0 0
        %2137 = vmatpush2.bf16.msra.mxu0 0
        %2138 = vmatprep.subr.bf16.mxu0 0
        %2139 = vmatpush2.bf16.msra.mxu0 0
        %2140 = vmatprep.subr.bf16.mxu0 0
        %2141 = vmatpush2.bf16.msra.mxu0 0
        %2142 = vmatprep.subr.bf16.mxu0 0
        %2143 = vmatpush2.bf16.msra.mxu0 0
        %2144 = vmatprep.mubr.bf16.mxu0 0
        %2145 = vmatmul.mubr.bf16.gmra.mxu0 %v1662
        %v2146 = vpop.f32.mrf.mxu0
        %v2147 = vadd.f32 0.0, %v2146
        %v2148 = vpop.f32.mrf.mxu0
        %v2149 = vadd.f32 0.0, %v2148
        %v2150 = vpop.f32.mrf.mxu0
        %v2151 = vadd.f32 0.0, %v2150
        %v2152 = vpop.f32.mrf.mxu0
        %v2153 = vadd.f32 0.0, %v2152
        %2154 = vmatprep.mubr.bf16.mxu0 0
        %2155 = vmatmul.mubr.bf16.gmra.mxu0 %v1663
        %v2156 = vpop.f32.mrf.mxu0
        %v2157 = vadd.f32 0.0, %v2156
        %v2158 = vpop.f32.mrf.mxu0
        %v2159 = vadd.f32 0.0, %v2158
        %v2160 = vpop.f32.mrf.mxu0
        %v2161 = vadd.f32 0.0, %v2160
        %v2162 = vpop.f32.mrf.mxu0
        %v2163 = vadd.f32 0.0, %v2162
        %2164 = vmatprep.mubr.bf16.mxu0 0
        %2165 = vmatmul.mubr.bf16.gmra.mxu0 %v1664
        %v2166 = vpop.f32.mrf.mxu0
        %v2167 = vadd.f32 0.0, %v2166
        %v2168 = vpop.f32.mrf.mxu0
        %v2169 = vadd.f32 0.0, %v2168
        %v2170 = vpop.f32.mrf.mxu0
        %v2171 = vadd.f32 0.0, %v2170
        %v2172 = vpop.f32.mrf.mxu0
        %v2173 = vadd.f32 0.0, %v2172
        %2174 = vmatprep.mubr.bf16.mxu0 0
        %2175 = vmatmul.mubr.bf16.gmra.mxu0 %v1665
        %v2176 = vpop.f32.mrf.mxu0
        %v2177 = vadd.f32 0.0, %v2176
        %v2178 = vpop.f32.mrf.mxu0
        %v2179 = vadd.f32 0.0, %v2178
        %v2180 = vpop.f32.mrf.mxu0
        %v2181 = vadd.f32 0.0, %v2180
        %v2182 = vpop.f32.mrf.mxu0
        %v2183 = vadd.f32 0.0, %v2182
        %2184 = vmatprep.mubr.bf16.mxu0 0
        %2185 = vmatmul.mubr.bf16.gmra.mxu0 %v1666
        %v2186 = vpop.f32.mrf.mxu0
        %v2187 = vadd.f32 0.0, %v2186
        %v2188 = vpop.f32.mrf.mxu0
        %v2189 = vadd.f32 0.0, %v2188
        %v2190 = vpop.f32.mrf.mxu0
        %v2191 = vpop.f32.mrf.mxu0
        %2192 = vdwg.mxu0
        %v2193 = vadd.f32 %v2094, %v2147
        %v2194 = vadd.f32 %v2095, %v2149
        %v2195 = vadd.f32 %v2096, %v2151
        %v2196 = vadd.f32 %v2097, %v2153
        %v2197 = vadd.f32 %v2098, %v2157
        %v2198 = vadd.f32 %v2099, %v2159
        %v2199 = vadd.f32 %v2100, %v2161
        %v2200 = vadd.f32 %v2101, %v2163
        %v2201 = vadd.f32 %v2102, %v2167
        %v2202 = vadd.f32 %v2103, %v2169
        %v2203 = vadd.f32 %v2104, %v2171
        %v2204 = vadd.f32 %v2105, %v2173
        %v2205 = vadd.f32 %v2106, %v2177
        %v2206 = vadd.f32 %v2107, %v2179
        %v2207 = vadd.f32 %v2108, %v2181
        %v2208 = vadd.f32 %v2109, %v2183
        %v2209 = vadd.f32 %v2110, %v2187
        %v2210 = vadd.f32 %v2111, %v2189
        %s2211 = scalar_lea.vmem %s673, 180 [#allocation2]
        %v2212 = vld [vmem:[%s2211] sm:$0xf]
        %v2213 = vld [vmem:[%s2211 + $0x4] sm:$0xf]
        %v2214 = vld [vmem:[%s2211 + $0x8] sm:$0xf]
        %v2215 = vld [vmem:[%s2211 + $0xc] sm:$0xf]
        %v2216 = vld [vmem:[%s2211 + $0x10] sm:$0xf]
        %v2217 = vld [vmem:[%s2211 + $0x14] sm:$0xf]
        %v2218 = vld [vmem:[%s2211 + $0x18] sm:$0xf]
        %v2219 = vld [vmem:[%s2211 + $0x1c] sm:$0xf]
        %v2220 = vld [vmem:[%s2211 + $0x20] sm:$0xf]
        %v2230 = vunpack.c.l.b16 %v2212
        %v2231 = vunpack.c.l.b16 %v2213
        %v2232 = vunpack.c.l.b16 %v2214
        %v2233 = vunpack.c.l.b16 %v2215
        %v2234 = vunpack.c.l.b16 %v2216
        %v2235 = vunpack.c.l.b16 %v2217
        %v2236 = vunpack.c.l.b16 %v2218
        %v2237 = vunpack.c.l.b16 %v2219
        %v2238 = vunpack.c.l.b16 %v2220
        %v2239 = vpack.c.b16 %v2231, %v2230
        %v2240 = vpack.c.b16 %v2233, %v2232
        %v2241 = vpack.c.b16 %v2235, %v2234
        %v2242 = vpack.c.b16 %v2237, %v2236
        %v2243 = vpack.c.b16 %v2238, %v2238
        %2249 = vmatprep.subr.bf16.mxu0 %v1735
        %2250 = vmatpush1.bf16.msra.mxu0 %v1734
        %2251 = vmatprep.subr.bf16.mxu0 %v1733
        %2252 = vmatpush1.bf16.msra.mxu0 %v1732
        %2253 = vmatprep.subr.bf16.mxu0 %v1731
        %2254 = vmatpush1.bf16.msra.mxu0 %v1730
        %2255 = vmatprep.subr.bf16.mxu0 %v1729
        %2256 = vmatpush1.bf16.msra.mxu0 %v1728
        %2257 = vmatprep.subr.bf16.mxu0 %v1727
        %2258 = vmatpush1.bf16.msra.mxu0 %v1726
        %2259 = vmatprep.subr.bf16.mxu0 %v1725
        %2260 = vmatpush1.bf16.msra.mxu0 %v1724
        %2261 = vmatprep.subr.bf16.mxu0 %v1723
        %2262 = vmatpush1.bf16.msra.mxu0 %v1722
        %2263 = vmatprep.subr.bf16.mxu0 %v1721
        %2264 = vmatpush1.bf16.msra.mxu0 %v1720
        %2265 = vmatprep.subr.bf16.mxu0 0
        %2266 = vmatpush2.bf16.msra.mxu0 0
        %2267 = vmatprep.subr.bf16.mxu0 0
        %2268 = vmatpush2.bf16.msra.mxu0 0
        %2269 = vmatprep.subr.bf16.mxu0 0
        %2270 = vmatpush2.bf16.msra.mxu0 0
        %2271 = vmatprep.subr.bf16.mxu0 0
        %2272 = vmatpush2.bf16.msra.mxu0 0
        %2273 = vmatprep.subr.bf16.mxu0 0
        %2274 = vmatpush2.bf16.msra.mxu0 0
        %2275 = vmatprep.subr.bf16.mxu0 0
        %2276 = vmatpush2.bf16.msra.mxu0 0
        %2277 = vmatprep.subr.bf16.mxu0 0
        %2278 = vmatpush2.bf16.msra.mxu0 0
        %2279 = vmatprep.subr.bf16.mxu0 0
        %2280 = vmatpush2.bf16.msra.mxu0 0
        %2281 = vmatprep.mubr.bf16.mxu0 0
        %2282 = vmatmul.mubr.bf16.gmra.mxu0 %v2239
        %v2283 = vpop.f32.mrf.mxu0
        %v2284 = vadd.f32 0.0, %v2283
        %v2285 = vpop.f32.mrf.mxu0
        %v2286 = vadd.f32 0.0, %v2285
        %v2287 = vpop.f32.mrf.mxu0
        %v2288 = vadd.f32 0.0, %v2287
        %v2289 = vpop.f32.mrf.mxu0
        %v2290 = vadd.f32 0.0, %v2289
        %2291 = vmatprep.mubr.bf16.mxu0 0
        %2292 = vmatmul.mubr.bf16.gmra.mxu0 %v2240
        %v2293 = vpop.f32.mrf.mxu0
        %v2294 = vadd.f32 0.0, %v2293
        %v2295 = vpop.f32.mrf.mxu0
        %v2296 = vadd.f32 0.0, %v2295
        %v2297 = vpop.f32.mrf.mxu0
        %v2298 = vadd.f32 0.0, %v2297
        %v2299 = vpop.f32.mrf.mxu0
        %v2300 = vadd.f32 0.0, %v2299
        %2301 = vmatprep.mubr.bf16.mxu0 0
        %2302 = vmatmul.mubr.bf16.gmra.mxu0 %v2241
        %v2303 = vpop.f32.mrf.mxu0
        %v2304 = vadd.f32 0.0, %v2303
        %v2305 = vpop.f32.mrf.mxu0
        %v2306 = vadd.f32 0.0, %v2305
        %v2307 = vpop.f32.mrf.mxu0
        %v2308 = vadd.f32 0.0, %v2307
        %v2309 = vpop.f32.mrf.mxu0
        %v2310 = vadd.f32 0.0, %v2309
        %2311 = vmatprep.mubr.bf16.mxu0 0
        %2312 = vmatmul.mubr.bf16.gmra.mxu0 %v2242
        %v2313 = vpop.f32.mrf.mxu0
        %v2314 = vadd.f32 0.0, %v2313
        %v2315 = vpop.f32.mrf.mxu0
        %v2316 = vadd.f32 0.0, %v2315
        %v2317 = vpop.f32.mrf.mxu0
        %v2318 = vadd.f32 0.0, %v2317
        %v2319 = vpop.f32.mrf.mxu0
        %v2320 = vadd.f32 0.0, %v2319
        %2321 = vmatprep.mubr.bf16.mxu0 0
        %2322 = vmatmul.mubr.bf16.gmra.mxu0 %v2243
        %v2323 = vpop.f32.mrf.mxu0
        %v2324 = vadd.f32 0.0, %v2323
        %v2325 = vpop.f32.mrf.mxu0
        %v2326 = vadd.f32 0.0, %v2325
        %v2327 = vpop.f32.mrf.mxu0
        %v2328 = vpop.f32.mrf.mxu0
        %2329 = vdwg.mxu0
        %v2330 = vadd.f32 %v2193, %v2284
        %v2331 = vadd.f32 %v2194, %v2286
        %v2332 = vadd.f32 %v2195, %v2288
        %v2333 = vadd.f32 %v2196, %v2290
        %v2334 = vadd.f32 %v2197, %v2294
        %v2335 = vadd.f32 %v2198, %v2296
        %v2336 = vadd.f32 %v2199, %v2298
        %v2337 = vadd.f32 %v2200, %v2300
        %v2338 = vadd.f32 %v2201, %v2304
        %v2339 = vadd.f32 %v2202, %v2306
        %v2340 = vadd.f32 %v2203, %v2308
        %v2341 = vadd.f32 %v2204, %v2310
        %v2342 = vadd.f32 %v2205, %v2314
        %v2343 = vadd.f32 %v2206, %v2316
        %v2344 = vadd.f32 %v2207, %v2318
        %v2345 = vadd.f32 %v2208, %v2320
        %v2346 = vadd.f32 %v2209, %v2324
        %v2347 = vadd.f32 %v2210, %v2326
        %v2348 = vmax.f32 %v1833, %v2330
        %v2349 = vmax.f32 %v1834, %v2331
        %v2350 = vmax.f32 %v1835, %v2332
        %v2351 = vmax.f32 %v1836, %v2333
        %v2352 = vmax.f32 %v1837, %v2334
        %v2353 = vmax.f32 %v1838, %v2335
        %v2354 = vmax.f32 %v1839, %v2336
        %v2355 = vmax.f32 %v1840, %v2337
        %v2356 = vmax.f32 %v1841, %v2338
        %v2357 = vmax.f32 %v1842, %v2339
        %v2358 = vmax.f32 %v1843, %v2340
        %v2359 = vmax.f32 %v1844, %v2341
        %v2360 = vmax.f32 %v1845, %v2342
        %v2361 = vmax.f32 %v1846, %v2343
        %v2362 = vmax.f32 %v1847, %v2344
        %v2363 = vmax.f32 %v1848, %v2345
        %v2364 = vmax.f32 %v1849, %v2346
        %v2365 = vmax.f32 %v1850, %v2347
        %v2366 = vmax.f32 %v2348, %v2349
        %v2367 = vmax.f32 %v2350, %v2351
        %v2368 = vmax.f32 %v2352, %v2353
        %v2369 = vmax.f32 %v2354, %v2355
        %v2370 = vmax.f32 %v2356, %v2357
        %v2371 = vmax.f32 %v2358, %v2359
        %v2372 = vmax.f32 %v2360, %v2361
        %v2373 = vmax.f32 %v2362, %v2363
        %v2374 = vmax.f32 %v2364, %v2365
        %v2376 = vlaneseq
        %v2377 = vshrl.u32 %v2376, 7
        %v2378 = vsub.s32 0, %v2377
        %v2379 = vrot.slane %v718, %v2378
        %v2381 = vadd.f32 %v2366, %v2379
        %v2382 = vadd.f32 %v2367, %v2379
        %v2383 = vadd.f32 %v2368, %v2379
        %v2384 = vadd.f32 %v2369, %v2379
        %v2385 = vadd.f32 %v2370, %v2379
        %v2386 = vadd.f32 %v2371, %v2379
        %v2387 = vadd.f32 %v2372, %v2379
        %v2388 = vadd.f32 %v2373, %v2379
        %v2389 = vadd.f32 %v2374, %v2379
        %v2390 = vmax.f32 %v2381, 0.0
        %v2391 = vmax.f32 %v2382, 0.0
        %v2392 = vmax.f32 %v2383, 0.0
        %v2393 = vmax.f32 %v2384, 0.0
        %v2394 = vmax.f32 %v2385, 0.0
        %v2395 = vmax.f32 %v2386, 0.0
        %v2396 = vmax.f32 %v2387, 0.0
        %v2397 = vmax.f32 %v2388, 0.0
        %v2398 = vmax.f32 %v2389, 0.0
        %2399 = vmatprep.subr.bf16.mxu0 %v862
        %2400 = vmatpush1.bf16.msra.mxu0 %v861
        %2401 = vmatprep.subr.bf16.mxu0 %v860
        %2402 = vmatpush1.bf16.msra.mxu0 %v859
        %2403 = vmatprep.subr.bf16.mxu0 %v858
        %2404 = vmatpush1.bf16.msra.mxu0 %v857
        %2405 = vmatprep.subr.bf16.mxu0 %v856
        %2406 = vmatpush1.bf16.msra.mxu0 %v855
        %2407 = vmatprep.subr.bf16.mxu0 %v854
        %2408 = vmatpush1.bf16.msra.mxu0 %v853
        %2409 = vmatprep.subr.bf16.mxu0 %v852
        %2410 = vmatpush1.bf16.msra.mxu0 %v851
        %2411 = vmatprep.subr.bf16.mxu0 %v850
        %2412 = vmatpush1.bf16.msra.mxu0 %v849
        %2413 = vmatprep.subr.bf16.mxu0 %v848
        %2414 = vmatpush1.bf16.msra.mxu0 %v847
        %2415 = vmatprep.subr.bf16.mxu0 0
        %2416 = vmatpush2.bf16.msra.mxu0 0
        %2417 = vmatprep.subr.bf16.mxu0 0
        %2418 = vmatpush2.bf16.msra.mxu0 0
        %2419 = vmatprep.subr.bf16.mxu0 0
        %2420 = vmatpush2.bf16.msra.mxu0 0
        %2421 = vmatprep.subr.bf16.mxu0 0
        %2422 = vmatpush2.bf16.msra.mxu0 0
        %2423 = vmatprep.subr.bf16.mxu0 0
        %2424 = vmatpush2.bf16.msra.mxu0 0
        %2425 = vmatprep.subr.bf16.mxu0 0
        %2426 = vmatpush2.bf16.msra.mxu0 0
        %2427 = vmatprep.subr.bf16.mxu0 0
        %2428 = vmatpush2.bf16.msra.mxu0 0
        %2429 = vmatprep.subr.bf16.mxu0 0
        %2430 = vmatpush2.bf16.msra.mxu0 0
        %2431 = vmatprep.mubr.bf16.mxu0 0
        %2432 = vmatmul.mubr.bf16.gmra.mxu0 %v1428
        %v2433 = vpop.f32.mrf.mxu0
        %v2434 = vadd.f32 0.0, %v2433
        %v2435 = vpop.f32.mrf.mxu0
        %v2436 = vadd.f32 0.0, %v2435
        %v2437 = vpop.f32.mrf.mxu0
        %v2438 = vadd.f32 0.0, %v2437
        %v2439 = vpop.f32.mrf.mxu0
        %v2440 = vadd.f32 0.0, %v2439
        %2441 = vmatprep.mubr.bf16.mxu0 0
        %2442 = vmatmul.mubr.bf16.gmra.mxu0 %v1429
        %v2443 = vpop.f32.mrf.mxu0
        %v2444 = vadd.f32 0.0, %v2443
        %v2445 = vpop.f32.mrf.mxu0
        %v2446 = vadd.f32 0.0, %v2445
        %v2447 = vpop.f32.mrf.mxu0
        %v2448 = vadd.f32 0.0, %v2447
        %v2449 = vpop.f32.mrf.mxu0
        %v2450 = vadd.f32 0.0, %v2449
        %2451 = vmatprep.mubr.bf16.mxu0 0
        %2452 = vmatmul.mubr.bf16.gmra.mxu0 %v1430
        %v2453 = vpop.f32.mrf.mxu0
        %v2454 = vadd.f32 0.0, %v2453
        %v2455 = vpop.f32.mrf.mxu0
        %v2456 = vadd.f32 0.0, %v2455
        %v2457 = vpop.f32.mrf.mxu0
        %v2458 = vadd.f32 0.0, %v2457
        %v2459 = vpop.f32.mrf.mxu0
        %v2460 = vadd.f32 0.0, %v2459
        %2461 = vmatprep.mubr.bf16.mxu0 0
        %2462 = vmatmul.mubr.bf16.gmra.mxu0 %v1431
        %v2463 = vpop.f32.mrf.mxu0
        %v2464 = vadd.f32 0.0, %v2463
        %v2465 = vpop.f32.mrf.mxu0
        %v2466 = vadd.f32 0.0, %v2465
        %v2467 = vpop.f32.mrf.mxu0
        %v2468 = vadd.f32 0.0, %v2467
        %v2469 = vpop.f32.mrf.mxu0
        %v2470 = vadd.f32 0.0, %v2469
        %2471 = vmatprep.mubr.bf16.mxu0 0
        %2472 = vmatmul.mubr.bf16.gmra.mxu0 %v1432
        %v2473 = vpop.f32.mrf.mxu0
        %v2474 = vadd.f32 0.0, %v2473
        %v2475 = vpop.f32.mrf.mxu0
        %v2476 = vadd.f32 0.0, %v2475
        %v2477 = vpop.f32.mrf.mxu0
        %v2478 = vpop.f32.mrf.mxu0
        %2479 = vdwg.mxu0
        %2480 = vmatprep.subr.bf16.mxu0 %v1051
        %2481 = vmatpush1.bf16.msra.mxu0 %v1050
        %2482 = vmatprep.subr.bf16.mxu0 %v1049
        %2483 = vmatpush1.bf16.msra.mxu0 %v1048
        %2484 = vmatprep.subr.bf16.mxu0 %v1047
        %2485 = vmatpush1.bf16.msra.mxu0 %v1046
        %2486 = vmatprep.subr.bf16.mxu0 %v1045
        %2487 = vmatpush1.bf16.msra.mxu0 %v1044
        %2488 = vmatprep.subr.bf16.mxu0 %v1043
        %2489 = vmatpush1.bf16.msra.mxu0 %v1042
        %2490 = vmatprep.subr.bf16.mxu0 %v1041
        %2491 = vmatpush1.bf16.msra.mxu0 %v1040
        %2492 = vmatprep.subr.bf16.mxu0 %v1039
        %2493 = vmatpush1.bf16.msra.mxu0 %v1038
        %2494 = vmatprep.subr.bf16.mxu0 %v1037
        %2495 = vmatpush1.bf16.msra.mxu0 %v1036
        %2496 = vmatprep.subr.bf16.mxu0 0
        %2497 = vmatpush2.bf16.msra.mxu0 0
        %2498 = vmatprep.subr.bf16.mxu0 0
        %2499 = vmatpush2.bf16.msra.mxu0 0
        %2500 = vmatprep.subr.bf16.mxu0 0
        %2501 = vmatpush2.bf16.msra.mxu0 0
        %2502 = vmatprep.subr.bf16.mxu0 0
        %2503 = vmatpush2.bf16.msra.mxu0 0
        %2504 = vmatprep.subr.bf16.mxu0 0
        %2505 = vmatpush2.bf16.msra.mxu0 0
        %2506 = vmatprep.subr.bf16.mxu0 0
        %2507 = vmatpush2.bf16.msra.mxu0 0
        %2508 = vmatprep.subr.bf16.mxu0 0
        %2509 = vmatpush2.bf16.msra.mxu0 0
        %2510 = vmatprep.subr.bf16.mxu0 0
        %2511 = vmatpush2.bf16.msra.mxu0 0
        %2512 = vmatprep.mubr.bf16.mxu0 0
        %2513 = vmatmul.mubr.bf16.gmra.mxu0 %v1194
        %v2514 = vpop.f32.mrf.mxu0
        %v2515 = vadd.f32 %v2434, %v2514
        %v2516 = vpop.f32.mrf.mxu0
        %v2517 = vadd.f32 %v2436, %v2516
        %v2518 = vpop.f32.mrf.mxu0
        %v2519 = vadd.f32 %v2438, %v2518
        %v2520 = vpop.f32.mrf.mxu0
        %v2521 = vadd.f32 %v2440, %v2520
        %2522 = vmatprep.mubr.bf16.mxu0 0
        %2523 = vmatmul.mubr.bf16.gmra.mxu0 %v1195
        %v2524 = vpop.f32.mrf.mxu0
        %v2525 = vadd.f32 %v2444, %v2524
        %v2526 = vpop.f32.mrf.mxu0
        %v2527 = vadd.f32 %v2446, %v2526
        %v2528 = vpop.f32.mrf.mxu0
        %v2529 = vadd.f32 %v2448, %v2528
        %v2530 = vpop.f32.mrf.mxu0
        %v2531 = vadd.f32 %v2450, %v2530
        %2532 = vmatprep.mubr.bf16.mxu0 0
        %2533 = vmatmul.mubr.bf16.gmra.mxu0 %v1196
        %v2534 = vpop.f32.mrf.mxu0
        %v2535 = vadd.f32 %v2454, %v2534
        %v2536 = vpop.f32.mrf.mxu0
        %v2537 = vadd.f32 %v2456, %v2536
        %v2538 = vpop.f32.mrf.mxu0
        %v2539 = vadd.f32 %v2458, %v2538
        %v2540 = vpop.f32.mrf.mxu0
        %v2541 = vadd.f32 %v2460, %v2540
        %2542 = vmatprep.mubr.bf16.mxu0 0
        %2543 = vmatmul.mubr.bf16.gmra.mxu0 %v1197
        %v2544 = vpop.f32.mrf.mxu0
        %v2545 = vadd.f32 %v2464, %v2544
        %v2546 = vpop.f32.mrf.mxu0
        %v2547 = vadd.f32 %v2466, %v2546
        %v2548 = vpop.f32.mrf.mxu0
        %v2549 = vadd.f32 %v2468, %v2548
        %v2550 = vpop.f32.mrf.mxu0
        %v2551 = vadd.f32 %v2470, %v2550
        %2552 = vmatprep.mubr.bf16.mxu0 0
        %2553 = vmatmul.mubr.bf16.gmra.mxu0 %v1198
        %v2554 = vpop.f32.mrf.mxu0
        %v2555 = vadd.f32 %v2474, %v2554
        %v2556 = vpop.f32.mrf.mxu0
        %v2557 = vadd.f32 %v2476, %v2556
        %v2558 = vpop.f32.mrf.mxu0
        %v2559 = vpop.f32.mrf.mxu0
        %2560 = vdwg.mxu0
        %2561 = vmatprep.subr.bf16.mxu0 %v1267
        %2562 = vmatpush1.bf16.msra.mxu0 %v1266
        %2563 = vmatprep.subr.bf16.mxu0 %v1265
        %2564 = vmatpush1.bf16.msra.mxu0 %v1264
        %2565 = vmatprep.subr.bf16.mxu0 %v1263
        %2566 = vmatpush1.bf16.msra.mxu0 %v1262
        %2567 = vmatprep.subr.bf16.mxu0 %v1261
        %2568 = vmatpush1.bf16.msra.mxu0 %v1260
        %2569 = vmatprep.subr.bf16.mxu0 %v1259
        %2570 = vmatpush1.bf16.msra.mxu0 %v1258
        %2571 = vmatprep.subr.bf16.mxu0 %v1257
        %2572 = vmatpush1.bf16.msra.mxu0 %v1256
        %2573 = vmatprep.subr.bf16.mxu0 %v1255
        %2574 = vmatpush1.bf16.msra.mxu0 %v1254
        %2575 = vmatprep.subr.bf16.mxu0 %v1253
        %2576 = vmatpush1.bf16.msra.mxu0 %v1252
        %2577 = vmatprep.subr.bf16.mxu0 0
        %2578 = vmatpush2.bf16.msra.mxu0 0
        %2579 = vmatprep.subr.bf16.mxu0 0
        %2580 = vmatpush2.bf16.msra.mxu0 0
        %2581 = vmatprep.subr.bf16.mxu0 0
        %2582 = vmatpush2.bf16.msra.mxu0 0
        %2583 = vmatprep.subr.bf16.mxu0 0
        %2584 = vmatpush2.bf16.msra.mxu0 0
        %2585 = vmatprep.subr.bf16.mxu0 0
        %2586 = vmatpush2.bf16.msra.mxu0 0
        %2587 = vmatprep.subr.bf16.mxu0 0
        %2588 = vmatpush2.bf16.msra.mxu0 0
        %2589 = vmatprep.subr.bf16.mxu0 0
        %2590 = vmatpush2.bf16.msra.mxu0 0
        %2591 = vmatprep.subr.bf16.mxu0 0
        %2592 = vmatpush2.bf16.msra.mxu0 0
        %2593 = vmatprep.mubr.bf16.mxu0 0
        %2594 = vmatmul.mubr.bf16.gmra.mxu0 %v1662
        %v2595 = vpop.f32.mrf.mxu0
        %v2596 = vadd.f32 0.0, %v2595
        %v2597 = vpop.f32.mrf.mxu0
        %v2598 = vadd.f32 0.0, %v2597
        %v2599 = vpop.f32.mrf.mxu0
        %v2600 = vadd.f32 0.0, %v2599
        %v2601 = vpop.f32.mrf.mxu0
        %v2602 = vadd.f32 0.0, %v2601
        %2603 = vmatprep.mubr.bf16.mxu0 0
        %2604 = vmatmul.mubr.bf16.gmra.mxu0 %v1663
        %v2605 = vpop.f32.mrf.mxu0
        %v2606 = vadd.f32 0.0, %v2605
        %v2607 = vpop.f32.mrf.mxu0
        %v2608 = vadd.f32 0.0, %v2607
        %v2609 = vpop.f32.mrf.mxu0
        %v2610 = vadd.f32 0.0, %v2609
        %v2611 = vpop.f32.mrf.mxu0
        %v2612 = vadd.f32 0.0, %v2611
        %2613 = vmatprep.mubr.bf16.mxu0 0
        %2614 = vmatmul.mubr.bf16.gmra.mxu0 %v1664
        %v2615 = vpop.f32.mrf.mxu0
        %v2616 = vadd.f32 0.0, %v2615
        %v2617 = vpop.f32.mrf.mxu0
        %v2618 = vadd.f32 0.0, %v2617
        %v2619 = vpop.f32.mrf.mxu0
        %v2620 = vadd.f32 0.0, %v2619
        %v2621 = vpop.f32.mrf.mxu0
        %v2622 = vadd.f32 0.0, %v2621
        %2623 = vmatprep.mubr.bf16.mxu0 0
        %2624 = vmatmul.mubr.bf16.gmra.mxu0 %v1665
        %v2625 = vpop.f32.mrf.mxu0
        %v2626 = vadd.f32 0.0, %v2625
        %v2627 = vpop.f32.mrf.mxu0
        %v2628 = vadd.f32 0.0, %v2627
        %v2629 = vpop.f32.mrf.mxu0
        %v2630 = vadd.f32 0.0, %v2629
        %v2631 = vpop.f32.mrf.mxu0
        %v2632 = vadd.f32 0.0, %v2631
        %2633 = vmatprep.mubr.bf16.mxu0 0
        %2634 = vmatmul.mubr.bf16.gmra.mxu0 %v1666
        %v2635 = vpop.f32.mrf.mxu0
        %v2636 = vadd.f32 0.0, %v2635
        %v2637 = vpop.f32.mrf.mxu0
        %v2638 = vadd.f32 0.0, %v2637
        %v2639 = vpop.f32.mrf.mxu0
        %v2640 = vpop.f32.mrf.mxu0
        %2641 = vdwg.mxu0
        %v2642 = vadd.f32 %v2515, %v2596
        %v2643 = vadd.f32 %v2517, %v2598
        %v2644 = vadd.f32 %v2519, %v2600
        %v2645 = vadd.f32 %v2521, %v2602
        %v2646 = vadd.f32 %v2525, %v2606
        %v2647 = vadd.f32 %v2527, %v2608
        %v2648 = vadd.f32 %v2529, %v2610
        %v2649 = vadd.f32 %v2531, %v2612
        %v2650 = vadd.f32 %v2535, %v2616
        %v2651 = vadd.f32 %v2537, %v2618
        %v2652 = vadd.f32 %v2539, %v2620
        %v2653 = vadd.f32 %v2541, %v2622
        %v2654 = vadd.f32 %v2545, %v2626
        %v2655 = vadd.f32 %v2547, %v2628
        %v2656 = vadd.f32 %v2549, %v2630
        %v2657 = vadd.f32 %v2551, %v2632
        %v2658 = vadd.f32 %v2555, %v2636
        %v2659 = vadd.f32 %v2557, %v2638
        %2660 = vmatprep.subr.bf16.mxu0 %v1501
        %2661 = vmatpush1.bf16.msra.mxu0 %v1500
        %2662 = vmatprep.subr.bf16.mxu0 %v1499
        %2663 = vmatpush1.bf16.msra.mxu0 %v1498
        %2664 = vmatprep.subr.bf16.mxu0 %v1497
        %2665 = vmatpush1.bf16.msra.mxu0 %v1496
        %2666 = vmatprep.subr.bf16.mxu0 %v1495
        %2667 = vmatpush1.bf16.msra.mxu0 %v1494
        %2668 = vmatprep.subr.bf16.mxu0 %v1493
        %2669 = vmatpush1.bf16.msra.mxu0 %v1492
        %2670 = vmatprep.subr.bf16.mxu0 %v1491
        %2671 = vmatpush1.bf16.msra.mxu0 %v1490
        %2672 = vmatprep.subr.bf16.mxu0 %v1489
        %2673 = vmatpush1.bf16.msra.mxu0 %v1488
        %2674 = vmatprep.subr.bf16.mxu0 %v1487
        %2675 = vmatpush1.bf16.msra.mxu0 %v1486
        %2676 = vmatprep.subr.bf16.mxu0 0
        %2677 = vmatpush2.bf16.msra.mxu0 0
        %2678 = vmatprep.subr.bf16.mxu0 0
        %2679 = vmatpush2.bf16.msra.mxu0 0
        %2680 = vmatprep.subr.bf16.mxu0 0
        %2681 = vmatpush2.bf16.msra.mxu0 0
        %2682 = vmatprep.subr.bf16.mxu0 0
        %2683 = vmatpush2.bf16.msra.mxu0 0
        %2684 = vmatprep.subr.bf16.mxu0 0
        %2685 = vmatpush2.bf16.msra.mxu0 0
        %2686 = vmatprep.subr.bf16.mxu0 0
        %2687 = vmatpush2.bf16.msra.mxu0 0
        %2688 = vmatprep.subr.bf16.mxu0 0
        %2689 = vmatpush2.bf16.msra.mxu0 0
        %2690 = vmatprep.subr.bf16.mxu0 0
        %2691 = vmatpush2.bf16.msra.mxu0 0
        %2692 = vmatprep.mubr.bf16.mxu0 0
        %2693 = vmatmul.mubr.bf16.gmra.mxu0 %v2239
        %v2694 = vpop.f32.mrf.mxu0
        %v2695 = vadd.f32 0.0, %v2694
        %v2696 = vpop.f32.mrf.mxu0
        %v2697 = vadd.f32 0.0, %v2696
        %v2698 = vpop.f32.mrf.mxu0
        %v2699 = vadd.f32 0.0, %v2698
        %v2700 = vpop.f32.mrf.mxu0
        %v2701 = vadd.f32 0.0, %v2700
        %2702 = vmatprep.mubr.bf16.mxu0 0
        %2703 = vmatmul.mubr.bf16.gmra.mxu0 %v2240
        %v2704 = vpop.f32.mrf.mxu0
        %v2705 = vadd.f32 0.0, %v2704
        %v2706 = vpop.f32.mrf.mxu0
        %v2707 = vadd.f32 0.0, %v2706
        %v2708 = vpop.f32.mrf.mxu0
        %v2709 = vadd.f32 0.0, %v2708
        %v2710 = vpop.f32.mrf.mxu0
        %v2711 = vadd.f32 0.0, %v2710
        %2712 = vmatprep.mubr.bf16.mxu0 0
        %2713 = vmatmul.mubr.bf16.gmra.mxu0 %v2241
        %v2714 = vpop.f32.mrf.mxu0
        %v2715 = vadd.f32 0.0, %v2714
        %v2716 = vpop.f32.mrf.mxu0
        %v2717 = vadd.f32 0.0, %v2716
        %v2718 = vpop.f32.mrf.mxu0
        %v2719 = vadd.f32 0.0, %v2718
        %v2720 = vpop.f32.mrf.mxu0
        %v2721 = vadd.f32 0.0, %v2720
        %2722 = vmatprep.mubr.bf16.mxu0 0
        %2723 = vmatmul.mubr.bf16.gmra.mxu0 %v2242
        %v2724 = vpop.f32.mrf.mxu0
        %v2725 = vadd.f32 0.0, %v2724
        %v2726 = vpop.f32.mrf.mxu0
        %v2727 = vadd.f32 0.0, %v2726
        %v2728 = vpop.f32.mrf.mxu0
        %v2729 = vadd.f32 0.0, %v2728
        %v2730 = vpop.f32.mrf.mxu0
        %v2731 = vadd.f32 0.0, %v2730
        %2732 = vmatprep.mubr.bf16.mxu0 0
        %2733 = vmatmul.mubr.bf16.gmra.mxu0 %v2243
        %v2734 = vpop.f32.mrf.mxu0
        %v2735 = vadd.f32 0.0, %v2734
        %v2736 = vpop.f32.mrf.mxu0
        %v2737 = vadd.f32 0.0, %v2736
        %v2738 = vpop.f32.mrf.mxu0
        %v2739 = vpop.f32.mrf.mxu0
        %2740 = vdwg.mxu0
        %v2741 = vadd.f32 %v2642, %v2695
        %v2742 = vadd.f32 %v2643, %v2697
        %v2743 = vadd.f32 %v2644, %v2699
        %v2744 = vadd.f32 %v2645, %v2701
        %v2745 = vadd.f32 %v2646, %v2705
        %v2746 = vadd.f32 %v2647, %v2707
        %v2747 = vadd.f32 %v2648, %v2709
        %v2748 = vadd.f32 %v2649, %v2711
        %v2749 = vadd.f32 %v2650, %v2715
        %v2750 = vadd.f32 %v2651, %v2717
        %v2751 = vadd.f32 %v2652, %v2719
        %v2752 = vadd.f32 %v2653, %v2721
        %v2753 = vadd.f32 %v2654, %v2725
        %v2754 = vadd.f32 %v2655, %v2727
        %v2755 = vadd.f32 %v2656, %v2729
        %v2756 = vadd.f32 %v2657, %v2731
        %v2757 = vadd.f32 %v2658, %v2735
        %v2758 = vadd.f32 %v2659, %v2737
        %s2759 = scalar_lea.vmem %s673, 216 [#allocation2]
        %v2760 = vld [vmem:[%s2759] sm:$0xf]
        %v2761 = vld [vmem:[%s2759 + $0x4] sm:$0xf]
        %v2762 = vld [vmem:[%s2759 + $0x8] sm:$0xf]
        %v2763 = vld [vmem:[%s2759 + $0xc] sm:$0xf]
        %v2764 = vld [vmem:[%s2759 + $0x10] sm:$0xf]
        %v2765 = vld [vmem:[%s2759 + $0x14] sm:$0xf]
        %v2766 = vld [vmem:[%s2759 + $0x18] sm:$0xf]
        %v2767 = vld [vmem:[%s2759 + $0x1c] sm:$0xf]
        %v2768 = vld [vmem:[%s2759 + $0x20] sm:$0xf]
        %v2778 = vunpack.c.l.b16 %v2760
        %v2779 = vunpack.c.l.b16 %v2761
        %v2780 = vunpack.c.l.b16 %v2762
        %v2781 = vunpack.c.l.b16 %v2763
        %v2782 = vunpack.c.l.b16 %v2764
        %v2783 = vunpack.c.l.b16 %v2765
        %v2784 = vunpack.c.l.b16 %v2766
        %v2785 = vunpack.c.l.b16 %v2767
        %v2786 = vunpack.c.l.b16 %v2768
        %v2787 = vpack.c.b16 %v2779, %v2778
        %v2788 = vpack.c.b16 %v2781, %v2780
        %v2789 = vpack.c.b16 %v2783, %v2782
        %v2790 = vpack.c.b16 %v2785, %v2784
        %v2791 = vpack.c.b16 %v2786, %v2786
        %2797 = vmatprep.subr.bf16.mxu0 %v1735
        %2798 = vmatpush1.bf16.msra.mxu0 %v1734
        %2799 = vmatprep.subr.bf16.mxu0 %v1733
        %2800 = vmatpush1.bf16.msra.mxu0 %v1732
        %2801 = vmatprep.subr.bf16.mxu0 %v1731
        %2802 = vmatpush1.bf16.msra.mxu0 %v1730
        %2803 = vmatprep.subr.bf16.mxu0 %v1729
        %2804 = vmatpush1.bf16.msra.mxu0 %v1728
        %2805 = vmatprep.subr.bf16.mxu0 %v1727
        %2806 = vmatpush1.bf16.msra.mxu0 %v1726
        %2807 = vmatprep.subr.bf16.mxu0 %v1725
        %2808 = vmatpush1.bf16.msra.mxu0 %v1724
        %2809 = vmatprep.subr.bf16.mxu0 %v1723
        %2810 = vmatpush1.bf16.msra.mxu0 %v1722
        %2811 = vmatprep.subr.bf16.mxu0 %v1721
        %2812 = vmatpush1.bf16.msra.mxu0 %v1720
        %2813 = vmatprep.subr.bf16.mxu0 0
        %2814 = vmatpush2.bf16.msra.mxu0 0
        %2815 = vmatprep.subr.bf16.mxu0 0
        %2816 = vmatpush2.bf16.msra.mxu0 0
        %2817 = vmatprep.subr.bf16.mxu0 0
        %2818 = vmatpush2.bf16.msra.mxu0 0
        %2819 = vmatprep.subr.bf16.mxu0 0
        %2820 = vmatpush2.bf16.msra.mxu0 0
        %2821 = vmatprep.subr.bf16.mxu0 0
        %2822 = vmatpush2.bf16.msra.mxu0 0
        %2823 = vmatprep.subr.bf16.mxu0 0
        %2824 = vmatpush2.bf16.msra.mxu0 0
        %2825 = vmatprep.subr.bf16.mxu0 0
        %2826 = vmatpush2.bf16.msra.mxu0 0
        %2827 = vmatprep.subr.bf16.mxu0 0
        %2828 = vmatpush2.bf16.msra.mxu0 0
        %2829 = vmatprep.mubr.bf16.mxu0 0
        %2830 = vmatmul.mubr.bf16.gmra.mxu0 %v2787
        %v2831 = vpop.f32.mrf.mxu0
        %v2832 = vadd.f32 0.0, %v2831
        %v2833 = vpop.f32.mrf.mxu0
        %v2834 = vadd.f32 0.0, %v2833
        %v2835 = vpop.f32.mrf.mxu0
        %v2836 = vadd.f32 0.0, %v2835
        %v2837 = vpop.f32.mrf.mxu0
        %v2838 = vadd.f32 0.0, %v2837
        %2839 = vmatprep.mubr.bf16.mxu0 0
        %2840 = vmatmul.mubr.bf16.gmra.mxu0 %v2788
        %v2841 = vpop.f32.mrf.mxu0
        %v2842 = vadd.f32 0.0, %v2841
        %v2843 = vpop.f32.mrf.mxu0
        %v2844 = vadd.f32 0.0, %v2843
        %v2845 = vpop.f32.mrf.mxu0
        %v2846 = vadd.f32 0.0, %v2845
        %v2847 = vpop.f32.mrf.mxu0
        %v2848 = vadd.f32 0.0, %v2847
        %2849 = vmatprep.mubr.bf16.mxu0 0
        %2850 = vmatmul.mubr.bf16.gmra.mxu0 %v2789
        %v2851 = vpop.f32.mrf.mxu0
        %v2852 = vadd.f32 0.0, %v2851
        %v2853 = vpop.f32.mrf.mxu0
        %v2854 = vadd.f32 0.0, %v2853
        %v2855 = vpop.f32.mrf.mxu0
        %v2856 = vadd.f32 0.0, %v2855
        %v2857 = vpop.f32.mrf.mxu0
        %v2858 = vadd.f32 0.0, %v2857
        %2859 = vmatprep.mubr.bf16.mxu0 0
        %2860 = vmatmul.mubr.bf16.gmra.mxu0 %v2790
        %v2861 = vpop.f32.mrf.mxu0
        %v2862 = vadd.f32 0.0, %v2861
        %v2863 = vpop.f32.mrf.mxu0
        %v2864 = vadd.f32 0.0, %v2863
        %v2865 = vpop.f32.mrf.mxu0
        %v2866 = vadd.f32 0.0, %v2865
        %v2867 = vpop.f32.mrf.mxu0
        %v2868 = vadd.f32 0.0, %v2867
        %2869 = vmatprep.mubr.bf16.mxu0 0
        %2870 = vmatmul.mubr.bf16.gmra.mxu0 %v2791
        %v2871 = vpop.f32.mrf.mxu0
        %v2872 = vadd.f32 0.0, %v2871
        %v2873 = vpop.f32.mrf.mxu0
        %v2874 = vadd.f32 0.0, %v2873
        %v2875 = vpop.f32.mrf.mxu0
        %v2876 = vpop.f32.mrf.mxu0
        %2877 = vdwg.mxu0
        %v2878 = vadd.f32 %v2741, %v2832
        %v2879 = vadd.f32 %v2742, %v2834
        %v2880 = vadd.f32 %v2743, %v2836
        %v2881 = vadd.f32 %v2744, %v2838
        %v2882 = vadd.f32 %v2745, %v2842
        %v2883 = vadd.f32 %v2746, %v2844
        %v2884 = vadd.f32 %v2747, %v2846
        %v2885 = vadd.f32 %v2748, %v2848
        %v2886 = vadd.f32 %v2749, %v2852
        %v2887 = vadd.f32 %v2750, %v2854
        %v2888 = vadd.f32 %v2751, %v2856
        %v2889 = vadd.f32 %v2752, %v2858
        %v2890 = vadd.f32 %v2753, %v2862
        %v2891 = vadd.f32 %v2754, %v2864
        %v2892 = vadd.f32 %v2755, %v2866
        %v2893 = vadd.f32 %v2756, %v2868
        %v2894 = vadd.f32 %v2757, %v2872
        %v2895 = vadd.f32 %v2758, %v2874
        %2896 = vmatprep.subr.bf16.mxu0 %v862
        %2897 = vmatpush1.bf16.msra.mxu0 %v861
        %2898 = vmatprep.subr.bf16.mxu0 %v860
        %2899 = vmatpush1.bf16.msra.mxu0 %v859
        %2900 = vmatprep.subr.bf16.mxu0 %v858
        %2901 = vmatpush1.bf16.msra.mxu0 %v857
        %2902 = vmatprep.subr.bf16.mxu0 %v856
        %2903 = vmatpush1.bf16.msra.mxu0 %v855
        %2904 = vmatprep.subr.bf16.mxu0 %v854
        %2905 = vmatpush1.bf16.msra.mxu0 %v853
        %2906 = vmatprep.subr.bf16.mxu0 %v852
        %2907 = vmatpush1.bf16.msra.mxu0 %v851
        %2908 = vmatprep.subr.bf16.mxu0 %v850
        %2909 = vmatpush1.bf16.msra.mxu0 %v849
        %2910 = vmatprep.subr.bf16.mxu0 %v848
        %2911 = vmatpush1.bf16.msra.mxu0 %v847
        %2912 = vmatprep.subr.bf16.mxu0 0
        %2913 = vmatpush2.bf16.msra.mxu0 0
        %2914 = vmatprep.subr.bf16.mxu0 0
        %2915 = vmatpush2.bf16.msra.mxu0 0
        %2916 = vmatprep.subr.bf16.mxu0 0
        %2917 = vmatpush2.bf16.msra.mxu0 0
        %2918 = vmatprep.subr.bf16.mxu0 0
        %2919 = vmatpush2.bf16.msra.mxu0 0
        %2920 = vmatprep.subr.bf16.mxu0 0
        %2921 = vmatpush2.bf16.msra.mxu0 0
        %2922 = vmatprep.subr.bf16.mxu0 0
        %2923 = vmatpush2.bf16.msra.mxu0 0
        %2924 = vmatprep.subr.bf16.mxu0 0
        %2925 = vmatpush2.bf16.msra.mxu0 0
        %2926 = vmatprep.subr.bf16.mxu0 0
        %2927 = vmatpush2.bf16.msra.mxu0 0
        %2928 = vmatprep.mubr.bf16.mxu0 0
        %2929 = vmatmul.mubr.bf16.gmra.mxu0 %v1662
        %v2930 = vpop.f32.mrf.mxu0
        %v2931 = vadd.f32 0.0, %v2930
        %v2932 = vpop.f32.mrf.mxu0
        %v2933 = vadd.f32 0.0, %v2932
        %v2934 = vpop.f32.mrf.mxu0
        %v2935 = vadd.f32 0.0, %v2934
        %v2936 = vpop.f32.mrf.mxu0
        %v2937 = vadd.f32 0.0, %v2936
        %2938 = vmatprep.mubr.bf16.mxu0 0
        %2939 = vmatmul.mubr.bf16.gmra.mxu0 %v1663
        %v2940 = vpop.f32.mrf.mxu0
        %v2941 = vadd.f32 0.0, %v2940
        %v2942 = vpop.f32.mrf.mxu0
        %v2943 = vadd.f32 0.0, %v2942
        %v2944 = vpop.f32.mrf.mxu0
        %v2945 = vadd.f32 0.0, %v2944
        %v2946 = vpop.f32.mrf.mxu0
        %v2947 = vadd.f32 0.0, %v2946
        %2948 = vmatprep.mubr.bf16.mxu0 0
        %2949 = vmatmul.mubr.bf16.gmra.mxu0 %v1664
        %v2950 = vpop.f32.mrf.mxu0
        %v2951 = vadd.f32 0.0, %v2950
        %v2952 = vpop.f32.mrf.mxu0
        %v2953 = vadd.f32 0.0, %v2952
        %v2954 = vpop.f32.mrf.mxu0
        %v2955 = vadd.f32 0.0, %v2954
        %v2956 = vpop.f32.mrf.mxu0
        %v2957 = vadd.f32 0.0, %v2956
        %2958 = vmatprep.mubr.bf16.mxu0 0
        %2959 = vmatmul.mubr.bf16.gmra.mxu0 %v1665
        %v2960 = vpop.f32.mrf.mxu0
        %v2961 = vadd.f32 0.0, %v2960
        %v2962 = vpop.f32.mrf.mxu0
        %v2963 = vadd.f32 0.0, %v2962
        %v2964 = vpop.f32.mrf.mxu0
        %v2965 = vadd.f32 0.0, %v2964
        %v2966 = vpop.f32.mrf.mxu0
        %v2967 = vadd.f32 0.0, %v2966
        %2968 = vmatprep.mubr.bf16.mxu0 0
        %2969 = vmatmul.mubr.bf16.gmra.mxu0 %v1666
        %v2970 = vpop.f32.mrf.mxu0
        %v2971 = vadd.f32 0.0, %v2970
        %v2972 = vpop.f32.mrf.mxu0
        %v2973 = vadd.f32 0.0, %v2972
        %v2974 = vpop.f32.mrf.mxu0
        %v2975 = vpop.f32.mrf.mxu0
        %2976 = vdwg.mxu0
        %2977 = vmatprep.subr.bf16.mxu0 %v1051
        %2978 = vmatpush1.bf16.msra.mxu0 %v1050
        %2979 = vmatprep.subr.bf16.mxu0 %v1049
        %2980 = vmatpush1.bf16.msra.mxu0 %v1048
        %2981 = vmatprep.subr.bf16.mxu0 %v1047
        %2982 = vmatpush1.bf16.msra.mxu0 %v1046
        %2983 = vmatprep.subr.bf16.mxu0 %v1045
        %2984 = vmatpush1.bf16.msra.mxu0 %v1044
        %2985 = vmatprep.subr.bf16.mxu0 %v1043
        %2986 = vmatpush1.bf16.msra.mxu0 %v1042
        %2987 = vmatprep.subr.bf16.mxu0 %v1041
        %2988 = vmatpush1.bf16.msra.mxu0 %v1040
        %2989 = vmatprep.subr.bf16.mxu0 %v1039
        %2990 = vmatpush1.bf16.msra.mxu0 %v1038
        %2991 = vmatprep.subr.bf16.mxu0 %v1037
        %2992 = vmatpush1.bf16.msra.mxu0 %v1036
        %2993 = vmatprep.subr.bf16.mxu0 0
        %2994 = vmatpush2.bf16.msra.mxu0 0
        %2995 = vmatprep.subr.bf16.mxu0 0
        %2996 = vmatpush2.bf16.msra.mxu0 0
        %2997 = vmatprep.subr.bf16.mxu0 0
        %2998 = vmatpush2.bf16.msra.mxu0 0
        %2999 = vmatprep.subr.bf16.mxu0 0
        %3000 = vmatpush2.bf16.msra.mxu0 0
        %3001 = vmatprep.subr.bf16.mxu0 0
        %3002 = vmatpush2.bf16.msra.mxu0 0
        %3003 = vmatprep.subr.bf16.mxu0 0
        %3004 = vmatpush2.bf16.msra.mxu0 0
        %3005 = vmatprep.subr.bf16.mxu0 0
        %3006 = vmatpush2.bf16.msra.mxu0 0
        %3007 = vmatprep.subr.bf16.mxu0 0
        %3008 = vmatpush2.bf16.msra.mxu0 0
        %3009 = vmatprep.mubr.bf16.mxu0 0
        %3010 = vmatmul.mubr.bf16.gmra.mxu0 %v1428
        %v3011 = vpop.f32.mrf.mxu0
        %v3012 = vadd.f32 %v2931, %v3011
        %v3013 = vpop.f32.mrf.mxu0
        %v3014 = vadd.f32 %v2933, %v3013
        %v3015 = vpop.f32.mrf.mxu0
        %v3016 = vadd.f32 %v2935, %v3015
        %v3017 = vpop.f32.mrf.mxu0
        %v3018 = vadd.f32 %v2937, %v3017
        %3019 = vmatprep.mubr.bf16.mxu0 0
        %3020 = vmatmul.mubr.bf16.gmra.mxu0 %v1429
        %v3021 = vpop.f32.mrf.mxu0
        %v3022 = vadd.f32 %v2941, %v3021
        %v3023 = vpop.f32.mrf.mxu0
        %v3024 = vadd.f32 %v2943, %v3023
        %v3025 = vpop.f32.mrf.mxu0
        %v3026 = vadd.f32 %v2945, %v3025
        %v3027 = vpop.f32.mrf.mxu0
        %v3028 = vadd.f32 %v2947, %v3027
        %3029 = vmatprep.mubr.bf16.mxu0 0
        %3030 = vmatmul.mubr.bf16.gmra.mxu0 %v1430
        %v3031 = vpop.f32.mrf.mxu0
        %v3032 = vadd.f32 %v2951, %v3031
        %v3033 = vpop.f32.mrf.mxu0
        %v3034 = vadd.f32 %v2953, %v3033
        %v3035 = vpop.f32.mrf.mxu0
        %v3036 = vadd.f32 %v2955, %v3035
        %v3037 = vpop.f32.mrf.mxu0
        %v3038 = vadd.f32 %v2957, %v3037
        %3039 = vmatprep.mubr.bf16.mxu0 0
        %3040 = vmatmul.mubr.bf16.gmra.mxu0 %v1431
        %v3041 = vpop.f32.mrf.mxu0
        %v3042 = vadd.f32 %v2961, %v3041
        %v3043 = vpop.f32.mrf.mxu0
        %v3044 = vadd.f32 %v2963, %v3043
        %v3045 = vpop.f32.mrf.mxu0
        %v3046 = vadd.f32 %v2965, %v3045
        %v3047 = vpop.f32.mrf.mxu0
        %v3048 = vadd.f32 %v2967, %v3047
        %3049 = vmatprep.mubr.bf16.mxu0 0
        %3050 = vmatmul.mubr.bf16.gmra.mxu0 %v1432
        %v3051 = vpop.f32.mrf.mxu0
        %v3052 = vadd.f32 %v2971, %v3051
        %v3053 = vpop.f32.mrf.mxu0
        %v3054 = vadd.f32 %v2973, %v3053
        %v3055 = vpop.f32.mrf.mxu0
        %v3056 = vpop.f32.mrf.mxu0
        %3057 = vdwg.mxu0
        %3058 = vmatprep.subr.bf16.mxu0 %v1267
        %3059 = vmatpush1.bf16.msra.mxu0 %v1266
        %3060 = vmatprep.subr.bf16.mxu0 %v1265
        %3061 = vmatpush1.bf16.msra.mxu0 %v1264
        %3062 = vmatprep.subr.bf16.mxu0 %v1263
        %3063 = vmatpush1.bf16.msra.mxu0 %v1262
        %3064 = vmatprep.subr.bf16.mxu0 %v1261
        %3065 = vmatpush1.bf16.msra.mxu0 %v1260
        %3066 = vmatprep.subr.bf16.mxu0 %v1259
        %3067 = vmatpush1.bf16.msra.mxu0 %v1258
        %3068 = vmatprep.subr.bf16.mxu0 %v1257
        %3069 = vmatpush1.bf16.msra.mxu0 %v1256
        %3070 = vmatprep.subr.bf16.mxu0 %v1255
        %3071 = vmatpush1.bf16.msra.mxu0 %v1254
        %3072 = vmatprep.subr.bf16.mxu0 %v1253
        %3073 = vmatpush1.bf16.msra.mxu0 %v1252
        %3074 = vmatprep.subr.bf16.mxu0 0
        %3075 = vmatpush2.bf16.msra.mxu0 0
        %3076 = vmatprep.subr.bf16.mxu0 0
        %3077 = vmatpush2.bf16.msra.mxu0 0
        %3078 = vmatprep.subr.bf16.mxu0 0
        %3079 = vmatpush2.bf16.msra.mxu0 0
        %3080 = vmatprep.subr.bf16.mxu0 0
        %3081 = vmatpush2.bf16.msra.mxu0 0
        %3082 = vmatprep.subr.bf16.mxu0 0
        %3083 = vmatpush2.bf16.msra.mxu0 0
        %3084 = vmatprep.subr.bf16.mxu0 0
        %3085 = vmatpush2.bf16.msra.mxu0 0
        %3086 = vmatprep.subr.bf16.mxu0 0
        %3087 = vmatpush2.bf16.msra.mxu0 0
        %3088 = vmatprep.subr.bf16.mxu0 0
        %3089 = vmatpush2.bf16.msra.mxu0 0
        %3090 = vmatprep.mubr.bf16.mxu0 0
        %3091 = vmatmul.mubr.bf16.gmra.mxu0 %v2239
        %v3092 = vpop.f32.mrf.mxu0
        %v3093 = vadd.f32 0.0, %v3092
        %v3094 = vpop.f32.mrf.mxu0
        %v3095 = vadd.f32 0.0, %v3094
        %v3096 = vpop.f32.mrf.mxu0
        %v3097 = vadd.f32 0.0, %v3096
        %v3098 = vpop.f32.mrf.mxu0
        %v3099 = vadd.f32 0.0, %v3098
        %3100 = vmatprep.mubr.bf16.mxu0 0
        %3101 = vmatmul.mubr.bf16.gmra.mxu0 %v2240
        %v3102 = vpop.f32.mrf.mxu0
        %v3103 = vadd.f32 0.0, %v3102
        %v3104 = vpop.f32.mrf.mxu0
        %v3105 = vadd.f32 0.0, %v3104
        %v3106 = vpop.f32.mrf.mxu0
        %v3107 = vadd.f32 0.0, %v3106
        %v3108 = vpop.f32.mrf.mxu0
        %v3109 = vadd.f32 0.0, %v3108
        %3110 = vmatprep.mubr.bf16.mxu0 0
        %3111 = vmatmul.mubr.bf16.gmra.mxu0 %v2241
        %v3112 = vpop.f32.mrf.mxu0
        %v3113 = vadd.f32 0.0, %v3112
        %v3114 = vpop.f32.mrf.mxu0
        %v3115 = vadd.f32 0.0, %v3114
        %v3116 = vpop.f32.mrf.mxu0
        %v3117 = vadd.f32 0.0, %v3116
        %v3118 = vpop.f32.mrf.mxu0
        %v3119 = vadd.f32 0.0, %v3118
        %3120 = vmatprep.mubr.bf16.mxu0 0
        %3121 = vmatmul.mubr.bf16.gmra.mxu0 %v2242
        %v3122 = vpop.f32.mrf.mxu0
        %v3123 = vadd.f32 0.0, %v3122
        %v3124 = vpop.f32.mrf.mxu0
        %v3125 = vadd.f32 0.0, %v3124
        %v3126 = vpop.f32.mrf.mxu0
        %v3127 = vadd.f32 0.0, %v3126
        %v3128 = vpop.f32.mrf.mxu0
        %v3129 = vadd.f32 0.0, %v3128
        %3130 = vmatprep.mubr.bf16.mxu0 0
        %3131 = vmatmul.mubr.bf16.gmra.mxu0 %v2243
        %v3132 = vpop.f32.mrf.mxu0
        %v3133 = vadd.f32 0.0, %v3132
        %v3134 = vpop.f32.mrf.mxu0
        %v3135 = vadd.f32 0.0, %v3134
        %v3136 = vpop.f32.mrf.mxu0
        %v3137 = vpop.f32.mrf.mxu0
        %3138 = vdwg.mxu0
        %v3139 = vadd.f32 %v3012, %v3093
        %v3140 = vadd.f32 %v3014, %v3095
        %v3141 = vadd.f32 %v3016, %v3097
        %v3142 = vadd.f32 %v3018, %v3099
        %v3143 = vadd.f32 %v3022, %v3103
        %v3144 = vadd.f32 %v3024, %v3105
        %v3145 = vadd.f32 %v3026, %v3107
        %v3146 = vadd.f32 %v3028, %v3109
        %v3147 = vadd.f32 %v3032, %v3113
        %v3148 = vadd.f32 %v3034, %v3115
        %v3149 = vadd.f32 %v3036, %v3117
        %v3150 = vadd.f32 %v3038, %v3119
        %v3151 = vadd.f32 %v3042, %v3123
        %v3152 = vadd.f32 %v3044, %v3125
        %v3153 = vadd.f32 %v3046, %v3127
        %v3154 = vadd.f32 %v3048, %v3129
        %v3155 = vadd.f32 %v3052, %v3133
        %v3156 = vadd.f32 %v3054, %v3135
        %3157 = vmatprep.subr.bf16.mxu0 %v1501
        %3158 = vmatpush1.bf16.msra.mxu0 %v1500
        %3159 = vmatprep.subr.bf16.mxu0 %v1499
        %3160 = vmatpush1.bf16.msra.mxu0 %v1498
        %3161 = vmatprep.subr.bf16.mxu0 %v1497
        %3162 = vmatpush1.bf16.msra.mxu0 %v1496
        %3163 = vmatprep.subr.bf16.mxu0 %v1495
        %3164 = vmatpush1.bf16.msra.mxu0 %v1494
        %3165 = vmatprep.subr.bf16.mxu0 %v1493
        %3166 = vmatpush1.bf16.msra.mxu0 %v1492
        %3167 = vmatprep.subr.bf16.mxu0 %v1491
        %3168 = vmatpush1.bf16.msra.mxu0 %v1490
        %3169 = vmatprep.subr.bf16.mxu0 %v1489
        %3170 = vmatpush1.bf16.msra.mxu0 %v1488
        %3171 = vmatprep.subr.bf16.mxu0 %v1487
        %3172 = vmatpush1.bf16.msra.mxu0 %v1486
        %3173 = vmatprep.subr.bf16.mxu0 0
        %3174 = vmatpush2.bf16.msra.mxu0 0
        %3175 = vmatprep.subr.bf16.mxu0 0
        %3176 = vmatpush2.bf16.msra.mxu0 0
        %3177 = vmatprep.subr.bf16.mxu0 0
        %3178 = vmatpush2.bf16.msra.mxu0 0
        %3179 = vmatprep.subr.bf16.mxu0 0
        %3180 = vmatpush2.bf16.msra.mxu0 0
        %3181 = vmatprep.subr.bf16.mxu0 0
        %3182 = vmatpush2.bf16.msra.mxu0 0
        %3183 = vmatprep.subr.bf16.mxu0 0
        %3184 = vmatpush2.bf16.msra.mxu0 0
        %3185 = vmatprep.subr.bf16.mxu0 0
        %3186 = vmatpush2.bf16.msra.mxu0 0
        %3187 = vmatprep.subr.bf16.mxu0 0
        %3188 = vmatpush2.bf16.msra.mxu0 0
        %3189 = vmatprep.mubr.bf16.mxu0 0
        %3190 = vmatmul.mubr.bf16.gmra.mxu0 %v2787
        %v3191 = vpop.f32.mrf.mxu0
        %v3192 = vadd.f32 0.0, %v3191
        %v3193 = vpop.f32.mrf.mxu0
        %v3194 = vadd.f32 0.0, %v3193
        %v3195 = vpop.f32.mrf.mxu0
        %v3196 = vadd.f32 0.0, %v3195
        %v3197 = vpop.f32.mrf.mxu0
        %v3198 = vadd.f32 0.0, %v3197
        %3199 = vmatprep.mubr.bf16.mxu0 0
        %3200 = vmatmul.mubr.bf16.gmra.mxu0 %v2788
        %v3201 = vpop.f32.mrf.mxu0
        %v3202 = vadd.f32 0.0, %v3201
        %v3203 = vpop.f32.mrf.mxu0
        %v3204 = vadd.f32 0.0, %v3203
        %v3205 = vpop.f32.mrf.mxu0
        %v3206 = vadd.f32 0.0, %v3205
        %v3207 = vpop.f32.mrf.mxu0
        %v3208 = vadd.f32 0.0, %v3207
        %3209 = vmatprep.mubr.bf16.mxu0 0
        %3210 = vmatmul.mubr.bf16.gmra.mxu0 %v2789
        %v3211 = vpop.f32.mrf.mxu0
        %v3212 = vadd.f32 0.0, %v3211
        %v3213 = vpop.f32.mrf.mxu0
        %v3214 = vadd.f32 0.0, %v3213
        %v3215 = vpop.f32.mrf.mxu0
        %v3216 = vadd.f32 0.0, %v3215
        %v3217 = vpop.f32.mrf.mxu0
        %v3218 = vadd.f32 0.0, %v3217
        %3219 = vmatprep.mubr.bf16.mxu0 0
        %3220 = vmatmul.mubr.bf16.gmra.mxu0 %v2790
        %v3221 = vpop.f32.mrf.mxu0
        %v3222 = vadd.f32 0.0, %v3221
        %v3223 = vpop.f32.mrf.mxu0
        %v3224 = vadd.f32 0.0, %v3223
        %v3225 = vpop.f32.mrf.mxu0
        %v3226 = vadd.f32 0.0, %v3225
        %v3227 = vpop.f32.mrf.mxu0
        %v3228 = vadd.f32 0.0, %v3227
        %3229 = vmatprep.mubr.bf16.mxu0 0
        %3230 = vmatmul.mubr.bf16.gmra.mxu0 %v2791
        %v3231 = vpop.f32.mrf.mxu0
        %v3232 = vadd.f32 0.0, %v3231
        %v3233 = vpop.f32.mrf.mxu0
        %v3234 = vadd.f32 0.0, %v3233
        %v3235 = vpop.f32.mrf.mxu0
        %v3236 = vpop.f32.mrf.mxu0
        %3237 = vdwg.mxu0
        %v3238 = vadd.f32 %v3139, %v3192
        %v3239 = vadd.f32 %v3140, %v3194
        %v3240 = vadd.f32 %v3141, %v3196
        %v3241 = vadd.f32 %v3142, %v3198
        %v3242 = vadd.f32 %v3143, %v3202
        %v3243 = vadd.f32 %v3144, %v3204
        %v3244 = vadd.f32 %v3145, %v3206
        %v3245 = vadd.f32 %v3146, %v3208
        %v3246 = vadd.f32 %v3147, %v3212
        %v3247 = vadd.f32 %v3148, %v3214
        %v3248 = vadd.f32 %v3149, %v3216
        %v3249 = vadd.f32 %v3150, %v3218
        %v3250 = vadd.f32 %v3151, %v3222
        %v3251 = vadd.f32 %v3152, %v3224
        %v3252 = vadd.f32 %v3153, %v3226
        %v3253 = vadd.f32 %v3154, %v3228
        %v3254 = vadd.f32 %v3155, %v3232
        %v3255 = vadd.f32 %v3156, %v3234
        %s3256 = scalar_lea.vmem %s673, 252 [#allocation2]
        %v3257 = vld [vmem:[%s3256] sm:$0xf]
        %v3258 = vld [vmem:[%s3256 + $0x4] sm:$0xf]
        %v3259 = vld [vmem:[%s3256 + $0x8] sm:$0xf]
        %v3260 = vld [vmem:[%s3256 + $0xc] sm:$0xf]
        %v3261 = vld [vmem:[%s3256 + $0x10] sm:$0xf]
        %v3262 = vld [vmem:[%s3256 + $0x14] sm:$0xf]
        %v3263 = vld [vmem:[%s3256 + $0x18] sm:$0xf]
        %v3264 = vld [vmem:[%s3256 + $0x1c] sm:$0xf]
        %v3265 = vld [vmem:[%s3256 + $0x20] sm:$0xf]
        %v3275 = vunpack.c.l.b16 %v3257
        %v3276 = vunpack.c.l.b16 %v3258
        %v3277 = vunpack.c.l.b16 %v3259
        %v3278 = vunpack.c.l.b16 %v3260
        %v3279 = vunpack.c.l.b16 %v3261
        %v3280 = vunpack.c.l.b16 %v3262
        %v3281 = vunpack.c.l.b16 %v3263
        %v3282 = vunpack.c.l.b16 %v3264
        %v3283 = vunpack.c.l.b16 %v3265
        %v3284 = vpack.c.b16 %v3276, %v3275
        %v3285 = vpack.c.b16 %v3278, %v3277
        %v3286 = vpack.c.b16 %v3280, %v3279
        %v3287 = vpack.c.b16 %v3282, %v3281
        %v3288 = vpack.c.b16 %v3283, %v3283
        %3294 = vmatprep.subr.bf16.mxu0 %v1735
        %3295 = vmatpush1.bf16.msra.mxu0 %v1734
        %3296 = vmatprep.subr.bf16.mxu0 %v1733
        %3297 = vmatpush1.bf16.msra.mxu0 %v1732
        %3298 = vmatprep.subr.bf16.mxu0 %v1731
        %3299 = vmatpush1.bf16.msra.mxu0 %v1730
        %3300 = vmatprep.subr.bf16.mxu0 %v1729
        %3301 = vmatpush1.bf16.msra.mxu0 %v1728
        %3302 = vmatprep.subr.bf16.mxu0 %v1727
        %3303 = vmatpush1.bf16.msra.mxu0 %v1726
        %3304 = vmatprep.subr.bf16.mxu0 %v1725
        %3305 = vmatpush1.bf16.msra.mxu0 %v1724
        %3306 = vmatprep.subr.bf16.mxu0 %v1723
        %3307 = vmatpush1.bf16.msra.mxu0 %v1722
        %3308 = vmatprep.subr.bf16.mxu0 %v1721
        %3309 = vmatpush1.bf16.msra.mxu0 %v1720
        %3310 = vmatprep.subr.bf16.mxu0 0
        %3311 = vmatpush2.bf16.msra.mxu0 0
        %3312 = vmatprep.subr.bf16.mxu0 0
        %3313 = vmatpush2.bf16.msra.mxu0 0
        %3314 = vmatprep.subr.bf16.mxu0 0
        %3315 = vmatpush2.bf16.msra.mxu0 0
        %3316 = vmatprep.subr.bf16.mxu0 0
        %3317 = vmatpush2.bf16.msra.mxu0 0
        %3318 = vmatprep.subr.bf16.mxu0 0
        %3319 = vmatpush2.bf16.msra.mxu0 0
        %3320 = vmatprep.subr.bf16.mxu0 0
        %3321 = vmatpush2.bf16.msra.mxu0 0
        %3322 = vmatprep.subr.bf16.mxu0 0
        %3323 = vmatpush2.bf16.msra.mxu0 0
        %3324 = vmatprep.subr.bf16.mxu0 0
        %3325 = vmatpush2.bf16.msra.mxu0 0
        %3326 = vmatprep.mubr.bf16.mxu0 0
        %3327 = vmatmul.mubr.bf16.gmra.mxu0 %v3284
        %v3328 = vpop.f32.mrf.mxu0
        %v3329 = vadd.f32 0.0, %v3328
        %v3330 = vpop.f32.mrf.mxu0
        %v3331 = vadd.f32 0.0, %v3330
        %v3332 = vpop.f32.mrf.mxu0
        %v3333 = vadd.f32 0.0, %v3332
        %v3334 = vpop.f32.mrf.mxu0
        %v3335 = vadd.f32 0.0, %v3334
        %3336 = vmatprep.mubr.bf16.mxu0 0
        %3337 = vmatmul.mubr.bf16.gmra.mxu0 %v3285
        %v3338 = vpop.f32.mrf.mxu0
        %v3339 = vadd.f32 0.0, %v3338
        %v3340 = vpop.f32.mrf.mxu0
        %v3341 = vadd.f32 0.0, %v3340
        %v3342 = vpop.f32.mrf.mxu0
        %v3343 = vadd.f32 0.0, %v3342
        %v3344 = vpop.f32.mrf.mxu0
        %v3345 = vadd.f32 0.0, %v3344
        %3346 = vmatprep.mubr.bf16.mxu0 0
        %3347 = vmatmul.mubr.bf16.gmra.mxu0 %v3286
        %v3348 = vpop.f32.mrf.mxu0
        %v3349 = vadd.f32 0.0, %v3348
        %v3350 = vpop.f32.mrf.mxu0
        %v3351 = vadd.f32 0.0, %v3350
        %v3352 = vpop.f32.mrf.mxu0
        %v3353 = vadd.f32 0.0, %v3352
        %v3354 = vpop.f32.mrf.mxu0
        %v3355 = vadd.f32 0.0, %v3354
        %3356 = vmatprep.mubr.bf16.mxu0 0
        %3357 = vmatmul.mubr.bf16.gmra.mxu0 %v3287
        %v3358 = vpop.f32.mrf.mxu0
        %v3359 = vadd.f32 0.0, %v3358
        %v3360 = vpop.f32.mrf.mxu0
        %v3361 = vadd.f32 0.0, %v3360
        %v3362 = vpop.f32.mrf.mxu0
        %v3363 = vadd.f32 0.0, %v3362
        %v3364 = vpop.f32.mrf.mxu0
        %v3365 = vadd.f32 0.0, %v3364
        %3366 = vmatprep.mubr.bf16.mxu0 0
        %3367 = vmatmul.mubr.bf16.gmra.mxu0 %v3288
        %v3368 = vpop.f32.mrf.mxu0
        %v3369 = vadd.f32 0.0, %v3368
        %v3370 = vpop.f32.mrf.mxu0
        %v3371 = vadd.f32 0.0, %v3370
        %v3372 = vpop.f32.mrf.mxu0
        %v3373 = vpop.f32.mrf.mxu0
        %3374 = vdwg.mxu0
        %v3375 = vadd.f32 %v3238, %v3329
        %v3376 = vadd.f32 %v3239, %v3331
        %v3377 = vadd.f32 %v3240, %v3333
        %v3378 = vadd.f32 %v3241, %v3335
        %v3379 = vadd.f32 %v3242, %v3339
        %v3380 = vadd.f32 %v3243, %v3341
        %v3381 = vadd.f32 %v3244, %v3343
        %v3382 = vadd.f32 %v3245, %v3345
        %v3383 = vadd.f32 %v3246, %v3349
        %v3384 = vadd.f32 %v3247, %v3351
        %v3385 = vadd.f32 %v3248, %v3353
        %v3386 = vadd.f32 %v3249, %v3355
        %v3387 = vadd.f32 %v3250, %v3359
        %v3388 = vadd.f32 %v3251, %v3361
        %v3389 = vadd.f32 %v3252, %v3363
        %v3390 = vadd.f32 %v3253, %v3365
        %v3391 = vadd.f32 %v3254, %v3369
        %v3392 = vadd.f32 %v3255, %v3371
        %v3393 = vmax.f32 %v2878, %v3375
        %v3394 = vmax.f32 %v2879, %v3376
        %v3395 = vmax.f32 %v2880, %v3377
        %v3396 = vmax.f32 %v2881, %v3378
        %v3397 = vmax.f32 %v2882, %v3379
        %v3398 = vmax.f32 %v2883, %v3380
        %v3399 = vmax.f32 %v2884, %v3381
        %v3400 = vmax.f32 %v2885, %v3382
        %v3401 = vmax.f32 %v2886, %v3383
        %v3402 = vmax.f32 %v2887, %v3384
        %v3403 = vmax.f32 %v2888, %v3385
        %v3404 = vmax.f32 %v2889, %v3386
        %v3405 = vmax.f32 %v2890, %v3387
        %v3406 = vmax.f32 %v2891, %v3388
        %v3407 = vmax.f32 %v2892, %v3389
        %v3408 = vmax.f32 %v2893, %v3390
        %v3409 = vmax.f32 %v2894, %v3391
        %v3410 = vmax.f32 %v2895, %v3392
        %v3411 = vmax.f32 %v3393, %v3394
        %v3412 = vmax.f32 %v3395, %v3396
        %v3413 = vmax.f32 %v3397, %v3398
        %v3414 = vmax.f32 %v3399, %v3400
        %v3415 = vmax.f32 %v3401, %v3402
        %v3416 = vmax.f32 %v3403, %v3404
        %v3417 = vmax.f32 %v3405, %v3406
        %v3418 = vmax.f32 %v3407, %v3408
        %v3419 = vmax.f32 %v3409, %v3410
        %v3420 = vadd.f32 %v3411, %v2379
        %v3421 = vadd.f32 %v3412, %v2379
        %v3422 = vadd.f32 %v3413, %v2379
        %v3423 = vadd.f32 %v3414, %v2379
        %v3424 = vadd.f32 %v3415, %v2379
        %v3425 = vadd.f32 %v3416, %v2379
        %v3426 = vadd.f32 %v3417, %v2379
        %v3427 = vadd.f32 %v3418, %v2379
        %v3428 = vadd.f32 %v3419, %v2379
        %v3429 = vmax.f32 %v3420, 0.0
        %v3430 = vmax.f32 %v3421, 0.0
        %v3431 = vmax.f32 %v3422, 0.0
        %v3432 = vmax.f32 %v3423, 0.0
        %v3433 = vmax.f32 %v3424, 0.0
        %v3434 = vmax.f32 %v3425, 0.0
        %v3435 = vmax.f32 %v3426, 0.0
        %v3436 = vmax.f32 %v3427, 0.0
        %v3437 = vmax.f32 %v3428, 0.0
        %v3438 = vpack.c.bf16 %v2391, %v2390
        %v3439 = vpack.c.bf16 %v2393, %v2392
        %v3440 = vpack.c.bf16 %v2395, %v2394
        %v3441 = vpack.c.bf16 %v2397, %v2396
        %v3442 = vpack.c.bf16 %v2398, %v2398
        %v3443 = vpack.c.bf16 %v3430, %v3429
        %v3444 = vpack.c.bf16 %v3432, %v3431
        %v3445 = vpack.c.bf16 %v3434, %v3433
        %v3446 = vpack.c.bf16 %v3436, %v3435
        %v3447 = vpack.c.bf16 %v3437, %v3437
        %v3448 = vld [vmem:[%s3] sm:$0xff]
        %v3449 = vld [vmem:[%s3 + $0x8] sm:$0xff]
        %v3450 = vld [vmem:[%s3 + $0x10] sm:$0xff]
        %v3451 = vld [vmem:[%s3 + $0x18] sm:$0xff]
        %v3452 = vld [vmem:[%s3 + $0x20] sm:$0xff]
        %v3453 = vld [vmem:[%s3 + $0x28] sm:$0xff]
        %v3454 = vld [vmem:[%s3 + $0x30] sm:$0xff]
        %v3455 = vld [vmem:[%s3 + $0x38] sm:$0xff]
        %v3456 = vld [vmem:[%s3 + $0x40] sm:$0xff]
        %v3457 = vld [vmem:[%s3 + $0x48] sm:$0xff]
        %v3458 = vld [vmem:[%s3 + $0x50] sm:$0xff]
        %v3459 = vld [vmem:[%s3 + $0x58] sm:$0xff]
        %v3460 = vld [vmem:[%s3 + $0x60] sm:$0xff]
        %v3461 = vld [vmem:[%s3 + $0x68] sm:$0xff]
        %v3462 = vld [vmem:[%s3 + $0x70] sm:$0xff]
        %v3463 = vld [vmem:[%s3 + $0x78] sm:$0xff]
        %s3464 = scalar_lea.vmem %s3, 128
        %v3465 = vld [vmem:[%s3464] sm:$0xff]
        %v3466 = vld [vmem:[%s3464 + $0x8] sm:$0xff]
        %v3467 = vld [vmem:[%s3464 + $0x10] sm:$0xff]
        %v3468 = vld [vmem:[%s3464 + $0x18] sm:$0xff]
        %v3469 = vld [vmem:[%s3464 + $0x20] sm:$0xff]
        %v3470 = vld [vmem:[%s3464 + $0x28] sm:$0xff]
        %v3471 = vld [vmem:[%s3464 + $0x30] sm:$0xff]
        %v3472 = vld [vmem:[%s3464 + $0x38] sm:$0xff]
        %v3473 = vld [vmem:[%s3464 + $0x40] sm:$0xff]
        %v3474 = vld [vmem:[%s3464 + $0x48] sm:$0xff]
        %v3475 = vld [vmem:[%s3464 + $0x50] sm:$0xff]
        %v3476 = vld [vmem:[%s3464 + $0x58] sm:$0xff]
        %v3477 = vld [vmem:[%s3464 + $0x60] sm:$0xff]
        %v3478 = vld [vmem:[%s3464 + $0x68] sm:$0xff]
        %v3479 = vld [vmem:[%s3464 + $0x70] sm:$0xff]
        %v3480 = vld [vmem:[%s3464 + $0x78] sm:$0xff]
        %v3497 = vunpack.c.l.b16 %v3465
        %v3498 = vunpack.c.h.b16 %v3465
        %v3499 = vunpack.c.l.b16 %v3466
        %v3500 = vunpack.c.h.b16 %v3466
        %v3501 = vunpack.c.l.b16 %v3467
        %v3502 = vunpack.c.h.b16 %v3467
        %v3503 = vunpack.c.l.b16 %v3468
        %v3504 = vunpack.c.h.b16 %v3468
        %v3505 = vunpack.c.l.b16 %v3469
        %v3506 = vunpack.c.h.b16 %v3469
        %v3507 = vunpack.c.l.b16 %v3470
        %v3508 = vunpack.c.h.b16 %v3470
        %v3509 = vunpack.c.l.b16 %v3471
        %v3510 = vunpack.c.h.b16 %v3471
        %v3511 = vunpack.c.l.b16 %v3472
        %v3512 = vunpack.c.h.b16 %v3472
        %v3513 = vunpack.c.l.b16 %v3473
        %v3514 = vunpack.c.h.b16 %v3473
        %v3515 = vunpack.c.l.b16 %v3474
        %v3516 = vunpack.c.h.b16 %v3474
        %v3517 = vunpack.c.l.b16 %v3475
        %v3518 = vunpack.c.h.b16 %v3475
        %v3519 = vunpack.c.l.b16 %v3476
        %v3520 = vunpack.c.h.b16 %v3476
        %v3521 = vunpack.c.l.b16 %v3477
        %v3522 = vunpack.c.h.b16 %v3477
        %v3523 = vunpack.c.l.b16 %v3478
        %v3524 = vunpack.c.h.b16 %v3478
        %v3525 = vunpack.c.l.b16 %v3479
        %v3526 = vunpack.c.h.b16 %v3479
        %v3527 = vunpack.c.l.b16 %v3480
        %v3528 = vunpack.c.h.b16 %v3480
        %v3529 = vpack.c.b16 %v3499, %v3497
        %v3530 = vpack.c.b16 %v3500, %v3498
        %v3531 = vpack.c.b16 %v3503, %v3501
        %v3532 = vpack.c.b16 %v3504, %v3502
        %v3533 = vpack.c.b16 %v3507, %v3505
        %v3534 = vpack.c.b16 %v3508, %v3506
        %v3535 = vpack.c.b16 %v3511, %v3509
        %v3536 = vpack.c.b16 %v3512, %v3510
        %v3537 = vpack.c.b16 %v3515, %v3513
        %v3538 = vpack.c.b16 %v3516, %v3514
        %v3539 = vpack.c.b16 %v3519, %v3517
        %v3540 = vpack.c.b16 %v3520, %v3518
        %v3541 = vpack.c.b16 %v3523, %v3521
        %v3542 = vpack.c.b16 %v3524, %v3522
        %v3543 = vpack.c.b16 %v3527, %v3525
        %v3544 = vpack.c.b16 %v3528, %v3526
        %3561 = vmatprep.subr.bf16.mxu0 %v3544
        %3562 = vmatpush1.bf16.msra.mxu0 %v3543
        %3563 = vmatprep.subr.bf16.mxu0 %v3542
        %3564 = vmatpush1.bf16.msra.mxu0 %v3541
        %3565 = vmatprep.subr.bf16.mxu0 %v3540
        %3566 = vmatpush1.bf16.msra.mxu0 %v3539
        %3567 = vmatprep.subr.bf16.mxu0 %v3538
        %3568 = vmatpush1.bf16.msra.mxu0 %v3537
        %3569 = vmatprep.subr.bf16.mxu0 %v3536
        %3570 = vmatpush1.bf16.msra.mxu0 %v3535
        %3571 = vmatprep.subr.bf16.mxu0 %v3534
        %3572 = vmatpush1.bf16.msra.mxu0 %v3533
        %3573 = vmatprep.subr.bf16.mxu0 %v3532
        %3574 = vmatpush1.bf16.msra.mxu0 %v3531
        %3575 = vmatprep.subr.bf16.mxu0 %v3530
        %3576 = vmatpush1.bf16.msra.mxu0 %v3529
        %3577 = vmatprep.subr.bf16.mxu0 0
        %3578 = vmatpush2.bf16.msra.mxu0 0
        %3579 = vmatprep.subr.bf16.mxu0 0
        %3580 = vmatpush2.bf16.msra.mxu0 0
        %3581 = vmatprep.subr.bf16.mxu0 0
        %3582 = vmatpush2.bf16.msra.mxu0 0
        %3583 = vmatprep.subr.bf16.mxu0 0
        %3584 = vmatpush2.bf16.msra.mxu0 0
        %3585 = vmatprep.subr.bf16.mxu0 0
        %3586 = vmatpush2.bf16.msra.mxu0 0
        %3587 = vmatprep.subr.bf16.mxu0 0
        %3588 = vmatpush2.bf16.msra.mxu0 0
        %3589 = vmatprep.subr.bf16.mxu0 0
        %3590 = vmatpush2.bf16.msra.mxu0 0
        %3591 = vmatprep.subr.bf16.mxu0 0
        %3592 = vmatpush2.bf16.msra.mxu0 0
        %3593 = vmatprep.mubr.bf16.mxu0 0
        %3594 = vmatmul.mubr.bf16.gmra.mxu0 %v3443
        %v3595 = vpop.f32.mrf.mxu0
        %v3596 = vadd.f32 0.0, %v3595
        %v3597 = vpop.f32.mrf.mxu0
        %v3598 = vadd.f32 0.0, %v3597
        %v3599 = vpop.f32.mrf.mxu0
        %v3600 = vadd.f32 0.0, %v3599
        %v3601 = vpop.f32.mrf.mxu0
        %v3602 = vadd.f32 0.0, %v3601
        %3603 = vmatprep.mubr.bf16.mxu0 0
        %3604 = vmatmul.mubr.bf16.gmra.mxu0 %v3444
        %v3605 = vpop.f32.mrf.mxu0
        %v3606 = vadd.f32 0.0, %v3605
        %v3607 = vpop.f32.mrf.mxu0
        %v3608 = vadd.f32 0.0, %v3607
        %v3609 = vpop.f32.mrf.mxu0
        %v3610 = vadd.f32 0.0, %v3609
        %v3611 = vpop.f32.mrf.mxu0
        %v3612 = vadd.f32 0.0, %v3611
        %3613 = vmatprep.mubr.bf16.mxu0 0
        %3614 = vmatmul.mubr.bf16.gmra.mxu0 %v3445
        %v3615 = vpop.f32.mrf.mxu0
        %v3616 = vadd.f32 0.0, %v3615
        %v3617 = vpop.f32.mrf.mxu0
        %v3618 = vadd.f32 0.0, %v3617
        %v3619 = vpop.f32.mrf.mxu0
        %v3620 = vadd.f32 0.0, %v3619
        %v3621 = vpop.f32.mrf.mxu0
        %v3622 = vadd.f32 0.0, %v3621
        %3623 = vmatprep.mubr.bf16.mxu0 0
        %3624 = vmatmul.mubr.bf16.gmra.mxu0 %v3446
        %v3625 = vpop.f32.mrf.mxu0
        %v3626 = vadd.f32 0.0, %v3625
        %v3627 = vpop.f32.mrf.mxu0
        %v3628 = vadd.f32 0.0, %v3627
        %v3629 = vpop.f32.mrf.mxu0
        %v3630 = vadd.f32 0.0, %v3629
        %v3631 = vpop.f32.mrf.mxu0
        %v3632 = vadd.f32 0.0, %v3631
        %3633 = vmatprep.mubr.bf16.mxu0 0
        %3634 = vmatmul.mubr.bf16.gmra.mxu0 %v3447
        %v3635 = vpop.f32.mrf.mxu0
        %v3636 = vadd.f32 0.0, %v3635
        %v3637 = vpop.f32.mrf.mxu0
        %v3638 = vadd.f32 0.0, %v3637
        %v3639 = vpop.f32.mrf.mxu0
        %v3640 = vpop.f32.mrf.mxu0
        %3641 = vdwg.mxu0
        %v3658 = vunpack.c.l.b16 %v3448
        %v3659 = vunpack.c.h.b16 %v3448
        %v3660 = vunpack.c.l.b16 %v3449
        %v3661 = vunpack.c.h.b16 %v3449
        %v3662 = vunpack.c.l.b16 %v3450
        %v3663 = vunpack.c.h.b16 %v3450
        %v3664 = vunpack.c.l.b16 %v3451
        %v3665 = vunpack.c.h.b16 %v3451
        %v3666 = vunpack.c.l.b16 %v3452
        %v3667 = vunpack.c.h.b16 %v3452
        %v3668 = vunpack.c.l.b16 %v3453
        %v3669 = vunpack.c.h.b16 %v3453
        %v3670 = vunpack.c.l.b16 %v3454
        %v3671 = vunpack.c.h.b16 %v3454
        %v3672 = vunpack.c.l.b16 %v3455
        %v3673 = vunpack.c.h.b16 %v3455
        %v3674 = vunpack.c.l.b16 %v3456
        %v3675 = vunpack.c.h.b16 %v3456
        %v3676 = vunpack.c.l.b16 %v3457
        %v3677 = vunpack.c.h.b16 %v3457
        %v3678 = vunpack.c.l.b16 %v3458
        %v3679 = vunpack.c.h.b16 %v3458
        %v3680 = vunpack.c.l.b16 %v3459
        %v3681 = vunpack.c.h.b16 %v3459
        %v3682 = vunpack.c.l.b16 %v3460
        %v3683 = vunpack.c.h.b16 %v3460
        %v3684 = vunpack.c.l.b16 %v3461
        %v3685 = vunpack.c.h.b16 %v3461
        %v3686 = vunpack.c.l.b16 %v3462
        %v3687 = vunpack.c.h.b16 %v3462
        %v3688 = vunpack.c.l.b16 %v3463
        %v3689 = vunpack.c.h.b16 %v3463
        %v3690 = vpack.c.b16 %v3660, %v3658
        %v3691 = vpack.c.b16 %v3661, %v3659
        %v3692 = vpack.c.b16 %v3664, %v3662
        %v3693 = vpack.c.b16 %v3665, %v3663
        %v3694 = vpack.c.b16 %v3668, %v3666
        %v3695 = vpack.c.b16 %v3669, %v3667
        %v3696 = vpack.c.b16 %v3672, %v3670
        %v3697 = vpack.c.b16 %v3673, %v3671
        %v3698 = vpack.c.b16 %v3676, %v3674
        %v3699 = vpack.c.b16 %v3677, %v3675
        %v3700 = vpack.c.b16 %v3680, %v3678
        %v3701 = vpack.c.b16 %v3681, %v3679
        %v3702 = vpack.c.b16 %v3684, %v3682
        %v3703 = vpack.c.b16 %v3685, %v3683
        %v3704 = vpack.c.b16 %v3688, %v3686
        %v3705 = vpack.c.b16 %v3689, %v3687
        %3722 = vmatprep.subr.bf16.mxu0 %v3705
        %3723 = vmatpush1.bf16.msra.mxu0 %v3704
        %3724 = vmatprep.subr.bf16.mxu0 %v3703
        %3725 = vmatpush1.bf16.msra.mxu0 %v3702
        %3726 = vmatprep.subr.bf16.mxu0 %v3701
        %3727 = vmatpush1.bf16.msra.mxu0 %v3700
        %3728 = vmatprep.subr.bf16.mxu0 %v3699
        %3729 = vmatpush1.bf16.msra.mxu0 %v3698
        %3730 = vmatprep.subr.bf16.mxu0 %v3697
        %3731 = vmatpush1.bf16.msra.mxu0 %v3696
        %3732 = vmatprep.subr.bf16.mxu0 %v3695
        %3733 = vmatpush1.bf16.msra.mxu0 %v3694
        %3734 = vmatprep.subr.bf16.mxu0 %v3693
        %3735 = vmatpush1.bf16.msra.mxu0 %v3692
        %3736 = vmatprep.subr.bf16.mxu0 %v3691
        %3737 = vmatpush1.bf16.msra.mxu0 %v3690
        %3738 = vmatprep.subr.bf16.mxu0 0
        %3739 = vmatpush2.bf16.msra.mxu0 0
        %3740 = vmatprep.subr.bf16.mxu0 0
        %3741 = vmatpush2.bf16.msra.mxu0 0
        %3742 = vmatprep.subr.bf16.mxu0 0
        %3743 = vmatpush2.bf16.msra.mxu0 0
        %3744 = vmatprep.subr.bf16.mxu0 0
        %3745 = vmatpush2.bf16.msra.mxu0 0
        %3746 = vmatprep.subr.bf16.mxu0 0
        %3747 = vmatpush2.bf16.msra.mxu0 0
        %3748 = vmatprep.subr.bf16.mxu0 0
        %3749 = vmatpush2.bf16.msra.mxu0 0
        %3750 = vmatprep.subr.bf16.mxu0 0
        %3751 = vmatpush2.bf16.msra.mxu0 0
        %3752 = vmatprep.subr.bf16.mxu0 0
        %3753 = vmatpush2.bf16.msra.mxu0 0
        %3754 = vmatprep.mubr.bf16.mxu0 0
        %3755 = vmatmul.mubr.bf16.gmra.mxu0 %v3438
        %v3756 = vpop.f32.mrf.mxu0
        %v3757 = vadd.f32 %v3596, %v3756
        %v3758 = vpop.f32.mrf.mxu0
        %v3759 = vadd.f32 %v3598, %v3758
        %v3760 = vpop.f32.mrf.mxu0
        %v3761 = vadd.f32 %v3600, %v3760
        %v3762 = vpop.f32.mrf.mxu0
        %v3763 = vadd.f32 %v3602, %v3762
        %3764 = vmatprep.mubr.bf16.mxu0 0
        %3765 = vmatmul.mubr.bf16.gmra.mxu0 %v3439
        %v3766 = vpop.f32.mrf.mxu0
        %v3767 = vadd.f32 %v3606, %v3766
        %v3768 = vpop.f32.mrf.mxu0
        %v3769 = vadd.f32 %v3608, %v3768
        %v3770 = vpop.f32.mrf.mxu0
        %v3771 = vadd.f32 %v3610, %v3770
        %v3772 = vpop.f32.mrf.mxu0
        %v3773 = vadd.f32 %v3612, %v3772
        %3774 = vmatprep.mubr.bf16.mxu0 0
        %3775 = vmatmul.mubr.bf16.gmra.mxu0 %v3440
        %v3776 = vpop.f32.mrf.mxu0
        %v3777 = vadd.f32 %v3616, %v3776
        %v3778 = vpop.f32.mrf.mxu0
        %v3779 = vadd.f32 %v3618, %v3778
        %v3780 = vpop.f32.mrf.mxu0
        %v3781 = vadd.f32 %v3620, %v3780
        %v3782 = vpop.f32.mrf.mxu0
        %v3783 = vadd.f32 %v3622, %v3782
        %3784 = vmatprep.mubr.bf16.mxu0 0
        %3785 = vmatmul.mubr.bf16.gmra.mxu0 %v3441
        %v3786 = vpop.f32.mrf.mxu0
        %v3787 = vadd.f32 %v3626, %v3786
        %v3788 = vpop.f32.mrf.mxu0
        %v3789 = vadd.f32 %v3628, %v3788
        %v3790 = vpop.f32.mrf.mxu0
        %v3791 = vadd.f32 %v3630, %v3790
        %v3792 = vpop.f32.mrf.mxu0
        %v3793 = vadd.f32 %v3632, %v3792
        %3794 = vmatprep.mubr.bf16.mxu0 0
        %3795 = vmatmul.mubr.bf16.gmra.mxu0 %v3442
        %v3796 = vpop.f32.mrf.mxu0
        %v3797 = vadd.f32 %v3636, %v3796
        %v3798 = vpop.f32.mrf.mxu0
        %v3799 = vadd.f32 %v3638, %v3798
        %v3800 = vpop.f32.mrf.mxu0
        %v3801 = vpop.f32.mrf.mxu0
        %3802 = vdwg.mxu0
        %s3803 = scalar_lea.vmem %s3, 256
        %v3804 = vld [vmem:[%s3803] sm:$0xff]
        %v3805 = vld [vmem:[%s3803 + $0x8] sm:$0xff]
        %v3806 = vld [vmem:[%s3803 + $0x10] sm:$0xff]
        %v3807 = vld [vmem:[%s3803 + $0x18] sm:$0xff]
        %v3808 = vld [vmem:[%s3803 + $0x20] sm:$0xff]
        %v3809 = vld [vmem:[%s3803 + $0x28] sm:$0xff]
        %v3810 = vld [vmem:[%s3803 + $0x30] sm:$0xff]
        %v3811 = vld [vmem:[%s3803 + $0x38] sm:$0xff]
        %v3812 = vld [vmem:[%s3803 + $0x40] sm:$0xff]
        %v3813 = vld [vmem:[%s3803 + $0x48] sm:$0xff]
        %v3814 = vld [vmem:[%s3803 + $0x50] sm:$0xff]
        %v3815 = vld [vmem:[%s3803 + $0x58] sm:$0xff]
        %v3816 = vld [vmem:[%s3803 + $0x60] sm:$0xff]
        %v3817 = vld [vmem:[%s3803 + $0x68] sm:$0xff]
        %v3818 = vld [vmem:[%s3803 + $0x70] sm:$0xff]
        %v3819 = vld [vmem:[%s3803 + $0x78] sm:$0xff]
        %vm3820 = vsmask.f32 7424
        %v3822 = vshrl.u32 %v3438, 16
        %v3824 = vshll.u32 %v3438, 16
        %v3826 = vrot.slane %v3824, 1
        %v3827 = vor.u32 %v3822, %v3826
        %v3829 = vshll.u32 %v3439, 16
        %v3831 = vrot.slane %v3829, 1
        %v3832 = vsel %vm3820, %v3827, %v3831
        %v3833 = vshrl.u32 %v3439, 16
        %v3835 = vor.u32 %v3833, %v3831
        %v3837 = vshll.u32 %v3440, 16
        %v3839 = vrot.slane %v3837, 1
        %v3840 = vsel %vm3820, %v3835, %v3839
        %v3841 = vshrl.u32 %v3440, 16
        %v3843 = vor.u32 %v3841, %v3839
        %v3845 = vshll.u32 %v3441, 16
        %v3847 = vrot.slane %v3845, 1
        %v3848 = vsel %vm3820, %v3843, %v3847
        %v3849 = vshrl.u32 %v3441, 16
        %v3851 = vor.u32 %v3849, %v3847
        %v3853 = vshll.u32 %v3442, 16
        %v3855 = vrot.slane %v3853, 1
        %v3856 = vsel %vm3820, %v3851, %v3855
        %v3857 = vshrl.u32 %v3442, 16
        %v3859 = vor.u32 %v3857, %v3855
        %v3881 = vunpack.c.l.b16 %v3804
        %v3882 = vunpack.c.h.b16 %v3804
        %v3883 = vunpack.c.l.b16 %v3805
        %v3884 = vunpack.c.h.b16 %v3805
        %v3885 = vunpack.c.l.b16 %v3806
        %v3886 = vunpack.c.h.b16 %v3806
        %v3887 = vunpack.c.l.b16 %v3807
        %v3888 = vunpack.c.h.b16 %v3807
        %v3889 = vunpack.c.l.b16 %v3808
        %v3890 = vunpack.c.h.b16 %v3808
        %v3891 = vunpack.c.l.b16 %v3809
        %v3892 = vunpack.c.h.b16 %v3809
        %v3893 = vunpack.c.l.b16 %v3810
        %v3894 = vunpack.c.h.b16 %v3810
        %v3895 = vunpack.c.l.b16 %v3811
        %v3896 = vunpack.c.h.b16 %v3811
        %v3897 = vunpack.c.l.b16 %v3812
        %v3898 = vunpack.c.h.b16 %v3812
        %v3899 = vunpack.c.l.b16 %v3813
        %v3900 = vunpack.c.h.b16 %v3813
        %v3901 = vunpack.c.l.b16 %v3814
        %v3902 = vunpack.c.h.b16 %v3814
        %v3903 = vunpack.c.l.b16 %v3815
        %v3904 = vunpack.c.h.b16 %v3815
        %v3905 = vunpack.c.l.b16 %v3816
        %v3906 = vunpack.c.h.b16 %v3816
        %v3907 = vunpack.c.l.b16 %v3817
        %v3908 = vunpack.c.h.b16 %v3817
        %v3909 = vunpack.c.l.b16 %v3818
        %v3910 = vunpack.c.h.b16 %v3818
        %v3911 = vunpack.c.l.b16 %v3819
        %v3912 = vunpack.c.h.b16 %v3819
        %v3913 = vpack.c.b16 %v3883, %v3881
        %v3914 = vpack.c.b16 %v3884, %v3882
        %v3915 = vpack.c.b16 %v3887, %v3885
        %v3916 = vpack.c.b16 %v3888, %v3886
        %v3917 = vpack.c.b16 %v3891, %v3889
        %v3918 = vpack.c.b16 %v3892, %v3890
        %v3919 = vpack.c.b16 %v3895, %v3893
        %v3920 = vpack.c.b16 %v3896, %v3894
        %v3921 = vpack.c.b16 %v3899, %v3897
        %v3922 = vpack.c.b16 %v3900, %v3898
        %v3923 = vpack.c.b16 %v3903, %v3901
        %v3924 = vpack.c.b16 %v3904, %v3902
        %v3925 = vpack.c.b16 %v3907, %v3905
        %v3926 = vpack.c.b16 %v3908, %v3906
        %v3927 = vpack.c.b16 %v3911, %v3909
        %v3928 = vpack.c.b16 %v3912, %v3910
        %3945 = vmatprep.subr.bf16.mxu0 %v3928
        %3946 = vmatpush1.bf16.msra.mxu0 %v3927
        %3947 = vmatprep.subr.bf16.mxu0 %v3926
        %3948 = vmatpush1.bf16.msra.mxu0 %v3925
        %3949 = vmatprep.subr.bf16.mxu0 %v3924
        %3950 = vmatpush1.bf16.msra.mxu0 %v3923
        %3951 = vmatprep.subr.bf16.mxu0 %v3922
        %3952 = vmatpush1.bf16.msra.mxu0 %v3921
        %3953 = vmatprep.subr.bf16.mxu0 %v3920
        %3954 = vmatpush1.bf16.msra.mxu0 %v3919
        %3955 = vmatprep.subr.bf16.mxu0 %v3918
        %3956 = vmatpush1.bf16.msra.mxu0 %v3917
        %3957 = vmatprep.subr.bf16.mxu0 %v3916
        %3958 = vmatpush1.bf16.msra.mxu0 %v3915
        %3959 = vmatprep.subr.bf16.mxu0 %v3914
        %3960 = vmatpush1.bf16.msra.mxu0 %v3913
        %3961 = vmatprep.subr.bf16.mxu0 0
        %3962 = vmatpush2.bf16.msra.mxu0 0
        %3963 = vmatprep.subr.bf16.mxu0 0
        %3964 = vmatpush2.bf16.msra.mxu0 0
        %3965 = vmatprep.subr.bf16.mxu0 0
        %3966 = vmatpush2.bf16.msra.mxu0 0
        %3967 = vmatprep.subr.bf16.mxu0 0
        %3968 = vmatpush2.bf16.msra.mxu0 0
        %3969 = vmatprep.subr.bf16.mxu0 0
        %3970 = vmatpush2.bf16.msra.mxu0 0
        %3971 = vmatprep.subr.bf16.mxu0 0
        %3972 = vmatpush2.bf16.msra.mxu0 0
        %3973 = vmatprep.subr.bf16.mxu0 0
        %3974 = vmatpush2.bf16.msra.mxu0 0
        %3975 = vmatprep.subr.bf16.mxu0 0
        %3976 = vmatpush2.bf16.msra.mxu0 0
        %3977 = vmatprep.mubr.bf16.mxu0 0
        %3978 = vmatmul.mubr.bf16.gmra.mxu0 %v3832
        %v3979 = vpop.f32.mrf.mxu0
        %v3980 = vadd.f32 0.0, %v3979
        %v3981 = vpop.f32.mrf.mxu0
        %v3982 = vadd.f32 0.0, %v3981
        %v3983 = vpop.f32.mrf.mxu0
        %v3984 = vadd.f32 0.0, %v3983
        %v3985 = vpop.f32.mrf.mxu0
        %v3986 = vadd.f32 0.0, %v3985
        %3987 = vmatprep.mubr.bf16.mxu0 0
        %3988 = vmatmul.mubr.bf16.gmra.mxu0 %v3840
        %v3989 = vpop.f32.mrf.mxu0
        %v3990 = vadd.f32 0.0, %v3989
        %v3991 = vpop.f32.mrf.mxu0
        %v3992 = vadd.f32 0.0, %v3991
        %v3993 = vpop.f32.mrf.mxu0
        %v3994 = vadd.f32 0.0, %v3993
        %v3995 = vpop.f32.mrf.mxu0
        %v3996 = vadd.f32 0.0, %v3995
        %3997 = vmatprep.mubr.bf16.mxu0 0
        %3998 = vmatmul.mubr.bf16.gmra.mxu0 %v3848
        %v3999 = vpop.f32.mrf.mxu0
        %v4000 = vadd.f32 0.0, %v3999
        %v4001 = vpop.f32.mrf.mxu0
        %v4002 = vadd.f32 0.0, %v4001
        %v4003 = vpop.f32.mrf.mxu0
        %v4004 = vadd.f32 0.0, %v4003
        %v4005 = vpop.f32.mrf.mxu0
        %v4006 = vadd.f32 0.0, %v4005
        %4007 = vmatprep.mubr.bf16.mxu0 0
        %4008 = vmatmul.mubr.bf16.gmra.mxu0 %v3856
        %v4009 = vpop.f32.mrf.mxu0
        %v4010 = vadd.f32 0.0, %v4009
        %v4011 = vpop.f32.mrf.mxu0
        %v4012 = vadd.f32 0.0, %v4011
        %v4013 = vpop.f32.mrf.mxu0
        %v4014 = vadd.f32 0.0, %v4013
        %v4015 = vpop.f32.mrf.mxu0
        %v4016 = vadd.f32 0.0, %v4015
        %4017 = vmatprep.mubr.bf16.mxu0 0
        %4018 = vmatmul.mubr.bf16.gmra.mxu0 %v3859
        %v4019 = vpop.f32.mrf.mxu0
        %v4020 = vadd.f32 0.0, %v4019
        %v4021 = vpop.f32.mrf.mxu0
        %v4022 = vadd.f32 0.0, %v4021
        %v4023 = vpop.f32.mrf.mxu0
        %v4024 = vpop.f32.mrf.mxu0
        %4025 = vdwg.mxu0
        %v4026 = vadd.f32 %v3757, %v3980
        %v4027 = vadd.f32 %v3759, %v3982
        %v4028 = vadd.f32 %v3761, %v3984
        %v4029 = vadd.f32 %v3763, %v3986
        %v4030 = vadd.f32 %v3767, %v3990
        %v4031 = vadd.f32 %v3769, %v3992
        %v4032 = vadd.f32 %v3771, %v3994
        %v4033 = vadd.f32 %v3773, %v3996
        %v4034 = vadd.f32 %v3777, %v4000
        %v4035 = vadd.f32 %v3779, %v4002
        %v4036 = vadd.f32 %v3781, %v4004
        %v4037 = vadd.f32 %v3783, %v4006
        %v4038 = vadd.f32 %v3787, %v4010
        %v4039 = vadd.f32 %v3789, %v4012
        %v4040 = vadd.f32 %v3791, %v4014
        %v4041 = vadd.f32 %v3793, %v4016
        %v4042 = vadd.f32 %v3797, %v4020
        %v4043 = vadd.f32 %v3799, %v4022
        %s4044 = scalar_lea.vmem %s3, 384
        %v4045 = vld [vmem:[%s4044] sm:$0xff]
        %v4046 = vld [vmem:[%s4044 + $0x8] sm:$0xff]
        %v4047 = vld [vmem:[%s4044 + $0x10] sm:$0xff]
        %v4048 = vld [vmem:[%s4044 + $0x18] sm:$0xff]
        %v4049 = vld [vmem:[%s4044 + $0x20] sm:$0xff]
        %v4050 = vld [vmem:[%s4044 + $0x28] sm:$0xff]
        %v4051 = vld [vmem:[%s4044 + $0x30] sm:$0xff]
        %v4052 = vld [vmem:[%s4044 + $0x38] sm:$0xff]
        %v4053 = vld [vmem:[%s4044 + $0x40] sm:$0xff]
        %v4054 = vld [vmem:[%s4044 + $0x48] sm:$0xff]
        %v4055 = vld [vmem:[%s4044 + $0x50] sm:$0xff]
        %v4056 = vld [vmem:[%s4044 + $0x58] sm:$0xff]
        %v4057 = vld [vmem:[%s4044 + $0x60] sm:$0xff]
        %v4058 = vld [vmem:[%s4044 + $0x68] sm:$0xff]
        %v4059 = vld [vmem:[%s4044 + $0x70] sm:$0xff]
        %v4060 = vld [vmem:[%s4044 + $0x78] sm:$0xff]
        %v4062 = vshrl.u32 %v3443, 16
        %v4064 = vshll.u32 %v3443, 16
        %v4066 = vrot.slane %v4064, 1
        %v4067 = vor.u32 %v4062, %v4066
        %v4069 = vshll.u32 %v3444, 16
        %v4071 = vrot.slane %v4069, 1
        %v4072 = vsel %vm3820, %v4067, %v4071
        %v4073 = vshrl.u32 %v3444, 16
        %v4075 = vor.u32 %v4073, %v4071
        %v4077 = vshll.u32 %v3445, 16
        %v4079 = vrot.slane %v4077, 1
        %v4080 = vsel %vm3820, %v4075, %v4079
        %v4081 = vshrl.u32 %v3445, 16
        %v4083 = vor.u32 %v4081, %v4079
        %v4085 = vshll.u32 %v3446, 16
        %v4087 = vrot.slane %v4085, 1
        %v4088 = vsel %vm3820, %v4083, %v4087
        %v4089 = vshrl.u32 %v3446, 16
        %v4091 = vor.u32 %v4089, %v4087
        %v4093 = vshll.u32 %v3447, 16
        %v4095 = vrot.slane %v4093, 1
        %v4096 = vsel %vm3820, %v4091, %v4095
        %v4097 = vshrl.u32 %v3447, 16
        %v4099 = vor.u32 %v4097, %v4095
        %v4121 = vunpack.c.l.b16 %v4045
        %v4122 = vunpack.c.h.b16 %v4045
        %v4123 = vunpack.c.l.b16 %v4046
        %v4124 = vunpack.c.h.b16 %v4046
        %v4125 = vunpack.c.l.b16 %v4047
        %v4126 = vunpack.c.h.b16 %v4047
        %v4127 = vunpack.c.l.b16 %v4048
        %v4128 = vunpack.c.h.b16 %v4048
        %v4129 = vunpack.c.l.b16 %v4049
        %v4130 = vunpack.c.h.b16 %v4049
        %v4131 = vunpack.c.l.b16 %v4050
        %v4132 = vunpack.c.h.b16 %v4050
        %v4133 = vunpack.c.l.b16 %v4051
        %v4134 = vunpack.c.h.b16 %v4051
        %v4135 = vunpack.c.l.b16 %v4052
        %v4136 = vunpack.c.h.b16 %v4052
        %v4137 = vunpack.c.l.b16 %v4053
        %v4138 = vunpack.c.h.b16 %v4053
        %v4139 = vunpack.c.l.b16 %v4054
        %v4140 = vunpack.c.h.b16 %v4054
        %v4141 = vunpack.c.l.b16 %v4055
        %v4142 = vunpack.c.h.b16 %v4055
        %v4143 = vunpack.c.l.b16 %v4056
        %v4144 = vunpack.c.h.b16 %v4056
        %v4145 = vunpack.c.l.b16 %v4057
        %v4146 = vunpack.c.h.b16 %v4057
        %v4147 = vunpack.c.l.b16 %v4058
        %v4148 = vunpack.c.h.b16 %v4058
        %v4149 = vunpack.c.l.b16 %v4059
        %v4150 = vunpack.c.h.b16 %v4059
        %v4151 = vunpack.c.l.b16 %v4060
        %v4152 = vunpack.c.h.b16 %v4060
        %v4153 = vpack.c.b16 %v4123, %v4121
        %v4154 = vpack.c.b16 %v4124, %v4122
        %v4155 = vpack.c.b16 %v4127, %v4125
        %v4156 = vpack.c.b16 %v4128, %v4126
        %v4157 = vpack.c.b16 %v4131, %v4129
        %v4158 = vpack.c.b16 %v4132, %v4130
        %v4159 = vpack.c.b16 %v4135, %v4133
        %v4160 = vpack.c.b16 %v4136, %v4134
        %v4161 = vpack.c.b16 %v4139, %v4137
        %v4162 = vpack.c.b16 %v4140, %v4138
        %v4163 = vpack.c.b16 %v4143, %v4141
        %v4164 = vpack.c.b16 %v4144, %v4142
        %v4165 = vpack.c.b16 %v4147, %v4145
        %v4166 = vpack.c.b16 %v4148, %v4146
        %v4167 = vpack.c.b16 %v4151, %v4149
        %v4168 = vpack.c.b16 %v4152, %v4150
        %4185 = vmatprep.subr.bf16.mxu0 %v4168
        %4186 = vmatpush1.bf16.msra.mxu0 %v4167
        %4187 = vmatprep.subr.bf16.mxu0 %v4166
        %4188 = vmatpush1.bf16.msra.mxu0 %v4165
        %4189 = vmatprep.subr.bf16.mxu0 %v4164
        %4190 = vmatpush1.bf16.msra.mxu0 %v4163
        %4191 = vmatprep.subr.bf16.mxu0 %v4162
        %4192 = vmatpush1.bf16.msra.mxu0 %v4161
        %4193 = vmatprep.subr.bf16.mxu0 %v4160
        %4194 = vmatpush1.bf16.msra.mxu0 %v4159
        %4195 = vmatprep.subr.bf16.mxu0 %v4158
        %4196 = vmatpush1.bf16.msra.mxu0 %v4157
        %4197 = vmatprep.subr.bf16.mxu0 %v4156
        %4198 = vmatpush1.bf16.msra.mxu0 %v4155
        %4199 = vmatprep.subr.bf16.mxu0 %v4154
        %4200 = vmatpush1.bf16.msra.mxu0 %v4153
        %4201 = vmatprep.subr.bf16.mxu0 0
        %4202 = vmatpush2.bf16.msra.mxu0 0
        %4203 = vmatprep.subr.bf16.mxu0 0
        %4204 = vmatpush2.bf16.msra.mxu0 0
        %4205 = vmatprep.subr.bf16.mxu0 0
        %4206 = vmatpush2.bf16.msra.mxu0 0
        %4207 = vmatprep.subr.bf16.mxu0 0
        %4208 = vmatpush2.bf16.msra.mxu0 0
        %4209 = vmatprep.subr.bf16.mxu0 0
        %4210 = vmatpush2.bf16.msra.mxu0 0
        %4211 = vmatprep.subr.bf16.mxu0 0
        %4212 = vmatpush2.bf16.msra.mxu0 0
        %4213 = vmatprep.subr.bf16.mxu0 0
        %4214 = vmatpush2.bf16.msra.mxu0 0
        %4215 = vmatprep.subr.bf16.mxu0 0
        %4216 = vmatpush2.bf16.msra.mxu0 0
        %4217 = vmatprep.mubr.bf16.mxu0 0
        %4218 = vmatmul.mubr.bf16.gmra.mxu0 %v4072
        %v4219 = vpop.f32.mrf.mxu0
        %v4220 = vadd.f32 0.0, %v4219
        %v4221 = vpop.f32.mrf.mxu0
        %v4222 = vadd.f32 0.0, %v4221
        %v4223 = vpop.f32.mrf.mxu0
        %v4224 = vadd.f32 0.0, %v4223
        %v4225 = vpop.f32.mrf.mxu0
        %v4226 = vadd.f32 0.0, %v4225
        %4227 = vmatprep.mubr.bf16.mxu0 0
        %4228 = vmatmul.mubr.bf16.gmra.mxu0 %v4080
        %v4229 = vpop.f32.mrf.mxu0
        %v4230 = vadd.f32 0.0, %v4229
        %v4231 = vpop.f32.mrf.mxu0
        %v4232 = vadd.f32 0.0, %v4231
        %v4233 = vpop.f32.mrf.mxu0
        %v4234 = vadd.f32 0.0, %v4233
        %v4235 = vpop.f32.mrf.mxu0
        %v4236 = vadd.f32 0.0, %v4235
        %4237 = vmatprep.mubr.bf16.mxu0 0
        %4238 = vmatmul.mubr.bf16.gmra.mxu0 %v4088
        %v4239 = vpop.f32.mrf.mxu0
        %v4240 = vadd.f32 0.0, %v4239
        %v4241 = vpop.f32.mrf.mxu0
        %v4242 = vadd.f32 0.0, %v4241
        %v4243 = vpop.f32.mrf.mxu0
        %v4244 = vadd.f32 0.0, %v4243
        %v4245 = vpop.f32.mrf.mxu0
        %v4246 = vadd.f32 0.0, %v4245
        %4247 = vmatprep.mubr.bf16.mxu0 0
        %4248 = vmatmul.mubr.bf16.gmra.mxu0 %v4096
        %v4249 = vpop.f32.mrf.mxu0
        %v4250 = vadd.f32 0.0, %v4249
        %v4251 = vpop.f32.mrf.mxu0
        %v4252 = vadd.f32 0.0, %v4251
        %v4253 = vpop.f32.mrf.mxu0
        %v4254 = vadd.f32 0.0, %v4253
        %v4255 = vpop.f32.mrf.mxu0
        %v4256 = vadd.f32 0.0, %v4255
        %4257 = vmatprep.mubr.bf16.mxu0 0
        %4258 = vmatmul.mubr.bf16.gmra.mxu0 %v4099
        %v4259 = vpop.f32.mrf.mxu0
        %v4260 = vadd.f32 0.0, %v4259
        %v4261 = vpop.f32.mrf.mxu0
        %v4262 = vadd.f32 0.0, %v4261
        %v4263 = vpop.f32.mrf.mxu0
        %v4264 = vpop.f32.mrf.mxu0
        %4265 = vdwg.mxu0
        %v4266 = vadd.f32 %v4026, %v4220
        %v4267 = vadd.f32 %v4027, %v4222
        %v4268 = vadd.f32 %v4028, %v4224
        %v4269 = vadd.f32 %v4029, %v4226
        %v4270 = vadd.f32 %v4030, %v4230
        %v4271 = vadd.f32 %v4031, %v4232
        %v4272 = vadd.f32 %v4032, %v4234
        %v4273 = vadd.f32 %v4033, %v4236
        %v4274 = vadd.f32 %v4034, %v4240
        %v4275 = vadd.f32 %v4035, %v4242
        %v4276 = vadd.f32 %v4036, %v4244
        %v4277 = vadd.f32 %v4037, %v4246
        %v4278 = vadd.f32 %v4038, %v4250
        %v4279 = vadd.f32 %v4039, %v4252
        %v4280 = vadd.f32 %v4040, %v4254
        %v4281 = vadd.f32 %v4041, %v4256
        %v4282 = vadd.f32 %v4042, %v4260
        %v4283 = vadd.f32 %v4043, %v4262
        %s4284 = scalar_lea.vmem %s3, 512
        %v4285 = vld [vmem:[%s4284] sm:$0xff]
        %v4286 = vld [vmem:[%s4284 + $0x8] sm:$0xff]
        %v4287 = vld [vmem:[%s4284 + $0x10] sm:$0xff]
        %v4288 = vld [vmem:[%s4284 + $0x18] sm:$0xff]
        %v4289 = vld [vmem:[%s4284 + $0x20] sm:$0xff]
        %v4290 = vld [vmem:[%s4284 + $0x28] sm:$0xff]
        %v4291 = vld [vmem:[%s4284 + $0x30] sm:$0xff]
        %v4292 = vld [vmem:[%s4284 + $0x38] sm:$0xff]
        %v4293 = vld [vmem:[%s4284 + $0x40] sm:$0xff]
        %v4294 = vld [vmem:[%s4284 + $0x48] sm:$0xff]
        %v4295 = vld [vmem:[%s4284 + $0x50] sm:$0xff]
        %v4296 = vld [vmem:[%s4284 + $0x58] sm:$0xff]
        %v4297 = vld [vmem:[%s4284 + $0x60] sm:$0xff]
        %v4298 = vld [vmem:[%s4284 + $0x68] sm:$0xff]
        %v4299 = vld [vmem:[%s4284 + $0x70] sm:$0xff]
        %v4300 = vld [vmem:[%s4284 + $0x78] sm:$0xff]
        %vm4306 = vcmask 1046528
        %v4307 = vrot.slane %v3438, 1
        %v4308 = vrot.slane %v3439, 1
        %v4309 = vsel %vm4306, %v4307, %v4308
        %v4310 = vrot.slane %v3440, 1
        %v4311 = vsel %vm4306, %v4308, %v4310
        %v4312 = vrot.slane %v3441, 1
        %v4313 = vsel %vm4306, %v4310, %v4312
        %v4314 = vrot.slane %v3442, 1
        %v4315 = vsel %vm4306, %v4312, %v4314
        %v4337 = vunpack.c.l.b16 %v4285
        %v4338 = vunpack.c.h.b16 %v4285
        %v4339 = vunpack.c.l.b16 %v4286
        %v4340 = vunpack.c.h.b16 %v4286
        %v4341 = vunpack.c.l.b16 %v4287
        %v4342 = vunpack.c.h.b16 %v4287
        %v4343 = vunpack.c.l.b16 %v4288
        %v4344 = vunpack.c.h.b16 %v4288
        %v4345 = vunpack.c.l.b16 %v4289
        %v4346 = vunpack.c.h.b16 %v4289
        %v4347 = vunpack.c.l.b16 %v4290
        %v4348 = vunpack.c.h.b16 %v4290
        %v4349 = vunpack.c.l.b16 %v4291
        %v4350 = vunpack.c.h.b16 %v4291
        %v4351 = vunpack.c.l.b16 %v4292
        %v4352 = vunpack.c.h.b16 %v4292
        %v4353 = vunpack.c.l.b16 %v4293
        %v4354 = vunpack.c.h.b16 %v4293
        %v4355 = vunpack.c.l.b16 %v4294
        %v4356 = vunpack.c.h.b16 %v4294
        %v4357 = vunpack.c.l.b16 %v4295
        %v4358 = vunpack.c.h.b16 %v4295
        %v4359 = vunpack.c.l.b16 %v4296
        %v4360 = vunpack.c.h.b16 %v4296
        %v4361 = vunpack.c.l.b16 %v4297
        %v4362 = vunpack.c.h.b16 %v4297
        %v4363 = vunpack.c.l.b16 %v4298
        %v4364 = vunpack.c.h.b16 %v4298
        %v4365 = vunpack.c.l.b16 %v4299
        %v4366 = vunpack.c.h.b16 %v4299
        %v4367 = vunpack.c.l.b16 %v4300
        %v4368 = vunpack.c.h.b16 %v4300
        %v4369 = vpack.c.b16 %v4339, %v4337
        %v4370 = vpack.c.b16 %v4340, %v4338
        %v4371 = vpack.c.b16 %v4343, %v4341
        %v4372 = vpack.c.b16 %v4344, %v4342
        %v4373 = vpack.c.b16 %v4347, %v4345
        %v4374 = vpack.c.b16 %v4348, %v4346
        %v4375 = vpack.c.b16 %v4351, %v4349
        %v4376 = vpack.c.b16 %v4352, %v4350
        %v4377 = vpack.c.b16 %v4355, %v4353
        %v4378 = vpack.c.b16 %v4356, %v4354
        %v4379 = vpack.c.b16 %v4359, %v4357
        %v4380 = vpack.c.b16 %v4360, %v4358
        %v4381 = vpack.c.b16 %v4363, %v4361
        %v4382 = vpack.c.b16 %v4364, %v4362
        %v4383 = vpack.c.b16 %v4367, %v4365
        %v4384 = vpack.c.b16 %v4368, %v4366
        %4401 = vmatprep.subr.bf16.mxu0 %v4384
        %4402 = vmatpush1.bf16.msra.mxu0 %v4383
        %4403 = vmatprep.subr.bf16.mxu0 %v4382
        %4404 = vmatpush1.bf16.msra.mxu0 %v4381
        %4405 = vmatprep.subr.bf16.mxu0 %v4380
        %4406 = vmatpush1.bf16.msra.mxu0 %v4379
        %4407 = vmatprep.subr.bf16.mxu0 %v4378
        %4408 = vmatpush1.bf16.msra.mxu0 %v4377
        %4409 = vmatprep.subr.bf16.mxu0 %v4376
        %4410 = vmatpush1.bf16.msra.mxu0 %v4375
        %4411 = vmatprep.subr.bf16.mxu0 %v4374
        %4412 = vmatpush1.bf16.msra.mxu0 %v4373
        %4413 = vmatprep.subr.bf16.mxu0 %v4372
        %4414 = vmatpush1.bf16.msra.mxu0 %v4371
        %4415 = vmatprep.subr.bf16.mxu0 %v4370
        %4416 = vmatpush1.bf16.msra.mxu0 %v4369
        %4417 = vmatprep.subr.bf16.mxu0 0
        %4418 = vmatpush2.bf16.msra.mxu0 0
        %4419 = vmatprep.subr.bf16.mxu0 0
        %4420 = vmatpush2.bf16.msra.mxu0 0
        %4421 = vmatprep.subr.bf16.mxu0 0
        %4422 = vmatpush2.bf16.msra.mxu0 0
        %4423 = vmatprep.subr.bf16.mxu0 0
        %4424 = vmatpush2.bf16.msra.mxu0 0
        %4425 = vmatprep.subr.bf16.mxu0 0
        %4426 = vmatpush2.bf16.msra.mxu0 0
        %4427 = vmatprep.subr.bf16.mxu0 0
        %4428 = vmatpush2.bf16.msra.mxu0 0
        %4429 = vmatprep.subr.bf16.mxu0 0
        %4430 = vmatpush2.bf16.msra.mxu0 0
        %4431 = vmatprep.subr.bf16.mxu0 0
        %4432 = vmatpush2.bf16.msra.mxu0 0
        %4433 = vmatprep.mubr.bf16.mxu0 0
        %4434 = vmatmul.mubr.bf16.gmra.mxu0 %v4309
        %v4435 = vpop.f32.mrf.mxu0
        %v4436 = vadd.f32 0.0, %v4435
        %v4437 = vpop.f32.mrf.mxu0
        %v4438 = vadd.f32 0.0, %v4437
        %v4439 = vpop.f32.mrf.mxu0
        %v4440 = vadd.f32 0.0, %v4439
        %v4441 = vpop.f32.mrf.mxu0
        %v4442 = vadd.f32 0.0, %v4441
        %4443 = vmatprep.mubr.bf16.mxu0 0
        %4444 = vmatmul.mubr.bf16.gmra.mxu0 %v4311
        %v4445 = vpop.f32.mrf.mxu0
        %v4446 = vadd.f32 0.0, %v4445
        %v4447 = vpop.f32.mrf.mxu0
        %v4448 = vadd.f32 0.0, %v4447
        %v4449 = vpop.f32.mrf.mxu0
        %v4450 = vadd.f32 0.0, %v4449
        %v4451 = vpop.f32.mrf.mxu0
        %v4452 = vadd.f32 0.0, %v4451
        %4453 = vmatprep.mubr.bf16.mxu0 0
        %4454 = vmatmul.mubr.bf16.gmra.mxu0 %v4313
        %v4455 = vpop.f32.mrf.mxu0
        %v4456 = vadd.f32 0.0, %v4455
        %v4457 = vpop.f32.mrf.mxu0
        %v4458 = vadd.f32 0.0, %v4457
        %v4459 = vpop.f32.mrf.mxu0
        %v4460 = vadd.f32 0.0, %v4459
        %v4461 = vpop.f32.mrf.mxu0
        %v4462 = vadd.f32 0.0, %v4461
        %4463 = vmatprep.mubr.bf16.mxu0 0
        %4464 = vmatmul.mubr.bf16.gmra.mxu0 %v4315
        %v4465 = vpop.f32.mrf.mxu0
        %v4466 = vadd.f32 0.0, %v4465
        %v4467 = vpop.f32.mrf.mxu0
        %v4468 = vadd.f32 0.0, %v4467
        %v4469 = vpop.f32.mrf.mxu0
        %v4470 = vadd.f32 0.0, %v4469
        %v4471 = vpop.f32.mrf.mxu0
        %v4472 = vadd.f32 0.0, %v4471
        %4473 = vmatprep.mubr.bf16.mxu0 0
        %4474 = vmatmul.mubr.bf16.gmra.mxu0 %v4314
        %v4475 = vpop.f32.mrf.mxu0
        %v4476 = vadd.f32 0.0, %v4475
        %v4477 = vpop.f32.mrf.mxu0
        %v4478 = vadd.f32 0.0, %v4477
        %v4479 = vpop.f32.mrf.mxu0
        %v4480 = vpop.f32.mrf.mxu0
        %4481 = vdwg.mxu0
        %v4482 = vadd.f32 %v4266, %v4436
        %v4483 = vadd.f32 %v4267, %v4438
        %v4484 = vadd.f32 %v4268, %v4440
        %v4485 = vadd.f32 %v4269, %v4442
        %v4486 = vadd.f32 %v4270, %v4446
        %v4487 = vadd.f32 %v4271, %v4448
        %v4488 = vadd.f32 %v4272, %v4450
        %v4489 = vadd.f32 %v4273, %v4452
        %v4490 = vadd.f32 %v4274, %v4456
        %v4491 = vadd.f32 %v4275, %v4458
        %v4492 = vadd.f32 %v4276, %v4460
        %v4493 = vadd.f32 %v4277, %v4462
        %v4494 = vadd.f32 %v4278, %v4466
        %v4495 = vadd.f32 %v4279, %v4468
        %v4496 = vadd.f32 %v4280, %v4470
        %v4497 = vadd.f32 %v4281, %v4472
        %v4498 = vadd.f32 %v4282, %v4476
        %v4499 = vadd.f32 %v4283, %v4478
        %4500 = vmatprep.subr.bf16.mxu0 %v3544
        %4501 = vmatpush1.bf16.msra.mxu0 %v3543
        %4502 = vmatprep.subr.bf16.mxu0 %v3542
        %4503 = vmatpush1.bf16.msra.mxu0 %v3541
        %4504 = vmatprep.subr.bf16.mxu0 %v3540
        %4505 = vmatpush1.bf16.msra.mxu0 %v3539
        %4506 = vmatprep.subr.bf16.mxu0 %v3538
        %4507 = vmatpush1.bf16.msra.mxu0 %v3537
        %4508 = vmatprep.subr.bf16.mxu0 %v3536
        %4509 = vmatpush1.bf16.msra.mxu0 %v3535
        %4510 = vmatprep.subr.bf16.mxu0 %v3534
        %4511 = vmatpush1.bf16.msra.mxu0 %v3533
        %4512 = vmatprep.subr.bf16.mxu0 %v3532
        %4513 = vmatpush1.bf16.msra.mxu0 %v3531
        %4514 = vmatprep.subr.bf16.mxu0 %v3530
        %4515 = vmatpush1.bf16.msra.mxu0 %v3529
        %4516 = vmatprep.subr.bf16.mxu0 0
        %4517 = vmatpush2.bf16.msra.mxu0 0
        %4518 = vmatprep.subr.bf16.mxu0 0
        %4519 = vmatpush2.bf16.msra.mxu0 0
        %4520 = vmatprep.subr.bf16.mxu0 0
        %4521 = vmatpush2.bf16.msra.mxu0 0
        %4522 = vmatprep.subr.bf16.mxu0 0
        %4523 = vmatpush2.bf16.msra.mxu0 0
        %4524 = vmatprep.subr.bf16.mxu0 0
        %4525 = vmatpush2.bf16.msra.mxu0 0
        %4526 = vmatprep.subr.bf16.mxu0 0
        %4527 = vmatpush2.bf16.msra.mxu0 0
        %4528 = vmatprep.subr.bf16.mxu0 0
        %4529 = vmatpush2.bf16.msra.mxu0 0
        %4530 = vmatprep.subr.bf16.mxu0 0
        %4531 = vmatpush2.bf16.msra.mxu0 0
        %4532 = vmatprep.mubr.bf16.mxu0 0
        %4533 = vmatmul.mubr.bf16.gmra.mxu0 %v3832
        %v4534 = vpop.f32.mrf.mxu0
        %v4535 = vadd.f32 0.0, %v4534
        %v4536 = vpop.f32.mrf.mxu0
        %v4537 = vadd.f32 0.0, %v4536
        %v4538 = vpop.f32.mrf.mxu0
        %v4539 = vadd.f32 0.0, %v4538
        %v4540 = vpop.f32.mrf.mxu0
        %v4541 = vadd.f32 0.0, %v4540
        %4542 = vmatprep.mubr.bf16.mxu0 0
        %4543 = vmatmul.mubr.bf16.gmra.mxu0 %v3840
        %v4544 = vpop.f32.mrf.mxu0
        %v4545 = vadd.f32 0.0, %v4544
        %v4546 = vpop.f32.mrf.mxu0
        %v4547 = vadd.f32 0.0, %v4546
        %v4548 = vpop.f32.mrf.mxu0
        %v4549 = vadd.f32 0.0, %v4548
        %v4550 = vpop.f32.mrf.mxu0
        %v4551 = vadd.f32 0.0, %v4550
        %4552 = vmatprep.mubr.bf16.mxu0 0
        %4553 = vmatmul.mubr.bf16.gmra.mxu0 %v3848
        %v4554 = vpop.f32.mrf.mxu0
        %v4555 = vadd.f32 0.0, %v4554
        %v4556 = vpop.f32.mrf.mxu0
        %v4557 = vadd.f32 0.0, %v4556
        %v4558 = vpop.f32.mrf.mxu0
        %v4559 = vadd.f32 0.0, %v4558
        %v4560 = vpop.f32.mrf.mxu0
        %v4561 = vadd.f32 0.0, %v4560
        %4562 = vmatprep.mubr.bf16.mxu0 0
        %4563 = vmatmul.mubr.bf16.gmra.mxu0 %v3856
        %v4564 = vpop.f32.mrf.mxu0
        %v4565 = vadd.f32 0.0, %v4564
        %v4566 = vpop.f32.mrf.mxu0
        %v4567 = vadd.f32 0.0, %v4566
        %v4568 = vpop.f32.mrf.mxu0
        %v4569 = vadd.f32 0.0, %v4568
        %v4570 = vpop.f32.mrf.mxu0
        %v4571 = vadd.f32 0.0, %v4570
        %4572 = vmatprep.mubr.bf16.mxu0 0
        %4573 = vmatmul.mubr.bf16.gmra.mxu0 %v3859
        %v4574 = vpop.f32.mrf.mxu0
        %v4575 = vadd.f32 0.0, %v4574
        %v4576 = vpop.f32.mrf.mxu0
        %v4577 = vadd.f32 0.0, %v4576
        %v4578 = vpop.f32.mrf.mxu0
        %v4579 = vpop.f32.mrf.mxu0
        %4580 = vdwg.mxu0
        %4581 = vmatprep.subr.bf16.mxu0 %v3705
        %4582 = vmatpush1.bf16.msra.mxu0 %v3704
        %4583 = vmatprep.subr.bf16.mxu0 %v3703
        %4584 = vmatpush1.bf16.msra.mxu0 %v3702
        %4585 = vmatprep.subr.bf16.mxu0 %v3701
        %4586 = vmatpush1.bf16.msra.mxu0 %v3700
        %4587 = vmatprep.subr.bf16.mxu0 %v3699
        %4588 = vmatpush1.bf16.msra.mxu0 %v3698
        %4589 = vmatprep.subr.bf16.mxu0 %v3697
        %4590 = vmatpush1.bf16.msra.mxu0 %v3696
        %4591 = vmatprep.subr.bf16.mxu0 %v3695
        %4592 = vmatpush1.bf16.msra.mxu0 %v3694
        %4593 = vmatprep.subr.bf16.mxu0 %v3693
        %4594 = vmatpush1.bf16.msra.mxu0 %v3692
        %4595 = vmatprep.subr.bf16.mxu0 %v3691
        %4596 = vmatpush1.bf16.msra.mxu0 %v3690
        %4597 = vmatprep.subr.bf16.mxu0 0
        %4598 = vmatpush2.bf16.msra.mxu0 0
        %4599 = vmatprep.subr.bf16.mxu0 0
        %4600 = vmatpush2.bf16.msra.mxu0 0
        %4601 = vmatprep.subr.bf16.mxu0 0
        %4602 = vmatpush2.bf16.msra.mxu0 0
        %4603 = vmatprep.subr.bf16.mxu0 0
        %4604 = vmatpush2.bf16.msra.mxu0 0
        %4605 = vmatprep.subr.bf16.mxu0 0
        %4606 = vmatpush2.bf16.msra.mxu0 0
        %4607 = vmatprep.subr.bf16.mxu0 0
        %4608 = vmatpush2.bf16.msra.mxu0 0
        %4609 = vmatprep.subr.bf16.mxu0 0
        %4610 = vmatpush2.bf16.msra.mxu0 0
        %4611 = vmatprep.subr.bf16.mxu0 0
        %4612 = vmatpush2.bf16.msra.mxu0 0
        %4613 = vmatprep.mubr.bf16.mxu0 0
        %4614 = vmatmul.mubr.bf16.gmra.mxu0 %v3443
        %v4615 = vpop.f32.mrf.mxu0
        %v4616 = vadd.f32 %v4535, %v4615
        %v4617 = vpop.f32.mrf.mxu0
        %v4618 = vadd.f32 %v4537, %v4617
        %v4619 = vpop.f32.mrf.mxu0
        %v4620 = vadd.f32 %v4539, %v4619
        %v4621 = vpop.f32.mrf.mxu0
        %v4622 = vadd.f32 %v4541, %v4621
        %4623 = vmatprep.mubr.bf16.mxu0 0
        %4624 = vmatmul.mubr.bf16.gmra.mxu0 %v3444
        %v4625 = vpop.f32.mrf.mxu0
        %v4626 = vadd.f32 %v4545, %v4625
        %v4627 = vpop.f32.mrf.mxu0
        %v4628 = vadd.f32 %v4547, %v4627
        %v4629 = vpop.f32.mrf.mxu0
        %v4630 = vadd.f32 %v4549, %v4629
        %v4631 = vpop.f32.mrf.mxu0
        %v4632 = vadd.f32 %v4551, %v4631
        %4633 = vmatprep.mubr.bf16.mxu0 0
        %4634 = vmatmul.mubr.bf16.gmra.mxu0 %v3445
        %v4635 = vpop.f32.mrf.mxu0
        %v4636 = vadd.f32 %v4555, %v4635
        %v4637 = vpop.f32.mrf.mxu0
        %v4638 = vadd.f32 %v4557, %v4637
        %v4639 = vpop.f32.mrf.mxu0
        %v4640 = vadd.f32 %v4559, %v4639
        %v4641 = vpop.f32.mrf.mxu0
        %v4642 = vadd.f32 %v4561, %v4641
        %4643 = vmatprep.mubr.bf16.mxu0 0
        %4644 = vmatmul.mubr.bf16.gmra.mxu0 %v3446
        %v4645 = vpop.f32.mrf.mxu0
        %v4646 = vadd.f32 %v4565, %v4645
        %v4647 = vpop.f32.mrf.mxu0
        %v4648 = vadd.f32 %v4567, %v4647
        %v4649 = vpop.f32.mrf.mxu0
        %v4650 = vadd.f32 %v4569, %v4649
        %v4651 = vpop.f32.mrf.mxu0
        %v4652 = vadd.f32 %v4571, %v4651
        %4653 = vmatprep.mubr.bf16.mxu0 0
        %4654 = vmatmul.mubr.bf16.gmra.mxu0 %v3447
        %v4655 = vpop.f32.mrf.mxu0
        %v4656 = vadd.f32 %v4575, %v4655
        %v4657 = vpop.f32.mrf.mxu0
        %v4658 = vadd.f32 %v4577, %v4657
        %v4659 = vpop.f32.mrf.mxu0
        %v4660 = vpop.f32.mrf.mxu0
        %4661 = vdwg.mxu0
        %4662 = vmatprep.subr.bf16.mxu0 %v3928
        %4663 = vmatpush1.bf16.msra.mxu0 %v3927
        %4664 = vmatprep.subr.bf16.mxu0 %v3926
        %4665 = vmatpush1.bf16.msra.mxu0 %v3925
        %4666 = vmatprep.subr.bf16.mxu0 %v3924
        %4667 = vmatpush1.bf16.msra.mxu0 %v3923
        %4668 = vmatprep.subr.bf16.mxu0 %v3922
        %4669 = vmatpush1.bf16.msra.mxu0 %v3921
        %4670 = vmatprep.subr.bf16.mxu0 %v3920
        %4671 = vmatpush1.bf16.msra.mxu0 %v3919
        %4672 = vmatprep.subr.bf16.mxu0 %v3918
        %4673 = vmatpush1.bf16.msra.mxu0 %v3917
        %4674 = vmatprep.subr.bf16.mxu0 %v3916
        %4675 = vmatpush1.bf16.msra.mxu0 %v3915
        %4676 = vmatprep.subr.bf16.mxu0 %v3914
        %4677 = vmatpush1.bf16.msra.mxu0 %v3913
        %4678 = vmatprep.subr.bf16.mxu0 0
        %4679 = vmatpush2.bf16.msra.mxu0 0
        %4680 = vmatprep.subr.bf16.mxu0 0
        %4681 = vmatpush2.bf16.msra.mxu0 0
        %4682 = vmatprep.subr.bf16.mxu0 0
        %4683 = vmatpush2.bf16.msra.mxu0 0
        %4684 = vmatprep.subr.bf16.mxu0 0
        %4685 = vmatpush2.bf16.msra.mxu0 0
        %4686 = vmatprep.subr.bf16.mxu0 0
        %4687 = vmatpush2.bf16.msra.mxu0 0
        %4688 = vmatprep.subr.bf16.mxu0 0
        %4689 = vmatpush2.bf16.msra.mxu0 0
        %4690 = vmatprep.subr.bf16.mxu0 0
        %4691 = vmatpush2.bf16.msra.mxu0 0
        %4692 = vmatprep.subr.bf16.mxu0 0
        %4693 = vmatpush2.bf16.msra.mxu0 0
        %4694 = vmatprep.mubr.bf16.mxu0 0
        %4695 = vmatmul.mubr.bf16.gmra.mxu0 %v4072
        %v4696 = vpop.f32.mrf.mxu0
        %v4697 = vadd.f32 0.0, %v4696
        %v4698 = vpop.f32.mrf.mxu0
        %v4699 = vadd.f32 0.0, %v4698
        %v4700 = vpop.f32.mrf.mxu0
        %v4701 = vadd.f32 0.0, %v4700
        %v4702 = vpop.f32.mrf.mxu0
        %v4703 = vadd.f32 0.0, %v4702
        %4704 = vmatprep.mubr.bf16.mxu0 0
        %4705 = vmatmul.mubr.bf16.gmra.mxu0 %v4080
        %v4706 = vpop.f32.mrf.mxu0
        %v4707 = vadd.f32 0.0, %v4706
        %v4708 = vpop.f32.mrf.mxu0
        %v4709 = vadd.f32 0.0, %v4708
        %v4710 = vpop.f32.mrf.mxu0
        %v4711 = vadd.f32 0.0, %v4710
        %v4712 = vpop.f32.mrf.mxu0
        %v4713 = vadd.f32 0.0, %v4712
        %4714 = vmatprep.mubr.bf16.mxu0 0
        %4715 = vmatmul.mubr.bf16.gmra.mxu0 %v4088
        %v4716 = vpop.f32.mrf.mxu0
        %v4717 = vadd.f32 0.0, %v4716
        %v4718 = vpop.f32.mrf.mxu0
        %v4719 = vadd.f32 0.0, %v4718
        %v4720 = vpop.f32.mrf.mxu0
        %v4721 = vadd.f32 0.0, %v4720
        %v4722 = vpop.f32.mrf.mxu0
        %v4723 = vadd.f32 0.0, %v4722
        %4724 = vmatprep.mubr.bf16.mxu0 0
        %4725 = vmatmul.mubr.bf16.gmra.mxu0 %v4096
        %v4726 = vpop.f32.mrf.mxu0
        %v4727 = vadd.f32 0.0, %v4726
        %v4728 = vpop.f32.mrf.mxu0
        %v4729 = vadd.f32 0.0, %v4728
        %v4730 = vpop.f32.mrf.mxu0
        %v4731 = vadd.f32 0.0, %v4730
        %v4732 = vpop.f32.mrf.mxu0
        %v4733 = vadd.f32 0.0, %v4732
        %4734 = vmatprep.mubr.bf16.mxu0 0
        %4735 = vmatmul.mubr.bf16.gmra.mxu0 %v4099
        %v4736 = vpop.f32.mrf.mxu0
        %v4737 = vadd.f32 0.0, %v4736
        %v4738 = vpop.f32.mrf.mxu0
        %v4739 = vadd.f32 0.0, %v4738
        %v4740 = vpop.f32.mrf.mxu0
        %v4741 = vpop.f32.mrf.mxu0
        %4742 = vdwg.mxu0
        %v4743 = vadd.f32 %v4616, %v4697
        %v4744 = vadd.f32 %v4618, %v4699
        %v4745 = vadd.f32 %v4620, %v4701
        %v4746 = vadd.f32 %v4622, %v4703
        %v4747 = vadd.f32 %v4626, %v4707
        %v4748 = vadd.f32 %v4628, %v4709
        %v4749 = vadd.f32 %v4630, %v4711
        %v4750 = vadd.f32 %v4632, %v4713
        %v4751 = vadd.f32 %v4636, %v4717
        %v4752 = vadd.f32 %v4638, %v4719
        %v4753 = vadd.f32 %v4640, %v4721
        %v4754 = vadd.f32 %v4642, %v4723
        %v4755 = vadd.f32 %v4646, %v4727
        %v4756 = vadd.f32 %v4648, %v4729
        %v4757 = vadd.f32 %v4650, %v4731
        %v4758 = vadd.f32 %v4652, %v4733
        %v4759 = vadd.f32 %v4656, %v4737
        %v4760 = vadd.f32 %v4658, %v4739
        %4761 = vmatprep.subr.bf16.mxu0 %v4168
        %4762 = vmatpush1.bf16.msra.mxu0 %v4167
        %4763 = vmatprep.subr.bf16.mxu0 %v4166
        %4764 = vmatpush1.bf16.msra.mxu0 %v4165
        %4765 = vmatprep.subr.bf16.mxu0 %v4164
        %4766 = vmatpush1.bf16.msra.mxu0 %v4163
        %4767 = vmatprep.subr.bf16.mxu0 %v4162
        %4768 = vmatpush1.bf16.msra.mxu0 %v4161
        %4769 = vmatprep.subr.bf16.mxu0 %v4160
        %4770 = vmatpush1.bf16.msra.mxu0 %v4159
        %4771 = vmatprep.subr.bf16.mxu0 %v4158
        %4772 = vmatpush1.bf16.msra.mxu0 %v4157
        %4773 = vmatprep.subr.bf16.mxu0 %v4156
        %4774 = vmatpush1.bf16.msra.mxu0 %v4155
        %4775 = vmatprep.subr.bf16.mxu0 %v4154
        %4776 = vmatpush1.bf16.msra.mxu0 %v4153
        %4777 = vmatprep.subr.bf16.mxu0 0
        %4778 = vmatpush2.bf16.msra.mxu0 0
        %4779 = vmatprep.subr.bf16.mxu0 0
        %4780 = vmatpush2.bf16.msra.mxu0 0
        %4781 = vmatprep.subr.bf16.mxu0 0
        %4782 = vmatpush2.bf16.msra.mxu0 0
        %4783 = vmatprep.subr.bf16.mxu0 0
        %4784 = vmatpush2.bf16.msra.mxu0 0
        %4785 = vmatprep.subr.bf16.mxu0 0
        %4786 = vmatpush2.bf16.msra.mxu0 0
        %4787 = vmatprep.subr.bf16.mxu0 0
        %4788 = vmatpush2.bf16.msra.mxu0 0
        %4789 = vmatprep.subr.bf16.mxu0 0
        %4790 = vmatpush2.bf16.msra.mxu0 0
        %4791 = vmatprep.subr.bf16.mxu0 0
        %4792 = vmatpush2.bf16.msra.mxu0 0
        %4793 = vmatprep.mubr.bf16.mxu0 0
        %4794 = vmatmul.mubr.bf16.gmra.mxu0 %v4309
        %v4795 = vpop.f32.mrf.mxu0
        %v4796 = vadd.f32 0.0, %v4795
        %v4797 = vpop.f32.mrf.mxu0
        %v4798 = vadd.f32 0.0, %v4797
        %v4799 = vpop.f32.mrf.mxu0
        %v4800 = vadd.f32 0.0, %v4799
        %v4801 = vpop.f32.mrf.mxu0
        %v4802 = vadd.f32 0.0, %v4801
        %4803 = vmatprep.mubr.bf16.mxu0 0
        %4804 = vmatmul.mubr.bf16.gmra.mxu0 %v4311
        %v4805 = vpop.f32.mrf.mxu0
        %v4806 = vadd.f32 0.0, %v4805
        %v4807 = vpop.f32.mrf.mxu0
        %v4808 = vadd.f32 0.0, %v4807
        %v4809 = vpop.f32.mrf.mxu0
        %v4810 = vadd.f32 0.0, %v4809
        %v4811 = vpop.f32.mrf.mxu0
        %v4812 = vadd.f32 0.0, %v4811
        %4813 = vmatprep.mubr.bf16.mxu0 0
        %4814 = vmatmul.mubr.bf16.gmra.mxu0 %v4313
        %v4815 = vpop.f32.mrf.mxu0
        %v4816 = vadd.f32 0.0, %v4815
        %v4817 = vpop.f32.mrf.mxu0
        %v4818 = vadd.f32 0.0, %v4817
        %v4819 = vpop.f32.mrf.mxu0
        %v4820 = vadd.f32 0.0, %v4819
        %v4821 = vpop.f32.mrf.mxu0
        %v4822 = vadd.f32 0.0, %v4821
        %4823 = vmatprep.mubr.bf16.mxu0 0
        %4824 = vmatmul.mubr.bf16.gmra.mxu0 %v4315
        %v4825 = vpop.f32.mrf.mxu0
        %v4826 = vadd.f32 0.0, %v4825
        %v4827 = vpop.f32.mrf.mxu0
        %v4828 = vadd.f32 0.0, %v4827
        %v4829 = vpop.f32.mrf.mxu0
        %v4830 = vadd.f32 0.0, %v4829
        %v4831 = vpop.f32.mrf.mxu0
        %v4832 = vadd.f32 0.0, %v4831
        %4833 = vmatprep.mubr.bf16.mxu0 0
        %4834 = vmatmul.mubr.bf16.gmra.mxu0 %v4314
        %v4835 = vpop.f32.mrf.mxu0
        %v4836 = vadd.f32 0.0, %v4835
        %v4837 = vpop.f32.mrf.mxu0
        %v4838 = vadd.f32 0.0, %v4837
        %v4839 = vpop.f32.mrf.mxu0
        %v4840 = vpop.f32.mrf.mxu0
        %4841 = vdwg.mxu0
        %v4842 = vadd.f32 %v4743, %v4796
        %v4843 = vadd.f32 %v4744, %v4798
        %v4844 = vadd.f32 %v4745, %v4800
        %v4845 = vadd.f32 %v4746, %v4802
        %v4846 = vadd.f32 %v4747, %v4806
        %v4847 = vadd.f32 %v4748, %v4808
        %v4848 = vadd.f32 %v4749, %v4810
        %v4849 = vadd.f32 %v4750, %v4812
        %v4850 = vadd.f32 %v4751, %v4816
        %v4851 = vadd.f32 %v4752, %v4818
        %v4852 = vadd.f32 %v4753, %v4820
        %v4853 = vadd.f32 %v4754, %v4822
        %v4854 = vadd.f32 %v4755, %v4826
        %v4855 = vadd.f32 %v4756, %v4828
        %v4856 = vadd.f32 %v4757, %v4830
        %v4857 = vadd.f32 %v4758, %v4832
        %v4858 = vadd.f32 %v4759, %v4836
        %v4859 = vadd.f32 %v4760, %v4838
        %v4865 = vrot.slane %v3443, 1
        %v4866 = vrot.slane %v3444, 1
        %v4867 = vsel %vm4306, %v4865, %v4866
        %v4868 = vrot.slane %v3445, 1
        %v4869 = vsel %vm4306, %v4866, %v4868
        %v4870 = vrot.slane %v3446, 1
        %v4871 = vsel %vm4306, %v4868, %v4870
        %v4872 = vrot.slane %v3447, 1
        %v4873 = vsel %vm4306, %v4870, %v4872
        %4879 = vmatprep.subr.bf16.mxu0 %v4384
        %4880 = vmatpush1.bf16.msra.mxu0 %v4383
        %4881 = vmatprep.subr.bf16.mxu0 %v4382
        %4882 = vmatpush1.bf16.msra.mxu0 %v4381
        %4883 = vmatprep.subr.bf16.mxu0 %v4380
        %4884 = vmatpush1.bf16.msra.mxu0 %v4379
        %4885 = vmatprep.subr.bf16.mxu0 %v4378
        %4886 = vmatpush1.bf16.msra.mxu0 %v4377
        %4887 = vmatprep.subr.bf16.mxu0 %v4376
        %4888 = vmatpush1.bf16.msra.mxu0 %v4375
        %4889 = vmatprep.subr.bf16.mxu0 %v4374
        %4890 = vmatpush1.bf16.msra.mxu0 %v4373
        %4891 = vmatprep.subr.bf16.mxu0 %v4372
        %4892 = vmatpush1.bf16.msra.mxu0 %v4371
        %4893 = vmatprep.subr.bf16.mxu0 %v4370
        %4894 = vmatpush1.bf16.msra.mxu0 %v4369
        %4895 = vmatprep.subr.bf16.mxu0 0
        %4896 = vmatpush2.bf16.msra.mxu0 0
        %4897 = vmatprep.subr.bf16.mxu0 0
        %4898 = vmatpush2.bf16.msra.mxu0 0
        %4899 = vmatprep.subr.bf16.mxu0 0
        %4900 = vmatpush2.bf16.msra.mxu0 0
        %4901 = vmatprep.subr.bf16.mxu0 0
        %4902 = vmatpush2.bf16.msra.mxu0 0
        %4903 = vmatprep.subr.bf16.mxu0 0
        %4904 = vmatpush2.bf16.msra.mxu0 0
        %4905 = vmatprep.subr.bf16.mxu0 0
        %4906 = vmatpush2.bf16.msra.mxu0 0
        %4907 = vmatprep.subr.bf16.mxu0 0
        %4908 = vmatpush2.bf16.msra.mxu0 0
        %4909 = vmatprep.subr.bf16.mxu0 0
        %4910 = vmatpush2.bf16.msra.mxu0 0
        %4911 = vmatprep.mubr.bf16.mxu0 0
        %4912 = vmatmul.mubr.bf16.gmra.mxu0 %v4867
        %v4913 = vpop.f32.mrf.mxu0
        %v4914 = vadd.f32 0.0, %v4913
        %v4915 = vpop.f32.mrf.mxu0
        %v4916 = vadd.f32 0.0, %v4915
        %v4917 = vpop.f32.mrf.mxu0
        %v4918 = vadd.f32 0.0, %v4917
        %v4919 = vpop.f32.mrf.mxu0
        %v4920 = vadd.f32 0.0, %v4919
        %4921 = vmatprep.mubr.bf16.mxu0 0
        %4922 = vmatmul.mubr.bf16.gmra.mxu0 %v4869
        %v4923 = vpop.f32.mrf.mxu0
        %v4924 = vadd.f32 0.0, %v4923
        %v4925 = vpop.f32.mrf.mxu0
        %v4926 = vadd.f32 0.0, %v4925
        %v4927 = vpop.f32.mrf.mxu0
        %v4928 = vadd.f32 0.0, %v4927
        %v4929 = vpop.f32.mrf.mxu0
        %v4930 = vadd.f32 0.0, %v4929
        %4931 = vmatprep.mubr.bf16.mxu0 0
        %4932 = vmatmul.mubr.bf16.gmra.mxu0 %v4871
        %v4933 = vpop.f32.mrf.mxu0
        %v4934 = vadd.f32 0.0, %v4933
        %v4935 = vpop.f32.mrf.mxu0
        %v4936 = vadd.f32 0.0, %v4935
        %v4937 = vpop.f32.mrf.mxu0
        %v4938 = vadd.f32 0.0, %v4937
        %v4939 = vpop.f32.mrf.mxu0
        %v4940 = vadd.f32 0.0, %v4939
        %4941 = vmatprep.mubr.bf16.mxu0 0
        %4942 = vmatmul.mubr.bf16.gmra.mxu0 %v4873
        %v4943 = vpop.f32.mrf.mxu0
        %v4944 = vadd.f32 0.0, %v4943
        %v4945 = vpop.f32.mrf.mxu0
        %v4946 = vadd.f32 0.0, %v4945
        %v4947 = vpop.f32.mrf.mxu0
        %v4948 = vadd.f32 0.0, %v4947
        %v4949 = vpop.f32.mrf.mxu0
        %v4950 = vadd.f32 0.0, %v4949
        %4951 = vmatprep.mubr.bf16.mxu0 0
        %4952 = vmatmul.mubr.bf16.gmra.mxu0 %v4872
        %v4953 = vpop.f32.mrf.mxu0
        %v4954 = vadd.f32 0.0, %v4953
        %v4955 = vpop.f32.mrf.mxu0
        %v4956 = vadd.f32 0.0, %v4955
        %v4957 = vpop.f32.mrf.mxu0
        %v4958 = vpop.f32.mrf.mxu0
        %4959 = vdwg.mxu0
        %v4960 = vadd.f32 %v4842, %v4914
        %v4961 = vadd.f32 %v4843, %v4916
        %v4962 = vadd.f32 %v4844, %v4918
        %v4963 = vadd.f32 %v4845, %v4920
        %v4964 = vadd.f32 %v4846, %v4924
        %v4965 = vadd.f32 %v4847, %v4926
        %v4966 = vadd.f32 %v4848, %v4928
        %v4967 = vadd.f32 %v4849, %v4930
        %v4968 = vadd.f32 %v4850, %v4934
        %v4969 = vadd.f32 %v4851, %v4936
        %v4970 = vadd.f32 %v4852, %v4938
        %v4971 = vadd.f32 %v4853, %v4940
        %v4972 = vadd.f32 %v4854, %v4944
        %v4973 = vadd.f32 %v4855, %v4946
        %v4974 = vadd.f32 %v4856, %v4948
        %v4975 = vadd.f32 %v4857, %v4950
        %v4976 = vadd.f32 %v4858, %v4954
        %v4977 = vadd.f32 %v4859, %v4956
        %v4978 = vmax.f32 %v4482, %v4960
        %v4979 = vmax.f32 %v4483, %v4961
        %v4980 = vmax.f32 %v4484, %v4962
        %v4981 = vmax.f32 %v4485, %v4963
        %v4982 = vmax.f32 %v4486, %v4964
        %v4983 = vmax.f32 %v4487, %v4965
        %v4984 = vmax.f32 %v4488, %v4966
        %v4985 = vmax.f32 %v4489, %v4967
        %v4986 = vmax.f32 %v4490, %v4968
        %v4987 = vmax.f32 %v4491, %v4969
        %v4988 = vmax.f32 %v4492, %v4970
        %v4989 = vmax.f32 %v4493, %v4971
        %v4990 = vmax.f32 %v4494, %v4972
        %v4991 = vmax.f32 %v4495, %v4973
        %v4992 = vmax.f32 %v4496, %v4974
        %v4993 = vmax.f32 %v4497, %v4975
        %v4994 = vmax.f32 %v4498, %v4976
        %v4995 = vmax.f32 %v4499, %v4977
        %v4996 = vmax.f32 %v4978, %v4979
        %v4997 = vmax.f32 %v4980, %v4981
        %v4998 = vmax.f32 %v4982, %v4983
        %v4999 = vmax.f32 %v4984, %v4985
        %v5000 = vmax.f32 %v4986, %v4987
        %v5001 = vmax.f32 %v4988, %v4989
        %v5002 = vmax.f32 %v4990, %v4991
        %v5003 = vmax.f32 %v4992, %v4993
        %v5004 = vmax.f32 %v4994, %v4995
        %v5005 = vld [vmem:[%s4] sm:$0x1]
        %v5007 = vlaneseq
        %v5008 = vshrl.u32 %v5007, 7
        %v5009 = vsub.s32 0, %v5008
        %v5010 = vrot.slane %v5005, %v5009
        %v5012 = vadd.f32 %v4996, %v5010
        %v5013 = vadd.f32 %v4997, %v5010
        %v5014 = vadd.f32 %v4998, %v5010
        %v5015 = vadd.f32 %v4999, %v5010
        %v5016 = vadd.f32 %v5000, %v5010
        %v5017 = vadd.f32 %v5001, %v5010
        %v5018 = vadd.f32 %v5002, %v5010
        %v5019 = vadd.f32 %v5003, %v5010
        %v5020 = vadd.f32 %v5004, %v5010
        %v5021 = vmax.f32 %v5012, 0.0
        %v5022 = vmax.f32 %v5013, 0.0
        %v5023 = vmax.f32 %v5014, 0.0
        %v5024 = vmax.f32 %v5015, 0.0
        %v5025 = vmax.f32 %v5016, 0.0
        %v5026 = vmax.f32 %v5017, 0.0
        %v5027 = vmax.f32 %v5018, 0.0
        %v5028 = vmax.f32 %v5019, 0.0
        %v5029 = vmax.f32 %v5020, 0.0
        %v5030 = vpack.c.bf16 %v5022, %v5021
        %v5031 = vpack.c.bf16 %v5024, %v5023
        %v5032 = vpack.c.bf16 %v5026, %v5025
        %v5033 = vpack.c.bf16 %v5028, %v5027
        %v5034 = vld [vmem:[%s5] sm:$0xf]
        %v5035 = vld [vmem:[%s5 + $0x4] sm:$0xf]
        %v5036 = vld [vmem:[%s5 + $0x8] sm:$0xf]
        %v5037 = vld [vmem:[%s5 + $0xc] sm:$0xf]
        %v5038 = vld [vmem:[%s5 + $0x10] sm:$0xf]
        %v5039 = vld [vmem:[%s5 + $0x14] sm:$0xf]
        %v5040 = vld [vmem:[%s5 + $0x18] sm:$0xf]
        %v5041 = vld [vmem:[%s5 + $0x1c] sm:$0xf]
        %v5042 = vld [vmem:[%s5 + $0x20] sm:$0xf]
        %v5043 = vld [vmem:[%s5 + $0x24] sm:$0xf]
        %v5044 = vld [vmem:[%s5 + $0x28] sm:$0xf]
        %v5045 = vld [vmem:[%s5 + $0x2c] sm:$0xf]
        %v5046 = vld [vmem:[%s5 + $0x30] sm:$0xf]
        %v5047 = vld [vmem:[%s5 + $0x34] sm:$0xf]
        %v5048 = vld [vmem:[%s5 + $0x38] sm:$0xf]
        %v5049 = vld [vmem:[%s5 + $0x3c] sm:$0xf]
        %v5050 = vpack.c.bf16 %v5029, %v5029
        %s5051 = scalar_lea.vmem %s5, 64
        %v5052 = vld [vmem:[%s5051] sm:$0xf]
        %v5053 = vld [vmem:[%s5051 + $0x4] sm:$0xf]
        %v5054 = vld [vmem:[%s5051 + $0x8] sm:$0xf]
        %v5055 = vld [vmem:[%s5051 + $0xc] sm:$0xf]
        %v5056 = vld [vmem:[%s5051 + $0x10] sm:$0xf]
        %v5057 = vld [vmem:[%s5051 + $0x14] sm:$0xf]
        %v5058 = vld [vmem:[%s5051 + $0x18] sm:$0xf]
        %v5059 = vld [vmem:[%s5051 + $0x1c] sm:$0xf]
        %v5060 = vld [vmem:[%s5051 + $0x20] sm:$0xf]
        %v5061 = vld [vmem:[%s5051 + $0x24] sm:$0xf]
        %v5062 = vld [vmem:[%s5051 + $0x28] sm:$0xf]
        %v5063 = vld [vmem:[%s5051 + $0x2c] sm:$0xf]
        %v5064 = vld [vmem:[%s5051 + $0x30] sm:$0xf]
        %v5065 = vld [vmem:[%s5051 + $0x34] sm:$0xf]
        %v5066 = vld [vmem:[%s5051 + $0x38] sm:$0xf]
        %v5067 = vld [vmem:[%s5051 + $0x3c] sm:$0xf]
        %v5069 = vshrl.u32 %v5030, 16
        %v5071 = vshll.u32 %v5030, 16
        %v5073 = vrot.slane %v5071, 1
        %v5074 = vor.u32 %v5069, %v5073
        %v5076 = vshll.u32 %v5031, 16
        %v5078 = vrot.slane %v5076, 1
        %v5079 = vsel %vm3820, %v5074, %v5078
        %v5080 = vshrl.u32 %v5031, 16
        %v5082 = vor.u32 %v5080, %v5078
        %v5084 = vshll.u32 %v5032, 16
        %v5086 = vrot.slane %v5084, 1
        %v5087 = vsel %vm3820, %v5082, %v5086
        %v5088 = vshrl.u32 %v5032, 16
        %v5090 = vor.u32 %v5088, %v5086
        %v5092 = vshll.u32 %v5033, 16
        %v5094 = vrot.slane %v5092, 1
        %v5095 = vsel %vm3820, %v5090, %v5094
        %v5096 = vshrl.u32 %v5033, 16
        %v5098 = vor.u32 %v5096, %v5094
        %v5100 = vshll.u32 %v5050, 16
        %v5102 = vrot.slane %v5100, 1
        %v5103 = vsel %vm3820, %v5098, %v5102
        %v5124 = vunpack.c.l.b16 %v5052
        %v5125 = vunpack.c.l.b16 %v5053
        %v5126 = vunpack.c.l.b16 %v5054
        %v5127 = vunpack.c.l.b16 %v5055
        %v5128 = vunpack.c.l.b16 %v5056
        %v5129 = vunpack.c.l.b16 %v5057
        %v5130 = vunpack.c.l.b16 %v5058
        %v5131 = vunpack.c.l.b16 %v5059
        %v5132 = vunpack.c.l.b16 %v5060
        %v5133 = vunpack.c.l.b16 %v5061
        %v5134 = vunpack.c.l.b16 %v5062
        %v5135 = vunpack.c.l.b16 %v5063
        %v5136 = vunpack.c.l.b16 %v5064
        %v5137 = vunpack.c.l.b16 %v5065
        %v5138 = vunpack.c.l.b16 %v5066
        %v5139 = vunpack.c.l.b16 %v5067
        %v5140 = vpack.c.b16 %v5125, %v5124
        %v5141 = vpack.c.b16 %v5127, %v5126
        %v5142 = vpack.c.b16 %v5129, %v5128
        %v5143 = vpack.c.b16 %v5131, %v5130
        %v5144 = vpack.c.b16 %v5133, %v5132
        %v5145 = vpack.c.b16 %v5135, %v5134
        %v5146 = vpack.c.b16 %v5137, %v5136
        %v5147 = vpack.c.b16 %v5139, %v5138
        %5156 = vmatprep.subr.bf16.mxu0 0
        %5157 = vmatpush1.bf16.msra.mxu0 %v5147
        %5158 = vmatprep.subr.bf16.mxu0 0
        %5159 = vmatpush1.bf16.msra.mxu0 %v5146
        %5160 = vmatprep.subr.bf16.mxu0 0
        %5161 = vmatpush1.bf16.msra.mxu0 %v5145
        %5162 = vmatprep.subr.bf16.mxu0 0
        %5163 = vmatpush1.bf16.msra.mxu0 %v5144
        %5164 = vmatprep.subr.bf16.mxu0 0
        %5165 = vmatpush1.bf16.msra.mxu0 %v5143
        %5166 = vmatprep.subr.bf16.mxu0 0
        %5167 = vmatpush1.bf16.msra.mxu0 %v5142
        %5168 = vmatprep.subr.bf16.mxu0 0
        %5169 = vmatpush1.bf16.msra.mxu0 %v5141
        %5170 = vmatprep.subr.bf16.mxu0 0
        %5171 = vmatpush1.bf16.msra.mxu0 %v5140
        %5172 = vmatprep.subr.bf16.mxu0 0
        %5173 = vmatpush2.bf16.msra.mxu0 0
        %5174 = vmatprep.subr.bf16.mxu0 0
        %5175 = vmatpush2.bf16.msra.mxu0 0
        %5176 = vmatprep.subr.bf16.mxu0 0
        %5177 = vmatpush2.bf16.msra.mxu0 0
        %5178 = vmatprep.subr.bf16.mxu0 0
        %5179 = vmatpush2.bf16.msra.mxu0 0
        %5180 = vmatprep.subr.bf16.mxu0 0
        %5181 = vmatpush2.bf16.msra.mxu0 0
        %5182 = vmatprep.subr.bf16.mxu0 0
        %5183 = vmatpush2.bf16.msra.mxu0 0
        %5184 = vmatprep.subr.bf16.mxu0 0
        %5185 = vmatpush2.bf16.msra.mxu0 0
        %5186 = vmatprep.subr.bf16.mxu0 0
        %5187 = vmatpush2.bf16.msra.mxu0 0
        %5188 = vmatprep.mubr.bf16.mxu0 0
        %5189 = vmatmul.mubr.bf16.gmra.mxu0 %v5079
        %v5190 = vpop.f32.mrf.mxu0
        %v5191 = vadd.f32 0.0, %v5190
        %v5192 = vpop.f32.mrf.mxu0
        %v5193 = vpop.f32.mrf.mxu0
        %v5194 = vadd.f32 0.0, %v5193
        %v5195 = vpop.f32.mrf.mxu0
        %5196 = vmatprep.mubr.bf16.mxu0 0
        %5197 = vmatmul.mubr.bf16.gmra.mxu0 %v5087
        %v5198 = vpop.f32.mrf.mxu0
        %v5199 = vadd.f32 0.0, %v5198
        %v5200 = vpop.f32.mrf.mxu0
        %v5201 = vpop.f32.mrf.mxu0
        %v5202 = vadd.f32 0.0, %v5201
        %v5203 = vpop.f32.mrf.mxu0
        %5204 = vmatprep.mubr.bf16.mxu0 0
        %5205 = vmatmul.mubr.bf16.gmra.mxu0 %v5095
        %v5206 = vpop.f32.mrf.mxu0
        %v5207 = vadd.f32 0.0, %v5206
        %v5208 = vpop.f32.mrf.mxu0
        %v5209 = vpop.f32.mrf.mxu0
        %v5210 = vadd.f32 0.0, %v5209
        %v5211 = vpop.f32.mrf.mxu0
        %5212 = vmatprep.mubr.bf16.mxu0 0
        %5213 = vmatmul.mubr.bf16.gmra.mxu0 %v5103
        %v5214 = vpop.f32.mrf.mxu0
        %v5215 = vadd.f32 0.0, %v5214
        %v5216 = vpop.f32.mrf.mxu0
        %v5217 = vpop.f32.mrf.mxu0
        %v5218 = vadd.f32 0.0, %v5217
        %v5219 = vpop.f32.mrf.mxu0
        %5220 = vdwg.mxu0
        %v5237 = vunpack.c.l.b16 %v5034
        %v5238 = vunpack.c.l.b16 %v5035
        %v5239 = vunpack.c.l.b16 %v5036
        %v5240 = vunpack.c.l.b16 %v5037
        %v5241 = vunpack.c.l.b16 %v5038
        %v5242 = vunpack.c.l.b16 %v5039
        %v5243 = vunpack.c.l.b16 %v5040
        %v5244 = vunpack.c.l.b16 %v5041
        %v5245 = vunpack.c.l.b16 %v5042
        %v5246 = vunpack.c.l.b16 %v5043
        %v5247 = vunpack.c.l.b16 %v5044
        %v5248 = vunpack.c.l.b16 %v5045
        %v5249 = vunpack.c.l.b16 %v5046
        %v5250 = vunpack.c.l.b16 %v5047
        %v5251 = vunpack.c.l.b16 %v5048
        %v5252 = vunpack.c.l.b16 %v5049
        %v5253 = vpack.c.b16 %v5238, %v5237
        %v5254 = vpack.c.b16 %v5240, %v5239
        %v5255 = vpack.c.b16 %v5242, %v5241
        %v5256 = vpack.c.b16 %v5244, %v5243
        %v5257 = vpack.c.b16 %v5246, %v5245
        %v5258 = vpack.c.b16 %v5248, %v5247
        %v5259 = vpack.c.b16 %v5250, %v5249
        %v5260 = vpack.c.b16 %v5252, %v5251
        %5269 = vmatprep.subr.bf16.mxu0 0
        %5270 = vmatpush1.bf16.msra.mxu0 %v5260
        %5271 = vmatprep.subr.bf16.mxu0 0
        %5272 = vmatpush1.bf16.msra.mxu0 %v5259
        %5273 = vmatprep.subr.bf16.mxu0 0
        %5274 = vmatpush1.bf16.msra.mxu0 %v5258
        %5275 = vmatprep.subr.bf16.mxu0 0
        %5276 = vmatpush1.bf16.msra.mxu0 %v5257
        %5277 = vmatprep.subr.bf16.mxu0 0
        %5278 = vmatpush1.bf16.msra.mxu0 %v5256
        %5279 = vmatprep.subr.bf16.mxu0 0
        %5280 = vmatpush1.bf16.msra.mxu0 %v5255
        %5281 = vmatprep.subr.bf16.mxu0 0
        %5282 = vmatpush1.bf16.msra.mxu0 %v5254
        %5283 = vmatprep.subr.bf16.mxu0 0
        %5284 = vmatpush1.bf16.msra.mxu0 %v5253
        %5285 = vmatprep.subr.bf16.mxu0 0
        %5286 = vmatpush2.bf16.msra.mxu0 0
        %5287 = vmatprep.subr.bf16.mxu0 0
        %5288 = vmatpush2.bf16.msra.mxu0 0
        %5289 = vmatprep.subr.bf16.mxu0 0
        %5290 = vmatpush2.bf16.msra.mxu0 0
        %5291 = vmatprep.subr.bf16.mxu0 0
        %5292 = vmatpush2.bf16.msra.mxu0 0
        %5293 = vmatprep.subr.bf16.mxu0 0
        %5294 = vmatpush2.bf16.msra.mxu0 0
        %5295 = vmatprep.subr.bf16.mxu0 0
        %5296 = vmatpush2.bf16.msra.mxu0 0
        %5297 = vmatprep.subr.bf16.mxu0 0
        %5298 = vmatpush2.bf16.msra.mxu0 0
        %5299 = vmatprep.subr.bf16.mxu0 0
        %5300 = vmatpush2.bf16.msra.mxu0 0
        %5301 = vmatprep.mubr.bf16.mxu0 0
        %5302 = vmatmul.mubr.bf16.gmra.mxu0 %v5030
        %v5303 = vpop.f32.mrf.mxu0
        %v5304 = vadd.f32 %v5191, %v5303
        %v5305 = vpop.f32.mrf.mxu0
        %v5306 = vpop.f32.mrf.mxu0
        %v5307 = vadd.f32 %v5194, %v5306
        %v5308 = vpop.f32.mrf.mxu0
        %5309 = vmatprep.mubr.bf16.mxu0 0
        %5310 = vmatmul.mubr.bf16.gmra.mxu0 %v5031
        %v5311 = vpop.f32.mrf.mxu0
        %v5312 = vadd.f32 %v5199, %v5311
        %v5313 = vpop.f32.mrf.mxu0
        %v5314 = vpop.f32.mrf.mxu0
        %v5315 = vadd.f32 %v5202, %v5314
        %v5316 = vpop.f32.mrf.mxu0
        %5317 = vmatprep.mubr.bf16.mxu0 0
        %5318 = vmatmul.mubr.bf16.gmra.mxu0 %v5032
        %v5319 = vpop.f32.mrf.mxu0
        %v5320 = vadd.f32 %v5207, %v5319
        %v5321 = vpop.f32.mrf.mxu0
        %v5322 = vpop.f32.mrf.mxu0
        %v5323 = vadd.f32 %v5210, %v5322
        %v5324 = vpop.f32.mrf.mxu0
        %5325 = vmatprep.mubr.bf16.mxu0 0
        %5326 = vmatmul.mubr.bf16.gmra.mxu0 %v5033
        %v5327 = vpop.f32.mrf.mxu0
        %v5328 = vadd.f32 %v5215, %v5327
        %v5329 = vpop.f32.mrf.mxu0
        %v5330 = vpop.f32.mrf.mxu0
        %v5331 = vadd.f32 %v5218, %v5330
        %v5332 = vpop.f32.mrf.mxu0
        %5333 = vdwg.mxu0
        %s5334 = scalar_lea.vmem %s5, 128
        %v5335 = vld [vmem:[%s5334] sm:$0xf]
        %v5336 = vld [vmem:[%s5334 + $0x4] sm:$0xf]
        %v5337 = vld [vmem:[%s5334 + $0x8] sm:$0xf]
        %v5338 = vld [vmem:[%s5334 + $0xc] sm:$0xf]
        %v5339 = vld [vmem:[%s5334 + $0x10] sm:$0xf]
        %v5340 = vld [vmem:[%s5334 + $0x14] sm:$0xf]
        %v5341 = vld [vmem:[%s5334 + $0x18] sm:$0xf]
        %v5342 = vld [vmem:[%s5334 + $0x1c] sm:$0xf]
        %v5343 = vld [vmem:[%s5334 + $0x20] sm:$0xf]
        %v5344 = vld [vmem:[%s5334 + $0x24] sm:$0xf]
        %v5345 = vld [vmem:[%s5334 + $0x28] sm:$0xf]
        %v5346 = vld [vmem:[%s5334 + $0x2c] sm:$0xf]
        %v5347 = vld [vmem:[%s5334 + $0x30] sm:$0xf]
        %v5348 = vld [vmem:[%s5334 + $0x34] sm:$0xf]
        %v5349 = vld [vmem:[%s5334 + $0x38] sm:$0xf]
        %v5350 = vld [vmem:[%s5334 + $0x3c] sm:$0xf]
        %v5356 = vrot.slane %v5030, 1
        %v5357 = vrot.slane %v5031, 1
        %v5358 = vsel %vm4306, %v5356, %v5357
        %v5359 = vrot.slane %v5032, 1
        %v5360 = vsel %vm4306, %v5357, %v5359
        %v5361 = vrot.slane %v5033, 1
        %v5362 = vsel %vm4306, %v5359, %v5361
        %v5363 = vrot.slane %v5050, 1
        %v5364 = vsel %vm4306, %v5361, %v5363
        %v5385 = vunpack.c.l.b16 %v5335
        %v5386 = vunpack.c.l.b16 %v5336
        %v5387 = vunpack.c.l.b16 %v5337
        %v5388 = vunpack.c.l.b16 %v5338
        %v5389 = vunpack.c.l.b16 %v5339
        %v5390 = vunpack.c.l.b16 %v5340
        %v5391 = vunpack.c.l.b16 %v5341
        %v5392 = vunpack.c.l.b16 %v5342
        %v5393 = vunpack.c.l.b16 %v5343
        %v5394 = vunpack.c.l.b16 %v5344
        %v5395 = vunpack.c.l.b16 %v5345
        %v5396 = vunpack.c.l.b16 %v5346
        %v5397 = vunpack.c.l.b16 %v5347
        %v5398 = vunpack.c.l.b16 %v5348
        %v5399 = vunpack.c.l.b16 %v5349
        %v5400 = vunpack.c.l.b16 %v5350
        %v5401 = vpack.c.b16 %v5386, %v5385
        %v5402 = vpack.c.b16 %v5388, %v5387
        %v5403 = vpack.c.b16 %v5390, %v5389
        %v5404 = vpack.c.b16 %v5392, %v5391
        %v5405 = vpack.c.b16 %v5394, %v5393
        %v5406 = vpack.c.b16 %v5396, %v5395
        %v5407 = vpack.c.b16 %v5398, %v5397
        %v5408 = vpack.c.b16 %v5400, %v5399
        %5417 = vmatprep.subr.bf16.mxu0 0
        %5418 = vmatpush1.bf16.msra.mxu0 %v5408
        %5419 = vmatprep.subr.bf16.mxu0 0
        %5420 = vmatpush1.bf16.msra.mxu0 %v5407
        %5421 = vmatprep.subr.bf16.mxu0 0
        %5422 = vmatpush1.bf16.msra.mxu0 %v5406
        %5423 = vmatprep.subr.bf16.mxu0 0
        %5424 = vmatpush1.bf16.msra.mxu0 %v5405
        %5425 = vmatprep.subr.bf16.mxu0 0
        %5426 = vmatpush1.bf16.msra.mxu0 %v5404
        %5427 = vmatprep.subr.bf16.mxu0 0
        %5428 = vmatpush1.bf16.msra.mxu0 %v5403
        %5429 = vmatprep.subr.bf16.mxu0 0
        %5430 = vmatpush1.bf16.msra.mxu0 %v5402
        %5431 = vmatprep.subr.bf16.mxu0 0
        %5432 = vmatpush1.bf16.msra.mxu0 %v5401
        %5433 = vmatprep.subr.bf16.mxu0 0
        %5434 = vmatpush2.bf16.msra.mxu0 0
        %5435 = vmatprep.subr.bf16.mxu0 0
        %5436 = vmatpush2.bf16.msra.mxu0 0
        %5437 = vmatprep.subr.bf16.mxu0 0
        %5438 = vmatpush2.bf16.msra.mxu0 0
        %5439 = vmatprep.subr.bf16.mxu0 0
        %5440 = vmatpush2.bf16.msra.mxu0 0
        %5441 = vmatprep.subr.bf16.mxu0 0
        %5442 = vmatpush2.bf16.msra.mxu0 0
        %5443 = vmatprep.subr.bf16.mxu0 0
        %5444 = vmatpush2.bf16.msra.mxu0 0
        %5445 = vmatprep.subr.bf16.mxu0 0
        %5446 = vmatpush2.bf16.msra.mxu0 0
        %5447 = vmatprep.subr.bf16.mxu0 0
        %5448 = vmatpush2.bf16.msra.mxu0 0
        %5449 = vmatprep.mubr.bf16.mxu0 0
        %5450 = vmatmul.mubr.bf16.gmra.mxu0 %v5358
        %v5451 = vpop.f32.mrf.mxu0
        %v5452 = vadd.f32 0.0, %v5451
        %v5453 = vpop.f32.mrf.mxu0
        %v5454 = vpop.f32.mrf.mxu0
        %v5455 = vadd.f32 0.0, %v5454
        %v5456 = vpop.f32.mrf.mxu0
        %5457 = vmatprep.mubr.bf16.mxu0 0
        %5458 = vmatmul.mubr.bf16.gmra.mxu0 %v5360
        %v5459 = vpop.f32.mrf.mxu0
        %v5460 = vadd.f32 0.0, %v5459
        %v5461 = vpop.f32.mrf.mxu0
        %v5462 = vpop.f32.mrf.mxu0
        %v5463 = vadd.f32 0.0, %v5462
        %v5464 = vpop.f32.mrf.mxu0
        %5465 = vmatprep.mubr.bf16.mxu0 0
        %5466 = vmatmul.mubr.bf16.gmra.mxu0 %v5362
        %v5467 = vpop.f32.mrf.mxu0
        %v5468 = vadd.f32 0.0, %v5467
        %v5469 = vpop.f32.mrf.mxu0
        %v5470 = vpop.f32.mrf.mxu0
        %v5471 = vadd.f32 0.0, %v5470
        %v5472 = vpop.f32.mrf.mxu0
        %5473 = vmatprep.mubr.bf16.mxu0 0
        %5474 = vmatmul.mubr.bf16.gmra.mxu0 %v5364
        %v5475 = vpop.f32.mrf.mxu0
        %v5476 = vadd.f32 0.0, %v5475
        %v5477 = vpop.f32.mrf.mxu0
        %v5478 = vpop.f32.mrf.mxu0
        %v5479 = vadd.f32 0.0, %v5478
        %v5480 = vpop.f32.mrf.mxu0
        %5481 = vdwg.mxu0
        %v5482 = vadd.f32 %v5304, %v5452
        %v5483 = vadd.f32 %v5307, %v5455
        %v5484 = vadd.f32 %v5312, %v5460
        %v5485 = vadd.f32 %v5315, %v5463
        %v5486 = vadd.f32 %v5320, %v5468
        %v5487 = vadd.f32 %v5323, %v5471
        %v5488 = vadd.f32 %v5328, %v5476
        %v5489 = vadd.f32 %v5331, %v5479
        %s5490 = scalar_lea.vmem %s5, 192
        %v5491 = vld [vmem:[%s5490] sm:$0xf]
        %v5492 = vld [vmem:[%s5490 + $0x4] sm:$0xf]
        %v5493 = vld [vmem:[%s5490 + $0x8] sm:$0xf]
        %v5494 = vld [vmem:[%s5490 + $0xc] sm:$0xf]
        %v5495 = vld [vmem:[%s5490 + $0x10] sm:$0xf]
        %v5496 = vld [vmem:[%s5490 + $0x14] sm:$0xf]
        %v5497 = vld [vmem:[%s5490 + $0x18] sm:$0xf]
        %v5498 = vld [vmem:[%s5490 + $0x1c] sm:$0xf]
        %v5499 = vld [vmem:[%s5490 + $0x20] sm:$0xf]
        %v5500 = vld [vmem:[%s5490 + $0x24] sm:$0xf]
        %v5501 = vld [vmem:[%s5490 + $0x28] sm:$0xf]
        %v5502 = vld [vmem:[%s5490 + $0x2c] sm:$0xf]
        %v5503 = vld [vmem:[%s5490 + $0x30] sm:$0xf]
        %v5504 = vld [vmem:[%s5490 + $0x34] sm:$0xf]
        %v5505 = vld [vmem:[%s5490 + $0x38] sm:$0xf]
        %v5506 = vld [vmem:[%s5490 + $0x3c] sm:$0xf]
        %vm5507 = vsmask.f32 6400
        %v5508 = vrot.slane %v5069, 1
        %v5509 = vrot.slane %v5071, 2
        %v5510 = vor.u32 %v5508, %v5509
        %v5511 = vrot.slane %v5080, 1
        %v5512 = vrot.slane %v5076, 2
        %v5513 = vor.u32 %v5511, %v5512
        %v5514 = vsel %vm5507, %v5510, %v5513
        %v5515 = vrot.slane %v5088, 1
        %v5516 = vrot.slane %v5084, 2
        %v5517 = vor.u32 %v5515, %v5516
        %v5518 = vsel %vm5507, %v5513, %v5517
        %v5519 = vrot.slane %v5096, 1
        %v5520 = vrot.slane %v5092, 2
        %v5521 = vor.u32 %v5519, %v5520
        %v5522 = vsel %vm5507, %v5517, %v5521
        %v5523 = vshrl.u32 %v5050, 16
        %v5525 = vrot.slane %v5523, 1
        %v5526 = vrot.slane %v5100, 2
        %v5527 = vor.u32 %v5525, %v5526
        %v5528 = vsel %vm5507, %v5521, %v5527
        %v5549 = vunpack.c.l.b16 %v5491
        %v5550 = vunpack.c.l.b16 %v5492
        %v5551 = vunpack.c.l.b16 %v5493
        %v5552 = vunpack.c.l.b16 %v5494
        %v5553 = vunpack.c.l.b16 %v5495
        %v5554 = vunpack.c.l.b16 %v5496
        %v5555 = vunpack.c.l.b16 %v5497
        %v5556 = vunpack.c.l.b16 %v5498
        %v5557 = vunpack.c.l.b16 %v5499
        %v5558 = vunpack.c.l.b16 %v5500
        %v5559 = vunpack.c.l.b16 %v5501
        %v5560 = vunpack.c.l.b16 %v5502
        %v5561 = vunpack.c.l.b16 %v5503
        %v5562 = vunpack.c.l.b16 %v5504
        %v5563 = vunpack.c.l.b16 %v5505
        %v5564 = vunpack.c.l.b16 %v5506
        %v5565 = vpack.c.b16 %v5550, %v5549
        %v5566 = vpack.c.b16 %v5552, %v5551
        %v5567 = vpack.c.b16 %v5554, %v5553
        %v5568 = vpack.c.b16 %v5556, %v5555
        %v5569 = vpack.c.b16 %v5558, %v5557
        %v5570 = vpack.c.b16 %v5560, %v5559
        %v5571 = vpack.c.b16 %v5562, %v5561
        %v5572 = vpack.c.b16 %v5564, %v5563
        %5581 = vmatprep.subr.bf16.mxu0 0
        %5582 = vmatpush1.bf16.msra.mxu0 %v5572
        %5583 = vmatprep.subr.bf16.mxu0 0
        %5584 = vmatpush1.bf16.msra.mxu0 %v5571
        %5585 = vmatprep.subr.bf16.mxu0 0
        %5586 = vmatpush1.bf16.msra.mxu0 %v5570
        %5587 = vmatprep.subr.bf16.mxu0 0
        %5588 = vmatpush1.bf16.msra.mxu0 %v5569
        %5589 = vmatprep.subr.bf16.mxu0 0
        %5590 = vmatpush1.bf16.msra.mxu0 %v5568
        %5591 = vmatprep.subr.bf16.mxu0 0
        %5592 = vmatpush1.bf16.msra.mxu0 %v5567
        %5593 = vmatprep.subr.bf16.mxu0 0
        %5594 = vmatpush1.bf16.msra.mxu0 %v5566
        %5595 = vmatprep.subr.bf16.mxu0 0
        %5596 = vmatpush1.bf16.msra.mxu0 %v5565
        %5597 = vmatprep.subr.bf16.mxu0 0
        %5598 = vmatpush2.bf16.msra.mxu0 0
        %5599 = vmatprep.subr.bf16.mxu0 0
        %5600 = vmatpush2.bf16.msra.mxu0 0
        %5601 = vmatprep.subr.bf16.mxu0 0
        %5602 = vmatpush2.bf16.msra.mxu0 0
        %5603 = vmatprep.subr.bf16.mxu0 0
        %5604 = vmatpush2.bf16.msra.mxu0 0
        %5605 = vmatprep.subr.bf16.mxu0 0
        %5606 = vmatpush2.bf16.msra.mxu0 0
        %5607 = vmatprep.subr.bf16.mxu0 0
        %5608 = vmatpush2.bf16.msra.mxu0 0
        %5609 = vmatprep.subr.bf16.mxu0 0
        %5610 = vmatpush2.bf16.msra.mxu0 0
        %5611 = vmatprep.subr.bf16.mxu0 0
        %5612 = vmatpush2.bf16.msra.mxu0 0
        %5613 = vmatprep.mubr.bf16.mxu0 0
        %5614 = vmatmul.mubr.bf16.gmra.mxu0 %v5514
        %v5615 = vpop.f32.mrf.mxu0
        %v5616 = vadd.f32 0.0, %v5615
        %v5617 = vpop.f32.mrf.mxu0
        %v5618 = vpop.f32.mrf.mxu0
        %v5619 = vadd.f32 0.0, %v5618
        %v5620 = vpop.f32.mrf.mxu0
        %5621 = vmatprep.mubr.bf16.mxu0 0
        %5622 = vmatmul.mubr.bf16.gmra.mxu0 %v5518
        %v5623 = vpop.f32.mrf.mxu0
        %v5624 = vadd.f32 0.0, %v5623
        %v5625 = vpop.f32.mrf.mxu0
        %v5626 = vpop.f32.mrf.mxu0
        %v5627 = vadd.f32 0.0, %v5626
        %v5628 = vpop.f32.mrf.mxu0
        %5629 = vmatprep.mubr.bf16.mxu0 0
        %5630 = vmatmul.mubr.bf16.gmra.mxu0 %v5522
        %v5631 = vpop.f32.mrf.mxu0
        %v5632 = vadd.f32 0.0, %v5631
        %v5633 = vpop.f32.mrf.mxu0
        %v5634 = vpop.f32.mrf.mxu0
        %v5635 = vadd.f32 0.0, %v5634
        %v5636 = vpop.f32.mrf.mxu0
        %5637 = vmatprep.mubr.bf16.mxu0 0
        %5638 = vmatmul.mubr.bf16.gmra.mxu0 %v5528
        %v5639 = vpop.f32.mrf.mxu0
        %v5640 = vadd.f32 0.0, %v5639
        %v5641 = vpop.f32.mrf.mxu0
        %v5642 = vpop.f32.mrf.mxu0
        %v5643 = vadd.f32 0.0, %v5642
        %v5644 = vpop.f32.mrf.mxu0
        %5645 = vdwg.mxu0
        %v5646 = vadd.f32 %v5482, %v5616
        %v5647 = vadd.f32 %v5483, %v5619
        %v5648 = vadd.f32 %v5484, %v5624
        %v5649 = vadd.f32 %v5485, %v5627
        %v5650 = vadd.f32 %v5486, %v5632
        %v5651 = vadd.f32 %v5487, %v5635
        %v5652 = vadd.f32 %v5488, %v5640
        %v5653 = vadd.f32 %v5489, %v5643
        %s5654 = scalar_lea.vmem %s5, 256
        %v5655 = vld [vmem:[%s5654] sm:$0xf]
        %v5656 = vld [vmem:[%s5654 + $0x4] sm:$0xf]
        %v5657 = vld [vmem:[%s5654 + $0x8] sm:$0xf]
        %v5658 = vld [vmem:[%s5654 + $0xc] sm:$0xf]
        %v5659 = vld [vmem:[%s5654 + $0x10] sm:$0xf]
        %v5660 = vld [vmem:[%s5654 + $0x14] sm:$0xf]
        %v5661 = vld [vmem:[%s5654 + $0x18] sm:$0xf]
        %v5662 = vld [vmem:[%s5654 + $0x1c] sm:$0xf]
        %v5663 = vld [vmem:[%s5654 + $0x20] sm:$0xf]
        %v5664 = vld [vmem:[%s5654 + $0x24] sm:$0xf]
        %v5665 = vld [vmem:[%s5654 + $0x28] sm:$0xf]
        %v5666 = vld [vmem:[%s5654 + $0x2c] sm:$0xf]
        %v5667 = vld [vmem:[%s5654 + $0x30] sm:$0xf]
        %v5668 = vld [vmem:[%s5654 + $0x34] sm:$0xf]
        %v5669 = vld [vmem:[%s5654 + $0x38] sm:$0xf]
        %v5670 = vld [vmem:[%s5654 + $0x3c] sm:$0xf]
        %vm5671 = vcmask 1045504
        %v5672 = vrot.slane %v5030, 2
        %v5673 = vrot.slane %v5031, 2
        %v5674 = vsel %vm5671, %v5672, %v5673
        %v5675 = vrot.slane %v5032, 2
        %v5676 = vsel %vm5671, %v5673, %v5675
        %v5677 = vrot.slane %v5033, 2
        %v5678 = vsel %vm5671, %v5675, %v5677
        %v5679 = vrot.slane %v5050, 2
        %v5680 = vsel %vm5671, %v5677, %v5679
        %v5701 = vunpack.c.l.b16 %v5655
        %v5702 = vunpack.c.l.b16 %v5656
        %v5703 = vunpack.c.l.b16 %v5657
        %v5704 = vunpack.c.l.b16 %v5658
        %v5705 = vunpack.c.l.b16 %v5659
        %v5706 = vunpack.c.l.b16 %v5660
        %v5707 = vunpack.c.l.b16 %v5661
        %v5708 = vunpack.c.l.b16 %v5662
        %v5709 = vunpack.c.l.b16 %v5663
        %v5710 = vunpack.c.l.b16 %v5664
        %v5711 = vunpack.c.l.b16 %v5665
        %v5712 = vunpack.c.l.b16 %v5666
        %v5713 = vunpack.c.l.b16 %v5667
        %v5714 = vunpack.c.l.b16 %v5668
        %v5715 = vunpack.c.l.b16 %v5669
        %v5716 = vunpack.c.l.b16 %v5670
        %v5717 = vpack.c.b16 %v5702, %v5701
        %v5718 = vpack.c.b16 %v5704, %v5703
        %v5719 = vpack.c.b16 %v5706, %v5705
        %v5720 = vpack.c.b16 %v5708, %v5707
        %v5721 = vpack.c.b16 %v5710, %v5709
        %v5722 = vpack.c.b16 %v5712, %v5711
        %v5723 = vpack.c.b16 %v5714, %v5713
        %v5724 = vpack.c.b16 %v5716, %v5715
        %5733 = vmatprep.subr.bf16.mxu0 0
        %5734 = vmatpush1.bf16.msra.mxu0 %v5724
        %5735 = vmatprep.subr.bf16.mxu0 0
        %5736 = vmatpush1.bf16.msra.mxu0 %v5723
        %5737 = vmatprep.subr.bf16.mxu0 0
        %5738 = vmatpush1.bf16.msra.mxu0 %v5722
        %5739 = vmatprep.subr.bf16.mxu0 0
        %5740 = vmatpush1.bf16.msra.mxu0 %v5721
        %5741 = vmatprep.subr.bf16.mxu0 0
        %5742 = vmatpush1.bf16.msra.mxu0 %v5720
        %5743 = vmatprep.subr.bf16.mxu0 0
        %5744 = vmatpush1.bf16.msra.mxu0 %v5719
        %5745 = vmatprep.subr.bf16.mxu0 0
        %5746 = vmatpush1.bf16.msra.mxu0 %v5718
        %5747 = vmatprep.subr.bf16.mxu0 0
        %5748 = vmatpush1.bf16.msra.mxu0 %v5717
        %5749 = vmatprep.subr.bf16.mxu0 0
        %5750 = vmatpush2.bf16.msra.mxu0 0
        %5751 = vmatprep.subr.bf16.mxu0 0
        %5752 = vmatpush2.bf16.msra.mxu0 0
        %5753 = vmatprep.subr.bf16.mxu0 0
        %5754 = vmatpush2.bf16.msra.mxu0 0
        %5755 = vmatprep.subr.bf16.mxu0 0
        %5756 = vmatpush2.bf16.msra.mxu0 0
        %5757 = vmatprep.subr.bf16.mxu0 0
        %5758 = vmatpush2.bf16.msra.mxu0 0
        %5759 = vmatprep.subr.bf16.mxu0 0
        %5760 = vmatpush2.bf16.msra.mxu0 0
        %5761 = vmatprep.subr.bf16.mxu0 0
        %5762 = vmatpush2.bf16.msra.mxu0 0
        %5763 = vmatprep.subr.bf16.mxu0 0
        %5764 = vmatpush2.bf16.msra.mxu0 0
        %5765 = vmatprep.mubr.bf16.mxu0 0
        %5766 = vmatmul.mubr.bf16.gmra.mxu0 %v5674
        %v5767 = vpop.f32.mrf.mxu0
        %v5768 = vadd.f32 0.0, %v5767
        %v5769 = vpop.f32.mrf.mxu0
        %v5770 = vpop.f32.mrf.mxu0
        %v5771 = vadd.f32 0.0, %v5770
        %v5772 = vpop.f32.mrf.mxu0
        %5773 = vmatprep.mubr.bf16.mxu0 0
        %5774 = vmatmul.mubr.bf16.gmra.mxu0 %v5676
        %v5775 = vpop.f32.mrf.mxu0
        %v5776 = vadd.f32 0.0, %v5775
        %v5777 = vpop.f32.mrf.mxu0
        %v5778 = vpop.f32.mrf.mxu0
        %v5779 = vadd.f32 0.0, %v5778
        %v5780 = vpop.f32.mrf.mxu0
        %5781 = vmatprep.mubr.bf16.mxu0 0
        %5782 = vmatmul.mubr.bf16.gmra.mxu0 %v5678
        %v5783 = vpop.f32.mrf.mxu0
        %v5784 = vadd.f32 0.0, %v5783
        %v5785 = vpop.f32.mrf.mxu0
        %v5786 = vpop.f32.mrf.mxu0
        %v5787 = vadd.f32 0.0, %v5786
        %v5788 = vpop.f32.mrf.mxu0
        %5789 = vmatprep.mubr.bf16.mxu0 0
        %5790 = vmatmul.mubr.bf16.gmra.mxu0 %v5680
        %v5791 = vpop.f32.mrf.mxu0
        %v5792 = vadd.f32 0.0, %v5791
        %v5793 = vpop.f32.mrf.mxu0
        %v5794 = vpop.f32.mrf.mxu0
        %v5795 = vadd.f32 0.0, %v5794
        %v5796 = vpop.f32.mrf.mxu0
        %5797 = vdwg.mxu0
        %v5798 = vadd.f32 %v5646, %v5768
        %v5799 = vadd.f32 %v5647, %v5771
        %v5800 = vadd.f32 %v5648, %v5776
        %v5801 = vadd.f32 %v5649, %v5779
        %v5802 = vadd.f32 %v5650, %v5784
        %v5803 = vadd.f32 %v5651, %v5787
        %v5804 = vadd.f32 %v5652, %v5792
        %v5805 = vadd.f32 %v5653, %v5795
        %v5806 = vld [vmem:[%s6] sm:$0x1]
        %v5808 = vlaneseq
        %v5809 = vshrl.u32 %v5808, 7
        %v5810 = vsub.s32 0, %v5809
        %v5811 = vrot.slane %v5806, %v5810
        %v5813 = vadd.f32 %v5798, %v5811
        %v5814 = vadd.f32 %v5799, %v5811
        %v5815 = vadd.f32 %v5800, %v5811
        %v5816 = vadd.f32 %v5801, %v5811
        %v5817 = vadd.f32 %v5802, %v5811
        %v5818 = vadd.f32 %v5803, %v5811
        %v5819 = vadd.f32 %v5804, %v5811
        %v5820 = vadd.f32 %v5805, %v5811
        %v5821 = vmax.f32 %v5813, 0.0
        %v5822 = vmax.f32 %v5814, 0.0
        %v5823 = vmax.f32 %v5815, 0.0
        %v5824 = vmax.f32 %v5816, 0.0
        %v5825 = vmax.f32 %v5817, 0.0
        %v5826 = vmax.f32 %v5818, 0.0
        %v5827 = vmax.f32 %v5819, 0.0
        %v5828 = vmax.f32 %v5820, 0.0
        %v5829 = vpack.c.bf16 %v5822, %v5821
        %v5830 = vpack.c.bf16 %v5824, %v5823
        %v5831 = vpack.c.bf16 %v5826, %v5825
        %v5832 = vpack.c.bf16 %v5828, %v5827
        %v5833 = vld [vmem:[%s7] sm:$0xf]
        %v5834 = vld [vmem:[%s7 + $0x4] sm:$0xf]
        %v5835 = vld [vmem:[%s7 + $0x8] sm:$0xf]
        %v5836 = vld [vmem:[%s7 + $0xc] sm:$0xf]
        %v5837 = vld [vmem:[%s7 + $0x10] sm:$0xf]
        %v5838 = vld [vmem:[%s7 + $0x14] sm:$0xf]
        %v5839 = vld [vmem:[%s7 + $0x18] sm:$0xf]
        %v5840 = vld [vmem:[%s7 + $0x1c] sm:$0xf]
        %v5841 = vld [vmem:[%s7 + $0x20] sm:$0xf]
        %v5842 = vld [vmem:[%s7 + $0x24] sm:$0xf]
        %v5843 = vld [vmem:[%s7 + $0x28] sm:$0xf]
        %v5844 = vld [vmem:[%s7 + $0x2c] sm:$0xf]
        %v5845 = vld [vmem:[%s7 + $0x30] sm:$0xf]
        %v5846 = vld [vmem:[%s7 + $0x34] sm:$0xf]
        %v5847 = vld [vmem:[%s7 + $0x38] sm:$0xf]
        %v5848 = vld [vmem:[%s7 + $0x3c] sm:$0xf]
        %v5849 = vld [vmem:[%s8] sm:$0x1]
        %v5851 = vlaneseq
        %v5852 = vshrl.u32 %v5851, 7
        %v5853 = vsub.s32 0, %v5852
        %v5854 = vrot.slane %v5849, %v5853
        %v5872 = vunpack.c.l.b16 %v5833
        %v5873 = vunpack.c.l.b16 %v5834
        %v5874 = vunpack.c.l.b16 %v5835
        %v5875 = vunpack.c.l.b16 %v5836
        %v5876 = vunpack.c.l.b16 %v5837
        %v5877 = vunpack.c.l.b16 %v5838
        %v5878 = vunpack.c.l.b16 %v5839
        %v5879 = vunpack.c.l.b16 %v5840
        %v5880 = vunpack.c.l.b16 %v5841
        %v5881 = vunpack.c.l.b16 %v5842
        %v5882 = vunpack.c.l.b16 %v5843
        %v5883 = vunpack.c.l.b16 %v5844
        %v5884 = vunpack.c.l.b16 %v5845
        %v5885 = vunpack.c.l.b16 %v5846
        %v5886 = vunpack.c.l.b16 %v5847
        %v5887 = vunpack.c.l.b16 %v5848
        %v5888 = vpack.c.b16 %v5873, %v5872
        %v5889 = vpack.c.b16 %v5875, %v5874
        %v5890 = vpack.c.b16 %v5877, %v5876
        %v5891 = vpack.c.b16 %v5879, %v5878
        %v5892 = vpack.c.b16 %v5881, %v5880
        %v5893 = vpack.c.b16 %v5883, %v5882
        %v5894 = vpack.c.b16 %v5885, %v5884
        %v5895 = vpack.c.b16 %v5887, %v5886
        %5904 = vmatprep.subr.bf16.mxu0 0
        %5905 = vmatpush1.bf16.msra.mxu0 %v5895
        %5906 = vmatprep.subr.bf16.mxu0 0
        %5907 = vmatpush1.bf16.msra.mxu0 %v5894
        %5908 = vmatprep.subr.bf16.mxu0 0
        %5909 = vmatpush1.bf16.msra.mxu0 %v5893
        %5910 = vmatprep.subr.bf16.mxu0 0
        %5911 = vmatpush1.bf16.msra.mxu0 %v5892
        %5912 = vmatprep.subr.bf16.mxu0 0
        %5913 = vmatpush1.bf16.msra.mxu0 %v5891
        %5914 = vmatprep.subr.bf16.mxu0 0
        %5915 = vmatpush1.bf16.msra.mxu0 %v5890
        %5916 = vmatprep.subr.bf16.mxu0 0
        %5917 = vmatpush1.bf16.msra.mxu0 %v5889
        %5918 = vmatprep.subr.bf16.mxu0 0
        %5919 = vmatpush1.bf16.msra.mxu0 %v5888
        %5920 = vmatprep.subr.bf16.mxu0 0
        %5921 = vmatpush2.bf16.msra.mxu0 0
        %5922 = vmatprep.subr.bf16.mxu0 0
        %5923 = vmatpush2.bf16.msra.mxu0 0
        %5924 = vmatprep.subr.bf16.mxu0 0
        %5925 = vmatpush2.bf16.msra.mxu0 0
        %5926 = vmatprep.subr.bf16.mxu0 0
        %5927 = vmatpush2.bf16.msra.mxu0 0
        %5928 = vmatprep.subr.bf16.mxu0 0
        %5929 = vmatpush2.bf16.msra.mxu0 0
        %5930 = vmatprep.subr.bf16.mxu0 0
        %5931 = vmatpush2.bf16.msra.mxu0 0
        %5932 = vmatprep.subr.bf16.mxu0 0
        %5933 = vmatpush2.bf16.msra.mxu0 0
        %5934 = vmatprep.subr.bf16.mxu0 0
        %5935 = vmatpush2.bf16.msra.mxu0 0
        %5936 = vmatprep.mubr.bf16.mxu0 0
        %5937 = vmatmul.mubr.bf16.gmra.mxu0 %v5829
        %v5938 = vpop.f32.mrf.mxu0
        %v5939 = vadd.f32 %v5854, %v5938
        %v5940 = vpop.f32.mrf.mxu0
        %v5941 = vpop.f32.mrf.mxu0
        %v5942 = vadd.f32 %v5854, %v5941
        %v5943 = vpop.f32.mrf.mxu0
        %5944 = vmatprep.mubr.bf16.mxu0 0
        %5945 = vmatmul.mubr.bf16.gmra.mxu0 %v5830
        %v5946 = vpop.f32.mrf.mxu0
        %v5947 = vadd.f32 %v5854, %v5946
        %v5948 = vpop.f32.mrf.mxu0
        %v5949 = vpop.f32.mrf.mxu0
        %v5950 = vadd.f32 %v5854, %v5949
        %v5951 = vpop.f32.mrf.mxu0
        %5952 = vmatprep.mubr.bf16.mxu0 0
        %5953 = vmatmul.mubr.bf16.gmra.mxu0 %v5831
        %v5954 = vpop.f32.mrf.mxu0
        %v5955 = vadd.f32 %v5854, %v5954
        %v5956 = vpop.f32.mrf.mxu0
        %v5957 = vpop.f32.mrf.mxu0
        %v5958 = vadd.f32 %v5854, %v5957
        %v5959 = vpop.f32.mrf.mxu0
        %5960 = vmatprep.mubr.bf16.mxu0 0
        %5961 = vmatmul.mubr.bf16.gmra.mxu0 %v5832
        %v5962 = vpop.f32.mrf.mxu0
        %v5963 = vadd.f32 %v5854, %v5962
        %v5964 = vpop.f32.mrf.mxu0
        %v5965 = vpop.f32.mrf.mxu0
        %v5966 = vadd.f32 %v5854, %v5965
        %v5967 = vpop.f32.mrf.mxu0
        %5968 = vdwg.mxu0
        %v5969 = vmax.f32 %v5939, 0.0
        %v5970 = vmax.f32 %v5942, 0.0
        %v5971 = vmax.f32 %v5947, 0.0
        %v5972 = vmax.f32 %v5950, 0.0
        %v5973 = vmax.f32 %v5955, 0.0
        %v5974 = vmax.f32 %v5958, 0.0
        %v5975 = vmax.f32 %v5963, 0.0
        %v5976 = vmax.f32 %v5966, 0.0
        %v5977 = vpack.c.bf16 %v5970, %v5969
        %v5978 = vpack.c.bf16 %v5972, %v5971
        %v5979 = vpack.c.bf16 %v5974, %v5973
        %v5980 = vpack.c.bf16 %v5976, %v5975
        %v5981 = vld [vmem:[%s9] sm:$0xf]
        %v5982 = vld [vmem:[%s9 + $0x4] sm:$0xf]
        %v5983 = vld [vmem:[%s9 + $0x8] sm:$0xf]
        %v5984 = vld [vmem:[%s9 + $0xc] sm:$0xf]
        %v5985 = vld [vmem:[%s9 + $0x10] sm:$0xf]
        %v5986 = vld [vmem:[%s9 + $0x14] sm:$0xf]
        %v5987 = vld [vmem:[%s9 + $0x18] sm:$0xf]
        %v5988 = vld [vmem:[%s9 + $0x1c] sm:$0xf]
        %v5989 = vld [vmem:[%s9 + $0x20] sm:$0xf]
        %v5990 = vld [vmem:[%s9 + $0x24] sm:$0xf]
        %v5991 = vld [vmem:[%s9 + $0x28] sm:$0xf]
        %v5992 = vld [vmem:[%s9 + $0x2c] sm:$0xf]
        %v5993 = vld [vmem:[%s9 + $0x30] sm:$0xf]
        %v5994 = vld [vmem:[%s9 + $0x34] sm:$0xf]
        %v5995 = vld [vmem:[%s9 + $0x38] sm:$0xf]
        %v5996 = vld [vmem:[%s9 + $0x3c] sm:$0xf]
        %v5997 = vld [vmem:[%s10] sm:$0x1]
        %v5999 = vlaneseq
        %v6000 = vshrl.u32 %v5999, 7
        %v6001 = vsub.s32 0, %v6000
        %v6002 = vrot.slane %v5997, %v6001
        %v6020 = vunpack.c.l.b16 %v5981
        %v6021 = vunpack.c.l.b16 %v5982
        %v6022 = vunpack.c.l.b16 %v5983
        %v6023 = vunpack.c.l.b16 %v5984
        %v6024 = vunpack.c.l.b16 %v5985
        %v6025 = vunpack.c.l.b16 %v5986
        %v6026 = vunpack.c.l.b16 %v5987
        %v6027 = vunpack.c.l.b16 %v5988
        %v6028 = vunpack.c.l.b16 %v5989
        %v6029 = vunpack.c.l.b16 %v5990
        %v6030 = vunpack.c.l.b16 %v5991
        %v6031 = vunpack.c.l.b16 %v5992
        %v6032 = vunpack.c.l.b16 %v5993
        %v6033 = vunpack.c.l.b16 %v5994
        %v6034 = vunpack.c.l.b16 %v5995
        %v6035 = vunpack.c.l.b16 %v5996
        %v6036 = vpack.c.b16 %v6021, %v6020
        %v6037 = vpack.c.b16 %v6023, %v6022
        %v6038 = vpack.c.b16 %v6025, %v6024
        %v6039 = vpack.c.b16 %v6027, %v6026
        %v6040 = vpack.c.b16 %v6029, %v6028
        %v6041 = vpack.c.b16 %v6031, %v6030
        %v6042 = vpack.c.b16 %v6033, %v6032
        %v6043 = vpack.c.b16 %v6035, %v6034
        %6052 = vmatprep.subr.bf16.mxu0 0
        %6053 = vmatpush1.bf16.msra.mxu0 %v6043
        %6054 = vmatprep.subr.bf16.mxu0 0
        %6055 = vmatpush1.bf16.msra.mxu0 %v6042
        %6056 = vmatprep.subr.bf16.mxu0 0
        %6057 = vmatpush1.bf16.msra.mxu0 %v6041
        %6058 = vmatprep.subr.bf16.mxu0 0
        %6059 = vmatpush1.bf16.msra.mxu0 %v6040
        %6060 = vmatprep.subr.bf16.mxu0 0
        %6061 = vmatpush1.bf16.msra.mxu0 %v6039
        %6062 = vmatprep.subr.bf16.mxu0 0
        %6063 = vmatpush1.bf16.msra.mxu0 %v6038
        %6064 = vmatprep.subr.bf16.mxu0 0
        %6065 = vmatpush1.bf16.msra.mxu0 %v6037
        %6066 = vmatprep.subr.bf16.mxu0 0
        %6067 = vmatpush1.bf16.msra.mxu0 %v6036
        %6068 = vmatprep.subr.bf16.mxu0 0
        %6069 = vmatpush2.bf16.msra.mxu0 0
        %6070 = vmatprep.subr.bf16.mxu0 0
        %6071 = vmatpush2.bf16.msra.mxu0 0
        %6072 = vmatprep.subr.bf16.mxu0 0
        %6073 = vmatpush2.bf16.msra.mxu0 0
        %6074 = vmatprep.subr.bf16.mxu0 0
        %6075 = vmatpush2.bf16.msra.mxu0 0
        %6076 = vmatprep.subr.bf16.mxu0 0
        %6077 = vmatpush2.bf16.msra.mxu0 0
        %6078 = vmatprep.subr.bf16.mxu0 0
        %6079 = vmatpush2.bf16.msra.mxu0 0
        %6080 = vmatprep.subr.bf16.mxu0 0
        %6081 = vmatpush2.bf16.msra.mxu0 0
        %6082 = vmatprep.subr.bf16.mxu0 0
        %6083 = vmatpush2.bf16.msra.mxu0 0
        %6084 = vmatprep.mubr.bf16.mxu0 0
        %6085 = vmatmul.mubr.bf16.gmra.mxu0 %v5977
        %v6086 = vpop.f32.mrf.mxu0
        %v6087 = vadd.f32 %v6002, %v6086
        %v6088 = vpop.f32.mrf.mxu0
        %v6089 = vpop.f32.mrf.mxu0
        %v6090 = vadd.f32 %v6002, %v6089
        %v6091 = vpop.f32.mrf.mxu0
        %6092 = vmatprep.mubr.bf16.mxu0 0
        %6093 = vmatmul.mubr.bf16.gmra.mxu0 %v5978
        %v6094 = vpop.f32.mrf.mxu0
        %v6095 = vadd.f32 %v6002, %v6094
        %v6096 = vpop.f32.mrf.mxu0
        %v6097 = vpop.f32.mrf.mxu0
        %v6098 = vadd.f32 %v6002, %v6097
        %v6099 = vpop.f32.mrf.mxu0
        %6100 = vmatprep.mubr.bf16.mxu0 0
        %6101 = vmatmul.mubr.bf16.gmra.mxu0 %v5979
        %v6102 = vpop.f32.mrf.mxu0
        %v6103 = vadd.f32 %v6002, %v6102
        %v6104 = vpop.f32.mrf.mxu0
        %v6105 = vpop.f32.mrf.mxu0
        %v6106 = vadd.f32 %v6002, %v6105
        %v6107 = vpop.f32.mrf.mxu0
        %6108 = vmatprep.mubr.bf16.mxu0 0
        %6109 = vmatmul.mubr.bf16.gmra.mxu0 %v5980
        %v6110 = vpop.f32.mrf.mxu0
        %v6111 = vadd.f32 %v6002, %v6110
        %v6112 = vpop.f32.mrf.mxu0
        %v6113 = vpop.f32.mrf.mxu0
        %v6114 = vadd.f32 %v6002, %v6113
        %v6115 = vpop.f32.mrf.mxu0
        %6116 = vdwg.mxu0
        %6117 = vst [vmem:[%s715] sm:$0xff] %v6087
        %6118 = vst [vmem:[%s715 + $0x8] sm:$0xff] %v6090
        %6119 = vst [vmem:[%s715 + $0x10] sm:$0xff] %v6095
        %6120 = vst [vmem:[%s715 + $0x18] sm:$0xff] %v6098
        %6121 = vst [vmem:[%s715 + $0x20] sm:$0xff] %v6103
        %6122 = vst [vmem:[%s715 + $0x28] sm:$0xff] %v6106
        %6123 = vst [vmem:[%s715 + $0x30] sm:$0xff] %v6111
        %6124 = vst [vmem:[%s715 + $0x38] sm:$0xff] %v6114
        %s6125 = smul.u32 8, %s22
        %p6126 = scmp.lt.s32.totalorder %s6125, 15
        %s6127 = scalar_select %p6126, %s6125, 15
        %s6128 = smul.addr %s6127, 8
        %s6129 = scalar_lea.vmem %s11, %s6128
        // Predicated region
        $region106: #{net_forward.1} parent=100 // pred_check
          %p6130 = pneg %p276
        $region107: #{net_forward.1} parent=100 // pred_check_branch
          %6132 = sbr.rel (%p6130) target = $region109
        $region108: #{net_forward.1} parent=100 // pred_region
          %s6133 = smul.u32 8, %s22
        $region109: #{net_forward.1} parent=100 // pred_fallthru
          _
      $region101: #{net_forward.1} parent=5 // pred_fallthru
        _
      %p6134 = scmp.le.s32.totalorder 2, %s17
      // Predicated region
      $region110: #{net_forward.1} parent=5 // pred_check
        %p6135 = pneg %p6134
      $region111: #{net_forward.1} parent=5 // pred_check_branch
        %6137 = sbr.rel (%p6135) target = $region113
      $region112: #{net_forward.1} parent=5 // pred_region
        %s6138 = ssub.s32 %s17, 2
        // Predicated region
        $region114: #{net_forward.1} parent=112 // pred_check
          %p6139 = pneg %p282
        $region115: #{net_forward.1} parent=112 // pred_check_branch
          %6141 = sbr.rel (%p6139) target = $region117
        $region116: #{net_forward.1} parent=112 // pred_region
          %s6142 = smul.u32 8, %s23
          %p6143 = scmp.lt.s32.totalorder %s6142, 15
          %s6144 = scalar_select %p6143, %s6142, 15
          %s6145 = smul.addr %s6144, 8
          %s6146 = scalar_lea.vmem %s11, %s6145
        $region117: #{net_forward.1} parent=112 // pred_fallthru
          _
      $region113: #{net_forward.1} parent=5 // pred_fallthru
        _
    $region6: #{net_forward.1} parent=1 // loop_footer
      %s21 = sadd.s32 1, %s17
    $region7: #{net_forward.1} parent=1 // loop_footer_branch
      %16 = sbr.rel target = $region3
    $region8: #{net_forward.1} parent=1 // loop_exit
      _

</llo_original>
